<compile_context>
chip_gen: v7x
topology: tpu7x:2x2x1
jax: 0.10.0
libtpu: 0.0.40
codegen_flags: <defaults>
</compile_context>

<pallas_src>
import functools

import numpy as np
import jax
import jax.numpy as jnp
from jax.experimental import pallas as pl
from jax.experimental.pallas import tpu as pltpu


# --------------------------------------------------------------------------
# Generation-aware VMEM budget and tile pickers
# --------------------------------------------------------------------------
def _vmem_limit_bytes():
    """Scoped-VMEM limit: ~half of physical VMEM (64 MiB v5e/v6e, 32 MiB v7x)."""
    try:
        cap = int(pltpu.get_tpu_info().vmem_capacity_bytes)
    except Exception:
        cap = 64 * 1024 * 1024           # conservative fallback
    return int(min(max(cap // 2, 32 * 1024 * 1024), 64 * 1024 * 1024))


_VMEM_LIMIT = _vmem_limit_bytes()
_BLOCK_BUDGET = _VMEM_LIMIT // 2         # budget for blocks (x2 double-buffer below)
_KRON_LIMIT_BYTES = 8 * 1024 * 1024      # max resident (bf16) kron matrix per kernel


def _compiler_params(semantics):
    return pltpu.CompilerParams(dimension_semantics=semantics,
                                vmem_limit_bytes=_VMEM_LIMIT)


def _row_tile(rows, bytes_per_row, resident_bytes):
    """Largest row tile (full `rows`, else a multiple of 8) whose double-buffered
    blocks plus resident operands fit the VMEM budget."""
    avail = max(_BLOCK_BUDGET - resident_bytes, 2 * 8 * bytes_per_row)
    fit = int(avail // (2 * max(bytes_per_row, 1)))
    if fit >= rows:
        return rows
    return max(8, (fit // 8) * 8)


def _lane_tile(lanes, bytes_per_lane, resident_bytes):
    """Largest lane tile (full `lanes`, else a multiple of 128) fitting the budget."""
    avail = max(_BLOCK_BUDGET - resident_bytes, 2 * 128 * bytes_per_lane)
    fit = int(avail // (2 * max(bytes_per_lane, 1)))
    if fit >= lanes:
        return lanes
    return max(128, (fit // 128) * 128)


# --------------------------------------------------------------------------
# Bilinear interpolation matrices (align_corners=True, like F.upsample_bilinear)
# --------------------------------------------------------------------------
def _interp_matrix_np(out_size, in_size):
    """Row-stochastic bilinear interpolation matrix (out_size, in_size), f32."""
    a = np.zeros((out_size, in_size), np.float32)
    if out_size == 1:
        src = np.zeros((1,), np.float64)
    else:
        src = np.arange(out_size, dtype=np.float64) * (in_size - 1) / (out_size - 1)
    i0 = np.clip(np.floor(src).astype(np.int64), 0, in_size - 1)
    i1 = np.minimum(i0 + 1, in_size - 1)
    w1 = (src - i0).astype(np.float32)
    w0 = (1.0 - w1).astype(np.float32)
    for r in range(out_size):
        a[r, i0[r]] += w0[r]
        a[r, i1[r]] += w1[r]
    return a


def _kron_resize_matrix(in_h, in_w, out_h, out_w, *, flip_in_w=False,
                        flip_out_w=False, scale=1.0):
    """(in_h*in_w, out_h*out_w) bf16 matrix so that  resize(x) == x2 @ M  for
    x2 = x flattened to (channels, in_h*in_w).  Optional horizontal flips of the
    input/output are folded into the matrix, as is an optional scalar (used to
    fold 1/num_terms for the 'mean' combine)."""
    ah = _interp_matrix_np(out_h, in_h)
    aw = _interp_matrix_np(out_w, in_w)
    if flip_out_w:
        aw = aw[::-1, :]           # flip the OUTPUT of the resize along W
    if flip_in_w:
        aw = aw[:, ::-1]           # flip the INPUT of the resize along W
    m = np.kron(ah, aw).astype(np.float32) * np.float32(scale)   # (out_hw, in_hw)
    if m.nbytes // 2 > _KRON_LIMIT_BYTES:
        # TODO(synk): separable two-matmul resize for large images (kron matrix
        # would not fit VMEM); only the fused kron path is implemented.
        raise NotImplementedError("image too large for the kron resize path")
    return jnp.asarray(np.ascontiguousarray(m.T), dtype=jnp.bfloat16)


# --------------------------------------------------------------------------
# Pallas kernel bodies
# --------------------------------------------------------------------------
def _kron_matmul_kernel(x_ref, m_ref, o_ref):
    # Lane-dense MXU matmul: (TB, Lin) @ (Lin, Lout) -> (TB, Lout), f32 accumulate.
    r = jnp.dot(x_ref[...].astype(jnp.bfloat16), m_ref[...],
                preferred_element_type=jnp.float32)
    o_ref[...] = r.astype(o_ref.dtype)


def _kron_matmul_combine_kernel(x_ref, m_ref, acc_ref, o_ref, *, combine):
    # Fused resize-back + running max/mean-add; acc is aliased with the output.
    r = jnp.dot(x_ref[...].astype(jnp.bfloat16), m_ref[...],
                preferred_element_type=jnp.float32)
    a = acc_ref[...]
    o_ref[...] = jnp.maximum(a, r) if combine == "max" else a + r


def _conv1x1_kernel(x_ref, w_ref, b_ref, o_ref):
    # Per image: (K, C) @ (C, TL) + bias, lane axis = flattened H*W (no transposes).
    y = jnp.dot(w_ref[...], x_ref[0], preferred_element_type=jnp.float32) + b_ref[...]
    o_ref[0] = y.astype(o_ref.dtype)


def _conv1x1_combine_kernel(x_ref, w_ref, b_ref, acc_ref, o_ref, *, combine):
    # Conv epilogue fused with the running combine (used at pyramid scale p == 1).
    y = jnp.dot(w_ref[...], x_ref[0], preferred_element_type=jnp.float32) + b_ref[...]
    a = acc_ref[0]
    o_ref[0] = jnp.maximum(a, y) if combine == "max" else a + y


# --------------------------------------------------------------------------
# Wrappers
# --------------------------------------------------------------------------
def kron_matmul(x2, m, *, out_dtype, acc2=None, combine=None):
    """out2 = x2 @ m, optionally fused with max/add into an aliased accumulator.

    x2:   (R, Lin)  bf16   rows = flattened channels, lanes = flattened pixels
    m:    (Lin, Lout) bf16 kron'd bilinear-interp (and/or flip) matrix, resident
    acc2: (R, Lout) f32    running multi-scale accumulator, updated in place
    """
    r, lin = x2.shape
    lout = m.shape[1]
    o_bytes = jnp.dtype(jnp.float32 if acc2 is not None else out_dtype).itemsize
    row_bytes = lin * x2.dtype.itemsize + lout * o_bytes
    if acc2 is not None:
        row_bytes += lout * 4                      # aliased acc input block
    resident = m.size * m.dtype.itemsize
    tb = _row_tile(r, row_bytes, resident)
    grid = (pl.cdiv(r, tb),)
    x_spec = pl.BlockSpec((tb, lin), lambda i: (i, 0))
    m_spec = pl.BlockSpec((lin, lout), lambda i: (0, 0))      # resident across grid
    acc_spec = pl.BlockSpec((tb, lout), lambda i: (i, 0))
    o_spec = pl.BlockSpec((tb, lout), lambda i: (i, 0))
    params = _compiler_params(("parallel",))
    if acc2 is None:
        return pl.pallas_call(
            _kron_matmul_kernel,
            out_shape=jax.ShapeDtypeStruct((r, lout), out_dtype),
            grid=grid,
            in_specs=[x_spec, m_spec],
            out_specs=o_spec,
            compiler_params=params,
        )(x2, m)
    return pl.pallas_call(
        functools.partial(_kron_matmul_combine_kernel, combine=combine),
        out_shape=jax.ShapeDtypeStruct((r, lout), jnp.float32),
        grid=grid,
        in_specs=[x_spec, m_spec, acc_spec],
        out_specs=o_spec,
        input_output_aliases={2: 0},               # acc updated in place in HBM
        compiler_params=params,
    )(x2, m, acc2)


def conv1x1_flat(x3, weight, bias, *, out_dtype, acc3=None, combine=None):
    """1x1-conv head in NCHW-flat form, optionally fused with the running combine.

    x3:   (N, C, HW) bf16  (lane axis = HW, lane-dense)
    weight (K, C) bf16, bias (K, 1) f32
    acc3: (N, K, HW) f32 running accumulator (aliased, fused combine) or None
    """
    n, c, hw = x3.shape
    k = weight.shape[0]
    o_bytes = jnp.dtype(jnp.float32 if acc3 is not None else out_dtype).itemsize
    lane_bytes = c * x3.dtype.itemsize + k * o_bytes + (k * 4 if acc3 is not None else 0)
    resident = weight.size * weight.dtype.itemsize + bias.size * 4
    tl = _lane_tile(hw, lane_bytes, resident)
    grid = (n, pl.cdiv(hw, tl))
    x_spec = pl.BlockSpec((1, c, tl), lambda i, j: (i, 0, j))
    w_spec = pl.BlockSpec((k, c), lambda i, j: (0, 0))
    b_spec = pl.BlockSpec((k, 1), lambda i, j: (0, 0))
    acc_spec = pl.BlockSpec((1, k, tl), lambda i, j: (i, 0, j))
    o_spec = pl.BlockSpec((1, k, tl), lambda i, j: (i, 0, j))
    params = _compiler_params(("parallel", "parallel"))     # N axis -> both TCs on v7x
    if acc3 is None:
        return pl.pallas_call(
            _conv1x1_kernel,
            out_shape=jax.ShapeDtypeStruct((n, k, hw), out_dtype),
            grid=grid,
            in_specs=[x_spec, w_spec, b_spec],
            out_specs=o_spec,
            compiler_params=params,
        )(x3, weight, bias)
    return pl.pallas_call(
        functools.partial(_conv1x1_combine_kernel, combine=combine),
        out_shape=jax.ShapeDtypeStruct((n, k, hw), jnp.float32),
        grid=grid,
        in_specs=[x_spec, w_spec, b_spec, acc_spec],
        out_specs=o_spec,
        input_output_aliases={3: 0},
        compiler_params=params,
    )(x3, weight, bias, acc3)


# --------------------------------------------------------------------------
# Inner model: synthetic 1x1-conv segmentation head (the wrapped `model`)
# --------------------------------------------------------------------------
class SimpleSegHead:
    """Returns {'out_seg': conv1x1(x)} (NCHW), plus flattened / fused entry points
    that MSC uses to avoid HBM round trips."""

    def __init__(self, in_ch, num_classes, key):
        kw, kb = jax.random.split(key)
        self.num_classes = num_classes
        # PyTorch Conv2d layout: weight (K, C), bias (K,) -> stored (K, 1)
        self.weight = 0.1 * jax.random.normal(kw, (num_classes, in_ch), jnp.float32)
        self.bias = 0.1 * jax.random.normal(kb, (num_classes, 1), jnp.float32)

    def _wb(self, scale_mul):
        w = (self.weight * scale_mul).astype(jnp.bfloat16)
        b = (self.bias * scale_mul).astype(jnp.float32)
        return w, b

    def apply3(self, x3, *, out_dtype=jnp.bfloat16, scale_mul=1.0):
        """x3 (N, C, HW) bf16 -> logits (N, K, HW)."""
        w, b = self._wb(scale_mul)
        return conv1x1_flat(x3, w, b, out_dtype=out_dtype)

    def apply3_fused(self, x3, acc3, *, combine, scale_mul=1.0):
        """Conv fused with the running max/mean combine; acc3 may be None (first term)."""
        w, b = self._wb(scale_mul)
        return conv1x1_flat(x3, w, b, out_dtype=jnp.float32, acc3=acc3, combine=combine)

    def __call__(self, x):
        n, c, h, w = x.shape
        y = self.apply3(x.reshape(n, c, h * w).astype(jnp.bfloat16))
        return {"out_seg": y.reshape(n, self.num_classes, h, w)}


# --------------------------------------------------------------------------
# MSC module (eval-mode forward)
# --------------------------------------------------------------------------
class MSC:
    """Multi-scale inputs (JAX/Pallas port of the PyTorch MSC module, eval mode)."""

    def __init__(self, model, pyramids=(0.5, 0.75, 1.0, 1.25, 1.5, 1.75),
                 flip=False, combine="max"):
        self.scale = model
        self.pyramids = list(pyramids)
        self.flip = flip
        self.combine = combine
        self.debug = True
        print("initialized msc-> pyramids:", self.pyramids, " flip: ", flip)

    def __call__(self, x):
        n, c, h, w = x.shape
        hw = h * w
        k = self.scale.num_classes
        mean = self.combine != "max"               # original: anything != 'max' is mean
        num_terms = len(self.pyramids) * (2 if self.flip else 1)
        inv = (1.0 / float(num_terms)) if mean else 1.0

        # One bf16 cast of x, reused by every scale (halves the dominant HBM reads).
        xb3 = x.astype(jnp.bfloat16).reshape(n, c, hw)
        xb2 = xb3.reshape(n * c, hw)

        acc = None                                  # (n*k, hw) f32, updated in place

        def fold(acc, y2, m_back):
            # fused resize-back (or flip-permute) + running combine
            if acc is None:                         # first term initialises acc
                return kron_matmul(y2, m_back, out_dtype=jnp.float32)
            return kron_matmul(y2, m_back, out_dtype=jnp.float32,
                               acc2=acc, combine=self.combine)

        for p in self.pyramids:
            hp, wp = int(h * p), int(w * p)        # matches the original int(s * p)
            if p == 1:
                # No resize: fuse the combine directly into the conv epilogue.
                acc3 = None if acc is None else acc.reshape(n, k, hw)
                acc = self.scale.apply3_fused(
                    xb3, acc3, combine=self.combine, scale_mul=inv
                ).reshape(n * k, hw)
            else:
                m_fwd = _kron_resize_matrix(h, w, hp, wp)
                xp3 = kron_matmul(xb2, m_fwd,
                                  out_dtype=jnp.bfloat16).reshape(n, c, hp * wp)
                yp2 = self.scale.apply3(xp3).reshape(n * k, hp * wp)
                m_back = _kron_resize_matrix(hp, wp, h, w, scale=inv)
                acc = fold(acc, yp2, m_back)

            if self.flip:
                # flip(model(flip(xp))) with both horizontal flips folded into the
                # interpolation / permutation matrices (no jnp.flip HBM passes).
                m_fwd_f = _kron_resize_matrix(h, w, hp, wp, flip_out_w=True)
                xf3 = kron_matmul(xb2, m_fwd_f,
                                  out_dtype=jnp.bfloat16).reshape(n, c, hp * wp)
                yf2 = self.scale.apply3(xf3).reshape(n * k, hp * wp)
                m_back_f = _kron_resize_matrix(hp, wp, h, w, flip_in_w=True, scale=inv)
                acc = fold(acc, yf2, m_back_f)

        if self.debug:
            print("doing max" if self.combine == "max" else "doing mean")
            self.debug = False
        # TODO(synk): training-mode output (logits_all + [logits_max]) is not wired
        # (eval path only: per-scale logits are folded into the running accumulator),
        # and wrapped models without the flattened apply3/apply3_fused interface
        # would need a separate (unfused) combine pass.
        return acc.reshape(n, k, h, w)


# --------------------------------------------------------------------------
# Pure-JAX f32 reference with the PyTorch MSC semantics (align_corners=True)
# --------------------------------------------------------------------------
def _ref_msc(x, weight, bias, pyramids, combine, flip=False):
    n, c, h, w = x.shape

    def resize(t, oh, ow):
        ah = jnp.asarray(_interp_matrix_np(oh, t.shape[2]))
        aw = jnp.asarray(_interp_matrix_np(ow, t.shape[3]))
        return jnp.einsum("oh,pw,nchw->ncop", ah, aw, t)

    def model(t):
        return jnp.einsum("kc,nchw->nkhw", weight, t) + bias.reshape(1, -1, 1, 1)

    outs = []
    for p in pyramids:
        hp, wp = int(h * p), int(w * p)
        xp = x if p == 1 else resize(x, hp, wp)
        yp = model(xp)
        outs.append(yp if p == 1 else resize(yp, h, w))
        if flip:
            yf = jnp.flip(model(jnp.flip(xp, axis=3)), axis=3)
            outs.append(yf if p == 1 else resize(yf, h, w))
    st = jnp.stack(outs)
    return jnp.max(st, axis=0) if combine == "max" else jnp.mean(st, axis=0)


# --------------------------------------------------------------------------
if __name__ == "__main__":
    key = jax.random.PRNGKey(0)
    kx, kmodel = jax.random.split(key)

    N, C, H, W = 2, 4, 16, 16
    NUM_CLASSES = 5
    x = jax.random.normal(kx, (N, C, H, W), jnp.float32)

    head = SimpleSegHead(C, NUM_CLASSES, kmodel)
    pyramids = (0.5, 0.75, 1.0, 1.25, 1.5, 1.75)

    # Kernels use bf16 operands with f32 accumulation; reference is pure f32.
    tol = dict(rtol=3e-2, atol=3e-2)

    # 1) max combine
    msc_max = MSC(head, pyramids=pyramids, flip=False, combine="max")
    out_max = jax.block_until_ready(jax.jit(msc_max.__call__)(x))
    assert out_max.shape == (N, NUM_CLASSES, H, W), out_max.shape
    assert out_max.dtype == jnp.float32, out_max.dtype
    ref_max = _ref_msc(x, head.weight, head.bias, pyramids, "max")
    np.testing.assert_allclose(np.asarray(out_max), np.asarray(ref_max), **tol)

    # 2) mean combine (1/num_terms folded into conv weights / back-matrices)
    msc_mean = MSC(head, pyramids=pyramids, flip=False, combine="mean")
    out_mean = jax.block_until_ready(jax.jit(msc_mean.__call__)(x))
    ref_mean = _ref_msc(x, head.weight, head.bias, pyramids, "mean")
    np.testing.assert_allclose(np.asarray(out_mean), np.asarray(ref_mean), **tol)

    # 3) flip=True (flips folded into the matrices; also exercises the f32 conv init)
    pyr_flip = (1.0, 0.5)
    msc_flip = MSC(head, pyramids=pyr_flip, flip=True, combine="max")
    out_flip = jax.block_until_ready(jax.jit(msc_flip.__call__)(x))
    ref_flip = _ref_msc(x, head.weight, head.bias, pyr_flip, "max", flip=True)
    np.testing.assert_allclose(np.asarray(out_flip), np.asarray(ref_flip), **tol)

    print("KERNEL_OK")
</pallas_src>

<mosaic_0001>
module attributes {stable_mosaic.version = 11 : i64} {
  func.func @_kron_matmul_kernel(%arg0: i32, %arg1: memref<8x256xbf16, #tpu.memory_space<vmem>>, %arg2: memref<256x144xbf16, #tpu.memory_space<vmem>>, %arg3: memref<8x144xbf16, #tpu.memory_space<vmem>>) attributes {dimension_semantics = [#tpu.dimension_semantics<parallel>], iteration_bounds = array<i64: 1>, scalar_prefetch = 0 : i64, scratch_operands = 0 : i64, tpu.core_type = #tpu.core_type<tc>, window_params = [{transform_indices = @transform_0, window_bounds = array<i64: 8, 256>}, {pipeline_mode = #tpu.pipeline_mode<synchronous>, transform_indices = @transform_1, window_bounds = array<i64: 256, 144>}, {transform_indices = @transform_2, window_bounds = array<i64: 8, 144>}]} {
    %c0 = arith.constant 0 : index
    %c0_0 = arith.constant 0 : index
    %0 = vector.load %arg1[%c0, %c0_0] : memref<8x256xbf16, #tpu.memory_space<vmem>>, vector<8x256xbf16>
    %c0_1 = arith.constant 0 : index
    %c0_2 = arith.constant 0 : index
    %1 = vector.load %arg2[%c0_1, %c0_2] : memref<256x144xbf16, #tpu.memory_space<vmem>>, vector<256x144xbf16>
    %cst = arith.constant dense<0.000000e+00> : vector<8x144xf32>
    %2 = tpu.matmul %0, %1, %cst {dimension_numbers = #tpu.dot_dimension_numbers<[1], [0], [0], [1], [0, 0, 1, 1], [], []>} : vector<8x256xbf16>, vector<256x144xbf16>, vector<8x144xf32> -> vector<8x144xf32>
    %3 = arith.truncf %2 : vector<8x144xf32> to vector<8x144xbf16>
    %c0_3 = arith.constant 0 : index
    %c0_4 = arith.constant 0 : index
    %4 = vector.load %arg3[%c0_3, %c0_4] : memref<8x144xbf16, #tpu.memory_space<vmem>>, vector<8x144xbf16>
    tpu.vector_store %arg3[%c0_3, %c0_4], %3 {strides = array<i32>} : memref<8x144xbf16, #tpu.memory_space<vmem>>, vector<8x144xbf16>,
    return
  }
  func.func @transform_0(%arg0: i32) -> (i32, i32) {
    %c0_i32 = arith.constant 0 : i32
    %c0_i32_0 = arith.constant 0 : i32
    return %arg0, %c0_i32 : i32, i32
  }
  func.func @transform_1(%arg0: i32) -> (i32, i32) {
    %c0_i32 = arith.constant 0 : i32
    %c0_i32_0 = arith.constant 0 : i32
    %c0_i32_1 = arith.constant 0 : i32
    return %c0_i32, %c0_i32_0 : i32, i32
  }
  func.func @transform_2(%arg0: i32) -> (i32, i32) {
    %c0_i32 = arith.constant 0 : i32
    %c0_i32_0 = arith.constant 0 : i32
    return %arg0, %c0_i32 : i32, i32
  }
}

module attributes {stable_mosaic.version = 11 : i64} {
  func.func @_conv1x1_kernel(%arg0: i32, %arg1: i32, %arg2: memref<1x4x144xbf16, #tpu.memory_space<vmem>>, %arg3: memref<5x4xbf16, #tpu.memory_space<vmem>>, %arg4: memref<5x1xf32, #tpu.memory_space<vmem>>, %arg5: memref<1x5x144xbf16, #tpu.memory_space<vmem>>) attributes {dimension_semantics = [#tpu.dimension_semantics<parallel>, #tpu.dimension_semantics<parallel>], iteration_bounds = array<i64: 2, 1>, scalar_prefetch = 0 : i64, scratch_operands = 0 : i64, tpu.core_type = #tpu.core_type<tc>, window_params = [{transform_indices = @transform_0, window_bounds = array<i64: 1, 4, 144>}, {pipeline_mode = #tpu.pipeline_mode<synchronous>, transform_indices = @transform_1, window_bounds = array<i64: 5, 4>}, {pipeline_mode = #tpu.pipeline_mode<synchronous>, transform_indices = @transform_2, window_bounds = array<i64: 5, 1>}, {transform_indices = @transform_3, window_bounds = array<i64: 1, 5, 144>}]} {
    %c0 = arith.constant 0 : index
    %c0_0 = arith.constant 0 : index
    %0 = vector.load %arg3[%c0, %c0_0] : memref<5x4xbf16, #tpu.memory_space<vmem>>, vector<5x4xbf16>
    %c0_1 = arith.constant 0 : index
    %c0_2 = arith.constant 0 : index
    %c0_3 = arith.constant 0 : index
    %1 = vector.load %arg2[%c0_1, %c0_2, %c0_3] : memref<1x4x144xbf16, #tpu.memory_space<vmem>>, vector<1x4x144xbf16>
    %2 = vector.shape_cast %1 : vector<1x4x144xbf16> to vector<4x144xbf16>
    %cst = arith.constant dense<0.000000e+00> : vector<5x144xf32>
    %3 = tpu.matmul %0, %2, %cst {dimension_numbers = #tpu.dot_dimension_numbers<[1], [0], [0], [1], [0, 0, 1, 1], [], []>} : vector<5x4xbf16>, vector<4x144xbf16>, vector<5x144xf32> -> vector<5x144xf32>
    %c0_4 = arith.constant 0 : index
    %c0_5 = arith.constant 0 : index
    %4 = vector.load %arg4[%c0_4, %c0_5] : memref<5x1xf32, #tpu.memory_space<vmem>>, vector<5x1xf32>
    %5 = vector.broadcast %4 : vector<5x1xf32> to vector<5x144xf32>
    %6 = arith.addf %3, %5 : vector<5x144xf32>
    %7 = arith.truncf %6 : vector<5x144xf32> to vector<5x144xbf16>
    %c0_6 = arith.constant 0 : index
    %c0_7 = arith.constant 0 : index
    %c0_8 = arith.constant 0 : index
    %8 = vector.load %arg5[%c0_6, %c0_7, %c0_8] : memref<1x5x144xbf16, #tpu.memory_space<vmem>>, vector<1x5x144xbf16>
    %9 = vector.shape_cast %8 : vector<1x5x144xbf16> to vector<5x144xbf16>
    %10 = vector.shape_cast %7 : vector<5x144xbf16> to vector<1x5x144xbf16>
    tpu.vector_store %arg5[%c0_6, %c0_7, %c0_8], %10 {strides = array<i32>} : memref<1x5x144xbf16, #tpu.memory_space<vmem>>, vector<1x5x144xbf16>,
    return
  }
  func.func @transform_0(%arg0: i32, %arg1: i32) -> (i32, i32, i32) {
    %c0_i32 = arith.constant 0 : i32
    %c0_i32_0 = arith.constant 0 : i32
    return %arg0, %c0_i32, %arg1 : i32, i32, i32
  }
  func.func @transform_1(%arg0: i32, %arg1: i32) -> (i32, i32) {
    %c0_i32 = arith.constant 0 : i32
    %c0_i32_0 = arith.constant 0 : i32
    %c0_i32_1 = arith.constant 0 : i32
    return %c0_i32, %c0_i32_0 : i32, i32
  }
  func.func @transform_2(%arg0: i32, %arg1: i32) -> (i32, i32) {
    %c0_i32 = arith.constant 0 : i32
    %c0_i32_0 = arith.constant 0 : i32
    %c0_i32_1 = arith.constant 0 : i32
    return %c0_i32, %c0_i32_0 : i32, i32
  }
  func.func @transform_3(%arg0: i32, %arg1: i32) -> (i32, i32, i32) {
    %c0_i32 = arith.constant 0 : i32
    %c0_i32_0 = arith.constant 0 : i32
    return %arg0, %c0_i32, %arg1 : i32, i32, i32
  }
}

module attributes {stable_mosaic.version = 11 : i64} {
  func.func @_conv1x1_kernel(%arg0: i32, %arg1: i32, %arg2: memref<1x4x64xbf16, #tpu.memory_space<vmem>>, %arg3: memref<5x4xbf16, #tpu.memory_space<vmem>>, %arg4: memref<5x1xf32, #tpu.memory_space<vmem>>, %arg5: memref<1x5x64xbf16, #tpu.memory_space<vmem>>) attributes {dimension_semantics = [#tpu.dimension_semantics<parallel>, #tpu.dimension_semantics<parallel>], iteration_bounds = array<i64: 2, 1>, scalar_prefetch = 0 : i64, scratch_operands = 0 : i64, tpu.core_type = #tpu.core_type<tc>, window_params = [{transform_indices = @transform_0, window_bounds = array<i64: 1, 4, 64>}, {pipeline_mode = #tpu.pipeline_mode<synchronous>, transform_indices = @transform_1, window_bounds = array<i64: 5, 4>}, {pipeline_mode = #tpu.pipeline_mode<synchronous>, transform_indices = @transform_2, window_bounds = array<i64: 5, 1>}, {transform_indices = @transform_3, window_bounds = array<i64: 1, 5, 64>}]} {
    %c0 = arith.constant 0 : index
    %c0_0 = arith.constant 0 : index
    %0 = vector.load %arg3[%c0, %c0_0] : memref<5x4xbf16, #tpu.memory_space<vmem>>, vector<5x4xbf16>
    %c0_1 = arith.constant 0 : index
    %c0_2 = arith.constant 0 : index
    %c0_3 = arith.constant 0 : index
    %1 = vector.load %arg2[%c0_1, %c0_2, %c0_3] : memref<1x4x64xbf16, #tpu.memory_space<vmem>>, vector<1x4x64xbf16>
    %2 = vector.shape_cast %1 : vector<1x4x64xbf16> to vector<4x64xbf16>
    %cst = arith.constant dense<0.000000e+00> : vector<5x64xf32>
    %3 = tpu.matmul %0, %2, %cst {dimension_numbers = #tpu.dot_dimension_numbers<[1], [0], [0], [1], [0, 0, 1, 1], [], []>} : vector<5x4xbf16>, vector<4x64xbf16>, vector<5x64xf32> -> vector<5x64xf32>
    %c0_4 = arith.constant 0 : index
    %c0_5 = arith.constant 0 : index
    %4 = vector.load %arg4[%c0_4, %c0_5] : memref<5x1xf32, #tpu.memory_space<vmem>>, vector<5x1xf32>
    %5 = vector.broadcast %4 : vector<5x1xf32> to vector<5x64xf32>
    %6 = arith.addf %3, %5 : vector<5x64xf32>
    %7 = arith.truncf %6 : vector<5x64xf32> to vector<5x64xbf16>
    %c0_6 = arith.constant 0 : index
    %c0_7 = arith.constant 0 : index
    %c0_8 = arith.constant 0 : index
    %8 = vector.load %arg5[%c0_6, %c0_7, %c0_8] : memref<1x5x64xbf16, #tpu.memory_space<vmem>>, vector<1x5x64xbf16>
    %9 = vector.shape_cast %8 : vector<1x5x64xbf16> to vector<5x64xbf16>
    %10 = vector.shape_cast %7 : vector<5x64xbf16> to vector<1x5x64xbf16>
    tpu.vector_store %arg5[%c0_6, %c0_7, %c0_8], %10 {strides = array<i32>} : memref<1x5x64xbf16, #tpu.memory_space<vmem>>, vector<1x5x64xbf16>,
    return
  }
  func.func @transform_0(%arg0: i32, %arg1: i32) -> (i32, i32, i32) {
    %c0_i32 = arith.constant 0 : i32
    %c0_i32_0 = arith.constant 0 : i32
    return %arg0, %c0_i32, %arg1 : i32, i32, i32
  }
  func.func @transform_1(%arg0: i32, %arg1: i32) -> (i32, i32) {
    %c0_i32 = arith.constant 0 : i32
    %c0_i32_0 = arith.constant 0 : i32
    %c0_i32_1 = arith.constant 0 : i32
    return %c0_i32, %c0_i32_0 : i32, i32
  }
  func.func @transform_2(%arg0: i32, %arg1: i32) -> (i32, i32) {
    %c0_i32 = arith.constant 0 : i32
    %c0_i32_0 = arith.constant 0 : i32
    %c0_i32_1 = arith.constant 0 : i32
    return %c0_i32, %c0_i32_0 : i32, i32
  }
  func.func @transform_3(%arg0: i32, %arg1: i32) -> (i32, i32, i32) {
    %c0_i32 = arith.constant 0 : i32
    %c0_i32_0 = arith.constant 0 : i32
    return %arg0, %c0_i32, %arg1 : i32, i32, i32
  }
}

module attributes {stable_mosaic.version = 11 : i64} {
  func.func @_kron_matmul_kernel(%arg0: i32, %arg1: memref<8x256xbf16, #tpu.memory_space<vmem>>, %arg2: memref<256x64xbf16, #tpu.memory_space<vmem>>, %arg3: memref<8x64xbf16, #tpu.memory_space<vmem>>) attributes {dimension_semantics = [#tpu.dimension_semantics<parallel>], iteration_bounds = array<i64: 1>, scalar_prefetch = 0 : i64, scratch_operands = 0 : i64, tpu.core_type = #tpu.core_type<tc>, window_params = [{transform_indices = @transform_0, window_bounds = array<i64: 8, 256>}, {pipeline_mode = #tpu.pipeline_mode<synchronous>, transform_indices = @transform_1, window_bounds = array<i64: 256, 64>}, {transform_indices = @transform_2, window_bounds = array<i64: 8, 64>}]} {
    %c0 = arith.constant 0 : index
    %c0_0 = arith.constant 0 : index
    %0 = vector.load %arg1[%c0, %c0_0] : memref<8x256xbf16, #tpu.memory_space<vmem>>, vector<8x256xbf16>
    %c0_1 = arith.constant 0 : index
    %c0_2 = arith.constant 0 : index
    %1 = vector.load %arg2[%c0_1, %c0_2] : memref<256x64xbf16, #tpu.memory_space<vmem>>, vector<256x64xbf16>
    %cst = arith.constant dense<0.000000e+00> : vector<8x64xf32>
    %2 = tpu.matmul %0, %1, %cst {dimension_numbers = #tpu.dot_dimension_numbers<[1], [0], [0], [1], [0, 0, 1, 1], [], []>} : vector<8x256xbf16>, vector<256x64xbf16>, vector<8x64xf32> -> vector<8x64xf32>
    %3 = arith.truncf %2 : vector<8x64xf32> to vector<8x64xbf16>
    %c0_3 = arith.constant 0 : index
    %c0_4 = arith.constant 0 : index
    %4 = vector.load %arg3[%c0_3, %c0_4] : memref<8x64xbf16, #tpu.memory_space<vmem>>, vector<8x64xbf16>
    tpu.vector_store %arg3[%c0_3, %c0_4], %3 {strides = array<i32>} : memref<8x64xbf16, #tpu.memory_space<vmem>>, vector<8x64xbf16>,
    return
  }
  func.func @transform_0(%arg0: i32) -> (i32, i32) {
    %c0_i32 = arith.constant 0 : i32
    %c0_i32_0 = arith.constant 0 : i32
    return %arg0, %c0_i32 : i32, i32
  }
  func.func @transform_1(%arg0: i32) -> (i32, i32) {
    %c0_i32 = arith.constant 0 : i32
    %c0_i32_0 = arith.constant 0 : i32
    %c0_i32_1 = arith.constant 0 : i32
    return %c0_i32, %c0_i32_0 : i32, i32
  }
  func.func @transform_2(%arg0: i32) -> (i32, i32) {
    %c0_i32 = arith.constant 0 : i32
    %c0_i32_0 = arith.constant 0 : i32
    return %arg0, %c0_i32 : i32, i32
  }
}

module attributes {stable_mosaic.version = 11 : i64} {
  func.func @_kron_matmul_kernel(%arg0: i32, %arg1: memref<10x64xbf16, #tpu.memory_space<vmem>>, %arg2: memref<64x256xbf16, #tpu.memory_space<vmem>>, %arg3: memref<10x256xf32, #tpu.memory_space<vmem>>) attributes {dimension_semantics = [#tpu.dimension_semantics<parallel>], iteration_bounds = array<i64: 1>, scalar_prefetch = 0 : i64, scratch_operands = 0 : i64, tpu.core_type = #tpu.core_type<tc>, window_params = [{transform_indices = @transform_0, window_bounds = array<i64: 10, 64>}, {pipeline_mode = #tpu.pipeline_mode<synchronous>, transform_indices = @transform_1, window_bounds = array<i64: 64, 256>}, {transform_indices = @transform_2, window_bounds = array<i64: 10, 256>}]} {
    %c0 = arith.constant 0 : index
    %c0_0 = arith.constant 0 : index
    %0 = vector.load %arg1[%c0, %c0_0] : memref<10x64xbf16, #tpu.memory_space<vmem>>, vector<10x64xbf16>
    %c0_1 = arith.constant 0 : index
    %c0_2 = arith.constant 0 : index
    %1 = vector.load %arg2[%c0_1, %c0_2] : memref<64x256xbf16, #tpu.memory_space<vmem>>, vector<64x256xbf16>
    %cst = arith.constant dense<0.000000e+00> : vector<10x256xf32>
    %2 = tpu.matmul %0, %1, %cst {dimension_numbers = #tpu.dot_dimension_numbers<[1], [0], [0], [1], [0, 0, 1, 1], [], []>} : vector<10x64xbf16>, vector<64x256xbf16>, vector<10x256xf32> -> vector<10x256xf32>
    %c0_3 = arith.constant 0 : index
    %c0_4 = arith.constant 0 : index
    %3 = vector.load %arg3[%c0_3, %c0_4] : memref<10x256xf32, #tpu.memory_space<vmem>>, vector<10x256xf32>
    tpu.vector_store %arg3[%c0_3, %c0_4], %2 {strides = array<i32>} : memref<10x256xf32, #tpu.memory_space<vmem>>, vector<10x256xf32>,
    return
  }
  func.func @transform_0(%arg0: i32) -> (i32, i32) {
    %c0_i32 = arith.constant 0 : i32
    %c0_i32_0 = arith.constant 0 : i32
    return %arg0, %c0_i32 : i32, i32
  }
  func.func @transform_1(%arg0: i32) -> (i32, i32) {
    %c0_i32 = arith.constant 0 : i32
    %c0_i32_0 = arith.constant 0 : i32
    %c0_i32_1 = arith.constant 0 : i32
    return %c0_i32, %c0_i32_0 : i32, i32
  }
  func.func @transform_2(%arg0: i32) -> (i32, i32) {
    %c0_i32 = arith.constant 0 : i32
    %c0_i32_0 = arith.constant 0 : i32
    return %arg0, %c0_i32 : i32, i32
  }
}

module attributes {stable_mosaic.version = 11 : i64} {
  func.func @_kron_matmul_combine_kernel(%arg0: i32, %arg1: memref<10x144xbf16, #tpu.memory_space<vmem>>, %arg2: memref<144x256xbf16, #tpu.memory_space<vmem>>, %arg3: memref<10x256xf32, #tpu.memory_space<vmem>>, %arg4: memref<10x256xf32, #tpu.memory_space<vmem>>) attributes {dimension_semantics = [#tpu.dimension_semantics<parallel>], iteration_bounds = array<i64: 1>, scalar_prefetch = 0 : i64, scratch_operands = 0 : i64, tpu.core_type = #tpu.core_type<tc>, window_params = [{transform_indices = @transform_0, window_bounds = array<i64: 10, 144>}, {pipeline_mode = #tpu.pipeline_mode<synchronous>, transform_indices = @transform_1, window_bounds = array<i64: 144, 256>}, {transform_indices = @transform_2, window_bounds = array<i64: 10, 256>}, {transform_indices = @transform_3, window_bounds = array<i64: 10, 256>}]} {
    %c0 = arith.constant 0 : index
    %c0_0 = arith.constant 0 : index
    %0 = vector.load %arg1[%c0, %c0_0] : memref<10x144xbf16, #tpu.memory_space<vmem>>, vector<10x144xbf16>
    %c0_1 = arith.constant 0 : index
    %c0_2 = arith.constant 0 : index
    %1 = vector.load %arg2[%c0_1, %c0_2] : memref<144x256xbf16, #tpu.memory_space<vmem>>, vector<144x256xbf16>
    %cst = arith.constant dense<0.000000e+00> : vector<10x256xf32>
    %2 = tpu.matmul %0, %1, %cst {dimension_numbers = #tpu.dot_dimension_numbers<[1], [0], [0], [1], [0, 0, 1, 1], [], []>} : vector<10x144xbf16>, vector<144x256xbf16>, vector<10x256xf32> -> vector<10x256xf32>
    %c0_3 = arith.constant 0 : index
    %c0_4 = arith.constant 0 : index
    %3 = vector.load %arg3[%c0_3, %c0_4] : memref<10x256xf32, #tpu.memory_space<vmem>>, vector<10x256xf32>
    %4 = arith.maximumf %3, %2 : vector<10x256xf32>
    %c0_5 = arith.constant 0 : index
    %c0_6 = arith.constant 0 : index
    %5 = vector.load %arg4[%c0_5, %c0_6] : memref<10x256xf32, #tpu.memory_space<vmem>>, vector<10x256xf32>
    tpu.vector_store %arg4[%c0_5, %c0_6], %4 {strides = array<i32>} : memref<10x256xf32, #tpu.memory_space<vmem>>, vector<10x256xf32>,
    return
  }
  func.func @transform_0(%arg0: i32) -> (i32, i32) {
    %c0_i32 = arith.constant 0 : i32
    %c0_i32_0 = arith.constant 0 : i32
    return %arg0, %c0_i32 : i32, i32
  }
  func.func @transform_1(%arg0: i32) -> (i32, i32) {
    %c0_i32 = arith.constant 0 : i32
    %c0_i32_0 = arith.constant 0 : i32
    %c0_i32_1 = arith.constant 0 : i32
    return %c0_i32, %c0_i32_0 : i32, i32
  }
  func.func @transform_2(%arg0: i32) -> (i32, i32) {
    %c0_i32 = arith.constant 0 : i32
    %c0_i32_0 = arith.constant 0 : i32
    return %arg0, %c0_i32 : i32, i32
  }
  func.func @transform_3(%arg0: i32) -> (i32, i32) {
    %c0_i32 = arith.constant 0 : i32
    %c0_i32_0 = arith.constant 0 : i32
    return %arg0, %c0_i32 : i32, i32
  }
}

module attributes {stable_mosaic.version = 11 : i64} {
  func.func @_kron_matmul_kernel(%arg0: i32, %arg1: memref<8x256xbf16, #tpu.memory_space<vmem>>, %arg2: memref<256x400xbf16, #tpu.memory_space<vmem>>, %arg3: memref<8x400xbf16, #tpu.memory_space<vmem>>) attributes {dimension_semantics = [#tpu.dimension_semantics<parallel>], iteration_bounds = array<i64: 1>, scalar_prefetch = 0 : i64, scratch_operands = 0 : i64, tpu.core_type = #tpu.core_type<tc>, window_params = [{transform_indices = @transform_0, window_bounds = array<i64: 8, 256>}, {pipeline_mode = #tpu.pipeline_mode<synchronous>, transform_indices = @transform_1, window_bounds = array<i64: 256, 400>}, {transform_indices = @transform_2, window_bounds = array<i64: 8, 400>}]} {
    %c0 = arith.constant 0 : index
    %c0_0 = arith.constant 0 : index
    %0 = vector.load %arg1[%c0, %c0_0] : memref<8x256xbf16, #tpu.memory_space<vmem>>, vector<8x256xbf16>
    %c0_1 = arith.constant 0 : index
    %c0_2 = arith.constant 0 : index
    %1 = vector.load %arg2[%c0_1, %c0_2] : memref<256x400xbf16, #tpu.memory_space<vmem>>, vector<256x400xbf16>
    %cst = arith.constant dense<0.000000e+00> : vector<8x400xf32>
    %2 = tpu.matmul %0, %1, %cst {dimension_numbers = #tpu.dot_dimension_numbers<[1], [0], [0], [1], [0, 0, 1, 1], [], []>} : vector<8x256xbf16>, vector<256x400xbf16>, vector<8x400xf32> -> vector<8x400xf32>
    %3 = arith.truncf %2 : vector<8x400xf32> to vector<8x400xbf16>
    %c0_3 = arith.constant 0 : index
    %c0_4 = arith.constant 0 : index
    %4 = vector.load %arg3[%c0_3, %c0_4] : memref<8x400xbf16, #tpu.memory_space<vmem>>, vector<8x400xbf16>
    tpu.vector_store %arg3[%c0_3, %c0_4], %3 {strides = array<i32>} : memref<8x400xbf16, #tpu.memory_space<vmem>>, vector<8x400xbf16>,
    return
  }
  func.func @transform_0(%arg0: i32) -> (i32, i32) {
    %c0_i32 = arith.constant 0 : i32
    %c0_i32_0 = arith.constant 0 : i32
    return %arg0, %c0_i32 : i32, i32
  }
  func.func @transform_1(%arg0: i32) -> (i32, i32) {
    %c0_i32 = arith.constant 0 : i32
    %c0_i32_0 = arith.constant 0 : i32
    %c0_i32_1 = arith.constant 0 : i32
    return %c0_i32, %c0_i32_0 : i32, i32
  }
  func.func @transform_2(%arg0: i32) -> (i32, i32) {
    %c0_i32 = arith.constant 0 : i32
    %c0_i32_0 = arith.constant 0 : i32
    return %arg0, %c0_i32 : i32, i32
  }
}

module attributes {stable_mosaic.version = 11 : i64} {
  func.func @_conv1x1_combine_kernel(%arg0: i32, %arg1: i32, %arg2: memref<1x4x256xbf16, #tpu.memory_space<vmem>>, %arg3: memref<5x4xbf16, #tpu.memory_space<vmem>>, %arg4: memref<5x1xf32, #tpu.memory_space<vmem>>, %arg5: memref<1x5x256xf32, #tpu.memory_space<vmem>>, %arg6: memref<1x5x256xf32, #tpu.memory_space<vmem>>) attributes {dimension_semantics = [#tpu.dimension_semantics<parallel>, #tpu.dimension_semantics<parallel>], iteration_bounds = array<i64: 2, 1>, scalar_prefetch = 0 : i64, scratch_operands = 0 : i64, tpu.core_type = #tpu.core_type<tc>, window_params = [{transform_indices = @transform_0, window_bounds = array<i64: 1, 4, 256>}, {pipeline_mode = #tpu.pipeline_mode<synchronous>, transform_indices = @transform_1, window_bounds = array<i64: 5, 4>}, {pipeline_mode = #tpu.pipeline_mode<synchronous>, transform_indices = @transform_2, window_bounds = array<i64: 5, 1>}, {transform_indices = @transform_3, window_bounds = array<i64: 1, 5, 256>}, {transform_indices = @transform_4, window_bounds = array<i64: 1, 5, 256>}]} {
    %c0 = arith.constant 0 : index
    %c0_0 = arith.constant 0 : index
    %0 = vector.load %arg3[%c0, %c0_0] : memref<5x4xbf16, #tpu.memory_space<vmem>>, vector<5x4xbf16>
    %c0_1 = arith.constant 0 : index
    %c0_2 = arith.constant 0 : index
    %c0_3 = arith.constant 0 : index
    %1 = vector.load %arg2[%c0_1, %c0_2, %c0_3] : memref<1x4x256xbf16, #tpu.memory_space<vmem>>, vector<1x4x256xbf16>
    %2 = vector.shape_cast %1 : vector<1x4x256xbf16> to vector<4x256xbf16>
    %cst = arith.constant dense<0.000000e+00> : vector<5x256xf32>
    %3 = tpu.matmul %0, %2, %cst {dimension_numbers = #tpu.dot_dimension_numbers<[1], [0], [0], [1], [0, 0, 1, 1], [], []>} : vector<5x4xbf16>, vector<4x256xbf16>, vector<5x256xf32> -> vector<5x256xf32>
    %c0_4 = arith.constant 0 : index
    %c0_5 = arith.constant 0 : index
    %4 = vector.load %arg4[%c0_4, %c0_5] : memref<5x1xf32, #tpu.memory_space<vmem>>, vector<5x1xf32>
    %5 = vector.broadcast %4 : vector<5x1xf32> to vector<5x256xf32>
    %6 = arith.addf %3, %5 : vector<5x256xf32>
    %c0_6 = arith.constant 0 : index
    %c0_7 = arith.constant 0 : index
    %c0_8 = arith.constant 0 : index
    %7 = vector.load %arg5[%c0_6, %c0_7, %c0_8] : memref<1x5x256xf32, #tpu.memory_space<vmem>>, vector<1x5x256xf32>
    %8 = vector.shape_cast %7 : vector<1x5x256xf32> to vector<5x256xf32>
    %9 = arith.maximumf %8, %6 : vector<5x256xf32>
    %c0_9 = arith.constant 0 : index
    %c0_10 = arith.constant 0 : index
    %c0_11 = arith.constant 0 : index
    %10 = vector.load %arg6[%c0_9, %c0_10, %c0_11] : memref<1x5x256xf32, #tpu.memory_space<vmem>>, vector<1x5x256xf32>
    %11 = vector.shape_cast %10 : vector<1x5x256xf32> to vector<5x256xf32>
    %12 = vector.shape_cast %9 : vector<5x256xf32> to vector<1x5x256xf32>
    tpu.vector_store %arg6[%c0_9, %c0_10, %c0_11], %12 {strides = array<i32>} : memref<1x5x256xf32, #tpu.memory_space<vmem>>, vector<1x5x256xf32>,
    return
  }
  func.func @transform_0(%arg0: i32, %arg1: i32) -> (i32, i32, i32) {
    %c0_i32 = arith.constant 0 : i32
    %c0_i32_0 = arith.constant 0 : i32
    return %arg0, %c0_i32, %arg1 : i32, i32, i32
  }
  func.func @transform_1(%arg0: i32, %arg1: i32) -> (i32, i32) {
    %c0_i32 = arith.constant 0 : i32
    %c0_i32_0 = arith.constant 0 : i32
    %c0_i32_1 = arith.constant 0 : i32
    return %c0_i32, %c0_i32_0 : i32, i32
  }
  func.func @transform_2(%arg0: i32, %arg1: i32) -> (i32, i32) {
    %c0_i32 = arith.constant 0 : i32
    %c0_i32_0 = arith.constant 0 : i32
    %c0_i32_1 = arith.constant 0 : i32
    return %c0_i32, %c0_i32_0 : i32, i32
  }
  func.func @transform_3(%arg0: i32, %arg1: i32) -> (i32, i32, i32) {
    %c0_i32 = arith.constant 0 : i32
    %c0_i32_0 = arith.constant 0 : i32
    return %arg0, %c0_i32, %arg1 : i32, i32, i32
  }
  func.func @transform_4(%arg0: i32, %arg1: i32) -> (i32, i32, i32) {
    %c0_i32 = arith.constant 0 : i32
    %c0_i32_0 = arith.constant 0 : i32
    return %arg0, %c0_i32, %arg1 : i32, i32, i32
  }
}

module attributes {stable_mosaic.version = 11 : i64} {
  func.func @_conv1x1_kernel(%arg0: i32, %arg1: i32, %arg2: memref<1x4x400xbf16, #tpu.memory_space<vmem>>, %arg3: memref<5x4xbf16, #tpu.memory_space<vmem>>, %arg4: memref<5x1xf32, #tpu.memory_space<vmem>>, %arg5: memref<1x5x400xbf16, #tpu.memory_space<vmem>>) attributes {dimension_semantics = [#tpu.dimension_semantics<parallel>, #tpu.dimension_semantics<parallel>], iteration_bounds = array<i64: 2, 1>, scalar_prefetch = 0 : i64, scratch_operands = 0 : i64, tpu.core_type = #tpu.core_type<tc>, window_params = [{transform_indices = @transform_0, window_bounds = array<i64: 1, 4, 400>}, {pipeline_mode = #tpu.pipeline_mode<synchronous>, transform_indices = @transform_1, window_bounds = array<i64: 5, 4>}, {pipeline_mode = #tpu.pipeline_mode<synchronous>, transform_indices = @transform_2, window_bounds = array<i64: 5, 1>}, {transform_indices = @transform_3, window_bounds = array<i64: 1, 5, 400>}]} {
    %c0 = arith.constant 0 : index
    %c0_0 = arith.constant 0 : index
    %0 = vector.load %arg3[%c0, %c0_0] : memref<5x4xbf16, #tpu.memory_space<vmem>>, vector<5x4xbf16>
    %c0_1 = arith.constant 0 : index
    %c0_2 = arith.constant 0 : index
    %c0_3 = arith.constant 0 : index
    %1 = vector.load %arg2[%c0_1, %c0_2, %c0_3] : memref<1x4x400xbf16, #tpu.memory_space<vmem>>, vector<1x4x400xbf16>
    %2 = vector.shape_cast %1 : vector<1x4x400xbf16> to vector<4x400xbf16>
    %cst = arith.constant dense<0.000000e+00> : vector<5x400xf32>
    %3 = tpu.matmul %0, %2, %cst {dimension_numbers = #tpu.dot_dimension_numbers<[1], [0], [0], [1], [0, 0, 1, 1], [], []>} : vector<5x4xbf16>, vector<4x400xbf16>, vector<5x400xf32> -> vector<5x400xf32>
    %c0_4 = arith.constant 0 : index
    %c0_5 = arith.constant 0 : index
    %4 = vector.load %arg4[%c0_4, %c0_5] : memref<5x1xf32, #tpu.memory_space<vmem>>, vector<5x1xf32>
    %5 = vector.broadcast %4 : vector<5x1xf32> to vector<5x400xf32>
    %6 = arith.addf %3, %5 : vector<5x400xf32>
    %7 = arith.truncf %6 : vector<5x400xf32> to vector<5x400xbf16>
    %c0_6 = arith.constant 0 : index
    %c0_7 = arith.constant 0 : index
    %c0_8 = arith.constant 0 : index
    %8 = vector.load %arg5[%c0_6, %c0_7, %c0_8] : memref<1x5x400xbf16, #tpu.memory_space<vmem>>, vector<1x5x400xbf16>
    %9 = vector.shape_cast %8 : vector<1x5x400xbf16> to vector<5x400xbf16>
    %10 = vector.shape_cast %7 : vector<5x400xbf16> to vector<1x5x400xbf16>
    tpu.vector_store %arg5[%c0_6, %c0_7, %c0_8], %10 {strides = array<i32>} : memref<1x5x400xbf16, #tpu.memory_space<vmem>>, vector<1x5x400xbf16>,
    return
  }
  func.func @transform_0(%arg0: i32, %arg1: i32) -> (i32, i32, i32) {
    %c0_i32 = arith.constant 0 : i32
    %c0_i32_0 = arith.constant 0 : i32
    return %arg0, %c0_i32, %arg1 : i32, i32, i32
  }
  func.func @transform_1(%arg0: i32, %arg1: i32) -> (i32, i32) {
    %c0_i32 = arith.constant 0 : i32
    %c0_i32_0 = arith.constant 0 : i32
    %c0_i32_1 = arith.constant 0 : i32
    return %c0_i32, %c0_i32_0 : i32, i32
  }
  func.func @transform_2(%arg0: i32, %arg1: i32) -> (i32, i32) {
    %c0_i32 = arith.constant 0 : i32
    %c0_i32_0 = arith.constant 0 : i32
    %c0_i32_1 = arith.constant 0 : i32
    return %c0_i32, %c0_i32_0 : i32, i32
  }
  func.func @transform_3(%arg0: i32, %arg1: i32) -> (i32, i32, i32) {
    %c0_i32 = arith.constant 0 : i32
    %c0_i32_0 = arith.constant 0 : i32
    return %arg0, %c0_i32, %arg1 : i32, i32, i32
  }
}

module attributes {stable_mosaic.version = 11 : i64} {
  func.func @_kron_matmul_combine_kernel(%arg0: i32, %arg1: memref<10x400xbf16, #tpu.memory_space<vmem>>, %arg2: memref<400x256xbf16, #tpu.memory_space<vmem>>, %arg3: memref<10x256xf32, #tpu.memory_space<vmem>>, %arg4: memref<10x256xf32, #tpu.memory_space<vmem>>) attributes {dimension_semantics = [#tpu.dimension_semantics<parallel>], iteration_bounds = array<i64: 1>, scalar_prefetch = 0 : i64, scratch_operands = 0 : i64, tpu.core_type = #tpu.core_type<tc>, window_params = [{transform_indices = @transform_0, window_bounds = array<i64: 10, 400>}, {pipeline_mode = #tpu.pipeline_mode<synchronous>, transform_indices = @transform_1, window_bounds = array<i64: 400, 256>}, {transform_indices = @transform_2, window_bounds = array<i64: 10, 256>}, {transform_indices = @transform_3, window_bounds = array<i64: 10, 256>}]} {
    %c0 = arith.constant 0 : index
    %c0_0 = arith.constant 0 : index
    %0 = vector.load %arg1[%c0, %c0_0] : memref<10x400xbf16, #tpu.memory_space<vmem>>, vector<10x400xbf16>
    %c0_1 = arith.constant 0 : index
    %c0_2 = arith.constant 0 : index
    %1 = vector.load %arg2[%c0_1, %c0_2] : memref<400x256xbf16, #tpu.memory_space<vmem>>, vector<400x256xbf16>
    %cst = arith.constant dense<0.000000e+00> : vector<10x256xf32>
    %2 = tpu.matmul %0, %1, %cst {dimension_numbers = #tpu.dot_dimension_numbers<[1], [0], [0], [1], [0, 0, 1, 1], [], []>} : vector<10x400xbf16>, vector<400x256xbf16>, vector<10x256xf32> -> vector<10x256xf32>
    %c0_3 = arith.constant 0 : index
    %c0_4 = arith.constant 0 : index
    %3 = vector.load %arg3[%c0_3, %c0_4] : memref<10x256xf32, #tpu.memory_space<vmem>>, vector<10x256xf32>
    %4 = arith.maximumf %3, %2 : vector<10x256xf32>
    %c0_5 = arith.constant 0 : index
    %c0_6 = arith.constant 0 : index
    %5 = vector.load %arg4[%c0_5, %c0_6] : memref<10x256xf32, #tpu.memory_space<vmem>>, vector<10x256xf32>
    tpu.vector_store %arg4[%c0_5, %c0_6], %4 {strides = array<i32>} : memref<10x256xf32, #tpu.memory_space<vmem>>, vector<10x256xf32>,
    return
  }
  func.func @transform_0(%arg0: i32) -> (i32, i32) {
    %c0_i32 = arith.constant 0 : i32
    %c0_i32_0 = arith.constant 0 : i32
    return %arg0, %c0_i32 : i32, i32
  }
  func.func @transform_1(%arg0: i32) -> (i32, i32) {
    %c0_i32 = arith.constant 0 : i32
    %c0_i32_0 = arith.constant 0 : i32
    %c0_i32_1 = arith.constant 0 : i32
    return %c0_i32, %c0_i32_0 : i32, i32
  }
  func.func @transform_2(%arg0: i32) -> (i32, i32) {
    %c0_i32 = arith.constant 0 : i32
    %c0_i32_0 = arith.constant 0 : i32
    return %arg0, %c0_i32 : i32, i32
  }
  func.func @transform_3(%arg0: i32) -> (i32, i32) {
    %c0_i32 = arith.constant 0 : i32
    %c0_i32_0 = arith.constant 0 : i32
    return %arg0, %c0_i32 : i32, i32
  }
}

module attributes {stable_mosaic.version = 11 : i64} {
  func.func @_kron_matmul_kernel(%arg0: i32, %arg1: memref<8x256xbf16, #tpu.memory_space<vmem>>, %arg2: memref<256x576xbf16, #tpu.memory_space<vmem>>, %arg3: memref<8x576xbf16, #tpu.memory_space<vmem>>) attributes {dimension_semantics = [#tpu.dimension_semantics<parallel>], iteration_bounds = array<i64: 1>, scalar_prefetch = 0 : i64, scratch_operands = 0 : i64, tpu.core_type = #tpu.core_type<tc>, window_params = [{transform_indices = @transform_0, window_bounds = array<i64: 8, 256>}, {pipeline_mode = #tpu.pipeline_mode<synchronous>, transform_indices = @transform_1, window_bounds = array<i64: 256, 576>}, {transform_indices = @transform_2, window_bounds = array<i64: 8, 576>}]} {
    %c0 = arith.constant 0 : index
    %c0_0 = arith.constant 0 : index
    %0 = vector.load %arg1[%c0, %c0_0] : memref<8x256xbf16, #tpu.memory_space<vmem>>, vector<8x256xbf16>
    %c0_1 = arith.constant 0 : index
    %c0_2 = arith.constant 0 : index
    %1 = vector.load %arg2[%c0_1, %c0_2] : memref<256x576xbf16, #tpu.memory_space<vmem>>, vector<256x576xbf16>
    %cst = arith.constant dense<0.000000e+00> : vector<8x576xf32>
    %2 = tpu.matmul %0, %1, %cst {dimension_numbers = #tpu.dot_dimension_numbers<[1], [0], [0], [1], [0, 0, 1, 1], [], []>} : vector<8x256xbf16>, vector<256x576xbf16>, vector<8x576xf32> -> vector<8x576xf32>
    %3 = arith.truncf %2 : vector<8x576xf32> to vector<8x576xbf16>
    %c0_3 = arith.constant 0 : index
    %c0_4 = arith.constant 0 : index
    %4 = vector.load %arg3[%c0_3, %c0_4] : memref<8x576xbf16, #tpu.memory_space<vmem>>, vector<8x576xbf16>
    tpu.vector_store %arg3[%c0_3, %c0_4], %3 {strides = array<i32>} : memref<8x576xbf16, #tpu.memory_space<vmem>>, vector<8x576xbf16>,
    return
  }
  func.func @transform_0(%arg0: i32) -> (i32, i32) {
    %c0_i32 = arith.constant 0 : i32
    %c0_i32_0 = arith.constant 0 : i32
    return %arg0, %c0_i32 : i32, i32
  }
  func.func @transform_1(%arg0: i32) -> (i32, i32) {
    %c0_i32 = arith.constant 0 : i32
    %c0_i32_0 = arith.constant 0 : i32
    %c0_i32_1 = arith.constant 0 : i32
    return %c0_i32, %c0_i32_0 : i32, i32
  }
  func.func @transform_2(%arg0: i32) -> (i32, i32) {
    %c0_i32 = arith.constant 0 : i32
    %c0_i32_0 = arith.constant 0 : i32
    return %arg0, %c0_i32 : i32, i32
  }
}

module attributes {stable_mosaic.version = 11 : i64} {
  func.func @_conv1x1_kernel(%arg0: i32, %arg1: i32, %arg2: memref<1x4x576xbf16, #tpu.memory_space<vmem>>, %arg3: memref<5x4xbf16, #tpu.memory_space<vmem>>, %arg4: memref<5x1xf32, #tpu.memory_space<vmem>>, %arg5: memref<1x5x576xbf16, #tpu.memory_space<vmem>>) attributes {dimension_semantics = [#tpu.dimension_semantics<parallel>, #tpu.dimension_semantics<parallel>], iteration_bounds = array<i64: 2, 1>, scalar_prefetch = 0 : i64, scratch_operands = 0 : i64, tpu.core_type = #tpu.core_type<tc>, window_params = [{transform_indices = @transform_0, window_bounds = array<i64: 1, 4, 576>}, {pipeline_mode = #tpu.pipeline_mode<synchronous>, transform_indices = @transform_1, window_bounds = array<i64: 5, 4>}, {pipeline_mode = #tpu.pipeline_mode<synchronous>, transform_indices = @transform_2, window_bounds = array<i64: 5, 1>}, {transform_indices = @transform_3, window_bounds = array<i64: 1, 5, 576>}]} {
    %c0 = arith.constant 0 : index
    %c0_0 = arith.constant 0 : index
    %0 = vector.load %arg3[%c0, %c0_0] : memref<5x4xbf16, #tpu.memory_space<vmem>>, vector<5x4xbf16>
    %c0_1 = arith.constant 0 : index
    %c0_2 = arith.constant 0 : index
    %c0_3 = arith.constant 0 : index
    %1 = vector.load %arg2[%c0_1, %c0_2, %c0_3] : memref<1x4x576xbf16, #tpu.memory_space<vmem>>, vector<1x4x576xbf16>
    %2 = vector.shape_cast %1 : vector<1x4x576xbf16> to vector<4x576xbf16>
    %cst = arith.constant dense<0.000000e+00> : vector<5x576xf32>
    %3 = tpu.matmul %0, %2, %cst {dimension_numbers = #tpu.dot_dimension_numbers<[1], [0], [0], [1], [0, 0, 1, 1], [], []>} : vector<5x4xbf16>, vector<4x576xbf16>, vector<5x576xf32> -> vector<5x576xf32>
    %c0_4 = arith.constant 0 : index
    %c0_5 = arith.constant 0 : index
    %4 = vector.load %arg4[%c0_4, %c0_5] : memref<5x1xf32, #tpu.memory_space<vmem>>, vector<5x1xf32>
    %5 = vector.broadcast %4 : vector<5x1xf32> to vector<5x576xf32>
    %6 = arith.addf %3, %5 : vector<5x576xf32>
    %7 = arith.truncf %6 : vector<5x576xf32> to vector<5x576xbf16>
    %c0_6 = arith.constant 0 : index
    %c0_7 = arith.constant 0 : index
    %c0_8 = arith.constant 0 : index
    %8 = vector.load %arg5[%c0_6, %c0_7, %c0_8] : memref<1x5x576xbf16, #tpu.memory_space<vmem>>, vector<1x5x576xbf16>
    %9 = vector.shape_cast %8 : vector<1x5x576xbf16> to vector<5x576xbf16>
    %10 = vector.shape_cast %7 : vector<5x576xbf16> to vector<1x5x576xbf16>
    tpu.vector_store %arg5[%c0_6, %c0_7, %c0_8], %10 {strides = array<i32>} : memref<1x5x576xbf16, #tpu.memory_space<vmem>>, vector<1x5x576xbf16>,
    return
  }
  func.func @transform_0(%arg0: i32, %arg1: i32) -> (i32, i32, i32) {
    %c0_i32 = arith.constant 0 : i32
    %c0_i32_0 = arith.constant 0 : i32
    return %arg0, %c0_i32, %arg1 : i32, i32, i32
  }
  func.func @transform_1(%arg0: i32, %arg1: i32) -> (i32, i32) {
    %c0_i32 = arith.constant 0 : i32
    %c0_i32_0 = arith.constant 0 : i32
    %c0_i32_1 = arith.constant 0 : i32
    return %c0_i32, %c0_i32_0 : i32, i32
  }
  func.func @transform_2(%arg0: i32, %arg1: i32) -> (i32, i32) {
    %c0_i32 = arith.constant 0 : i32
    %c0_i32_0 = arith.constant 0 : i32
    %c0_i32_1 = arith.constant 0 : i32
    return %c0_i32, %c0_i32_0 : i32, i32
  }
  func.func @transform_3(%arg0: i32, %arg1: i32) -> (i32, i32, i32) {
    %c0_i32 = arith.constant 0 : i32
    %c0_i32_0 = arith.constant 0 : i32
    return %arg0, %c0_i32, %arg1 : i32, i32, i32
  }
}

module attributes {stable_mosaic.version = 11 : i64} {
  func.func @_kron_matmul_combine_kernel(%arg0: i32, %arg1: memref<10x576xbf16, #tpu.memory_space<vmem>>, %arg2: memref<576x256xbf16, #tpu.memory_space<vmem>>, %arg3: memref<10x256xf32, #tpu.memory_space<vmem>>, %arg4: memref<10x256xf32, #tpu.memory_space<vmem>>) attributes {dimension_semantics = [#tpu.dimension_semantics<parallel>], iteration_bounds = array<i64: 1>, scalar_prefetch = 0 : i64, scratch_operands = 0 : i64, tpu.core_type = #tpu.core_type<tc>, window_params = [{transform_indices = @transform_0, window_bounds = array<i64: 10, 576>}, {pipeline_mode = #tpu.pipeline_mode<synchronous>, transform_indices = @transform_1, window_bounds = array<i64: 576, 256>}, {transform_indices = @transform_2, window_bounds = array<i64: 10, 256>}, {transform_indices = @transform_3, window_bounds = array<i64: 10, 256>}]} {
    %c0 = arith.constant 0 : index
    %c0_0 = arith.constant 0 : index
    %0 = vector.load %arg1[%c0, %c0_0] : memref<10x576xbf16, #tpu.memory_space<vmem>>, vector<10x576xbf16>
    %c0_1 = arith.constant 0 : index
    %c0_2 = arith.constant 0 : index
    %1 = vector.load %arg2[%c0_1, %c0_2] : memref<576x256xbf16, #tpu.memory_space<vmem>>, vector<576x256xbf16>
    %cst = arith.constant dense<0.000000e+00> : vector<10x256xf32>
    %2 = tpu.matmul %0, %1, %cst {dimension_numbers = #tpu.dot_dimension_numbers<[1], [0], [0], [1], [0, 0, 1, 1], [], []>} : vector<10x576xbf16>, vector<576x256xbf16>, vector<10x256xf32> -> vector<10x256xf32>
    %c0_3 = arith.constant 0 : index
    %c0_4 = arith.constant 0 : index
    %3 = vector.load %arg3[%c0_3, %c0_4] : memref<10x256xf32, #tpu.memory_space<vmem>>, vector<10x256xf32>
    %4 = arith.maximumf %3, %2 : vector<10x256xf32>
    %c0_5 = arith.constant 0 : index
    %c0_6 = arith.constant 0 : index
    %5 = vector.load %arg4[%c0_5, %c0_6] : memref<10x256xf32, #tpu.memory_space<vmem>>, vector<10x256xf32>
    tpu.vector_store %arg4[%c0_5, %c0_6], %4 {strides = array<i32>} : memref<10x256xf32, #tpu.memory_space<vmem>>, vector<10x256xf32>,
    return
  }
  func.func @transform_0(%arg0: i32) -> (i32, i32) {
    %c0_i32 = arith.constant 0 : i32
    %c0_i32_0 = arith.constant 0 : i32
    return %arg0, %c0_i32 : i32, i32
  }
  func.func @transform_1(%arg0: i32) -> (i32, i32) {
    %c0_i32 = arith.constant 0 : i32
    %c0_i32_0 = arith.constant 0 : i32
    %c0_i32_1 = arith.constant 0 : i32
    return %c0_i32, %c0_i32_0 : i32, i32
  }
  func.func @transform_2(%arg0: i32) -> (i32, i32) {
    %c0_i32 = arith.constant 0 : i32
    %c0_i32_0 = arith.constant 0 : i32
    return %arg0, %c0_i32 : i32, i32
  }
  func.func @transform_3(%arg0: i32) -> (i32, i32) {
    %c0_i32 = arith.constant 0 : i32
    %c0_i32_0 = arith.constant 0 : i32
    return %arg0, %c0_i32 : i32, i32
  }
}

module attributes {stable_mosaic.version = 11 : i64} {
  func.func @_kron_matmul_kernel(%arg0: i32, %arg1: memref<8x256xbf16, #tpu.memory_space<vmem>>, %arg2: memref<256x784xbf16, #tpu.memory_space<vmem>>, %arg3: memref<8x784xbf16, #tpu.memory_space<vmem>>) attributes {dimension_semantics = [#tpu.dimension_semantics<parallel>], iteration_bounds = array<i64: 1>, scalar_prefetch = 0 : i64, scratch_operands = 0 : i64, tpu.core_type = #tpu.core_type<tc>, window_params = [{transform_indices = @transform_0, window_bounds = array<i64: 8, 256>}, {pipeline_mode = #tpu.pipeline_mode<synchronous>, transform_indices = @transform_1, window_bounds = array<i64: 256, 784>}, {transform_indices = @transform_2, window_bounds = array<i64: 8, 784>}]} {
    %c0 = arith.constant 0 : index
    %c0_0 = arith.constant 0 : index
    %0 = vector.load %arg1[%c0, %c0_0] : memref<8x256xbf16, #tpu.memory_space<vmem>>, vector<8x256xbf16>
    %c0_1 = arith.constant 0 : index
    %c0_2 = arith.constant 0 : index
    %1 = vector.load %arg2[%c0_1, %c0_2] : memref<256x784xbf16, #tpu.memory_space<vmem>>, vector<256x784xbf16>
    %cst = arith.constant dense<0.000000e+00> : vector<8x784xf32>
    %2 = tpu.matmul %0, %1, %cst {dimension_numbers = #tpu.dot_dimension_numbers<[1], [0], [0], [1], [0, 0, 1, 1], [], []>} : vector<8x256xbf16>, vector<256x784xbf16>, vector<8x784xf32> -> vector<8x784xf32>
    %3 = arith.truncf %2 : vector<8x784xf32> to vector<8x784xbf16>
    %c0_3 = arith.constant 0 : index
    %c0_4 = arith.constant 0 : index
    %4 = vector.load %arg3[%c0_3, %c0_4] : memref<8x784xbf16, #tpu.memory_space<vmem>>, vector<8x784xbf16>
    tpu.vector_store %arg3[%c0_3, %c0_4], %3 {strides = array<i32>} : memref<8x784xbf16, #tpu.memory_space<vmem>>, vector<8x784xbf16>,
    return
  }
  func.func @transform_0(%arg0: i32) -> (i32, i32) {
    %c0_i32 = arith.constant 0 : i32
    %c0_i32_0 = arith.constant 0 : i32
    return %arg0, %c0_i32 : i32, i32
  }
  func.func @transform_1(%arg0: i32) -> (i32, i32) {
    %c0_i32 = arith.constant 0 : i32
    %c0_i32_0 = arith.constant 0 : i32
    %c0_i32_1 = arith.constant 0 : i32
    return %c0_i32, %c0_i32_0 : i32, i32
  }
  func.func @transform_2(%arg0: i32) -> (i32, i32) {
    %c0_i32 = arith.constant 0 : i32
    %c0_i32_0 = arith.constant 0 : i32
    return %arg0, %c0_i32 : i32, i32
  }
}

module attributes {stable_mosaic.version = 11 : i64} {
  func.func @_conv1x1_kernel(%arg0: i32, %arg1: i32, %arg2: memref<1x4x784xbf16, #tpu.memory_space<vmem>>, %arg3: memref<5x4xbf16, #tpu.memory_space<vmem>>, %arg4: memref<5x1xf32, #tpu.memory_space<vmem>>, %arg5: memref<1x5x784xbf16, #tpu.memory_space<vmem>>) attributes {dimension_semantics = [#tpu.dimension_semantics<parallel>, #tpu.dimension_semantics<parallel>], iteration_bounds = array<i64: 2, 1>, scalar_prefetch = 0 : i64, scratch_operands = 0 : i64, tpu.core_type = #tpu.core_type<tc>, window_params = [{transform_indices = @transform_0, window_bounds = array<i64: 1, 4, 784>}, {pipeline_mode = #tpu.pipeline_mode<synchronous>, transform_indices = @transform_1, window_bounds = array<i64: 5, 4>}, {pipeline_mode = #tpu.pipeline_mode<synchronous>, transform_indices = @transform_2, window_bounds = array<i64: 5, 1>}, {transform_indices = @transform_3, window_bounds = array<i64: 1, 5, 784>}]} {
    %c0 = arith.constant 0 : index
    %c0_0 = arith.constant 0 : index
    %0 = vector.load %arg3[%c0, %c0_0] : memref<5x4xbf16, #tpu.memory_space<vmem>>, vector<5x4xbf16>
    %c0_1 = arith.constant 0 : index
    %c0_2 = arith.constant 0 : index
    %c0_3 = arith.constant 0 : index
    %1 = vector.load %arg2[%c0_1, %c0_2, %c0_3] : memref<1x4x784xbf16, #tpu.memory_space<vmem>>, vector<1x4x784xbf16>
    %2 = vector.shape_cast %1 : vector<1x4x784xbf16> to vector<4x784xbf16>
    %cst = arith.constant dense<0.000000e+00> : vector<5x784xf32>
    %3 = tpu.matmul %0, %2, %cst {dimension_numbers = #tpu.dot_dimension_numbers<[1], [0], [0], [1], [0, 0, 1, 1], [], []>} : vector<5x4xbf16>, vector<4x784xbf16>, vector<5x784xf32> -> vector<5x784xf32>
    %c0_4 = arith.constant 0 : index
    %c0_5 = arith.constant 0 : index
    %4 = vector.load %arg4[%c0_4, %c0_5] : memref<5x1xf32, #tpu.memory_space<vmem>>, vector<5x1xf32>
    %5 = vector.broadcast %4 : vector<5x1xf32> to vector<5x784xf32>
    %6 = arith.addf %3, %5 : vector<5x784xf32>
    %7 = arith.truncf %6 : vector<5x784xf32> to vector<5x784xbf16>
    %c0_6 = arith.constant 0 : index
    %c0_7 = arith.constant 0 : index
    %c0_8 = arith.constant 0 : index
    %8 = vector.load %arg5[%c0_6, %c0_7, %c0_8] : memref<1x5x784xbf16, #tpu.memory_space<vmem>>, vector<1x5x784xbf16>
    %9 = vector.shape_cast %8 : vector<1x5x784xbf16> to vector<5x784xbf16>
    %10 = vector.shape_cast %7 : vector<5x784xbf16> to vector<1x5x784xbf16>
    tpu.vector_store %arg5[%c0_6, %c0_7, %c0_8], %10 {strides = array<i32>} : memref<1x5x784xbf16, #tpu.memory_space<vmem>>, vector<1x5x784xbf16>,
    return
  }
  func.func @transform_0(%arg0: i32, %arg1: i32) -> (i32, i32, i32) {
    %c0_i32 = arith.constant 0 : i32
    %c0_i32_0 = arith.constant 0 : i32
    return %arg0, %c0_i32, %arg1 : i32, i32, i32
  }
  func.func @transform_1(%arg0: i32, %arg1: i32) -> (i32, i32) {
    %c0_i32 = arith.constant 0 : i32
    %c0_i32_0 = arith.constant 0 : i32
    %c0_i32_1 = arith.constant 0 : i32
    return %c0_i32, %c0_i32_0 : i32, i32
  }
  func.func @transform_2(%arg0: i32, %arg1: i32) -> (i32, i32) {
    %c0_i32 = arith.constant 0 : i32
    %c0_i32_0 = arith.constant 0 : i32
    %c0_i32_1 = arith.constant 0 : i32
    return %c0_i32, %c0_i32_0 : i32, i32
  }
  func.func @transform_3(%arg0: i32, %arg1: i32) -> (i32, i32, i32) {
    %c0_i32 = arith.constant 0 : i32
    %c0_i32_0 = arith.constant 0 : i32
    return %arg0, %c0_i32, %arg1 : i32, i32, i32
  }
}

module attributes {stable_mosaic.version = 11 : i64} {
  func.func @_kron_matmul_combine_kernel(%arg0: i32, %arg1: memref<10x784xbf16, #tpu.memory_space<vmem>>, %arg2: memref<784x256xbf16, #tpu.memory_space<vmem>>, %arg3: memref<10x256xf32, #tpu.memory_space<vmem>>, %arg4: memref<10x256xf32, #tpu.memory_space<vmem>>) attributes {dimension_semantics = [#tpu.dimension_semantics<parallel>], iteration_bounds = array<i64: 1>, scalar_prefetch = 0 : i64, scratch_operands = 0 : i64, tpu.core_type = #tpu.core_type<tc>, window_params = [{transform_indices = @transform_0, window_bounds = array<i64: 10, 784>}, {pipeline_mode = #tpu.pipeline_mode<synchronous>, transform_indices = @transform_1, window_bounds = array<i64: 784, 256>}, {transform_indices = @transform_2, window_bounds = array<i64: 10, 256>}, {transform_indices = @transform_3, window_bounds = array<i64: 10, 256>}]} {
    %c0 = arith.constant 0 : index
    %c0_0 = arith.constant 0 : index
    %0 = vector.load %arg1[%c0, %c0_0] : memref<10x784xbf16, #tpu.memory_space<vmem>>, vector<10x784xbf16>
    %c0_1 = arith.constant 0 : index
    %c0_2 = arith.constant 0 : index
    %1 = vector.load %arg2[%c0_1, %c0_2] : memref<784x256xbf16, #tpu.memory_space<vmem>>, vector<784x256xbf16>
    %cst = arith.constant dense<0.000000e+00> : vector<10x256xf32>
    %2 = tpu.matmul %0, %1, %cst {dimension_numbers = #tpu.dot_dimension_numbers<[1], [0], [0], [1], [0, 0, 1, 1], [], []>} : vector<10x784xbf16>, vector<784x256xbf16>, vector<10x256xf32> -> vector<10x256xf32>
    %c0_3 = arith.constant 0 : index
    %c0_4 = arith.constant 0 : index
    %3 = vector.load %arg3[%c0_3, %c0_4] : memref<10x256xf32, #tpu.memory_space<vmem>>, vector<10x256xf32>
    %4 = arith.maximumf %3, %2 : vector<10x256xf32>
    %c0_5 = arith.constant 0 : index
    %c0_6 = arith.constant 0 : index
    %5 = vector.load %arg4[%c0_5, %c0_6] : memref<10x256xf32, #tpu.memory_space<vmem>>, vector<10x256xf32>
    tpu.vector_store %arg4[%c0_5, %c0_6], %4 {strides = array<i32>} : memref<10x256xf32, #tpu.memory_space<vmem>>, vector<10x256xf32>,
    return
  }
  func.func @transform_0(%arg0: i32) -> (i32, i32) {
    %c0_i32 = arith.constant 0 : i32
    %c0_i32_0 = arith.constant 0 : i32
    return %arg0, %c0_i32 : i32, i32
  }
  func.func @transform_1(%arg0: i32) -> (i32, i32) {
    %c0_i32 = arith.constant 0 : i32
    %c0_i32_0 = arith.constant 0 : i32
    %c0_i32_1 = arith.constant 0 : i32
    return %c0_i32, %c0_i32_0 : i32, i32
  }
  func.func @transform_2(%arg0: i32) -> (i32, i32) {
    %c0_i32 = arith.constant 0 : i32
    %c0_i32_0 = arith.constant 0 : i32
    return %arg0, %c0_i32 : i32, i32
  }
  func.func @transform_3(%arg0: i32) -> (i32, i32) {
    %c0_i32 = arith.constant 0 : i32
    %c0_i32_0 = arith.constant 0 : i32
    return %arg0, %c0_i32 : i32, i32
  }
}

</mosaic_0001>

<llo_original>
// kernel: a_call__.19
$region0: #{a_call__.19}
  #allocation0 [shape = 'u32[]', space=smem, size = 0x4, offset = 0x4, fixed_abs, tag = 'smem constant byte address 0x4 - core index']
  #allocation1 [shape = 'u32[144,128]{1,0:T(1,128)}', space=vmem, size = 0x12000, scoped, tag = 'internal scratch']
  %s0 = inlined_call_operand.vmem [shape: bf16[8,256], index: 0, kind: input, shape index: {}]
  %s1 = inlined_call_operand.vmem [shape: bf16[256,144], index: 1, kind: input, shape index: {}]
  %s2 = inlined_call_operand.vmem [shape: bf16[8,144], index: 2, kind: output, shape index: {}]
  %s3 = sld [smem:[#allocation0]]
  $region18: #{a_call__.19} parent=0
    _
  %s5 = ssub.s32 1, %s3
  %s6 = scalar_select 0, %s5, %s3
  // Predicated region
  $region2: #{a_call__.19} parent=0 // pred_check
    _
  $region3: #{a_call__.19} parent=0 // pred_check_branch
    %8 = sbr.rel (0) target = $region5
  $region4: #{a_call__.19} parent=0 // pred_region
    _
  $region5: #{a_call__.19} parent=0 // pred_fallthru
    _
  // Predicated region
  $region6: #{a_call__.19} parent=0 // pred_check
    _
  $region7: #{a_call__.19} parent=0 // pred_check_branch
    %10 = sbr.rel (0) target = $region9
  $region8: #{a_call__.19} parent=0 // pred_region
    _
  $region9: #{a_call__.19} parent=0 // pred_fallthru
    _
  %v11 = vld [vmem:[%s0] sm:$0xff]
  %v12 = vld [vmem:[%s1] sm:$0xff]
  %v13 = vld [vmem:[%s1 + $0x8] sm:$0xff]
  %v14 = vld [vmem:[%s1 + $0x10] sm:$0xff]
  %v15 = vld [vmem:[%s1 + $0x18] sm:$0xff]
  %v16 = vld [vmem:[%s1 + $0x20] sm:$0xff]
  %v17 = vld [vmem:[%s1 + $0x28] sm:$0xff]
  %v18 = vld [vmem:[%s1 + $0x30] sm:$0xff]
  %v19 = vld [vmem:[%s1 + $0x38] sm:$0xff]
  %v20 = vld [vmem:[%s1 + $0x40] sm:$0xff]
  %v21 = vld [vmem:[%s1 + $0x48] sm:$0xff]
  %v22 = vld [vmem:[%s1 + $0x50] sm:$0xff]
  %v23 = vld [vmem:[%s1 + $0x58] sm:$0xff]
  %v24 = vld [vmem:[%s1 + $0x60] sm:$0xff]
  %v25 = vld [vmem:[%s1 + $0x68] sm:$0xff]
  %v26 = vld [vmem:[%s1 + $0x70] sm:$0xff]
  %v27 = vld [vmem:[%s1 + $0x78] sm:$0xff]
  %v28 = vld [vmem:[%s1 + $0x80] sm:$0xff]
  %v29 = vld [vmem:[%s1 + $0x88] sm:$0xff]
  %v30 = vld [vmem:[%s1 + $0x90] sm:$0xff]
  %v31 = vld [vmem:[%s1 + $0x98] sm:$0xff]
  %v32 = vld [vmem:[%s1 + $0xa0] sm:$0xff]
  %v33 = vld [vmem:[%s1 + $0xa8] sm:$0xff]
  %v34 = vld [vmem:[%s1 + $0xb0] sm:$0xff]
  %v35 = vld [vmem:[%s1 + $0xb8] sm:$0xff]
  %v36 = vld [vmem:[%s1 + $0xc0] sm:$0xff]
  %v37 = vld [vmem:[%s1 + $0xc8] sm:$0xff]
  %v38 = vld [vmem:[%s1 + $0xd0] sm:$0xff]
  %v39 = vld [vmem:[%s1 + $0xd8] sm:$0xff]
  %v40 = vld [vmem:[%s1 + $0xe0] sm:$0xff]
  %v41 = vld [vmem:[%s1 + $0xe8] sm:$0xff]
  %v42 = vld [vmem:[%s1 + $0xf0] sm:$0xff]
  %v43 = vld [vmem:[%s1 + $0xf8] sm:$0xff]
  %v45 = vunpack.c.l.b16 %v11
  %v46 = vunpack.c.h.b16 %v11
  %v47 = vpack.c.b16 %v45, %v45
  %v48 = vpack.c.b16 %v46, %v46
  %v83 = vunpack.c.l.b16 %v12
  %v84 = vunpack.c.h.b16 %v12
  %v85 = vunpack.c.l.b16 %v13
  %v86 = vunpack.c.h.b16 %v13
  %v87 = vunpack.c.l.b16 %v14
  %v88 = vunpack.c.h.b16 %v14
  %v89 = vunpack.c.l.b16 %v15
  %v90 = vunpack.c.h.b16 %v15
  %v91 = vunpack.c.l.b16 %v16
  %v92 = vunpack.c.h.b16 %v16
  %v93 = vunpack.c.l.b16 %v17
  %v94 = vunpack.c.h.b16 %v17
  %v95 = vunpack.c.l.b16 %v18
  %v96 = vunpack.c.h.b16 %v18
  %v97 = vunpack.c.l.b16 %v19
  %v98 = vunpack.c.h.b16 %v19
  %v99 = vunpack.c.l.b16 %v20
  %v100 = vunpack.c.h.b16 %v20
  %v101 = vunpack.c.l.b16 %v21
  %v102 = vunpack.c.h.b16 %v21
  %v103 = vunpack.c.l.b16 %v22
  %v104 = vunpack.c.h.b16 %v22
  %v105 = vunpack.c.l.b16 %v23
  %v106 = vunpack.c.h.b16 %v23
  %v107 = vunpack.c.l.b16 %v24
  %v108 = vunpack.c.h.b16 %v24
  %v109 = vunpack.c.l.b16 %v25
  %v110 = vunpack.c.h.b16 %v25
  %v111 = vunpack.c.l.b16 %v26
  %v112 = vunpack.c.h.b16 %v26
  %v113 = vunpack.c.l.b16 %v27
  %v114 = vunpack.c.h.b16 %v27
  %v115 = vunpack.c.l.b16 %v28
  %v116 = vunpack.c.h.b16 %v28
  %v117 = vunpack.c.l.b16 %v29
  %v118 = vunpack.c.h.b16 %v29
  %v119 = vunpack.c.l.b16 %v30
  %v120 = vunpack.c.h.b16 %v30
  %v121 = vunpack.c.l.b16 %v31
  %v122 = vunpack.c.h.b16 %v31
  %v123 = vunpack.c.l.b16 %v32
  %v124 = vunpack.c.h.b16 %v32
  %v125 = vunpack.c.l.b16 %v33
  %v126 = vunpack.c.h.b16 %v33
  %v127 = vunpack.c.l.b16 %v34
  %v128 = vunpack.c.h.b16 %v34
  %v129 = vunpack.c.l.b16 %v35
  %v130 = vunpack.c.h.b16 %v35
  %v131 = vunpack.c.l.b16 %v36
  %v132 = vunpack.c.h.b16 %v36
  %v133 = vunpack.c.l.b16 %v37
  %v134 = vunpack.c.h.b16 %v37
  %v135 = vunpack.c.l.b16 %v38
  %v136 = vunpack.c.h.b16 %v38
  %v137 = vunpack.c.l.b16 %v39
  %v138 = vunpack.c.h.b16 %v39
  %v139 = vunpack.c.l.b16 %v40
  %v140 = vunpack.c.h.b16 %v40
  %v141 = vunpack.c.l.b16 %v41
  %v142 = vunpack.c.h.b16 %v41
  %v143 = vunpack.c.l.b16 %v42
  %v144 = vunpack.c.h.b16 %v42
  %v145 = vunpack.c.l.b16 %v43
  %v146 = vunpack.c.h.b16 %v43
  %v147 = vpack.c.b16 %v85, %v83
  %v148 = vpack.c.b16 %v86, %v84
  %v149 = vpack.c.b16 %v89, %v87
  %v150 = vpack.c.b16 %v90, %v88
  %v151 = vpack.c.b16 %v93, %v91
  %v152 = vpack.c.b16 %v94, %v92
  %v153 = vpack.c.b16 %v97, %v95
  %v154 = vpack.c.b16 %v98, %v96
  %v155 = vpack.c.b16 %v101, %v99
  %v156 = vpack.c.b16 %v102, %v100
  %v157 = vpack.c.b16 %v105, %v103
  %v158 = vpack.c.b16 %v106, %v104
  %v159 = vpack.c.b16 %v109, %v107
  %v160 = vpack.c.b16 %v110, %v108
  %v161 = vpack.c.b16 %v113, %v111
  %v162 = vpack.c.b16 %v114, %v112
  %v163 = vpack.c.b16 %v117, %v115
  %v164 = vpack.c.b16 %v118, %v116
  %v165 = vpack.c.b16 %v121, %v119
  %v166 = vpack.c.b16 %v122, %v120
  %v167 = vpack.c.b16 %v125, %v123
  %v168 = vpack.c.b16 %v126, %v124
  %v169 = vpack.c.b16 %v129, %v127
  %v170 = vpack.c.b16 %v130, %v128
  %v171 = vpack.c.b16 %v133, %v131
  %v172 = vpack.c.b16 %v134, %v132
  %v173 = vpack.c.b16 %v137, %v135
  %v174 = vpack.c.b16 %v138, %v136
  %v175 = vpack.c.b16 %v141, %v139
  %v176 = vpack.c.b16 %v142, %v140
  %v177 = vpack.c.b16 %v145, %v143
  %v178 = vpack.c.b16 %v146, %v144
  %211 = vmatprep.subr.bf16.mxu0 %v148
  %212 = vmatpush1.bf16.msra.mxu0 %v147
  %213 = vmatprep.subr.bf16.mxu0 %v150
  %214 = vmatpush1.bf16.msra.mxu0 %v149
  %215 = vmatprep.subr.bf16.mxu0 %v152
  %216 = vmatpush1.bf16.msra.mxu0 %v151
  %217 = vmatprep.subr.bf16.mxu0 %v154
  %218 = vmatpush1.bf16.msra.mxu0 %v153
  %219 = vmatprep.subr.bf16.mxu0 %v156
  %220 = vmatpush1.bf16.msra.mxu0 %v155
  %221 = vmatprep.subr.bf16.mxu0 %v158
  %222 = vmatpush1.bf16.msra.mxu0 %v157
  %223 = vmatprep.subr.bf16.mxu0 %v160
  %224 = vmatpush1.bf16.msra.mxu0 %v159
  %225 = vmatprep.subr.bf16.mxu0 %v162
  %226 = vmatpush1.bf16.msra.mxu0 %v161
  %227 = vmatprep.subr.bf16.mxu0 %v164
  %228 = vmatpush1.bf16.msra.mxu0 %v163
  %229 = vmatprep.subr.bf16.mxu0 %v166
  %230 = vmatpush1.bf16.msra.mxu0 %v165
  %231 = vmatprep.subr.bf16.mxu0 %v168
  %232 = vmatpush1.bf16.msra.mxu0 %v167
  %233 = vmatprep.subr.bf16.mxu0 %v170
  %234 = vmatpush1.bf16.msra.mxu0 %v169
  %235 = vmatprep.subr.bf16.mxu0 %v172
  %236 = vmatpush1.bf16.msra.mxu0 %v171
  %237 = vmatprep.subr.bf16.mxu0 %v174
  %238 = vmatpush1.bf16.msra.mxu0 %v173
  %239 = vmatprep.subr.bf16.mxu0 %v176
  %240 = vmatpush1.bf16.msra.mxu0 %v175
  %241 = vmatprep.subr.bf16.mxu0 %v178
  %242 = vmatpush1.bf16.msra.mxu0 %v177
  %243 = vmatprep.mubr.bf16.mxu0 %v48
  %244 = vmatmul.mubr.bf16.gmra.mrb[0].mxu0 %v47
  %v245 = vpop.f32.mrb[0].mxu0
  %v246 = vadd.f32 0.0, %v245
  %v247 = vpop.f32.mrb[0].mxu0
  %v248 = vadd.f32 0.0, %v247
  %v249 = vpop.f32.mrb[0].mxu0
  %v250 = vpop.f32.mrb[0].mxu0
  %251 = vdwg.mxu0
  %v252 = vpack.c.bf16 %v246, %v246
  %v253 = vpack.c.bf16 %v248, %v248
  %v256 = vunpack.c.l.b16 %v252
  %v257 = vunpack.c.l.b16 %v253
  %v258 = vpack.c.b16 %v257, %v256
  %vm260 = vcmask 1043456
  %vm261 = vcmask 130052
  %vm262 = vmor %vm261, %vm260
  %263 = vst.msk [vmem:[%s2] sm:$0xff] %vm262, %v258
  // Predicated region
  $region10: #{a_call__.19} parent=0 // pred_check
    _
  $region11: #{a_call__.19} parent=0 // pred_check_branch
    %265 = sbr.rel (0) target = $region13
  $region12: #{a_call__.19} parent=0 // pred_region
    _
  $region13: #{a_call__.19} parent=0 // pred_fallthru
    _
  // Predicated region
  $region14: #{a_call__.19} parent=0 // pred_check
    _
  $region15: #{a_call__.19} parent=0 // pred_check_branch
    %267 = sbr.rel (0) target = $region17
  $region16: #{a_call__.19} parent=0 // pred_region
    _
  $region17: #{a_call__.19} parent=0 // pred_fallthru
    _

// kernel: a_call__.17
$region0: #{a_call__.17}
  #allocation0 [shape = 'u32[]', space=smem, size = 0x4, offset = 0x4, fixed_abs, tag = 'smem constant byte address 0x4 - core index']
  #allocation1 [shape = 'u32[144,128]{1,0:T(1,128)}', space=vmem, size = 0x12000, scoped, tag = 'internal scratch']
  %s0 = inlined_call_operand.vmem [shape: bf16[2,4,64], index: 0, kind: input, shape index: {}]
  %s1 = inlined_call_operand.vmem [shape: bf16[5,4], index: 1, kind: input, shape index: {}]
  %s2 = inlined_call_operand.vmem [shape: f32[5,1], index: 2, kind: input, shape index: {}]
  %s3 = inlined_call_operand.vmem [shape: bf16[2,5,64], index: 3, kind: output, shape index: {}]
  %s4 = sld [smem:[#allocation0]]
  $region45: #{a_call__.17} parent=0
    _
  %s6 = ssub.s32 1, %s4
  %s7 = scalar_select 0, %s6, %s4
  loop: start=0, step=1, limit=4
  $region2: #{a_call__.17} parent=0 // loop_pre_header
    _
  $region3: #{a_call__.17} parent=0 // loop_header
    %s9 = sphi 0, %s13
    %p10 = scmp.ge.s32.totalorder %s9, 4
    %s16 = sphi 0, %s28
    %s17 = sphi 0, %s24
    %s18 = sphi 0, %s16
    %s19 = sphi 0, %s17
    %s20 = sphi 0, %s18
    %s21 = sphi 0, %s19
    %s33 = sphi 0, %s35
    %s36 = sphi 0, %s33
    %s37 = sphi 0, %s36
    %s53 = sphi 0, %s37
    %s57 = sphi 0, %s57
    %s59 = sphi 0, %s57
    %s60 = sphi 0, %s59
    %s74 = sphi 0, %s60
    %s78 = sphi 0, %s78
    %s80 = sphi 0, %s78
    %s81 = sphi 0, %s80
    %s95 = sphi 0, %s81
    %s103 = sphi 0, %s105
    %s106 = sphi 0, %s103
    %s107 = sphi 0, %s106
    %s123 = sphi 0, %s107
  $region4: #{a_call__.17} parent=0 // loop_header_branch
    %12 = sbr.rel (%p10) target = $region8
  $region5: #{a_call__.17} parent=0 // loop_body
    %s14 = ssub.s32 %s9, 1
    %s15 = ssub.s32 %s9, 2
    %s22 = sadd.s32 1, %s17
    %p23 = scmp.ge.s32.totalorder %s22, 1
    %s24 = scalar_select %p23, 0, %s22
    %s25 = sadd.s32 1, %s16
    %s26 = scalar_select %p23, %s25, %s16
    %p27 = scmp.ge.s32.totalorder %s26, 2
    %s28 = scalar_select %p27, 0, %s26
    %s29 = ssub.s32 %s16, %s28
    %s30 = ssub.s32 %s17, %s24
    %s31 = sor.u32 %s29, %s30
    %p32 = scmp.eq.s32.totalorder %s31, 0
    %s34 = sadd.s32 %s33, 1
    %s35 = scalar_select %p32, %s33, %s34
    %p38 = pneg %p32
    %p39 = scmp.eq.s32.totalorder %s9, 1
    %p40 = por %p38, %p39
    %p41 = scmp.ne.s32.totalorder %s33, %s36
    %p42 = scmp.eq.s32.totalorder %s9, 0
    %p43 = por %p41, %p42
    %p44 = scmp.ne.s32.totalorder %s33, %s36
    %p45 = scmp.eq.s32.totalorder %s14, 1
    %p46 = por %p44, %p45
    %p47 = scmp.ne.s32.totalorder %s36, %s37
    %p48 = scmp.eq.s32.totalorder %s14, 0
    %p49 = por %p47, %p48
    %p50 = scmp.ne.s32.totalorder %s36, %s37
    %p51 = scmp.eq.s32.totalorder %s15, 1
    %p52 = por %p50, %p51
    %p54 = scmp.ne.s32.totalorder %s37, %s53
    %p55 = scmp.eq.s32.totalorder %s15, 0
    %p56 = por %p54, %p55
    %s58 = sadd.s32 %s57, 1
    %p61 = scmp.eq.s32.totalorder %s9, 1
    %p62 = scmp.ne.s32.totalorder %s57, %s59
    %p63 = scmp.eq.s32.totalorder %s9, 0
    %p64 = por %p62, %p63
    %p65 = scmp.ne.s32.totalorder %s57, %s59
    %p66 = scmp.eq.s32.totalorder %s14, 1
    %p67 = por %p65, %p66
    %p68 = scmp.ne.s32.totalorder %s59, %s60
    %p69 = scmp.eq.s32.totalorder %s14, 0
    %p70 = por %p68, %p69
    %p71 = scmp.ne.s32.totalorder %s59, %s60
    %p72 = scmp.eq.s32.totalorder %s15, 1
    %p73 = por %p71, %p72
    %p75 = scmp.ne.s32.totalorder %s60, %s74
    %p76 = scmp.eq.s32.totalorder %s15, 0
    %p77 = por %p75, %p76
    %s79 = sadd.s32 %s78, 1
    %p82 = scmp.eq.s32.totalorder %s9, 1
    %p83 = scmp.ne.s32.totalorder %s78, %s80
    %p84 = scmp.eq.s32.totalorder %s9, 0
    %p85 = por %p83, %p84
    %p86 = scmp.ne.s32.totalorder %s78, %s80
    %p87 = scmp.eq.s32.totalorder %s14, 1
    %p88 = por %p86, %p87
    %p89 = scmp.ne.s32.totalorder %s80, %s81
    %p90 = scmp.eq.s32.totalorder %s14, 0
    %p91 = por %p89, %p90
    %p92 = scmp.ne.s32.totalorder %s80, %s81
    %p93 = scmp.eq.s32.totalorder %s15, 1
    %p94 = por %p92, %p93
    %p96 = scmp.ne.s32.totalorder %s81, %s95
    %p97 = scmp.eq.s32.totalorder %s15, 0
    %p98 = por %p96, %p97
    %s99 = ssub.s32 %s16, %s28
    %s100 = ssub.s32 %s17, %s24
    %s101 = sor.u32 %s99, %s100
    %p102 = scmp.eq.s32.totalorder %s101, 0
    %s104 = sadd.s32 %s103, 1
    %s105 = scalar_select %p102, %s103, %s104
    %p108 = pneg %p102
    %p109 = scmp.eq.s32.totalorder %s9, 1
    %p110 = por %p108, %p109
    %p111 = scmp.ne.s32.totalorder %s103, %s106
    %p112 = scmp.eq.s32.totalorder %s9, 0
    %p113 = por %p111, %p112
    %p114 = scmp.ne.s32.totalorder %s103, %s106
    %p115 = scmp.eq.s32.totalorder %s14, 1
    %p116 = por %p114, %p115
    %p117 = scmp.ne.s32.totalorder %s106, %s107
    %p118 = scmp.eq.s32.totalorder %s14, 0
    %p119 = por %p117, %p118
    %p120 = scmp.ne.s32.totalorder %s106, %s107
    %p121 = scmp.eq.s32.totalorder %s15, 1
    %p122 = por %p120, %p121
    %p124 = scmp.ne.s32.totalorder %s107, %s123
    %p125 = scmp.eq.s32.totalorder %s15, 0
    %p126 = por %p124, %p125
    %p127 = scmp.le.s32.totalorder 1, %s9
    %p128 = scmp.lt.s32.totalorder %s9, 3
    %p129 = pnand %p127, %p128
    %p130 = pneg %p129
    // Predicated region
    $region9: #{a_call__.17} parent=5 // pred_check
      _
    $region10: #{a_call__.17} parent=5 // pred_check_branch
      %132 = sbr.rel (%p129) target = $region12
    $region11: #{a_call__.17} parent=5 // pred_region
      %s133 = ssub.s32 %s9, 1
      // Predicated region
      $region13: #{a_call__.17} parent=11 // pred_check
        %p134 = pneg %p70
      $region14: #{a_call__.17} parent=11 // pred_check_branch
        %136 = sbr.rel (%p134) target = $region16
      $region15: #{a_call__.17} parent=11 // pred_region
        _
      $region16: #{a_call__.17} parent=11 // pred_fallthru
        _
      // Predicated region
      $region17: #{a_call__.17} parent=11 // pred_check
        %p137 = pneg %p91
      $region18: #{a_call__.17} parent=11 // pred_check_branch
        %139 = sbr.rel (%p137) target = $region20
      $region19: #{a_call__.17} parent=11 // pred_region
        _
      $region20: #{a_call__.17} parent=11 // pred_fallthru
        _
    $region12: #{a_call__.17} parent=5 // pred_fallthru
      _
    %p140 = scmp.lt.s32.totalorder %s9, 2
    // Predicated region
    $region21: #{a_call__.17} parent=5 // pred_check
      %p141 = pneg %p140
    $region22: #{a_call__.17} parent=5 // pred_check_branch
      %143 = sbr.rel (%p141) target = $region24
    $region23: #{a_call__.17} parent=5 // pred_region
      // Predicated region
      $region25: #{a_call__.17} parent=23 // pred_check
        %p144 = pneg %p43
      $region26: #{a_call__.17} parent=23 // pred_check_branch
        %146 = sbr.rel (%p144) target = $region28
      $region27: #{a_call__.17} parent=23 // pred_region
        %p147 = scmp.lt.s32.totalorder %s16, 1
        %s148 = scalar_select %p147, %s16, 1
        %p149 = scmp.lt.s32.totalorder %s17, 0
        %s150 = scalar_select %p149, %s17, 0
        %s151 = sadd.s32 %s150, %s148
        %s152 = smul.addr %s151, 2
        %s153 = scalar_lea.vmem %s0, %s152
      $region28: #{a_call__.17} parent=23 // pred_fallthru
        _
    $region24: #{a_call__.17} parent=5 // pred_fallthru
      _
    %p154 = scmp.le.s32.totalorder 1, %s9
    %p155 = scmp.lt.s32.totalorder %s9, 3
    %p156 = pnand %p154, %p155
    %p157 = pneg %p156
    // Predicated region
    $region29: #{a_call__.17} parent=5 // pred_check
      _
    $region30: #{a_call__.17} parent=5 // pred_check_branch
      %159 = sbr.rel (%p156) target = $region32
    $region31: #{a_call__.17} parent=5 // pred_region
      %s160 = ssub.s32 %s9, 1
      %p161 = scmp.lt.s32.totalorder %s18, 1
      %s162 = scalar_select %p161, %s18, 1
      %p163 = scmp.lt.s32.totalorder %s19, 0
      %s164 = scalar_select %p163, %s19, 0
      %s165 = sadd.s32 %s164, %s162
      %s166 = smul.addr %s165, 2
      %s167 = scalar_lea.vmem %s0, %s166
      %p168 = pneg %p49
      %p169 = pneg %p46
      %p170 = pneg %p70
      %p171 = pneg %p67
      %p172 = pneg %p91
      %p173 = pneg %p88
      %p174 = pneg %p119
      %p175 = pneg %p116
      %p176 = scmp.lt.s32.totalorder %s18, 1
      %s177 = scalar_select %p176, %s18, 1
      %p178 = scmp.lt.s32.totalorder %s19, 0
      %s179 = scalar_select %p178, %s19, 0
      %s180 = sadd.s32 %s179, %s177
      %s181 = smul.addr %s180, 4
      %s182 = scalar_lea.vmem %s3, %s181
      %p183 = scmp.lt.s32.totalorder %s18, 1
      %s184 = scalar_select %p183, %s18, 1
      %p185 = scmp.lt.s32.totalorder %s19, 0
      %s186 = scalar_select %p185, %s19, 0
      %s187 = sadd.s32 %s186, %s184
      %s188 = smul.addr %s187, 2
      %s189 = scalar_lea.vmem %s0, %s188
      %p190 = scmp.lt.s32.totalorder %s18, 1
      %s191 = scalar_select %p190, %s18, 1
      %p192 = scmp.lt.s32.totalorder %s19, 0
      %s193 = scalar_select %p192, %s19, 0
      %s194 = sadd.s32 %s193, %s191
      %s195 = smul.addr %s194, 4
      %s196 = scalar_lea.vmem %s3, %s195
      %v198 = vld [vmem:[%s1] sm:$0x7]
      %v199 = vld [vmem:[%s189] sm:$0x3]
      %v200 = vld [vmem:[%s2] sm:$0x1f]
      %202 = vset.pattern.permute.xlu0 0
      %203 = vperm.xlu0 %202, %v200
      %v204 = vpop.permute.xlu0 %203
      %vm206 = vcmask 31744
      %v208 = vsel %vm206, %v198, 0
      %vm210 = vcmask 1041408
      %v212 = vsel %vm210, %v199, 0
      %214 = vmatprep.subr.bf16.mxu0 0
      %215 = vmatpush1.bf16.msra.mxu0 %v212
      %216 = vmatprep.subr.bf16.mxu0 0
      %217 = vmatpush1.bf16.msra.mxu0 0
      %218 = vmatprep.subr.bf16.mxu0 0
      %219 = vmatpush1.bf16.msra.mxu0 0
      %220 = vmatprep.subr.bf16.mxu0 0
      %221 = vmatpush1.bf16.msra.mxu0 0
      %222 = vmatprep.subr.bf16.mxu0 0
      %223 = vmatpush1.bf16.msra.mxu0 0
      %224 = vmatprep.subr.bf16.mxu0 0
      %225 = vmatpush1.bf16.msra.mxu0 0
      %226 = vmatprep.subr.bf16.mxu0 0
      %227 = vmatpush1.bf16.msra.mxu0 0
      %228 = vmatprep.subr.bf16.mxu0 0
      %229 = vmatpush1.bf16.msra.mxu0 0
      %230 = vmatprep.subr.bf16.mxu0 0
      %231 = vmatpush1.bf16.msra.mxu0 0
      %232 = vmatprep.subr.bf16.mxu0 0
      %233 = vmatpush1.bf16.msra.mxu0 0
      %234 = vmatprep.subr.bf16.mxu0 0
      %235 = vmatpush1.bf16.msra.mxu0 0
      %236 = vmatprep.subr.bf16.mxu0 0
      %237 = vmatpush1.bf16.msra.mxu0 0
      %238 = vmatprep.subr.bf16.mxu0 0
      %239 = vmatpush1.bf16.msra.mxu0 0
      %240 = vmatprep.subr.bf16.mxu0 0
      %241 = vmatpush1.bf16.msra.mxu0 0
      %242 = vmatprep.subr.bf16.mxu0 0
      %243 = vmatpush1.bf16.msra.mxu0 0
      %244 = vmatprep.subr.bf16.mxu0 0
      %245 = vmatpush1.bf16.msra.mxu0 0
      %246 = vmatprep.mubr.bf16.mxu0 0
      %247 = vmatmul.mubr.bf16.gmra.mrb[0].mxu0 %v208
      %v248 = vpop.f32.mrb[0].mxu0
      %v249 = vadd.f32 %v204, %v248
      %v250 = vpop.f32.mrb[0].mxu0
      %v251 = vpop.f32.mrb[0].mxu0
      %v252 = vpop.f32.mrb[0].mxu0
      %253 = vdwg.mxu0
      %v254 = vpack.c.bf16 %v249, %v249
      %vm255 = vcmask 518144
      %vm256 = vsmask.f32 2304
      %vm257 = vmand %vm255, %vm256
      %v258 = vld [vmem:[%s196] sm:$0x7]
      %v259 = vsel %vm257, %v254, %v258
      %260 = vst [vmem:[%s196] sm:$0x7] %v259
      %p261 = scmp.lt.s32.totalorder %s18, 1
      %s262 = scalar_select %p261, %s18, 1
      %p263 = scmp.lt.s32.totalorder %s19, 0
      %s264 = scalar_select %p263, %s19, 0
      %s265 = sadd.s32 %s264, %s262
      %s266 = smul.addr %s265, 4
      %s267 = scalar_lea.vmem %s3, %s266
      // Predicated region
      $region33: #{a_call__.17} parent=31 // pred_check
        %p268 = pneg %p116
      $region34: #{a_call__.17} parent=31 // pred_check_branch
        %270 = sbr.rel (%p268) target = $region36
      $region35: #{a_call__.17} parent=31 // pred_region
        _
      $region36: #{a_call__.17} parent=31 // pred_fallthru
        _
    $region32: #{a_call__.17} parent=5 // pred_fallthru
      _
    %p271 = scmp.le.s32.totalorder 2, %s9
    // Predicated region
    $region37: #{a_call__.17} parent=5 // pred_check
      %p272 = pneg %p271
    $region38: #{a_call__.17} parent=5 // pred_check_branch
      %274 = sbr.rel (%p272) target = $region40
    $region39: #{a_call__.17} parent=5 // pred_region
      %s275 = ssub.s32 %s9, 2
      // Predicated region
      $region41: #{a_call__.17} parent=39 // pred_check
        %p276 = pneg %p122
      $region42: #{a_call__.17} parent=39 // pred_check_branch
        %278 = sbr.rel (%p276) target = $region44
      $region43: #{a_call__.17} parent=39 // pred_region
        %p279 = scmp.lt.s32.totalorder %s20, 1
        %s280 = scalar_select %p279, %s20, 1
        %p281 = scmp.lt.s32.totalorder %s21, 0
        %s282 = scalar_select %p281, %s21, 0
        %s283 = sadd.s32 %s282, %s280
        %s284 = smul.addr %s283, 4
        %s285 = scalar_lea.vmem %s3, %s284
      $region44: #{a_call__.17} parent=39 // pred_fallthru
        _
    $region40: #{a_call__.17} parent=5 // pred_fallthru
      _
  $region6: #{a_call__.17} parent=0 // loop_footer
    %s13 = sadd.s32 1, %s9
  $region7: #{a_call__.17} parent=0 // loop_footer_branch
    %8 = sbr.rel target = $region3
  $region8: #{a_call__.17} parent=0 // loop_exit
    _

// kernel: a_call__.20
$region0: #{a_call__.20}
  #allocation0 [shape = 'u32[]', space=smem, size = 0x4, offset = 0x4, fixed_abs, tag = 'smem constant byte address 0x4 - core index']
  #allocation1 [shape = 'u32[144,128]{1,0:T(1,128)}', space=vmem, size = 0x12000, scoped, tag = 'internal scratch']
  %s0 = inlined_call_operand.vmem [shape: bf16[2,4,144], index: 0, kind: input, shape index: {}]
  %s1 = inlined_call_operand.vmem [shape: bf16[5,4], index: 1, kind: input, shape index: {}]
  %s2 = inlined_call_operand.vmem [shape: f32[5,1], index: 2, kind: input, shape index: {}]
  %s3 = inlined_call_operand.vmem [shape: bf16[2,5,144], index: 3, kind: output, shape index: {}]
  %s4 = sld [smem:[#allocation0]]
  $region45: #{a_call__.20} parent=0
    _
  %s6 = ssub.s32 1, %s4
  %s7 = scalar_select 0, %s6, %s4
  loop: start=0, step=1, limit=4
  $region2: #{a_call__.20} parent=0 // loop_pre_header
    _
  $region3: #{a_call__.20} parent=0 // loop_header
    %s9 = sphi 0, %s13
    %p10 = scmp.ge.s32.totalorder %s9, 4
    %s16 = sphi 0, %s28
    %s17 = sphi 0, %s24
    %s18 = sphi 0, %s16
    %s19 = sphi 0, %s17
    %s20 = sphi 0, %s18
    %s21 = sphi 0, %s19
    %s33 = sphi 0, %s35
    %s36 = sphi 0, %s33
    %s37 = sphi 0, %s36
    %s53 = sphi 0, %s37
    %s57 = sphi 0, %s57
    %s59 = sphi 0, %s57
    %s60 = sphi 0, %s59
    %s74 = sphi 0, %s60
    %s78 = sphi 0, %s78
    %s80 = sphi 0, %s78
    %s81 = sphi 0, %s80
    %s95 = sphi 0, %s81
    %s103 = sphi 0, %s105
    %s106 = sphi 0, %s103
    %s107 = sphi 0, %s106
    %s123 = sphi 0, %s107
  $region4: #{a_call__.20} parent=0 // loop_header_branch
    %12 = sbr.rel (%p10) target = $region8
  $region5: #{a_call__.20} parent=0 // loop_body
    %s14 = ssub.s32 %s9, 1
    %s15 = ssub.s32 %s9, 2
    %s22 = sadd.s32 1, %s17
    %p23 = scmp.ge.s32.totalorder %s22, 1
    %s24 = scalar_select %p23, 0, %s22
    %s25 = sadd.s32 1, %s16
    %s26 = scalar_select %p23, %s25, %s16
    %p27 = scmp.ge.s32.totalorder %s26, 2
    %s28 = scalar_select %p27, 0, %s26
    %s29 = ssub.s32 %s16, %s28
    %s30 = ssub.s32 %s17, %s24
    %s31 = sor.u32 %s29, %s30
    %p32 = scmp.eq.s32.totalorder %s31, 0
    %s34 = sadd.s32 %s33, 1
    %s35 = scalar_select %p32, %s33, %s34
    %p38 = pneg %p32
    %p39 = scmp.eq.s32.totalorder %s9, 1
    %p40 = por %p38, %p39
    %p41 = scmp.ne.s32.totalorder %s33, %s36
    %p42 = scmp.eq.s32.totalorder %s9, 0
    %p43 = por %p41, %p42
    %p44 = scmp.ne.s32.totalorder %s33, %s36
    %p45 = scmp.eq.s32.totalorder %s14, 1
    %p46 = por %p44, %p45
    %p47 = scmp.ne.s32.totalorder %s36, %s37
    %p48 = scmp.eq.s32.totalorder %s14, 0
    %p49 = por %p47, %p48
    %p50 = scmp.ne.s32.totalorder %s36, %s37
    %p51 = scmp.eq.s32.totalorder %s15, 1
    %p52 = por %p50, %p51
    %p54 = scmp.ne.s32.totalorder %s37, %s53
    %p55 = scmp.eq.s32.totalorder %s15, 0
    %p56 = por %p54, %p55
    %s58 = sadd.s32 %s57, 1
    %p61 = scmp.eq.s32.totalorder %s9, 1
    %p62 = scmp.ne.s32.totalorder %s57, %s59
    %p63 = scmp.eq.s32.totalorder %s9, 0
    %p64 = por %p62, %p63
    %p65 = scmp.ne.s32.totalorder %s57, %s59
    %p66 = scmp.eq.s32.totalorder %s14, 1
    %p67 = por %p65, %p66
    %p68 = scmp.ne.s32.totalorder %s59, %s60
    %p69 = scmp.eq.s32.totalorder %s14, 0
    %p70 = por %p68, %p69
    %p71 = scmp.ne.s32.totalorder %s59, %s60
    %p72 = scmp.eq.s32.totalorder %s15, 1
    %p73 = por %p71, %p72
    %p75 = scmp.ne.s32.totalorder %s60, %s74
    %p76 = scmp.eq.s32.totalorder %s15, 0
    %p77 = por %p75, %p76
    %s79 = sadd.s32 %s78, 1
    %p82 = scmp.eq.s32.totalorder %s9, 1
    %p83 = scmp.ne.s32.totalorder %s78, %s80
    %p84 = scmp.eq.s32.totalorder %s9, 0
    %p85 = por %p83, %p84
    %p86 = scmp.ne.s32.totalorder %s78, %s80
    %p87 = scmp.eq.s32.totalorder %s14, 1
    %p88 = por %p86, %p87
    %p89 = scmp.ne.s32.totalorder %s80, %s81
    %p90 = scmp.eq.s32.totalorder %s14, 0
    %p91 = por %p89, %p90
    %p92 = scmp.ne.s32.totalorder %s80, %s81
    %p93 = scmp.eq.s32.totalorder %s15, 1
    %p94 = por %p92, %p93
    %p96 = scmp.ne.s32.totalorder %s81, %s95
    %p97 = scmp.eq.s32.totalorder %s15, 0
    %p98 = por %p96, %p97
    %s99 = ssub.s32 %s16, %s28
    %s100 = ssub.s32 %s17, %s24
    %s101 = sor.u32 %s99, %s100
    %p102 = scmp.eq.s32.totalorder %s101, 0
    %s104 = sadd.s32 %s103, 1
    %s105 = scalar_select %p102, %s103, %s104
    %p108 = pneg %p102
    %p109 = scmp.eq.s32.totalorder %s9, 1
    %p110 = por %p108, %p109
    %p111 = scmp.ne.s32.totalorder %s103, %s106
    %p112 = scmp.eq.s32.totalorder %s9, 0
    %p113 = por %p111, %p112
    %p114 = scmp.ne.s32.totalorder %s103, %s106
    %p115 = scmp.eq.s32.totalorder %s14, 1
    %p116 = por %p114, %p115
    %p117 = scmp.ne.s32.totalorder %s106, %s107
    %p118 = scmp.eq.s32.totalorder %s14, 0
    %p119 = por %p117, %p118
    %p120 = scmp.ne.s32.totalorder %s106, %s107
    %p121 = scmp.eq.s32.totalorder %s15, 1
    %p122 = por %p120, %p121
    %p124 = scmp.ne.s32.totalorder %s107, %s123
    %p125 = scmp.eq.s32.totalorder %s15, 0
    %p126 = por %p124, %p125
    %p127 = scmp.le.s32.totalorder 1, %s9
    %p128 = scmp.lt.s32.totalorder %s9, 3
    %p129 = pnand %p127, %p128
    %p130 = pneg %p129
    // Predicated region
    $region9: #{a_call__.20} parent=5 // pred_check
      _
    $region10: #{a_call__.20} parent=5 // pred_check_branch
      %132 = sbr.rel (%p129) target = $region12
    $region11: #{a_call__.20} parent=5 // pred_region
      %s133 = ssub.s32 %s9, 1
      // Predicated region
      $region13: #{a_call__.20} parent=11 // pred_check
        %p134 = pneg %p70
      $region14: #{a_call__.20} parent=11 // pred_check_branch
        %136 = sbr.rel (%p134) target = $region16
      $region15: #{a_call__.20} parent=11 // pred_region
        _
      $region16: #{a_call__.20} parent=11 // pred_fallthru
        _
      // Predicated region
      $region17: #{a_call__.20} parent=11 // pred_check
        %p137 = pneg %p91
      $region18: #{a_call__.20} parent=11 // pred_check_branch
        %139 = sbr.rel (%p137) target = $region20
      $region19: #{a_call__.20} parent=11 // pred_region
        _
      $region20: #{a_call__.20} parent=11 // pred_fallthru
        _
    $region12: #{a_call__.20} parent=5 // pred_fallthru
      _
    %p140 = scmp.lt.s32.totalorder %s9, 2
    // Predicated region
    $region21: #{a_call__.20} parent=5 // pred_check
      %p141 = pneg %p140
    $region22: #{a_call__.20} parent=5 // pred_check_branch
      %143 = sbr.rel (%p141) target = $region24
    $region23: #{a_call__.20} parent=5 // pred_region
      // Predicated region
      $region25: #{a_call__.20} parent=23 // pred_check
        %p144 = pneg %p43
      $region26: #{a_call__.20} parent=23 // pred_check_branch
        %146 = sbr.rel (%p144) target = $region28
      $region27: #{a_call__.20} parent=23 // pred_region
        %s147 = smul.u32 2, %s17
        %p148 = scmp.lt.s32.totalorder %s16, 1
        %s149 = scalar_select %p148, %s16, 1
        %p150 = scmp.lt.s32.totalorder %s147, 1
        %s151 = scalar_select %p150, %s147, 1
        %s152 = smul.addr %s149, 2
        %s153 = sadd.s32 %s151, %s152
        %s154 = smul.addr %s153, 2
        %s155 = scalar_lea.vmem %s0, %s154
        %s156 = smul.u32 2, %s17
      $region28: #{a_call__.20} parent=23 // pred_fallthru
        _
    $region24: #{a_call__.20} parent=5 // pred_fallthru
      _
    %p157 = scmp.le.s32.totalorder 1, %s9
    %p158 = scmp.lt.s32.totalorder %s9, 3
    %p159 = pnand %p157, %p158
    %p160 = pneg %p159
    // Predicated region
    $region29: #{a_call__.20} parent=5 // pred_check
      _
    $region30: #{a_call__.20} parent=5 // pred_check_branch
      %162 = sbr.rel (%p159) target = $region32
    $region31: #{a_call__.20} parent=5 // pred_region
      %s163 = ssub.s32 %s9, 1
      %s164 = smul.u32 2, %s19
      %p165 = scmp.lt.s32.totalorder %s18, 1
      %s166 = scalar_select %p165, %s18, 1
      %p167 = scmp.lt.s32.totalorder %s164, 1
      %s168 = scalar_select %p167, %s164, 1
      %s169 = smul.addr %s166, 2
      %s170 = sadd.s32 %s168, %s169
      %s171 = smul.addr %s170, 2
      %s172 = scalar_lea.vmem %s0, %s171
      %p173 = pneg %p49
      %p174 = pneg %p46
      %p175 = pneg %p70
      %p176 = pneg %p67
      %p177 = pneg %p91
      %p178 = pneg %p88
      %p179 = pneg %p119
      %p180 = pneg %p116
      %s181 = smul.u32 2, %s19
      %p182 = scmp.lt.s32.totalorder %s18, 1
      %s183 = scalar_select %p182, %s18, 1
      %p184 = scmp.lt.s32.totalorder %s181, 1
      %s185 = scalar_select %p184, %s181, 1
      %s186 = smul.addr %s183, 2
      %s187 = sadd.s32 %s185, %s186
      %s188 = smul.addr %s187, 4
      %s189 = scalar_lea.vmem %s3, %s188
      %s190 = smul.u32 2, %s19
      %p191 = scmp.lt.s32.totalorder %s18, 1
      %s192 = scalar_select %p191, %s18, 1
      %p193 = scmp.lt.s32.totalorder %s190, 1
      %s194 = scalar_select %p193, %s190, 1
      %s195 = smul.addr %s192, 2
      %s196 = sadd.s32 %s194, %s195
      %s197 = smul.addr %s196, 2
      %s198 = scalar_lea.vmem %s0, %s197
      %s199 = smul.u32 2, %s19
      %s200 = smul.u32 2, %s19
      %p201 = scmp.lt.s32.totalorder %s18, 1
      %s202 = scalar_select %p201, %s18, 1
      %p203 = scmp.lt.s32.totalorder %s200, 1
      %s204 = scalar_select %p203, %s200, 1
      %s205 = smul.addr %s202, 2
      %s206 = sadd.s32 %s204, %s205
      %s207 = smul.addr %s206, 4
      %s208 = scalar_lea.vmem %s3, %s207
      %s209 = smul.u32 2, %s19
      %v211 = vld [vmem:[%s1] sm:$0x7]
      %v212 = vld [vmem:[%s198] sm:$0xf]
      %v213 = vld [vmem:[%s2] sm:$0x1f]
      %215 = vset.pattern.permute.xlu0 0
      %216 = vperm.xlu0 %215, %v213
      %v217 = vpop.permute.xlu0 %216
      %v221 = vunpack.c.l.s4 1983009808
      %v222 = vunpack.c.0.s8 %v221
      %v223 = vlaneseq
      %v224 = vshrl.u32 %v223, 7
      %v225 = vsub.s32 %v222, %v224
      %v226 = vrot.slane %v212, %v225
      %v227 = vcombine.high %v226, %v226
      %vm228 = vcmask 31744
      %v230 = vsel %vm228, %v211, 0
      %vm232 = vcmask 1041408
      %v234 = vsel %vm232, %v226, 0
      %v237 = vsel %vm232, %v227, 0
      %239 = vmatprep.subr.bf16.mxu0 %v237
      %240 = vmatpush1.bf16.msra.mxu0 %v234
      %241 = vmatprep.subr.bf16.mxu0 0
      %242 = vmatpush1.bf16.msra.mxu0 0
      %243 = vmatprep.subr.bf16.mxu0 0
      %244 = vmatpush1.bf16.msra.mxu0 0
      %245 = vmatprep.subr.bf16.mxu0 0
      %246 = vmatpush1.bf16.msra.mxu0 0
      %247 = vmatprep.subr.bf16.mxu0 0
      %248 = vmatpush1.bf16.msra.mxu0 0
      %249 = vmatprep.subr.bf16.mxu0 0
      %250 = vmatpush1.bf16.msra.mxu0 0
      %251 = vmatprep.subr.bf16.mxu0 0
      %252 = vmatpush1.bf16.msra.mxu0 0
      %253 = vmatprep.subr.bf16.mxu0 0
      %254 = vmatpush1.bf16.msra.mxu0 0
      %255 = vmatprep.subr.bf16.mxu0 0
      %256 = vmatpush1.bf16.msra.mxu0 0
      %257 = vmatprep.subr.bf16.mxu0 0
      %258 = vmatpush1.bf16.msra.mxu0 0
      %259 = vmatprep.subr.bf16.mxu0 0
      %260 = vmatpush1.bf16.msra.mxu0 0
      %261 = vmatprep.subr.bf16.mxu0 0
      %262 = vmatpush1.bf16.msra.mxu0 0
      %263 = vmatprep.subr.bf16.mxu0 0
      %264 = vmatpush1.bf16.msra.mxu0 0
      %265 = vmatprep.subr.bf16.mxu0 0
      %266 = vmatpush1.bf16.msra.mxu0 0
      %267 = vmatprep.subr.bf16.mxu0 0
      %268 = vmatpush1.bf16.msra.mxu0 0
      %269 = vmatprep.subr.bf16.mxu0 0
      %270 = vmatpush1.bf16.msra.mxu0 0
      %271 = vmatprep.mubr.bf16.mxu0 0
      %272 = vmatmul.mubr.bf16.gmra.mrb[0].mxu0 %v230
      %v273 = vpop.f32.mrb[0].mxu0
      %v274 = vadd.f32 %v217, %v273
      %v275 = vpop.f32.mrb[0].mxu0
      %v276 = vadd.f32 %v217, %v275
      %v277 = vpop.f32.mrb[0].mxu0
      %v278 = vpop.f32.mrb[0].mxu0
      %279 = vdwg.mxu0
      %v280 = vpack.c.bf16 %v274, %v274
      %v281 = vpack.c.bf16 %v276, %v276
      %v284 = vunpack.c.l.b16 %v280
      %v285 = vunpack.c.l.b16 %v281
      %v286 = vpack.c.b16 %v285, %v284
      %vm288 = vcmask 1042432
      %vm289 = vsmask.f32 2304
      %vm290 = vmand %vm288, %vm289
      %vm291 = vcmask 129028
      %vm292 = vsmask.f32 6400
      %vm293 = vmand %vm291, %vm292
      %vm294 = vmor %vm293, %vm290
      %v295 = vld [vmem:[%s208] sm:$0x77]
      %v296 = vsel %vm294, %v286, %v295
      %297 = vst [vmem:[%s208] sm:$0x77] %v296
      %s298 = smul.u32 2, %s19
      %p299 = scmp.lt.s32.totalorder %s18, 1
      %s300 = scalar_select %p299, %s18, 1
      %p301 = scmp.lt.s32.totalorder %s298, 1
      %s302 = scalar_select %p301, %s298, 1
      %s303 = smul.addr %s300, 2
      %s304 = sadd.s32 %s302, %s303
      %s305 = smul.addr %s304, 4
      %s306 = scalar_lea.vmem %s3, %s305
      // Predicated region
      $region33: #{a_call__.20} parent=31 // pred_check
        %p307 = pneg %p116
      $region34: #{a_call__.20} parent=31 // pred_check_branch
        %309 = sbr.rel (%p307) target = $region36
      $region35: #{a_call__.20} parent=31 // pred_region
        %s310 = smul.u32 2, %s19
      $region36: #{a_call__.20} parent=31 // pred_fallthru
        _
    $region32: #{a_call__.20} parent=5 // pred_fallthru
      _
    %p311 = scmp.le.s32.totalorder 2, %s9
    // Predicated region
    $region37: #{a_call__.20} parent=5 // pred_check
      %p312 = pneg %p311
    $region38: #{a_call__.20} parent=5 // pred_check_branch
      %314 = sbr.rel (%p312) target = $region40
    $region39: #{a_call__.20} parent=5 // pred_region
      %s315 = ssub.s32 %s9, 2
      // Predicated region
      $region41: #{a_call__.20} parent=39 // pred_check
        %p316 = pneg %p122
      $region42: #{a_call__.20} parent=39 // pred_check_branch
        %318 = sbr.rel (%p316) target = $region44
      $region43: #{a_call__.20} parent=39 // pred_region
        %s319 = smul.u32 2, %s21
        %p320 = scmp.lt.s32.totalorder %s20, 1
        %s321 = scalar_select %p320, %s20, 1
        %p322 = scmp.lt.s32.totalorder %s319, 1
        %s323 = scalar_select %p322, %s319, 1
        %s324 = smul.addr %s321, 2
        %s325 = sadd.s32 %s323, %s324
        %s326 = smul.addr %s325, 4
        %s327 = scalar_lea.vmem %s3, %s326
      $region44: #{a_call__.20} parent=39 // pred_fallthru
        _
    $region40: #{a_call__.20} parent=5 // pred_fallthru
      _
  $region6: #{a_call__.20} parent=0 // loop_footer
    %s13 = sadd.s32 1, %s9
  $region7: #{a_call__.20} parent=0 // loop_footer_branch
    %8 = sbr.rel target = $region3
  $region8: #{a_call__.20} parent=0 // loop_exit
    _

// kernel: a_call__.16
$region0: #{a_call__.16}
  #allocation0 [shape = 'u32[]', space=smem, size = 0x4, offset = 0x4, fixed_abs, tag = 'smem constant byte address 0x4 - core index']
  #allocation1 [shape = 'u32[144,128]{1,0:T(1,128)}', space=vmem, size = 0x12000, scoped, tag = 'internal scratch']
  %s0 = inlined_call_operand.vmem [shape: bf16[8,256], index: 0, kind: input, shape index: {}]
  %s1 = inlined_call_operand.vmem [shape: bf16[256,64], index: 1, kind: input, shape index: {}]
  %s2 = inlined_call_operand.vmem [shape: bf16[8,64], index: 2, kind: output, shape index: {}]
  %s3 = sld [smem:[#allocation0]]
  $region18: #{a_call__.16} parent=0
    _
  %s5 = ssub.s32 1, %s3
  %s6 = scalar_select 0, %s5, %s3
  // Predicated region
  $region2: #{a_call__.16} parent=0 // pred_check
    _
  $region3: #{a_call__.16} parent=0 // pred_check_branch
    %8 = sbr.rel (0) target = $region5
  $region4: #{a_call__.16} parent=0 // pred_region
    _
  $region5: #{a_call__.16} parent=0 // pred_fallthru
    _
  // Predicated region
  $region6: #{a_call__.16} parent=0 // pred_check
    _
  $region7: #{a_call__.16} parent=0 // pred_check_branch
    %10 = sbr.rel (0) target = $region9
  $region8: #{a_call__.16} parent=0 // pred_region
    _
  $region9: #{a_call__.16} parent=0 // pred_fallthru
    _
  %v12 = vld [vmem:[%s0] sm:$0xff]
  %v13 = vld [vmem:[%s1] sm:$0xf]
  %v14 = vld [vmem:[%s1 + $0x4] sm:$0xf]
  %v15 = vld [vmem:[%s1 + $0x8] sm:$0xf]
  %v16 = vld [vmem:[%s1 + $0xc] sm:$0xf]
  %v17 = vld [vmem:[%s1 + $0x10] sm:$0xf]
  %v18 = vld [vmem:[%s1 + $0x14] sm:$0xf]
  %v19 = vld [vmem:[%s1 + $0x18] sm:$0xf]
  %v20 = vld [vmem:[%s1 + $0x1c] sm:$0xf]
  %v21 = vld [vmem:[%s1 + $0x20] sm:$0xf]
  %v22 = vld [vmem:[%s1 + $0x24] sm:$0xf]
  %v23 = vld [vmem:[%s1 + $0x28] sm:$0xf]
  %v24 = vld [vmem:[%s1 + $0x2c] sm:$0xf]
  %v25 = vld [vmem:[%s1 + $0x30] sm:$0xf]
  %v26 = vld [vmem:[%s1 + $0x34] sm:$0xf]
  %v27 = vld [vmem:[%s1 + $0x38] sm:$0xf]
  %v28 = vld [vmem:[%s1 + $0x3c] sm:$0xf]
  %v29 = vld [vmem:[%s1 + $0x40] sm:$0xf]
  %v30 = vld [vmem:[%s1 + $0x44] sm:$0xf]
  %v31 = vld [vmem:[%s1 + $0x48] sm:$0xf]
  %v32 = vld [vmem:[%s1 + $0x4c] sm:$0xf]
  %v33 = vld [vmem:[%s1 + $0x50] sm:$0xf]
  %v34 = vld [vmem:[%s1 + $0x54] sm:$0xf]
  %v35 = vld [vmem:[%s1 + $0x58] sm:$0xf]
  %v36 = vld [vmem:[%s1 + $0x5c] sm:$0xf]
  %v37 = vld [vmem:[%s1 + $0x60] sm:$0xf]
  %v38 = vld [vmem:[%s1 + $0x64] sm:$0xf]
  %v39 = vld [vmem:[%s1 + $0x68] sm:$0xf]
  %v40 = vld [vmem:[%s1 + $0x6c] sm:$0xf]
  %v41 = vld [vmem:[%s1 + $0x70] sm:$0xf]
  %v42 = vld [vmem:[%s1 + $0x74] sm:$0xf]
  %v43 = vld [vmem:[%s1 + $0x78] sm:$0xf]
  %v44 = vld [vmem:[%s1 + $0x7c] sm:$0xf]
  %v46 = vunpack.c.l.b16 %v12
  %v47 = vunpack.c.h.b16 %v12
  %v48 = vpack.c.b16 %v46, %v46
  %v49 = vpack.c.b16 %v47, %v47
  %v84 = vunpack.c.l.b16 %v13
  %v85 = vunpack.c.l.b16 %v14
  %v86 = vunpack.c.l.b16 %v15
  %v87 = vunpack.c.l.b16 %v16
  %v88 = vunpack.c.l.b16 %v17
  %v89 = vunpack.c.l.b16 %v18
  %v90 = vunpack.c.l.b16 %v19
  %v91 = vunpack.c.l.b16 %v20
  %v92 = vunpack.c.l.b16 %v21
  %v93 = vunpack.c.l.b16 %v22
  %v94 = vunpack.c.l.b16 %v23
  %v95 = vunpack.c.l.b16 %v24
  %v96 = vunpack.c.l.b16 %v25
  %v97 = vunpack.c.l.b16 %v26
  %v98 = vunpack.c.l.b16 %v27
  %v99 = vunpack.c.l.b16 %v28
  %v100 = vunpack.c.l.b16 %v29
  %v101 = vunpack.c.l.b16 %v30
  %v102 = vunpack.c.l.b16 %v31
  %v103 = vunpack.c.l.b16 %v32
  %v104 = vunpack.c.l.b16 %v33
  %v105 = vunpack.c.l.b16 %v34
  %v106 = vunpack.c.l.b16 %v35
  %v107 = vunpack.c.l.b16 %v36
  %v108 = vunpack.c.l.b16 %v37
  %v109 = vunpack.c.l.b16 %v38
  %v110 = vunpack.c.l.b16 %v39
  %v111 = vunpack.c.l.b16 %v40
  %v112 = vunpack.c.l.b16 %v41
  %v113 = vunpack.c.l.b16 %v42
  %v114 = vunpack.c.l.b16 %v43
  %v115 = vunpack.c.l.b16 %v44
  %v116 = vpack.c.b16 %v85, %v84
  %v117 = vpack.c.b16 %v87, %v86
  %v118 = vpack.c.b16 %v89, %v88
  %v119 = vpack.c.b16 %v91, %v90
  %v120 = vpack.c.b16 %v93, %v92
  %v121 = vpack.c.b16 %v95, %v94
  %v122 = vpack.c.b16 %v97, %v96
  %v123 = vpack.c.b16 %v99, %v98
  %v124 = vpack.c.b16 %v101, %v100
  %v125 = vpack.c.b16 %v103, %v102
  %v126 = vpack.c.b16 %v105, %v104
  %v127 = vpack.c.b16 %v107, %v106
  %v128 = vpack.c.b16 %v109, %v108
  %v129 = vpack.c.b16 %v111, %v110
  %v130 = vpack.c.b16 %v113, %v112
  %v131 = vpack.c.b16 %v115, %v114
  %148 = vmatprep.subr.bf16.mxu0 0
  %149 = vmatpush1.bf16.msra.mxu0 %v116
  %150 = vmatprep.subr.bf16.mxu0 0
  %151 = vmatpush1.bf16.msra.mxu0 %v117
  %152 = vmatprep.subr.bf16.mxu0 0
  %153 = vmatpush1.bf16.msra.mxu0 %v118
  %154 = vmatprep.subr.bf16.mxu0 0
  %155 = vmatpush1.bf16.msra.mxu0 %v119
  %156 = vmatprep.subr.bf16.mxu0 0
  %157 = vmatpush1.bf16.msra.mxu0 %v120
  %158 = vmatprep.subr.bf16.mxu0 0
  %159 = vmatpush1.bf16.msra.mxu0 %v121
  %160 = vmatprep.subr.bf16.mxu0 0
  %161 = vmatpush1.bf16.msra.mxu0 %v122
  %162 = vmatprep.subr.bf16.mxu0 0
  %163 = vmatpush1.bf16.msra.mxu0 %v123
  %164 = vmatprep.subr.bf16.mxu0 0
  %165 = vmatpush1.bf16.msra.mxu0 %v124
  %166 = vmatprep.subr.bf16.mxu0 0
  %167 = vmatpush1.bf16.msra.mxu0 %v125
  %168 = vmatprep.subr.bf16.mxu0 0
  %169 = vmatpush1.bf16.msra.mxu0 %v126
  %170 = vmatprep.subr.bf16.mxu0 0
  %171 = vmatpush1.bf16.msra.mxu0 %v127
  %172 = vmatprep.subr.bf16.mxu0 0
  %173 = vmatpush1.bf16.msra.mxu0 %v128
  %174 = vmatprep.subr.bf16.mxu0 0
  %175 = vmatpush1.bf16.msra.mxu0 %v129
  %176 = vmatprep.subr.bf16.mxu0 0
  %177 = vmatpush1.bf16.msra.mxu0 %v130
  %178 = vmatprep.subr.bf16.mxu0 0
  %179 = vmatpush1.bf16.msra.mxu0 %v131
  %180 = vmatprep.mubr.bf16.mxu0 %v49
  %181 = vmatmul.mubr.bf16.gmra.mrb[0].mxu0 %v48
  %v182 = vpop.f32.mrb[0].mxu0
  %v183 = vadd.f32 0.0, %v182
  %v184 = vpop.f32.mrb[0].mxu0
  %v185 = vpop.f32.mrb[0].mxu0
  %v186 = vpop.f32.mrb[0].mxu0
  %187 = vdwg.mxu0
  %v188 = vpack.c.bf16 %v183, %v183
  %vm189 = vcmask 519168
  %190 = vst.msk [vmem:[%s2] sm:$0xf] %vm189, %v188
  // Predicated region
  $region10: #{a_call__.16} parent=0 // pred_check
    _
  $region11: #{a_call__.16} parent=0 // pred_check_branch
    %192 = sbr.rel (0) target = $region13
  $region12: #{a_call__.16} parent=0 // pred_region
    _
  $region13: #{a_call__.16} parent=0 // pred_fallthru
    _
  // Predicated region
  $region14: #{a_call__.16} parent=0 // pred_check
    _
  $region15: #{a_call__.16} parent=0 // pred_check_branch
    %194 = sbr.rel (0) target = $region17
  $region16: #{a_call__.16} parent=0 // pred_region
    _
  $region17: #{a_call__.16} parent=0 // pred_fallthru
    _

// kernel: a_call__.18
$region0: #{a_call__.18}
  #allocation0 [shape = 'u32[]', space=smem, size = 0x4, offset = 0x4, fixed_abs, tag = 'smem constant byte address 0x4 - core index']
  #allocation1 [shape = 'u32[144,128]{1,0:T(1,128)}', space=vmem, size = 0x12000, scoped, tag = 'internal scratch']
  %s0 = inlined_call_operand.vmem [shape: bf16[10,64], index: 0, kind: input, shape index: {}]
  %s1 = inlined_call_operand.vmem [shape: bf16[64,256], index: 1, kind: input, shape index: {}]
  %s2 = inlined_call_operand.vmem [shape: f32[10,256], index: 2, kind: output, shape index: {}]
  %s3 = sld [smem:[#allocation0]]
  $region18: #{a_call__.18} parent=0
    _
  %s5 = ssub.s32 1, %s3
  %s6 = scalar_select 0, %s5, %s3
  // Predicated region
  $region2: #{a_call__.18} parent=0 // pred_check
    _
  $region3: #{a_call__.18} parent=0 // pred_check_branch
    %8 = sbr.rel (0) target = $region5
  $region4: #{a_call__.18} parent=0 // pred_region
    _
  $region5: #{a_call__.18} parent=0 // pred_fallthru
    _
  // Predicated region
  $region6: #{a_call__.18} parent=0 // pred_check
    _
  $region7: #{a_call__.18} parent=0 // pred_check_branch
    %10 = sbr.rel (0) target = $region9
  $region8: #{a_call__.18} parent=0 // pred_region
    _
  $region9: #{a_call__.18} parent=0 // pred_fallthru
    _
  %v12 = vld [vmem:[%s0] sm:$0xf]
  %v13 = vld [vmem:[%s0 + $0x4] sm:$0x1]
  %v14 = vld [vmem:[%s1] sm:$0xff]
  %v15 = vld [vmem:[%s1 + $0x8] sm:$0xff]
  %v16 = vld [vmem:[%s1 + $0x10] sm:$0xff]
  %v17 = vld [vmem:[%s1 + $0x18] sm:$0xff]
  %v18 = vld [vmem:[%s1 + $0x20] sm:$0xff]
  %v19 = vld [vmem:[%s1 + $0x28] sm:$0xff]
  %v20 = vld [vmem:[%s1 + $0x30] sm:$0xff]
  %v21 = vld [vmem:[%s1 + $0x38] sm:$0xff]
  %v24 = vunpack.c.l.b16 %v12
  %v25 = vunpack.c.l.b16 %v13
  %v26 = vpack.c.b16 %v25, %v24
  %v35 = vunpack.c.l.b16 %v14
  %v36 = vunpack.c.h.b16 %v14
  %v37 = vunpack.c.l.b16 %v15
  %v38 = vunpack.c.h.b16 %v15
  %v39 = vunpack.c.l.b16 %v16
  %v40 = vunpack.c.h.b16 %v16
  %v41 = vunpack.c.l.b16 %v17
  %v42 = vunpack.c.h.b16 %v17
  %v43 = vunpack.c.l.b16 %v18
  %v44 = vunpack.c.h.b16 %v18
  %v45 = vunpack.c.l.b16 %v19
  %v46 = vunpack.c.h.b16 %v19
  %v47 = vunpack.c.l.b16 %v20
  %v48 = vunpack.c.h.b16 %v20
  %v49 = vunpack.c.l.b16 %v21
  %v50 = vunpack.c.h.b16 %v21
  %v51 = vpack.c.b16 %v37, %v35
  %v52 = vpack.c.b16 %v38, %v36
  %v53 = vpack.c.b16 %v41, %v39
  %v54 = vpack.c.b16 %v42, %v40
  %v55 = vpack.c.b16 %v45, %v43
  %v56 = vpack.c.b16 %v46, %v44
  %v57 = vpack.c.b16 %v49, %v47
  %v58 = vpack.c.b16 %v50, %v48
  %vm67 = vcmask 523264
  %v69 = vsel %vm67, %v26, 0
  %71 = vmatprep.subr.bf16.mxu0 %v52
  %72 = vmatpush1.bf16.msra.mxu0 %v51
  %73 = vmatprep.subr.bf16.mxu0 %v54
  %74 = vmatpush1.bf16.msra.mxu0 %v53
  %75 = vmatprep.subr.bf16.mxu0 %v56
  %76 = vmatpush1.bf16.msra.mxu0 %v55
  %77 = vmatprep.subr.bf16.mxu0 %v58
  %78 = vmatpush1.bf16.msra.mxu0 %v57
  %79 = vmatprep.subr.bf16.mxu0 0
  %80 = vmatpush1.bf16.msra.mxu0 0
  %81 = vmatprep.subr.bf16.mxu0 0
  %82 = vmatpush1.bf16.msra.mxu0 0
  %83 = vmatprep.subr.bf16.mxu0 0
  %84 = vmatpush1.bf16.msra.mxu0 0
  %85 = vmatprep.subr.bf16.mxu0 0
  %86 = vmatpush1.bf16.msra.mxu0 0
  %87 = vmatprep.subr.bf16.mxu0 0
  %88 = vmatpush1.bf16.msra.mxu0 0
  %89 = vmatprep.subr.bf16.mxu0 0
  %90 = vmatpush1.bf16.msra.mxu0 0
  %91 = vmatprep.subr.bf16.mxu0 0
  %92 = vmatpush1.bf16.msra.mxu0 0
  %93 = vmatprep.subr.bf16.mxu0 0
  %94 = vmatpush1.bf16.msra.mxu0 0
  %95 = vmatprep.subr.bf16.mxu0 0
  %96 = vmatpush1.bf16.msra.mxu0 0
  %97 = vmatprep.subr.bf16.mxu0 0
  %98 = vmatpush1.bf16.msra.mxu0 0
  %99 = vmatprep.subr.bf16.mxu0 0
  %100 = vmatpush1.bf16.msra.mxu0 0
  %101 = vmatprep.subr.bf16.mxu0 0
  %102 = vmatpush1.bf16.msra.mxu0 0
  %103 = vmatprep.mubr.bf16.mxu0 0
  %104 = vmatmul.mubr.bf16.gmra.mrb[0].mxu0 %v69
  %v105 = vpop.f32.mrb[0].mxu0
  %v106 = vadd.f32 0.0, %v105
  %v107 = vpop.f32.mrb[0].mxu0
  %v108 = vadd.f32 0.0, %v107
  %v109 = vpop.f32.mrb[0].mxu0
  %v110 = vadd.f32 0.0, %v109
  %v111 = vpop.f32.mrb[0].mxu0
  %v112 = vadd.f32 0.0, %v111
  %113 = vdwg.mxu0
  %114 = vst [vmem:[%s2] sm:$0xff] %v106
  %115 = vst [vmem:[%s2 + $0x8] sm:$0xff] %v108
  %116 = vst [vmem:[%s2 + $0x10] sm:$0x3] %v110
  %117 = vst [vmem:[%s2 + $0x18] sm:$0x3] %v112
  // Predicated region
  $region10: #{a_call__.18} parent=0 // pred_check
    _
  $region11: #{a_call__.18} parent=0 // pred_check_branch
    %119 = sbr.rel (0) target = $region13
  $region12: #{a_call__.18} parent=0 // pred_region
    _
  $region13: #{a_call__.18} parent=0 // pred_fallthru
    _
  // Predicated region
  $region14: #{a_call__.18} parent=0 // pred_check
    _
  $region15: #{a_call__.18} parent=0 // pred_check_branch
    %121 = sbr.rel (0) target = $region17
  $region16: #{a_call__.18} parent=0 // pred_region
    _
  $region17: #{a_call__.18} parent=0 // pred_fallthru
    _

// kernel: a_call__.21
$region0: #{a_call__.21}
  #allocation0 [shape = 'u32[]', space=smem, size = 0x4, offset = 0x4, fixed_abs, tag = 'smem constant byte address 0x4 - core index']
  #allocation1 [shape = 'u32[144,128]{1,0:T(1,128)}', space=vmem, size = 0x12000, scoped, tag = 'internal scratch']
  %s0 = inlined_call_operand.vmem [shape: bf16[10,144], index: 0, kind: input, shape index: {}]
  %s1 = inlined_call_operand.vmem [shape: bf16[144,256], index: 1, kind: input, shape index: {}]
  %s2 = inlined_call_operand.vmem [shape: f32[10,256], index: 2, kind: input, shape index: {}, may-alias: {2,3}]
  %s3 = inlined_call_operand.vmem [shape: f32[10,256], index: 3, kind: output, shape index: {}, may-alias: {2,3}]
  %s4 = sld [smem:[#allocation0]]
  $region22: #{a_call__.21} parent=0
    _
  %s6 = ssub.s32 1, %s4
  %s7 = scalar_select 0, %s6, %s4
  // Predicated region
  $region2: #{a_call__.21} parent=0 // pred_check
    _
  $region3: #{a_call__.21} parent=0 // pred_check_branch
    %9 = sbr.rel (0) target = $region5
  $region4: #{a_call__.21} parent=0 // pred_region
    _
  $region5: #{a_call__.21} parent=0 // pred_fallthru
    _
  // Predicated region
  $region6: #{a_call__.21} parent=0 // pred_check
    _
  $region7: #{a_call__.21} parent=0 // pred_check_branch
    %11 = sbr.rel (0) target = $region9
  $region8: #{a_call__.21} parent=0 // pred_region
    _
  $region9: #{a_call__.21} parent=0 // pred_fallthru
    _
  // Predicated region
  $region10: #{a_call__.21} parent=0 // pred_check
    _
  $region11: #{a_call__.21} parent=0 // pred_check_branch
    %13 = sbr.rel (0) target = $region13
  $region12: #{a_call__.21} parent=0 // pred_region
    _
  $region13: #{a_call__.21} parent=0 // pred_fallthru
    _
  %v15 = vld [vmem:[%s0] sm:$0xff]
  %v16 = vld [vmem:[%s0 + $0x8] sm:$0x11]
  %v17 = vld [vmem:[%s1] sm:$0xff]
  %v18 = vld [vmem:[%s1 + $0x8] sm:$0xff]
  %v19 = vld [vmem:[%s1 + $0x10] sm:$0xff]
  %v20 = vld [vmem:[%s1 + $0x18] sm:$0xff]
  %v21 = vld [vmem:[%s1 + $0x20] sm:$0xff]
  %v22 = vld [vmem:[%s1 + $0x28] sm:$0xff]
  %v23 = vld [vmem:[%s1 + $0x30] sm:$0xff]
  %v24 = vld [vmem:[%s1 + $0x38] sm:$0xff]
  %v25 = vld [vmem:[%s1 + $0x40] sm:$0xff]
  %v26 = vld [vmem:[%s1 + $0x48] sm:$0xff]
  %v27 = vld [vmem:[%s1 + $0x50] sm:$0xff]
  %v28 = vld [vmem:[%s1 + $0x58] sm:$0xff]
  %v29 = vld [vmem:[%s1 + $0x60] sm:$0xff]
  %v30 = vld [vmem:[%s1 + $0x68] sm:$0xff]
  %v31 = vld [vmem:[%s1 + $0x70] sm:$0xff]
  %v32 = vld [vmem:[%s1 + $0x78] sm:$0xff]
  %v33 = vld [vmem:[%s1 + $0x80] sm:$0xff]
  %v34 = vld [vmem:[%s1 + $0x88] sm:$0xff]
  %v37 = vunpack.c.l.b16 %v15
  %v38 = vunpack.c.h.b16 %v15
  %v39 = vunpack.c.l.b16 %v16
  %v40 = vunpack.c.h.b16 %v16
  %v41 = vpack.c.b16 %v39, %v37
  %v42 = vpack.c.b16 %v40, %v38
  %v62 = vunpack.c.l.b16 %v17
  %v63 = vunpack.c.h.b16 %v17
  %v64 = vunpack.c.l.b16 %v18
  %v65 = vunpack.c.h.b16 %v18
  %v66 = vunpack.c.l.b16 %v19
  %v67 = vunpack.c.h.b16 %v19
  %v68 = vunpack.c.l.b16 %v20
  %v69 = vunpack.c.h.b16 %v20
  %v70 = vunpack.c.l.b16 %v21
  %v71 = vunpack.c.h.b16 %v21
  %v72 = vunpack.c.l.b16 %v22
  %v73 = vunpack.c.h.b16 %v22
  %v74 = vunpack.c.l.b16 %v23
  %v75 = vunpack.c.h.b16 %v23
  %v76 = vunpack.c.l.b16 %v24
  %v77 = vunpack.c.h.b16 %v24
  %v78 = vunpack.c.l.b16 %v25
  %v79 = vunpack.c.h.b16 %v25
  %v80 = vunpack.c.l.b16 %v26
  %v81 = vunpack.c.h.b16 %v26
  %v82 = vunpack.c.l.b16 %v27
  %v83 = vunpack.c.h.b16 %v27
  %v84 = vunpack.c.l.b16 %v28
  %v85 = vunpack.c.h.b16 %v28
  %v86 = vunpack.c.l.b16 %v29
  %v87 = vunpack.c.h.b16 %v29
  %v88 = vunpack.c.l.b16 %v30
  %v89 = vunpack.c.h.b16 %v30
  %v90 = vunpack.c.l.b16 %v31
  %v91 = vunpack.c.h.b16 %v31
  %v92 = vunpack.c.l.b16 %v32
  %v93 = vunpack.c.h.b16 %v32
  %v94 = vunpack.c.l.b16 %v33
  %v95 = vunpack.c.h.b16 %v33
  %v96 = vunpack.c.l.b16 %v34
  %v97 = vunpack.c.h.b16 %v34
  %v98 = vpack.c.b16 %v64, %v62
  %v99 = vpack.c.b16 %v65, %v63
  %v100 = vpack.c.b16 %v68, %v66
  %v101 = vpack.c.b16 %v69, %v67
  %v102 = vpack.c.b16 %v72, %v70
  %v103 = vpack.c.b16 %v73, %v71
  %v104 = vpack.c.b16 %v76, %v74
  %v105 = vpack.c.b16 %v77, %v75
  %v106 = vpack.c.b16 %v80, %v78
  %v107 = vpack.c.b16 %v81, %v79
  %v108 = vpack.c.b16 %v84, %v82
  %v109 = vpack.c.b16 %v85, %v83
  %v110 = vpack.c.b16 %v88, %v86
  %v111 = vpack.c.b16 %v89, %v87
  %v112 = vpack.c.b16 %v92, %v90
  %v113 = vpack.c.b16 %v93, %v91
  %v114 = vpack.c.b16 %v96, %v94
  %v115 = vpack.c.b16 %v97, %v95
  %vm134 = vcmask 130048
  %v136 = vsel %vm134, %v42, 0
  %138 = vmatprep.subr.bf16.mxu0 %v99
  %139 = vmatpush1.bf16.msra.mxu0 %v98
  %140 = vmatprep.subr.bf16.mxu0 %v101
  %141 = vmatpush1.bf16.msra.mxu0 %v100
  %142 = vmatprep.subr.bf16.mxu0 %v103
  %143 = vmatpush1.bf16.msra.mxu0 %v102
  %144 = vmatprep.subr.bf16.mxu0 %v105
  %145 = vmatpush1.bf16.msra.mxu0 %v104
  %146 = vmatprep.subr.bf16.mxu0 %v107
  %147 = vmatpush1.bf16.msra.mxu0 %v106
  %148 = vmatprep.subr.bf16.mxu0 %v109
  %149 = vmatpush1.bf16.msra.mxu0 %v108
  %150 = vmatprep.subr.bf16.mxu0 %v111
  %151 = vmatpush1.bf16.msra.mxu0 %v110
  %152 = vmatprep.subr.bf16.mxu0 %v113
  %153 = vmatpush1.bf16.msra.mxu0 %v112
  %154 = vmatprep.subr.bf16.mxu0 %v115
  %155 = vmatpush1.bf16.msra.mxu0 %v114
  %156 = vmatprep.subr.bf16.mxu0 0
  %157 = vmatpush1.bf16.msra.mxu0 0
  %158 = vmatprep.subr.bf16.mxu0 0
  %159 = vmatpush1.bf16.msra.mxu0 0
  %160 = vmatprep.subr.bf16.mxu0 0
  %161 = vmatpush1.bf16.msra.mxu0 0
  %162 = vmatprep.subr.bf16.mxu0 0
  %163 = vmatpush1.bf16.msra.mxu0 0
  %164 = vmatprep.subr.bf16.mxu0 0
  %165 = vmatpush1.bf16.msra.mxu0 0
  %166 = vmatprep.subr.bf16.mxu0 0
  %167 = vmatpush1.bf16.msra.mxu0 0
  %168 = vmatprep.subr.bf16.mxu0 0
  %169 = vmatpush1.bf16.msra.mxu0 0
  %170 = vmatprep.mubr.bf16.mxu0 %v136
  %171 = vmatmul.mubr.bf16.gmra.mrb[0].mxu0 %v41
  %v172 = vpop.f32.mrb[0].mxu0
  %v173 = vadd.f32 0.0, %v172
  %v174 = vpop.f32.mrb[0].mxu0
  %v175 = vadd.f32 0.0, %v174
  %v176 = vpop.f32.mrb[0].mxu0
  %v177 = vadd.f32 0.0, %v176
  %v178 = vpop.f32.mrb[0].mxu0
  %v179 = vadd.f32 0.0, %v178
  %180 = vdwg.mxu0
  %v181 = vld [vmem:[%s2] sm:$0xff]
  %v182 = vld [vmem:[%s2 + $0x8] sm:$0xff]
  %v183 = vld [vmem:[%s2 + $0x10] sm:$0x3]
  %v184 = vld [vmem:[%s2 + $0x18] sm:$0x3]
  %v185 = vmax.f32 %v181, %v173
  %v186 = vmax.f32 %v182, %v175
  %v187 = vmax.f32 %v183, %v177
  %v188 = vmax.f32 %v184, %v179
  %189 = vst [vmem:[%s3] sm:$0xff] %v185
  %190 = vst [vmem:[%s3 + $0x8] sm:$0xff] %v186
  %191 = vst [vmem:[%s3 + $0x10] sm:$0x3] %v187
  %192 = vst [vmem:[%s3 + $0x18] sm:$0x3] %v188
  // Predicated region
  $region14: #{a_call__.21} parent=0 // pred_check
    _
  $region15: #{a_call__.21} parent=0 // pred_check_branch
    %194 = sbr.rel (0) target = $region17
  $region16: #{a_call__.21} parent=0 // pred_region
    _
  $region17: #{a_call__.21} parent=0 // pred_fallthru
    _
  // Predicated region
  $region18: #{a_call__.21} parent=0 // pred_check
    _
  $region19: #{a_call__.21} parent=0 // pred_check_branch
    %196 = sbr.rel (0) target = $region21
  $region20: #{a_call__.21} parent=0 // pred_region
    _
  $region21: #{a_call__.21} parent=0 // pred_fallthru
    _

// kernel: a_call__.22
$region0: #{a_call__.22}
  #allocation0 [shape = 'u32[]', space=smem, size = 0x4, offset = 0x4, fixed_abs, tag = 'smem constant byte address 0x4 - core index']
  #allocation1 [shape = 'u32[144,128]{1,0:T(1,128)}', space=vmem, size = 0x12000, scoped, tag = 'internal scratch']
  %s0 = inlined_call_operand.vmem [shape: bf16[2,4,256], index: 0, kind: input, shape index: {}]
  %s1 = inlined_call_operand.vmem [shape: bf16[5,4], index: 1, kind: input, shape index: {}]
  %s2 = inlined_call_operand.vmem [shape: f32[5,1], index: 2, kind: input, shape index: {}]
  %s3 = inlined_call_operand.vmem [shape: f32[2,5,256], index: 3, kind: input, shape index: {}, may-alias: {3,4}]
  %s4 = inlined_call_operand.vmem [shape: f32[2,5,256], index: 4, kind: output, shape index: {}, may-alias: {3,4}]
  %s5 = sld [smem:[#allocation0]]
  $region49: #{a_call__.22} parent=0
    _
  %s7 = ssub.s32 1, %s5
  %s8 = scalar_select 0, %s7, %s5
  loop: start=0, step=1, limit=4
  $region2: #{a_call__.22} parent=0 // loop_pre_header
    _
  $region3: #{a_call__.22} parent=0 // loop_header
    %s10 = sphi 0, %s14
    %p11 = scmp.ge.s32.totalorder %s10, 4
    %s17 = sphi 0, %s29
    %s18 = sphi 0, %s25
    %s19 = sphi 0, %s17
    %s20 = sphi 0, %s18
    %s21 = sphi 0, %s19
    %s22 = sphi 0, %s20
    %s34 = sphi 0, %s36
    %s37 = sphi 0, %s34
    %s38 = sphi 0, %s37
    %s54 = sphi 0, %s38
    %s58 = sphi 0, %s58
    %s60 = sphi 0, %s58
    %s61 = sphi 0, %s60
    %s75 = sphi 0, %s61
    %s79 = sphi 0, %s79
    %s81 = sphi 0, %s79
    %s82 = sphi 0, %s81
    %s96 = sphi 0, %s82
    %s104 = sphi 0, %s106
    %s107 = sphi 0, %s104
    %s108 = sphi 0, %s107
    %s124 = sphi 0, %s108
    %s132 = sphi 0, %s134
    %s135 = sphi 0, %s132
    %s136 = sphi 0, %s135
    %s152 = sphi 0, %s136
  $region4: #{a_call__.22} parent=0 // loop_header_branch
    %13 = sbr.rel (%p11) target = $region8
  $region5: #{a_call__.22} parent=0 // loop_body
    %s15 = ssub.s32 %s10, 1
    %s16 = ssub.s32 %s10, 2
    %s23 = sadd.s32 1, %s18
    %p24 = scmp.ge.s32.totalorder %s23, 1
    %s25 = scalar_select %p24, 0, %s23
    %s26 = sadd.s32 1, %s17
    %s27 = scalar_select %p24, %s26, %s17
    %p28 = scmp.ge.s32.totalorder %s27, 2
    %s29 = scalar_select %p28, 0, %s27
    %s30 = ssub.s32 %s17, %s29
    %s31 = ssub.s32 %s18, %s25
    %s32 = sor.u32 %s30, %s31
    %p33 = scmp.eq.s32.totalorder %s32, 0
    %s35 = sadd.s32 %s34, 1
    %s36 = scalar_select %p33, %s34, %s35
    %p39 = pneg %p33
    %p40 = scmp.eq.s32.totalorder %s10, 1
    %p41 = por %p39, %p40
    %p42 = scmp.ne.s32.totalorder %s34, %s37
    %p43 = scmp.eq.s32.totalorder %s10, 0
    %p44 = por %p42, %p43
    %p45 = scmp.ne.s32.totalorder %s34, %s37
    %p46 = scmp.eq.s32.totalorder %s15, 1
    %p47 = por %p45, %p46
    %p48 = scmp.ne.s32.totalorder %s37, %s38
    %p49 = scmp.eq.s32.totalorder %s15, 0
    %p50 = por %p48, %p49
    %p51 = scmp.ne.s32.totalorder %s37, %s38
    %p52 = scmp.eq.s32.totalorder %s16, 1
    %p53 = por %p51, %p52
    %p55 = scmp.ne.s32.totalorder %s38, %s54
    %p56 = scmp.eq.s32.totalorder %s16, 0
    %p57 = por %p55, %p56
    %s59 = sadd.s32 %s58, 1
    %p62 = scmp.eq.s32.totalorder %s10, 1
    %p63 = scmp.ne.s32.totalorder %s58, %s60
    %p64 = scmp.eq.s32.totalorder %s10, 0
    %p65 = por %p63, %p64
    %p66 = scmp.ne.s32.totalorder %s58, %s60
    %p67 = scmp.eq.s32.totalorder %s15, 1
    %p68 = por %p66, %p67
    %p69 = scmp.ne.s32.totalorder %s60, %s61
    %p70 = scmp.eq.s32.totalorder %s15, 0
    %p71 = por %p69, %p70
    %p72 = scmp.ne.s32.totalorder %s60, %s61
    %p73 = scmp.eq.s32.totalorder %s16, 1
    %p74 = por %p72, %p73
    %p76 = scmp.ne.s32.totalorder %s61, %s75
    %p77 = scmp.eq.s32.totalorder %s16, 0
    %p78 = por %p76, %p77
    %s80 = sadd.s32 %s79, 1
    %p83 = scmp.eq.s32.totalorder %s10, 1
    %p84 = scmp.ne.s32.totalorder %s79, %s81
    %p85 = scmp.eq.s32.totalorder %s10, 0
    %p86 = por %p84, %p85
    %p87 = scmp.ne.s32.totalorder %s79, %s81
    %p88 = scmp.eq.s32.totalorder %s15, 1
    %p89 = por %p87, %p88
    %p90 = scmp.ne.s32.totalorder %s81, %s82
    %p91 = scmp.eq.s32.totalorder %s15, 0
    %p92 = por %p90, %p91
    %p93 = scmp.ne.s32.totalorder %s81, %s82
    %p94 = scmp.eq.s32.totalorder %s16, 1
    %p95 = por %p93, %p94
    %p97 = scmp.ne.s32.totalorder %s82, %s96
    %p98 = scmp.eq.s32.totalorder %s16, 0
    %p99 = por %p97, %p98
    %s100 = ssub.s32 %s17, %s29
    %s101 = ssub.s32 %s18, %s25
    %s102 = sor.u32 %s100, %s101
    %p103 = scmp.eq.s32.totalorder %s102, 0
    %s105 = sadd.s32 %s104, 1
    %s106 = scalar_select %p103, %s104, %s105
    %p109 = pneg %p103
    %p110 = scmp.eq.s32.totalorder %s10, 1
    %p111 = por %p109, %p110
    %p112 = scmp.ne.s32.totalorder %s104, %s107
    %p113 = scmp.eq.s32.totalorder %s10, 0
    %p114 = por %p112, %p113
    %p115 = scmp.ne.s32.totalorder %s104, %s107
    %p116 = scmp.eq.s32.totalorder %s15, 1
    %p117 = por %p115, %p116
    %p118 = scmp.ne.s32.totalorder %s107, %s108
    %p119 = scmp.eq.s32.totalorder %s15, 0
    %p120 = por %p118, %p119
    %p121 = scmp.ne.s32.totalorder %s107, %s108
    %p122 = scmp.eq.s32.totalorder %s16, 1
    %p123 = por %p121, %p122
    %p125 = scmp.ne.s32.totalorder %s108, %s124
    %p126 = scmp.eq.s32.totalorder %s16, 0
    %p127 = por %p125, %p126
    %s128 = ssub.s32 %s17, %s29
    %s129 = ssub.s32 %s18, %s25
    %s130 = sor.u32 %s128, %s129
    %p131 = scmp.eq.s32.totalorder %s130, 0
    %s133 = sadd.s32 %s132, 1
    %s134 = scalar_select %p131, %s132, %s133
    %p137 = pneg %p131
    %p138 = scmp.eq.s32.totalorder %s10, 1
    %p139 = por %p137, %p138
    %p140 = scmp.ne.s32.totalorder %s132, %s135
    %p141 = scmp.eq.s32.totalorder %s10, 0
    %p142 = por %p140, %p141
    %p143 = scmp.ne.s32.totalorder %s132, %s135
    %p144 = scmp.eq.s32.totalorder %s15, 1
    %p145 = por %p143, %p144
    %p146 = scmp.ne.s32.totalorder %s135, %s136
    %p147 = scmp.eq.s32.totalorder %s15, 0
    %p148 = por %p146, %p147
    %p149 = scmp.ne.s32.totalorder %s135, %s136
    %p150 = scmp.eq.s32.totalorder %s16, 1
    %p151 = por %p149, %p150
    %p153 = scmp.ne.s32.totalorder %s136, %s152
    %p154 = scmp.eq.s32.totalorder %s16, 0
    %p155 = por %p153, %p154
    %p156 = scmp.le.s32.totalorder 1, %s10
    %p157 = scmp.lt.s32.totalorder %s10, 3
    %p158 = pnand %p156, %p157
    %p159 = pneg %p158
    // Predicated region
    $region9: #{a_call__.22} parent=5 // pred_check
      _
    $region10: #{a_call__.22} parent=5 // pred_check_branch
      %161 = sbr.rel (%p158) target = $region12
    $region11: #{a_call__.22} parent=5 // pred_region
      %s162 = ssub.s32 %s10, 1
      // Predicated region
      $region13: #{a_call__.22} parent=11 // pred_check
        %p163 = pneg %p71
      $region14: #{a_call__.22} parent=11 // pred_check_branch
        %165 = sbr.rel (%p163) target = $region16
      $region15: #{a_call__.22} parent=11 // pred_region
        _
      $region16: #{a_call__.22} parent=11 // pred_fallthru
        _
      // Predicated region
      $region17: #{a_call__.22} parent=11 // pred_check
        %p166 = pneg %p92
      $region18: #{a_call__.22} parent=11 // pred_check_branch
        %168 = sbr.rel (%p166) target = $region20
      $region19: #{a_call__.22} parent=11 // pred_region
        _
      $region20: #{a_call__.22} parent=11 // pred_fallthru
        _
    $region12: #{a_call__.22} parent=5 // pred_fallthru
      _
    %p169 = scmp.lt.s32.totalorder %s10, 2
    // Predicated region
    $region21: #{a_call__.22} parent=5 // pred_check
      %p170 = pneg %p169
    $region22: #{a_call__.22} parent=5 // pred_check_branch
      %172 = sbr.rel (%p170) target = $region24
    $region23: #{a_call__.22} parent=5 // pred_region
      // Predicated region
      $region25: #{a_call__.22} parent=23 // pred_check
        %p173 = pneg %p44
      $region26: #{a_call__.22} parent=23 // pred_check_branch
        %175 = sbr.rel (%p173) target = $region28
      $region27: #{a_call__.22} parent=23 // pred_region
        %s176 = smul.u32 2, %s18
        %p177 = scmp.lt.s32.totalorder %s17, 1
        %s178 = scalar_select %p177, %s17, 1
        %p179 = scmp.lt.s32.totalorder %s176, 1
        %s180 = scalar_select %p179, %s176, 1
        %s181 = smul.addr %s178, 2
        %s182 = sadd.s32 %s180, %s181
        %s183 = smul.addr %s182, 2
        %s184 = scalar_lea.vmem %s0, %s183
        %s185 = smul.u32 2, %s18
      $region28: #{a_call__.22} parent=23 // pred_fallthru
        _
      // Predicated region
      $region29: #{a_call__.22} parent=23 // pred_check
        %p186 = pneg %p114
      $region30: #{a_call__.22} parent=23 // pred_check_branch
        %188 = sbr.rel (%p186) target = $region32
      $region31: #{a_call__.22} parent=23 // pred_region
        %s189 = smul.u32 2, %s18
        %p190 = scmp.lt.s32.totalorder %s17, 1
        %s191 = scalar_select %p190, %s17, 1
        %p192 = scmp.lt.s32.totalorder %s189, 1
        %s193 = scalar_select %p192, %s189, 1
        %s194 = smul.addr %s191, 2
        %s195 = sadd.s32 %s193, %s194
        %s196 = smul.addr %s195, 8
        %s197 = scalar_lea.vmem %s3, %s196
        %s198 = smul.u32 2, %s18
      $region32: #{a_call__.22} parent=23 // pred_fallthru
        _
    $region24: #{a_call__.22} parent=5 // pred_fallthru
      _
    %p199 = scmp.le.s32.totalorder 1, %s10
    %p200 = scmp.lt.s32.totalorder %s10, 3
    %p201 = pnand %p199, %p200
    %p202 = pneg %p201
    // Predicated region
    $region33: #{a_call__.22} parent=5 // pred_check
      _
    $region34: #{a_call__.22} parent=5 // pred_check_branch
      %204 = sbr.rel (%p201) target = $region36
    $region35: #{a_call__.22} parent=5 // pred_region
      %s205 = ssub.s32 %s10, 1
      %s206 = smul.u32 2, %s20
      %p207 = scmp.lt.s32.totalorder %s19, 1
      %s208 = scalar_select %p207, %s19, 1
      %p209 = scmp.lt.s32.totalorder %s206, 1
      %s210 = scalar_select %p209, %s206, 1
      %s211 = smul.addr %s208, 2
      %s212 = sadd.s32 %s210, %s211
      %s213 = smul.addr %s212, 2
      %s214 = scalar_lea.vmem %s0, %s213
      %p215 = pneg %p50
      %p216 = pneg %p47
      %p217 = pneg %p71
      %p218 = pneg %p68
      %p219 = pneg %p92
      %p220 = pneg %p89
      %s221 = smul.u32 2, %s20
      %p222 = scmp.lt.s32.totalorder %s19, 1
      %s223 = scalar_select %p222, %s19, 1
      %p224 = scmp.lt.s32.totalorder %s221, 1
      %s225 = scalar_select %p224, %s221, 1
      %s226 = smul.addr %s223, 2
      %s227 = sadd.s32 %s225, %s226
      %s228 = smul.addr %s227, 8
      %s229 = scalar_lea.vmem %s3, %s228
      %p230 = pneg %p120
      %p231 = pneg %p117
      %p232 = pneg %p148
      %p233 = pneg %p145
      %s234 = smul.u32 2, %s20
      %p235 = scmp.lt.s32.totalorder %s19, 1
      %s236 = scalar_select %p235, %s19, 1
      %p237 = scmp.lt.s32.totalorder %s234, 1
      %s238 = scalar_select %p237, %s234, 1
      %s239 = smul.addr %s236, 2
      %s240 = sadd.s32 %s238, %s239
      %s241 = smul.addr %s240, 8
      %s242 = scalar_lea.vmem %s4, %s241
      %s243 = smul.u32 2, %s20
      %p244 = scmp.lt.s32.totalorder %s19, 1
      %s245 = scalar_select %p244, %s19, 1
      %p246 = scmp.lt.s32.totalorder %s243, 1
      %s247 = scalar_select %p246, %s243, 1
      %s248 = smul.addr %s245, 2
      %s249 = sadd.s32 %s247, %s248
      %s250 = smul.addr %s249, 2
      %s251 = scalar_lea.vmem %s0, %s250
      %s252 = smul.u32 2, %s20
      %s253 = smul.u32 2, %s20
      %p254 = scmp.lt.s32.totalorder %s19, 1
      %s255 = scalar_select %p254, %s19, 1
      %p256 = scmp.lt.s32.totalorder %s253, 1
      %s257 = scalar_select %p256, %s253, 1
      %s258 = smul.addr %s255, 2
      %s259 = sadd.s32 %s257, %s258
      %s260 = smul.addr %s259, 8
      %s261 = scalar_lea.vmem %s3, %s260
      %s262 = smul.u32 2, %s20
      %s263 = smul.u32 2, %s20
      %p264 = scmp.lt.s32.totalorder %s19, 1
      %s265 = scalar_select %p264, %s19, 1
      %p266 = scmp.lt.s32.totalorder %s263, 1
      %s267 = scalar_select %p266, %s263, 1
      %s268 = smul.addr %s265, 2
      %s269 = sadd.s32 %s267, %s268
      %s270 = smul.addr %s269, 8
      %s271 = scalar_lea.vmem %s4, %s270
      %s272 = smul.u32 2, %s20
      %v274 = vld [vmem:[%s1] sm:$0x7]
      %v275 = vld [vmem:[%s251] sm:$0xf]
      %v276 = vld [vmem:[%s2] sm:$0x1f]
      %278 = vset.pattern.permute.xlu0 0
      %279 = vperm.xlu0 %278, %v276
      %v280 = vpop.permute.xlu0 %279
      %v284 = vunpack.c.l.s4 1983009808
      %v285 = vunpack.c.0.s8 %v284
      %v286 = vlaneseq
      %v287 = vshrl.u32 %v286, 7
      %v288 = vsub.s32 %v285, %v287
      %v289 = vrot.slane %v275, %v288
      %v290 = vcombine.high %v289, %v289
      %vm291 = vcmask 31744
      %v293 = vsel %vm291, %v274, 0
      %vm295 = vcmask 1041408
      %v297 = vsel %vm295, %v289, 0
      %v300 = vsel %vm295, %v290, 0
      %302 = vmatprep.subr.bf16.mxu0 %v300
      %303 = vmatpush1.bf16.msra.mxu0 %v297
      %304 = vmatprep.subr.bf16.mxu0 0
      %305 = vmatpush1.bf16.msra.mxu0 0
      %306 = vmatprep.subr.bf16.mxu0 0
      %307 = vmatpush1.bf16.msra.mxu0 0
      %308 = vmatprep.subr.bf16.mxu0 0
      %309 = vmatpush1.bf16.msra.mxu0 0
      %310 = vmatprep.subr.bf16.mxu0 0
      %311 = vmatpush1.bf16.msra.mxu0 0
      %312 = vmatprep.subr.bf16.mxu0 0
      %313 = vmatpush1.bf16.msra.mxu0 0
      %314 = vmatprep.subr.bf16.mxu0 0
      %315 = vmatpush1.bf16.msra.mxu0 0
      %316 = vmatprep.subr.bf16.mxu0 0
      %317 = vmatpush1.bf16.msra.mxu0 0
      %318 = vmatprep.subr.bf16.mxu0 0
      %319 = vmatpush1.bf16.msra.mxu0 0
      %320 = vmatprep.subr.bf16.mxu0 0
      %321 = vmatpush1.bf16.msra.mxu0 0
      %322 = vmatprep.subr.bf16.mxu0 0
      %323 = vmatpush1.bf16.msra.mxu0 0
      %324 = vmatprep.subr.bf16.mxu0 0
      %325 = vmatpush1.bf16.msra.mxu0 0
      %326 = vmatprep.subr.bf16.mxu0 0
      %327 = vmatpush1.bf16.msra.mxu0 0
      %328 = vmatprep.subr.bf16.mxu0 0
      %329 = vmatpush1.bf16.msra.mxu0 0
      %330 = vmatprep.subr.bf16.mxu0 0
      %331 = vmatpush1.bf16.msra.mxu0 0
      %332 = vmatprep.subr.bf16.mxu0 0
      %333 = vmatpush1.bf16.msra.mxu0 0
      %334 = vmatprep.mubr.bf16.mxu0 0
      %335 = vmatmul.mubr.bf16.gmra.mrb[0].mxu0 %v293
      %v336 = vpop.f32.mrb[0].mxu0
      %v337 = vadd.f32 %v280, %v336
      %v338 = vpop.f32.mrb[0].mxu0
      %v339 = vadd.f32 %v280, %v338
      %v340 = vpop.f32.mrb[0].mxu0
      %v341 = vpop.f32.mrb[0].mxu0
      %342 = vdwg.mxu0
      %v343 = vld [vmem:[%s261] sm:$0x1f]
      %v344 = vld [vmem:[%s261 + $0x8] sm:$0x1f]
      %v345 = vmax.f32 %v343, %v337
      %v346 = vmax.f32 %v344, %v339
      %347 = vst [vmem:[%s271] sm:$0x1f] %v345
      %348 = vst [vmem:[%s271 + $0x8] sm:$0x1f] %v346
      %s349 = smul.u32 2, %s20
      %p350 = scmp.lt.s32.totalorder %s19, 1
      %s351 = scalar_select %p350, %s19, 1
      %p352 = scmp.lt.s32.totalorder %s349, 1
      %s353 = scalar_select %p352, %s349, 1
      %s354 = smul.addr %s351, 2
      %s355 = sadd.s32 %s353, %s354
      %s356 = smul.addr %s355, 8
      %s357 = scalar_lea.vmem %s4, %s356
      // Predicated region
      $region37: #{a_call__.22} parent=35 // pred_check
        %p358 = pneg %p145
      $region38: #{a_call__.22} parent=35 // pred_check_branch
        %360 = sbr.rel (%p358) target = $region40
      $region39: #{a_call__.22} parent=35 // pred_region
        %s361 = smul.u32 2, %s20
      $region40: #{a_call__.22} parent=35 // pred_fallthru
        _
    $region36: #{a_call__.22} parent=5 // pred_fallthru
      _
    %p362 = scmp.le.s32.totalorder 2, %s10
    // Predicated region
    $region41: #{a_call__.22} parent=5 // pred_check
      %p363 = pneg %p362
    $region42: #{a_call__.22} parent=5 // pred_check_branch
      %365 = sbr.rel (%p363) target = $region44
    $region43: #{a_call__.22} parent=5 // pred_region
      %s366 = ssub.s32 %s10, 2
      // Predicated region
      $region45: #{a_call__.22} parent=43 // pred_check
        %p367 = pneg %p151
      $region46: #{a_call__.22} parent=43 // pred_check_branch
        %369 = sbr.rel (%p367) target = $region48
      $region47: #{a_call__.22} parent=43 // pred_region
        %s370 = smul.u32 2, %s22
        %p371 = scmp.lt.s32.totalorder %s21, 1
        %s372 = scalar_select %p371, %s21, 1
        %p373 = scmp.lt.s32.totalorder %s370, 1
        %s374 = scalar_select %p373, %s370, 1
        %s375 = smul.addr %s372, 2
        %s376 = sadd.s32 %s374, %s375
        %s377 = smul.addr %s376, 8
        %s378 = scalar_lea.vmem %s4, %s377
      $region48: #{a_call__.22} parent=43 // pred_fallthru
        _
    $region44: #{a_call__.22} parent=5 // pred_fallthru
      _
  $region6: #{a_call__.22} parent=0 // loop_footer
    %s14 = sadd.s32 1, %s10
  $region7: #{a_call__.22} parent=0 // loop_footer_branch
    %9 = sbr.rel target = $region3
  $region8: #{a_call__.22} parent=0 // loop_exit
    _

// kernel: a_call__.23
$region0: #{a_call__.23}
  #allocation0 [shape = 'u32[]', space=smem, size = 0x4, offset = 0x4, fixed_abs, tag = 'smem constant byte address 0x4 - core index']
  #allocation1 [shape = 'u32[144,128]{1,0:T(1,128)}', space=vmem, size = 0x12000, scoped, tag = 'internal scratch']
  %s0 = inlined_call_operand.vmem [shape: bf16[8,256], index: 0, kind: input, shape index: {}]
  %s1 = inlined_call_operand.vmem [shape: bf16[256,400], index: 1, kind: input, shape index: {}]
  %s2 = inlined_call_operand.vmem [shape: bf16[8,400], index: 2, kind: output, shape index: {}]
  %s3 = sld [smem:[#allocation0]]
  $region18: #{a_call__.23} parent=0
    _
  %s5 = ssub.s32 1, %s3
  %s6 = scalar_select 0, %s5, %s3
  // Predicated region
  $region2: #{a_call__.23} parent=0 // pred_check
    _
  $region3: #{a_call__.23} parent=0 // pred_check_branch
    %8 = sbr.rel (0) target = $region5
  $region4: #{a_call__.23} parent=0 // pred_region
    _
  $region5: #{a_call__.23} parent=0 // pred_fallthru
    _
  // Predicated region
  $region6: #{a_call__.23} parent=0 // pred_check
    _
  $region7: #{a_call__.23} parent=0 // pred_check_branch
    %10 = sbr.rel (0) target = $region9
  $region8: #{a_call__.23} parent=0 // pred_region
    _
  $region9: #{a_call__.23} parent=0 // pred_fallthru
    _
  %v11 = vld [vmem:[%s0] sm:$0xff]
  %v12 = vld [vmem:[%s1] sm:$0xff]
  %v13 = vld [vmem:[%s1 + $0x8] sm:$0xff]
  %v14 = vld [vmem:[%s1 + $0x10] sm:$0xff]
  %v15 = vld [vmem:[%s1 + $0x18] sm:$0xff]
  %v16 = vld [vmem:[%s1 + $0x20] sm:$0xff]
  %v17 = vld [vmem:[%s1 + $0x28] sm:$0xff]
  %v18 = vld [vmem:[%s1 + $0x30] sm:$0xff]
  %v19 = vld [vmem:[%s1 + $0x38] sm:$0xff]
  %v20 = vld [vmem:[%s1 + $0x40] sm:$0xff]
  %v21 = vld [vmem:[%s1 + $0x48] sm:$0xff]
  %v22 = vld [vmem:[%s1 + $0x50] sm:$0xff]
  %v23 = vld [vmem:[%s1 + $0x58] sm:$0xff]
  %v24 = vld [vmem:[%s1 + $0x60] sm:$0xff]
  %v25 = vld [vmem:[%s1 + $0x68] sm:$0xff]
  %v26 = vld [vmem:[%s1 + $0x70] sm:$0xff]
  %v27 = vld [vmem:[%s1 + $0x78] sm:$0xff]
  %v28 = vld [vmem:[%s1 + $0x80] sm:$0xff]
  %v29 = vld [vmem:[%s1 + $0x88] sm:$0xff]
  %v30 = vld [vmem:[%s1 + $0x90] sm:$0xff]
  %v31 = vld [vmem:[%s1 + $0x98] sm:$0xff]
  %v32 = vld [vmem:[%s1 + $0xa0] sm:$0xff]
  %v33 = vld [vmem:[%s1 + $0xa8] sm:$0xff]
  %v34 = vld [vmem:[%s1 + $0xb0] sm:$0xff]
  %v35 = vld [vmem:[%s1 + $0xb8] sm:$0xff]
  %v36 = vld [vmem:[%s1 + $0xc0] sm:$0xff]
  %v37 = vld [vmem:[%s1 + $0xc8] sm:$0xff]
  %v38 = vld [vmem:[%s1 + $0xd0] sm:$0xff]
  %v39 = vld [vmem:[%s1 + $0xd8] sm:$0xff]
  %v40 = vld [vmem:[%s1 + $0xe0] sm:$0xff]
  %v41 = vld [vmem:[%s1 + $0xe8] sm:$0xff]
  %v42 = vld [vmem:[%s1 + $0xf0] sm:$0xff]
  %v43 = vld [vmem:[%s1 + $0xf8] sm:$0xff]
  %v44 = vld [vmem:[%s1 + $0x100] sm:$0xff]
  %v45 = vld [vmem:[%s1 + $0x108] sm:$0xff]
  %v46 = vld [vmem:[%s1 + $0x110] sm:$0xff]
  %v47 = vld [vmem:[%s1 + $0x118] sm:$0xff]
  %v48 = vld [vmem:[%s1 + $0x120] sm:$0xff]
  %v49 = vld [vmem:[%s1 + $0x128] sm:$0xff]
  %v50 = vld [vmem:[%s1 + $0x130] sm:$0xff]
  %v51 = vld [vmem:[%s1 + $0x138] sm:$0xff]
  %v52 = vld [vmem:[%s1 + $0x140] sm:$0xff]
  %v53 = vld [vmem:[%s1 + $0x148] sm:$0xff]
  %v54 = vld [vmem:[%s1 + $0x150] sm:$0xff]
  %v55 = vld [vmem:[%s1 + $0x158] sm:$0xff]
  %v56 = vld [vmem:[%s1 + $0x160] sm:$0xff]
  %v57 = vld [vmem:[%s1 + $0x168] sm:$0xff]
  %v58 = vld [vmem:[%s1 + $0x170] sm:$0xff]
  %v59 = vld [vmem:[%s1 + $0x178] sm:$0xff]
  %v60 = vld [vmem:[%s1 + $0x180] sm:$0xff]
  %v61 = vld [vmem:[%s1 + $0x188] sm:$0xff]
  %v62 = vld [vmem:[%s1 + $0x190] sm:$0xff]
  %v63 = vld [vmem:[%s1 + $0x198] sm:$0xff]
  %v64 = vld [vmem:[%s1 + $0x1a0] sm:$0xff]
  %v65 = vld [vmem:[%s1 + $0x1a8] sm:$0xff]
  %v66 = vld [vmem:[%s1 + $0x1b0] sm:$0xff]
  %v67 = vld [vmem:[%s1 + $0x1b8] sm:$0xff]
  %v68 = vld [vmem:[%s1 + $0x1c0] sm:$0xff]
  %v69 = vld [vmem:[%s1 + $0x1c8] sm:$0xff]
  %v70 = vld [vmem:[%s1 + $0x1d0] sm:$0xff]
  %v71 = vld [vmem:[%s1 + $0x1d8] sm:$0xff]
  %v72 = vld [vmem:[%s1 + $0x1e0] sm:$0xff]
  %v73 = vld [vmem:[%s1 + $0x1e8] sm:$0xff]
  %v74 = vld [vmem:[%s1 + $0x1f0] sm:$0xff]
  %v75 = vld [vmem:[%s1 + $0x1f8] sm:$0xff]
  %v77 = vunpack.c.l.b16 %v11
  %v78 = vunpack.c.h.b16 %v11
  %v79 = vpack.c.b16 %v77, %v77
  %v80 = vpack.c.b16 %v78, %v78
  %v147 = vunpack.c.l.b16 %v12
  %v148 = vunpack.c.h.b16 %v12
  %v149 = vunpack.c.l.b16 %v13
  %v150 = vunpack.c.h.b16 %v13
  %v151 = vunpack.c.l.b16 %v14
  %v152 = vunpack.c.h.b16 %v14
  %v153 = vunpack.c.l.b16 %v15
  %v154 = vunpack.c.h.b16 %v15
  %v155 = vunpack.c.l.b16 %v16
  %v156 = vunpack.c.h.b16 %v16
  %v157 = vunpack.c.l.b16 %v17
  %v158 = vunpack.c.h.b16 %v17
  %v159 = vunpack.c.l.b16 %v18
  %v160 = vunpack.c.h.b16 %v18
  %v161 = vunpack.c.l.b16 %v19
  %v162 = vunpack.c.h.b16 %v19
  %v163 = vunpack.c.l.b16 %v20
  %v164 = vunpack.c.h.b16 %v20
  %v165 = vunpack.c.l.b16 %v21
  %v166 = vunpack.c.h.b16 %v21
  %v167 = vunpack.c.l.b16 %v22
  %v168 = vunpack.c.h.b16 %v22
  %v169 = vunpack.c.l.b16 %v23
  %v170 = vunpack.c.h.b16 %v23
  %v171 = vunpack.c.l.b16 %v24
  %v172 = vunpack.c.h.b16 %v24
  %v173 = vunpack.c.l.b16 %v25
  %v174 = vunpack.c.h.b16 %v25
  %v175 = vunpack.c.l.b16 %v26
  %v176 = vunpack.c.h.b16 %v26
  %v177 = vunpack.c.l.b16 %v27
  %v178 = vunpack.c.h.b16 %v27
  %v179 = vunpack.c.l.b16 %v28
  %v180 = vunpack.c.h.b16 %v28
  %v181 = vunpack.c.l.b16 %v29
  %v182 = vunpack.c.h.b16 %v29
  %v183 = vunpack.c.l.b16 %v30
  %v184 = vunpack.c.h.b16 %v30
  %v185 = vunpack.c.l.b16 %v31
  %v186 = vunpack.c.h.b16 %v31
  %v187 = vunpack.c.l.b16 %v32
  %v188 = vunpack.c.h.b16 %v32
  %v189 = vunpack.c.l.b16 %v33
  %v190 = vunpack.c.h.b16 %v33
  %v191 = vunpack.c.l.b16 %v34
  %v192 = vunpack.c.h.b16 %v34
  %v193 = vunpack.c.l.b16 %v35
  %v194 = vunpack.c.h.b16 %v35
  %v195 = vunpack.c.l.b16 %v36
  %v196 = vunpack.c.h.b16 %v36
  %v197 = vunpack.c.l.b16 %v37
  %v198 = vunpack.c.h.b16 %v37
  %v199 = vunpack.c.l.b16 %v38
  %v200 = vunpack.c.h.b16 %v38
  %v201 = vunpack.c.l.b16 %v39
  %v202 = vunpack.c.h.b16 %v39
  %v203 = vunpack.c.l.b16 %v40
  %v204 = vunpack.c.h.b16 %v40
  %v205 = vunpack.c.l.b16 %v41
  %v206 = vunpack.c.h.b16 %v41
  %v207 = vunpack.c.l.b16 %v42
  %v208 = vunpack.c.h.b16 %v42
  %v209 = vunpack.c.l.b16 %v43
  %v210 = vunpack.c.h.b16 %v43
  %v211 = vunpack.c.l.b16 %v44
  %v212 = vunpack.c.h.b16 %v44
  %v213 = vunpack.c.l.b16 %v45
  %v214 = vunpack.c.h.b16 %v45
  %v215 = vunpack.c.l.b16 %v46
  %v216 = vunpack.c.h.b16 %v46
  %v217 = vunpack.c.l.b16 %v47
  %v218 = vunpack.c.h.b16 %v47
  %v219 = vunpack.c.l.b16 %v48
  %v220 = vunpack.c.h.b16 %v48
  %v221 = vunpack.c.l.b16 %v49
  %v222 = vunpack.c.h.b16 %v49
  %v223 = vunpack.c.l.b16 %v50
  %v224 = vunpack.c.h.b16 %v50
  %v225 = vunpack.c.l.b16 %v51
  %v226 = vunpack.c.h.b16 %v51
  %v227 = vunpack.c.l.b16 %v52
  %v228 = vunpack.c.h.b16 %v52
  %v229 = vunpack.c.l.b16 %v53
  %v230 = vunpack.c.h.b16 %v53
  %v231 = vunpack.c.l.b16 %v54
  %v232 = vunpack.c.h.b16 %v54
  %v233 = vunpack.c.l.b16 %v55
  %v234 = vunpack.c.h.b16 %v55
  %v235 = vunpack.c.l.b16 %v56
  %v236 = vunpack.c.h.b16 %v56
  %v237 = vunpack.c.l.b16 %v57
  %v238 = vunpack.c.h.b16 %v57
  %v239 = vunpack.c.l.b16 %v58
  %v240 = vunpack.c.h.b16 %v58
  %v241 = vunpack.c.l.b16 %v59
  %v242 = vunpack.c.h.b16 %v59
  %v243 = vunpack.c.l.b16 %v60
  %v244 = vunpack.c.h.b16 %v60
  %v245 = vunpack.c.l.b16 %v61
  %v246 = vunpack.c.h.b16 %v61
  %v247 = vunpack.c.l.b16 %v62
  %v248 = vunpack.c.h.b16 %v62
  %v249 = vunpack.c.l.b16 %v63
  %v250 = vunpack.c.h.b16 %v63
  %v251 = vunpack.c.l.b16 %v64
  %v252 = vunpack.c.h.b16 %v64
  %v253 = vunpack.c.l.b16 %v65
  %v254 = vunpack.c.h.b16 %v65
  %v255 = vunpack.c.l.b16 %v66
  %v256 = vunpack.c.h.b16 %v66
  %v257 = vunpack.c.l.b16 %v67
  %v258 = vunpack.c.h.b16 %v67
  %v259 = vunpack.c.l.b16 %v68
  %v260 = vunpack.c.h.b16 %v68
  %v261 = vunpack.c.l.b16 %v69
  %v262 = vunpack.c.h.b16 %v69
  %v263 = vunpack.c.l.b16 %v70
  %v264 = vunpack.c.h.b16 %v70
  %v265 = vunpack.c.l.b16 %v71
  %v266 = vunpack.c.h.b16 %v71
  %v267 = vunpack.c.l.b16 %v72
  %v268 = vunpack.c.h.b16 %v72
  %v269 = vunpack.c.l.b16 %v73
  %v270 = vunpack.c.h.b16 %v73
  %v271 = vunpack.c.l.b16 %v74
  %v272 = vunpack.c.h.b16 %v74
  %v273 = vunpack.c.l.b16 %v75
  %v274 = vunpack.c.h.b16 %v75
  %v275 = vpack.c.b16 %v151, %v147
  %v276 = vpack.c.b16 %v152, %v148
  %v277 = vpack.c.b16 %v153, %v149
  %v278 = vpack.c.b16 %v154, %v150
  %v279 = vpack.c.b16 %v159, %v155
  %v280 = vpack.c.b16 %v160, %v156
  %v281 = vpack.c.b16 %v161, %v157
  %v282 = vpack.c.b16 %v162, %v158
  %v283 = vpack.c.b16 %v167, %v163
  %v284 = vpack.c.b16 %v168, %v164
  %v285 = vpack.c.b16 %v169, %v165
  %v286 = vpack.c.b16 %v170, %v166
  %v287 = vpack.c.b16 %v175, %v171
  %v288 = vpack.c.b16 %v176, %v172
  %v289 = vpack.c.b16 %v177, %v173
  %v290 = vpack.c.b16 %v178, %v174
  %v291 = vpack.c.b16 %v183, %v179
  %v292 = vpack.c.b16 %v184, %v180
  %v293 = vpack.c.b16 %v185, %v181
  %v294 = vpack.c.b16 %v186, %v182
  %v295 = vpack.c.b16 %v191, %v187
  %v296 = vpack.c.b16 %v192, %v188
  %v297 = vpack.c.b16 %v193, %v189
  %v298 = vpack.c.b16 %v194, %v190
  %v299 = vpack.c.b16 %v199, %v195
  %v300 = vpack.c.b16 %v200, %v196
  %v301 = vpack.c.b16 %v201, %v197
  %v302 = vpack.c.b16 %v202, %v198
  %v303 = vpack.c.b16 %v207, %v203
  %v304 = vpack.c.b16 %v208, %v204
  %v305 = vpack.c.b16 %v209, %v205
  %v306 = vpack.c.b16 %v210, %v206
  %v307 = vpack.c.b16 %v215, %v211
  %v308 = vpack.c.b16 %v216, %v212
  %v309 = vpack.c.b16 %v217, %v213
  %v310 = vpack.c.b16 %v218, %v214
  %v311 = vpack.c.b16 %v223, %v219
  %v312 = vpack.c.b16 %v224, %v220
  %v313 = vpack.c.b16 %v225, %v221
  %v314 = vpack.c.b16 %v226, %v222
  %v315 = vpack.c.b16 %v231, %v227
  %v316 = vpack.c.b16 %v232, %v228
  %v317 = vpack.c.b16 %v233, %v229
  %v318 = vpack.c.b16 %v234, %v230
  %v319 = vpack.c.b16 %v239, %v235
  %v320 = vpack.c.b16 %v240, %v236
  %v321 = vpack.c.b16 %v241, %v237
  %v322 = vpack.c.b16 %v242, %v238
  %v323 = vpack.c.b16 %v247, %v243
  %v324 = vpack.c.b16 %v248, %v244
  %v325 = vpack.c.b16 %v249, %v245
  %v326 = vpack.c.b16 %v250, %v246
  %v327 = vpack.c.b16 %v255, %v251
  %v328 = vpack.c.b16 %v256, %v252
  %v329 = vpack.c.b16 %v257, %v253
  %v330 = vpack.c.b16 %v258, %v254
  %v331 = vpack.c.b16 %v263, %v259
  %v332 = vpack.c.b16 %v264, %v260
  %v333 = vpack.c.b16 %v265, %v261
  %v334 = vpack.c.b16 %v266, %v262
  %v335 = vpack.c.b16 %v271, %v267
  %v336 = vpack.c.b16 %v272, %v268
  %v337 = vpack.c.b16 %v273, %v269
  %v338 = vpack.c.b16 %v274, %v270
  %403 = vmatprep.subr.bf16.mxu0 %v276
  %404 = vmatpush1.bf16.msra.mxu0 %v275
  %405 = vmatprep.subr.bf16.mxu0 %v280
  %406 = vmatpush1.bf16.msra.mxu0 %v279
  %407 = vmatprep.subr.bf16.mxu0 %v284
  %408 = vmatpush1.bf16.msra.mxu0 %v283
  %409 = vmatprep.subr.bf16.mxu0 %v288
  %410 = vmatpush1.bf16.msra.mxu0 %v287
  %411 = vmatprep.subr.bf16.mxu0 %v292
  %412 = vmatpush1.bf16.msra.mxu0 %v291
  %413 = vmatprep.subr.bf16.mxu0 %v296
  %414 = vmatpush1.bf16.msra.mxu0 %v295
  %415 = vmatprep.subr.bf16.mxu0 %v300
  %416 = vmatpush1.bf16.msra.mxu0 %v299
  %417 = vmatprep.subr.bf16.mxu0 %v304
  %418 = vmatpush1.bf16.msra.mxu0 %v303
  %419 = vmatprep.subr.bf16.mxu0 %v308
  %420 = vmatpush1.bf16.msra.mxu0 %v307
  %421 = vmatprep.subr.bf16.mxu0 %v312
  %422 = vmatpush1.bf16.msra.mxu0 %v311
  %423 = vmatprep.subr.bf16.mxu0 %v316
  %424 = vmatpush1.bf16.msra.mxu0 %v315
  %425 = vmatprep.subr.bf16.mxu0 %v320
  %426 = vmatpush1.bf16.msra.mxu0 %v319
  %427 = vmatprep.subr.bf16.mxu0 %v324
  %428 = vmatpush1.bf16.msra.mxu0 %v323
  %429 = vmatprep.subr.bf16.mxu0 %v328
  %430 = vmatpush1.bf16.msra.mxu0 %v327
  %431 = vmatprep.subr.bf16.mxu0 %v332
  %432 = vmatpush1.bf16.msra.mxu0 %v331
  %433 = vmatprep.subr.bf16.mxu0 %v336
  %434 = vmatpush1.bf16.msra.mxu0 %v335
  %435 = vmatprep.mubr.bf16.mxu0 %v80
  %436 = vmatmul.mubr.bf16.gmra.mrb[0].mxu0 %v79
  %v437 = vpop.f32.mrb[0].mxu0
  %v438 = vadd.f32 0.0, %v437
  %v439 = vpop.f32.mrb[0].mxu0
  %v440 = vadd.f32 0.0, %v439
  %v441 = vpop.f32.mrb[0].mxu0
  %v442 = vpop.f32.mrb[0].mxu0
  %443 = vdwg.mxu0
  %444 = vmatprep.subr.bf16.mxu0 %v278
  %445 = vmatpush1.bf16.msra.mxu0 %v277
  %446 = vmatprep.subr.bf16.mxu0 %v282
  %447 = vmatpush1.bf16.msra.mxu0 %v281
  %448 = vmatprep.subr.bf16.mxu0 %v286
  %449 = vmatpush1.bf16.msra.mxu0 %v285
  %450 = vmatprep.subr.bf16.mxu0 %v290
  %451 = vmatpush1.bf16.msra.mxu0 %v289
  %452 = vmatprep.subr.bf16.mxu0 %v294
  %453 = vmatpush1.bf16.msra.mxu0 %v293
  %454 = vmatprep.subr.bf16.mxu0 %v298
  %455 = vmatpush1.bf16.msra.mxu0 %v297
  %456 = vmatprep.subr.bf16.mxu0 %v302
  %457 = vmatpush1.bf16.msra.mxu0 %v301
  %458 = vmatprep.subr.bf16.mxu0 %v306
  %459 = vmatpush1.bf16.msra.mxu0 %v305
  %460 = vmatprep.subr.bf16.mxu0 %v310
  %461 = vmatpush1.bf16.msra.mxu0 %v309
  %462 = vmatprep.subr.bf16.mxu0 %v314
  %463 = vmatpush1.bf16.msra.mxu0 %v313
  %464 = vmatprep.subr.bf16.mxu0 %v318
  %465 = vmatpush1.bf16.msra.mxu0 %v317
  %466 = vmatprep.subr.bf16.mxu0 %v322
  %467 = vmatpush1.bf16.msra.mxu0 %v321
  %468 = vmatprep.subr.bf16.mxu0 %v326
  %469 = vmatpush1.bf16.msra.mxu0 %v325
  %470 = vmatprep.subr.bf16.mxu0 %v330
  %471 = vmatpush1.bf16.msra.mxu0 %v329
  %472 = vmatprep.subr.bf16.mxu0 %v334
  %473 = vmatpush1.bf16.msra.mxu0 %v333
  %474 = vmatprep.subr.bf16.mxu0 %v338
  %475 = vmatpush1.bf16.msra.mxu0 %v337
  %476 = vmatprep.mubr.bf16.mxu0 %v80
  %477 = vmatmul.mubr.bf16.gmra.mrb[0].mxu0 %v79
  %v478 = vpop.f32.mrb[0].mxu0
  %v479 = vadd.f32 0.0, %v478
  %v480 = vpop.f32.mrb[0].mxu0
  %v481 = vadd.f32 0.0, %v480
  %v482 = vpop.f32.mrb[0].mxu0
  %v483 = vpop.f32.mrb[0].mxu0
  %484 = vdwg.mxu0
  %v485 = vpack.c.bf16 %v438, %v438
  %v486 = vpack.c.bf16 %v440, %v440
  %v487 = vpack.c.bf16 %v479, %v479
  %v488 = vpack.c.bf16 %v481, %v481
  %v493 = vunpack.c.l.b16 %v485
  %v494 = vunpack.c.l.b16 %v486
  %v495 = vunpack.c.l.b16 %v487
  %v496 = vunpack.c.l.b16 %v488
  %v497 = vpack.c.b16 %v494, %v493
  %v498 = vpack.c.b16 %v496, %v495
  %501 = vst [vmem:[%s2] sm:$0xff] %v497
  %vm502 = vcmask 1043456
  %vm503 = vcmask 130052
  %vm504 = vmor %vm503, %vm502
  %505 = vst.msk [vmem:[%s2 + $0x8] sm:$0xff] %vm504, %v498
  // Predicated region
  $region10: #{a_call__.23} parent=0 // pred_check
    _
  $region11: #{a_call__.23} parent=0 // pred_check_branch
    %507 = sbr.rel (0) target = $region13
  $region12: #{a_call__.23} parent=0 // pred_region
    _
  $region13: #{a_call__.23} parent=0 // pred_fallthru
    _
  // Predicated region
  $region14: #{a_call__.23} parent=0 // pred_check
    _
  $region15: #{a_call__.23} parent=0 // pred_check_branch
    %509 = sbr.rel (0) target = $region17
  $region16: #{a_call__.23} parent=0 // pred_region
    _
  $region17: #{a_call__.23} parent=0 // pred_fallthru
    _

// kernel: a_call__.24
$region0: #{a_call__.24}
  #allocation0 [shape = 'u32[]', space=smem, size = 0x4, offset = 0x4, fixed_abs, tag = 'smem constant byte address 0x4 - core index']
  #allocation1 [shape = 'u32[144,128]{1,0:T(1,128)}', space=vmem, size = 0x12000, scoped, tag = 'internal scratch']
  %s0 = inlined_call_operand.vmem [shape: bf16[2,4,400], index: 0, kind: input, shape index: {}]
  %s1 = inlined_call_operand.vmem [shape: bf16[5,4], index: 1, kind: input, shape index: {}]
  %s2 = inlined_call_operand.vmem [shape: f32[5,1], index: 2, kind: input, shape index: {}]
  %s3 = inlined_call_operand.vmem [shape: bf16[2,5,400], index: 3, kind: output, shape index: {}]
  %s4 = sld [smem:[#allocation0]]
  $region45: #{a_call__.24} parent=0
    _
  %s6 = ssub.s32 1, %s4
  %s7 = scalar_select 0, %s6, %s4
  loop: start=0, step=1, limit=4
  $region2: #{a_call__.24} parent=0 // loop_pre_header
    _
  $region3: #{a_call__.24} parent=0 // loop_header
    %s9 = sphi 0, %s13
    %p10 = scmp.ge.s32.totalorder %s9, 4
    %s16 = sphi 0, %s28
    %s17 = sphi 0, %s24
    %s18 = sphi 0, %s16
    %s19 = sphi 0, %s17
    %s20 = sphi 0, %s18
    %s21 = sphi 0, %s19
    %s33 = sphi 0, %s35
    %s36 = sphi 0, %s33
    %s37 = sphi 0, %s36
    %s53 = sphi 0, %s37
    %s57 = sphi 0, %s57
    %s59 = sphi 0, %s57
    %s60 = sphi 0, %s59
    %s74 = sphi 0, %s60
    %s78 = sphi 0, %s78
    %s80 = sphi 0, %s78
    %s81 = sphi 0, %s80
    %s95 = sphi 0, %s81
    %s103 = sphi 0, %s105
    %s106 = sphi 0, %s103
    %s107 = sphi 0, %s106
    %s123 = sphi 0, %s107
  $region4: #{a_call__.24} parent=0 // loop_header_branch
    %12 = sbr.rel (%p10) target = $region8
  $region5: #{a_call__.24} parent=0 // loop_body
    %s14 = ssub.s32 %s9, 1
    %s15 = ssub.s32 %s9, 2
    %s22 = sadd.s32 1, %s17
    %p23 = scmp.ge.s32.totalorder %s22, 1
    %s24 = scalar_select %p23, 0, %s22
    %s25 = sadd.s32 1, %s16
    %s26 = scalar_select %p23, %s25, %s16
    %p27 = scmp.ge.s32.totalorder %s26, 2
    %s28 = scalar_select %p27, 0, %s26
    %s29 = ssub.s32 %s16, %s28
    %s30 = ssub.s32 %s17, %s24
    %s31 = sor.u32 %s29, %s30
    %p32 = scmp.eq.s32.totalorder %s31, 0
    %s34 = sadd.s32 %s33, 1
    %s35 = scalar_select %p32, %s33, %s34
    %p38 = pneg %p32
    %p39 = scmp.eq.s32.totalorder %s9, 1
    %p40 = por %p38, %p39
    %p41 = scmp.ne.s32.totalorder %s33, %s36
    %p42 = scmp.eq.s32.totalorder %s9, 0
    %p43 = por %p41, %p42
    %p44 = scmp.ne.s32.totalorder %s33, %s36
    %p45 = scmp.eq.s32.totalorder %s14, 1
    %p46 = por %p44, %p45
    %p47 = scmp.ne.s32.totalorder %s36, %s37
    %p48 = scmp.eq.s32.totalorder %s14, 0
    %p49 = por %p47, %p48
    %p50 = scmp.ne.s32.totalorder %s36, %s37
    %p51 = scmp.eq.s32.totalorder %s15, 1
    %p52 = por %p50, %p51
    %p54 = scmp.ne.s32.totalorder %s37, %s53
    %p55 = scmp.eq.s32.totalorder %s15, 0
    %p56 = por %p54, %p55
    %s58 = sadd.s32 %s57, 1
    %p61 = scmp.eq.s32.totalorder %s9, 1
    %p62 = scmp.ne.s32.totalorder %s57, %s59
    %p63 = scmp.eq.s32.totalorder %s9, 0
    %p64 = por %p62, %p63
    %p65 = scmp.ne.s32.totalorder %s57, %s59
    %p66 = scmp.eq.s32.totalorder %s14, 1
    %p67 = por %p65, %p66
    %p68 = scmp.ne.s32.totalorder %s59, %s60
    %p69 = scmp.eq.s32.totalorder %s14, 0
    %p70 = por %p68, %p69
    %p71 = scmp.ne.s32.totalorder %s59, %s60
    %p72 = scmp.eq.s32.totalorder %s15, 1
    %p73 = por %p71, %p72
    %p75 = scmp.ne.s32.totalorder %s60, %s74
    %p76 = scmp.eq.s32.totalorder %s15, 0
    %p77 = por %p75, %p76
    %s79 = sadd.s32 %s78, 1
    %p82 = scmp.eq.s32.totalorder %s9, 1
    %p83 = scmp.ne.s32.totalorder %s78, %s80
    %p84 = scmp.eq.s32.totalorder %s9, 0
    %p85 = por %p83, %p84
    %p86 = scmp.ne.s32.totalorder %s78, %s80
    %p87 = scmp.eq.s32.totalorder %s14, 1
    %p88 = por %p86, %p87
    %p89 = scmp.ne.s32.totalorder %s80, %s81
    %p90 = scmp.eq.s32.totalorder %s14, 0
    %p91 = por %p89, %p90
    %p92 = scmp.ne.s32.totalorder %s80, %s81
    %p93 = scmp.eq.s32.totalorder %s15, 1
    %p94 = por %p92, %p93
    %p96 = scmp.ne.s32.totalorder %s81, %s95
    %p97 = scmp.eq.s32.totalorder %s15, 0
    %p98 = por %p96, %p97
    %s99 = ssub.s32 %s16, %s28
    %s100 = ssub.s32 %s17, %s24
    %s101 = sor.u32 %s99, %s100
    %p102 = scmp.eq.s32.totalorder %s101, 0
    %s104 = sadd.s32 %s103, 1
    %s105 = scalar_select %p102, %s103, %s104
    %p108 = pneg %p102
    %p109 = scmp.eq.s32.totalorder %s9, 1
    %p110 = por %p108, %p109
    %p111 = scmp.ne.s32.totalorder %s103, %s106
    %p112 = scmp.eq.s32.totalorder %s9, 0
    %p113 = por %p111, %p112
    %p114 = scmp.ne.s32.totalorder %s103, %s106
    %p115 = scmp.eq.s32.totalorder %s14, 1
    %p116 = por %p114, %p115
    %p117 = scmp.ne.s32.totalorder %s106, %s107
    %p118 = scmp.eq.s32.totalorder %s14, 0
    %p119 = por %p117, %p118
    %p120 = scmp.ne.s32.totalorder %s106, %s107
    %p121 = scmp.eq.s32.totalorder %s15, 1
    %p122 = por %p120, %p121
    %p124 = scmp.ne.s32.totalorder %s107, %s123
    %p125 = scmp.eq.s32.totalorder %s15, 0
    %p126 = por %p124, %p125
    %p127 = scmp.le.s32.totalorder 1, %s9
    %p128 = scmp.lt.s32.totalorder %s9, 3
    %p129 = pnand %p127, %p128
    %p130 = pneg %p129
    // Predicated region
    $region9: #{a_call__.24} parent=5 // pred_check
      _
    $region10: #{a_call__.24} parent=5 // pred_check_branch
      %132 = sbr.rel (%p129) target = $region12
    $region11: #{a_call__.24} parent=5 // pred_region
      %s133 = ssub.s32 %s9, 1
      // Predicated region
      $region13: #{a_call__.24} parent=11 // pred_check
        %p134 = pneg %p70
      $region14: #{a_call__.24} parent=11 // pred_check_branch
        %136 = sbr.rel (%p134) target = $region16
      $region15: #{a_call__.24} parent=11 // pred_region
        _
      $region16: #{a_call__.24} parent=11 // pred_fallthru
        _
      // Predicated region
      $region17: #{a_call__.24} parent=11 // pred_check
        %p137 = pneg %p91
      $region18: #{a_call__.24} parent=11 // pred_check_branch
        %139 = sbr.rel (%p137) target = $region20
      $region19: #{a_call__.24} parent=11 // pred_region
        _
      $region20: #{a_call__.24} parent=11 // pred_fallthru
        _
    $region12: #{a_call__.24} parent=5 // pred_fallthru
      _
    %p140 = scmp.lt.s32.totalorder %s9, 2
    // Predicated region
    $region21: #{a_call__.24} parent=5 // pred_check
      %p141 = pneg %p140
    $region22: #{a_call__.24} parent=5 // pred_check_branch
      %143 = sbr.rel (%p141) target = $region24
    $region23: #{a_call__.24} parent=5 // pred_region
      // Predicated region
      $region25: #{a_call__.24} parent=23 // pred_check
        %p144 = pneg %p43
      $region26: #{a_call__.24} parent=23 // pred_check_branch
        %146 = sbr.rel (%p144) target = $region28
      $region27: #{a_call__.24} parent=23 // pred_region
        %s147 = smul.u32 4, %s17
        %p148 = scmp.lt.s32.totalorder %s16, 1
        %s149 = scalar_select %p148, %s16, 1
        %p150 = scmp.lt.s32.totalorder %s147, 3
        %s151 = scalar_select %p150, %s147, 3
        %s152 = smul.addr %s149, 4
        %s153 = sadd.s32 %s151, %s152
        %s154 = smul.addr %s153, 2
        %s155 = scalar_lea.vmem %s0, %s154
        %s156 = smul.u32 4, %s17
      $region28: #{a_call__.24} parent=23 // pred_fallthru
        _
    $region24: #{a_call__.24} parent=5 // pred_fallthru
      _
    %p157 = scmp.le.s32.totalorder 1, %s9
    %p158 = scmp.lt.s32.totalorder %s9, 3
    %p159 = pnand %p157, %p158
    %p160 = pneg %p159
    // Predicated region
    $region29: #{a_call__.24} parent=5 // pred_check
      _
    $region30: #{a_call__.24} parent=5 // pred_check_branch
      %162 = sbr.rel (%p159) target = $region32
    $region31: #{a_call__.24} parent=5 // pred_region
      %s163 = ssub.s32 %s9, 1
      %s164 = smul.u32 4, %s19
      %p165 = scmp.lt.s32.totalorder %s18, 1
      %s166 = scalar_select %p165, %s18, 1
      %p167 = scmp.lt.s32.totalorder %s164, 3
      %s168 = scalar_select %p167, %s164, 3
      %s169 = smul.addr %s166, 4
      %s170 = sadd.s32 %s168, %s169
      %s171 = smul.addr %s170, 2
      %s172 = scalar_lea.vmem %s0, %s171
      %p173 = pneg %p49
      %p174 = pneg %p46
      %p175 = pneg %p70
      %p176 = pneg %p67
      %p177 = pneg %p91
      %p178 = pneg %p88
      %p179 = pneg %p119
      %p180 = pneg %p116
      %s181 = smul.u32 4, %s19
      %p182 = scmp.lt.s32.totalorder %s18, 1
      %s183 = scalar_select %p182, %s18, 1
      %p184 = scmp.lt.s32.totalorder %s181, 3
      %s185 = scalar_select %p184, %s181, 3
      %s186 = smul.addr %s183, 4
      %s187 = sadd.s32 %s185, %s186
      %s188 = smul.addr %s187, 4
      %s189 = scalar_lea.vmem %s3, %s188
      %s190 = smul.u32 4, %s19
      %p191 = scmp.lt.s32.totalorder %s18, 1
      %s192 = scalar_select %p191, %s18, 1
      %p193 = scmp.lt.s32.totalorder %s190, 3
      %s194 = scalar_select %p193, %s190, 3
      %s195 = smul.addr %s192, 4
      %s196 = sadd.s32 %s194, %s195
      %s197 = smul.addr %s196, 2
      %s198 = scalar_lea.vmem %s0, %s197
      %s199 = smul.u32 4, %s19
      %s200 = smul.u32 4, %s19
      %p201 = scmp.lt.s32.totalorder %s18, 1
      %s202 = scalar_select %p201, %s18, 1
      %p203 = scmp.lt.s32.totalorder %s200, 3
      %s204 = scalar_select %p203, %s200, 3
      %s205 = smul.addr %s202, 4
      %s206 = sadd.s32 %s204, %s205
      %s207 = smul.addr %s206, 4
      %s208 = scalar_lea.vmem %s3, %s207
      %s209 = smul.u32 4, %s19
      %v211 = vld [vmem:[%s1] sm:$0x7]
      %v212 = vld [vmem:[%s198] sm:$0xff]
      %v213 = vld [vmem:[%s2] sm:$0x1f]
      %215 = vset.pattern.permute.xlu0 0
      %216 = vperm.xlu0 %215, %v213
      %v217 = vpop.permute.xlu0 %216
      %v220 = vcombine.high %v212, %v212
      %v222 = vunpack.c.l.s4 1983009808
      %v223 = vunpack.c.0.s8 %v222
      %v224 = vlaneseq
      %v225 = vshrl.u32 %v224, 7
      %v226 = vsub.s32 %v223, %v225
      %v227 = vrot.slane %v212, %v226
      %v229 = vunpack.c.l.s4 1983009808
      %v230 = vunpack.c.0.s8 %v229
      %v231 = vlaneseq
      %v232 = vshrl.u32 %v231, 7
      %v233 = vsub.s32 %v230, %v232
      %v234 = vrot.slane %v220, %v233
      %v235 = vcombine.high %v227, %v227
      %v236 = vcombine.high %v234, %v234
      %vm237 = vcmask 31744
      %v239 = vsel %vm237, %v211, 0
      %vm241 = vcmask 1041408
      %v243 = vsel %vm241, %v227, 0
      %v246 = vsel %vm241, %v235, 0
      %v249 = vsel %vm241, %v234, 0
      %v252 = vsel %vm241, %v236, 0
      %254 = vmatprep.subr.bf16.mxu0 %v246
      %255 = vmatpush1.bf16.msra.mxu0 %v243
      %256 = vmatprep.subr.bf16.mxu0 0
      %257 = vmatpush1.bf16.msra.mxu0 0
      %258 = vmatprep.subr.bf16.mxu0 0
      %259 = vmatpush1.bf16.msra.mxu0 0
      %260 = vmatprep.subr.bf16.mxu0 0
      %261 = vmatpush1.bf16.msra.mxu0 0
      %262 = vmatprep.subr.bf16.mxu0 0
      %263 = vmatpush1.bf16.msra.mxu0 0
      %264 = vmatprep.subr.bf16.mxu0 0
      %265 = vmatpush1.bf16.msra.mxu0 0
      %266 = vmatprep.subr.bf16.mxu0 0
      %267 = vmatpush1.bf16.msra.mxu0 0
      %268 = vmatprep.subr.bf16.mxu0 0
      %269 = vmatpush1.bf16.msra.mxu0 0
      %270 = vmatprep.subr.bf16.mxu0 0
      %271 = vmatpush1.bf16.msra.mxu0 0
      %272 = vmatprep.subr.bf16.mxu0 0
      %273 = vmatpush1.bf16.msra.mxu0 0
      %274 = vmatprep.subr.bf16.mxu0 0
      %275 = vmatpush1.bf16.msra.mxu0 0
      %276 = vmatprep.subr.bf16.mxu0 0
      %277 = vmatpush1.bf16.msra.mxu0 0
      %278 = vmatprep.subr.bf16.mxu0 0
      %279 = vmatpush1.bf16.msra.mxu0 0
      %280 = vmatprep.subr.bf16.mxu0 0
      %281 = vmatpush1.bf16.msra.mxu0 0
      %282 = vmatprep.subr.bf16.mxu0 0
      %283 = vmatpush1.bf16.msra.mxu0 0
      %284 = vmatprep.subr.bf16.mxu0 0
      %285 = vmatpush1.bf16.msra.mxu0 0
      %286 = vmatprep.mubr.bf16.mxu0 0
      %287 = vmatmul.mubr.bf16.gmra.mrb[0].mxu0 %v239
      %v288 = vpop.f32.mrb[0].mxu0
      %v289 = vadd.f32 %v217, %v288
      %v290 = vpop.f32.mrb[0].mxu0
      %v291 = vadd.f32 %v217, %v290
      %v292 = vpop.f32.mrb[0].mxu0
      %v293 = vpop.f32.mrb[0].mxu0
      %294 = vdwg.mxu0
      %295 = vmatprep.subr.bf16.mxu0 %v252
      %296 = vmatpush1.bf16.msra.mxu0 %v249
      %297 = vmatprep.subr.bf16.mxu0 0
      %298 = vmatpush1.bf16.msra.mxu0 0
      %299 = vmatprep.subr.bf16.mxu0 0
      %300 = vmatpush1.bf16.msra.mxu0 0
      %301 = vmatprep.subr.bf16.mxu0 0
      %302 = vmatpush1.bf16.msra.mxu0 0
      %303 = vmatprep.subr.bf16.mxu0 0
      %304 = vmatpush1.bf16.msra.mxu0 0
      %305 = vmatprep.subr.bf16.mxu0 0
      %306 = vmatpush1.bf16.msra.mxu0 0
      %307 = vmatprep.subr.bf16.mxu0 0
      %308 = vmatpush1.bf16.msra.mxu0 0
      %309 = vmatprep.subr.bf16.mxu0 0
      %310 = vmatpush1.bf16.msra.mxu0 0
      %311 = vmatprep.subr.bf16.mxu0 0
      %312 = vmatpush1.bf16.msra.mxu0 0
      %313 = vmatprep.subr.bf16.mxu0 0
      %314 = vmatpush1.bf16.msra.mxu0 0
      %315 = vmatprep.subr.bf16.mxu0 0
      %316 = vmatpush1.bf16.msra.mxu0 0
      %317 = vmatprep.subr.bf16.mxu0 0
      %318 = vmatpush1.bf16.msra.mxu0 0
      %319 = vmatprep.subr.bf16.mxu0 0
      %320 = vmatpush1.bf16.msra.mxu0 0
      %321 = vmatprep.subr.bf16.mxu0 0
      %322 = vmatpush1.bf16.msra.mxu0 0
      %323 = vmatprep.subr.bf16.mxu0 0
      %324 = vmatpush1.bf16.msra.mxu0 0
      %325 = vmatprep.subr.bf16.mxu0 0
      %326 = vmatpush1.bf16.msra.mxu0 0
      %327 = vmatprep.mubr.bf16.mxu0 0
      %328 = vmatmul.mubr.bf16.gmra.mrb[0].mxu0 %v239
      %v329 = vpop.f32.mrb[0].mxu0
      %v330 = vadd.f32 %v217, %v329
      %v331 = vpop.f32.mrb[0].mxu0
      %v332 = vadd.f32 %v217, %v331
      %v333 = vpop.f32.mrb[0].mxu0
      %v334 = vpop.f32.mrb[0].mxu0
      %335 = vdwg.mxu0
      %v336 = vpack.c.bf16 %v289, %v289
      %v337 = vpack.c.bf16 %v291, %v291
      %v338 = vpack.c.bf16 %v330, %v330
      %v339 = vpack.c.bf16 %v332, %v332
      %v344 = vunpack.c.l.b16 %v336
      %v345 = vunpack.c.l.b16 %v337
      %v346 = vunpack.c.l.b16 %v338
      %v347 = vunpack.c.l.b16 %v339
      %v348 = vpack.c.b16 %v345, %v344
      %v349 = vpack.c.b16 %v347, %v346
      %vm352 = vcmask 1042432
      %vm353 = vsmask.f32 2304
      %vm354 = vmand %vm352, %vm353
      %vm355 = vcmask 1046532
      %vm356 = vsmask.f32 6400
      %vm357 = vmand %vm355, %vm356
      %vm358 = vmor %vm357, %vm354
      %v359 = vld [vmem:[%s208] sm:$0x77]
      %v360 = vsel %vm358, %v348, %v359
      %361 = vst [vmem:[%s208] sm:$0x77] %v360
      %vm362 = vcmask 129028
      %vm363 = vmand %vm362, %vm356
      %vm364 = vmor %vm363, %vm354
      %v365 = vld [vmem:[%s208 + $0x8] sm:$0x77]
      %v366 = vsel %vm364, %v349, %v365
      %367 = vst [vmem:[%s208 + $0x8] sm:$0x77] %v366
      %s368 = smul.u32 4, %s19
      %p369 = scmp.lt.s32.totalorder %s18, 1
      %s370 = scalar_select %p369, %s18, 1
      %p371 = scmp.lt.s32.totalorder %s368, 3
      %s372 = scalar_select %p371, %s368, 3
      %s373 = smul.addr %s370, 4
      %s374 = sadd.s32 %s372, %s373
      %s375 = smul.addr %s374, 4
      %s376 = scalar_lea.vmem %s3, %s375
      // Predicated region
      $region33: #{a_call__.24} parent=31 // pred_check
        %p377 = pneg %p116
      $region34: #{a_call__.24} parent=31 // pred_check_branch
        %379 = sbr.rel (%p377) target = $region36
      $region35: #{a_call__.24} parent=31 // pred_region
        %s380 = smul.u32 4, %s19
      $region36: #{a_call__.24} parent=31 // pred_fallthru
        _
    $region32: #{a_call__.24} parent=5 // pred_fallthru
      _
    %p381 = scmp.le.s32.totalorder 2, %s9
    // Predicated region
    $region37: #{a_call__.24} parent=5 // pred_check
      %p382 = pneg %p381
    $region38: #{a_call__.24} parent=5 // pred_check_branch
      %384 = sbr.rel (%p382) target = $region40
    $region39: #{a_call__.24} parent=5 // pred_region
      %s385 = ssub.s32 %s9, 2
      // Predicated region
      $region41: #{a_call__.24} parent=39 // pred_check
        %p386 = pneg %p122
      $region42: #{a_call__.24} parent=39 // pred_check_branch
        %388 = sbr.rel (%p386) target = $region44
      $region43: #{a_call__.24} parent=39 // pred_region
        %s389 = smul.u32 4, %s21
        %p390 = scmp.lt.s32.totalorder %s20, 1
        %s391 = scalar_select %p390, %s20, 1
        %p392 = scmp.lt.s32.totalorder %s389, 3
        %s393 = scalar_select %p392, %s389, 3
        %s394 = smul.addr %s391, 4
        %s395 = sadd.s32 %s393, %s394
        %s396 = smul.addr %s395, 4
        %s397 = scalar_lea.vmem %s3, %s396
      $region44: #{a_call__.24} parent=39 // pred_fallthru
        _
    $region40: #{a_call__.24} parent=5 // pred_fallthru
      _
  $region6: #{a_call__.24} parent=0 // loop_footer
    %s13 = sadd.s32 1, %s9
  $region7: #{a_call__.24} parent=0 // loop_footer_branch
    %8 = sbr.rel target = $region3
  $region8: #{a_call__.24} parent=0 // loop_exit
    _

// kernel: a_call__.25
$region0: #{a_call__.25}
  #allocation0 [shape = 'u32[]', space=smem, size = 0x4, offset = 0x4, fixed_abs, tag = 'smem constant byte address 0x4 - core index']
  #allocation1 [shape = 'u32[144,128]{1,0:T(1,128)}', space=vmem, size = 0x12000, scoped, tag = 'internal scratch']
  %s0 = inlined_call_operand.vmem [shape: bf16[10,400], index: 0, kind: input, shape index: {}]
  %s1 = inlined_call_operand.vmem [shape: bf16[400,256], index: 1, kind: input, shape index: {}]
  %s2 = inlined_call_operand.vmem [shape: f32[10,256], index: 2, kind: input, shape index: {}, may-alias: {2,3}]
  %s3 = inlined_call_operand.vmem [shape: f32[10,256], index: 3, kind: output, shape index: {}, may-alias: {2,3}]
  %s4 = sld [smem:[#allocation0]]
  $region22: #{a_call__.25} parent=0
    _
  %s6 = ssub.s32 1, %s4
  %s7 = scalar_select 0, %s6, %s4
  // Predicated region
  $region2: #{a_call__.25} parent=0 // pred_check
    _
  $region3: #{a_call__.25} parent=0 // pred_check_branch
    %9 = sbr.rel (0) target = $region5
  $region4: #{a_call__.25} parent=0 // pred_region
    _
  $region5: #{a_call__.25} parent=0 // pred_fallthru
    _
  // Predicated region
  $region6: #{a_call__.25} parent=0 // pred_check
    _
  $region7: #{a_call__.25} parent=0 // pred_check_branch
    %11 = sbr.rel (0) target = $region9
  $region8: #{a_call__.25} parent=0 // pred_region
    _
  $region9: #{a_call__.25} parent=0 // pred_fallthru
    _
  // Predicated region
  $region10: #{a_call__.25} parent=0 // pred_check
    _
  $region11: #{a_call__.25} parent=0 // pred_check_branch
    %13 = sbr.rel (0) target = $region13
  $region12: #{a_call__.25} parent=0 // pred_region
    _
  $region13: #{a_call__.25} parent=0 // pred_fallthru
    _
  %v15 = vld [vmem:[%s0] sm:$0xff]
  %v16 = vld [vmem:[%s0 + $0x8] sm:$0xff]
  %v17 = vld [vmem:[%s0 + $0x10] sm:$0x11]
  %v18 = vld [vmem:[%s0 + $0x18] sm:$0x11]
  %v19 = vld [vmem:[%s1] sm:$0xff]
  %v20 = vld [vmem:[%s1 + $0x8] sm:$0xff]
  %v21 = vld [vmem:[%s1 + $0x10] sm:$0xff]
  %v22 = vld [vmem:[%s1 + $0x18] sm:$0xff]
  %v23 = vld [vmem:[%s1 + $0x20] sm:$0xff]
  %v24 = vld [vmem:[%s1 + $0x28] sm:$0xff]
  %v25 = vld [vmem:[%s1 + $0x30] sm:$0xff]
  %v26 = vld [vmem:[%s1 + $0x38] sm:$0xff]
  %v27 = vld [vmem:[%s1 + $0x40] sm:$0xff]
  %v28 = vld [vmem:[%s1 + $0x48] sm:$0xff]
  %v29 = vld [vmem:[%s1 + $0x50] sm:$0xff]
  %v30 = vld [vmem:[%s1 + $0x58] sm:$0xff]
  %v31 = vld [vmem:[%s1 + $0x60] sm:$0xff]
  %v32 = vld [vmem:[%s1 + $0x68] sm:$0xff]
  %v33 = vld [vmem:[%s1 + $0x70] sm:$0xff]
  %v34 = vld [vmem:[%s1 + $0x78] sm:$0xff]
  %v35 = vld [vmem:[%s1 + $0x80] sm:$0xff]
  %v36 = vld [vmem:[%s1 + $0x88] sm:$0xff]
  %v37 = vld [vmem:[%s1 + $0x90] sm:$0xff]
  %v38 = vld [vmem:[%s1 + $0x98] sm:$0xff]
  %v39 = vld [vmem:[%s1 + $0xa0] sm:$0xff]
  %v40 = vld [vmem:[%s1 + $0xa8] sm:$0xff]
  %v41 = vld [vmem:[%s1 + $0xb0] sm:$0xff]
  %v42 = vld [vmem:[%s1 + $0xb8] sm:$0xff]
  %v43 = vld [vmem:[%s1 + $0xc0] sm:$0xff]
  %v44 = vld [vmem:[%s1 + $0xc8] sm:$0xff]
  %v45 = vld [vmem:[%s1 + $0xd0] sm:$0xff]
  %v46 = vld [vmem:[%s1 + $0xd8] sm:$0xff]
  %v47 = vld [vmem:[%s1 + $0xe0] sm:$0xff]
  %v48 = vld [vmem:[%s1 + $0xe8] sm:$0xff]
  %v49 = vld [vmem:[%s1 + $0xf0] sm:$0xff]
  %v50 = vld [vmem:[%s1 + $0xf8] sm:$0xff]
  %v51 = vld [vmem:[%s1 + $0x100] sm:$0xff]
  %v52 = vld [vmem:[%s1 + $0x108] sm:$0xff]
  %v53 = vld [vmem:[%s1 + $0x110] sm:$0xff]
  %v54 = vld [vmem:[%s1 + $0x118] sm:$0xff]
  %v55 = vld [vmem:[%s1 + $0x120] sm:$0xff]
  %v56 = vld [vmem:[%s1 + $0x128] sm:$0xff]
  %v57 = vld [vmem:[%s1 + $0x130] sm:$0xff]
  %v58 = vld [vmem:[%s1 + $0x138] sm:$0xff]
  %v59 = vld [vmem:[%s1 + $0x140] sm:$0xff]
  %v60 = vld [vmem:[%s1 + $0x148] sm:$0xff]
  %v61 = vld [vmem:[%s1 + $0x150] sm:$0xff]
  %v62 = vld [vmem:[%s1 + $0x158] sm:$0xff]
  %v63 = vld [vmem:[%s1 + $0x160] sm:$0xff]
  %v64 = vld [vmem:[%s1 + $0x168] sm:$0xff]
  %v65 = vld [vmem:[%s1 + $0x170] sm:$0xff]
  %v66 = vld [vmem:[%s1 + $0x178] sm:$0xff]
  %v67 = vld [vmem:[%s1 + $0x180] sm:$0xff]
  %v68 = vld [vmem:[%s1 + $0x188] sm:$0xff]
  %v73 = vunpack.c.l.b16 %v15
  %v74 = vunpack.c.h.b16 %v15
  %v75 = vunpack.c.l.b16 %v16
  %v76 = vunpack.c.h.b16 %v16
  %v77 = vunpack.c.l.b16 %v17
  %v78 = vunpack.c.h.b16 %v17
  %v79 = vunpack.c.l.b16 %v18
  %v80 = vunpack.c.h.b16 %v18
  %v81 = vpack.c.b16 %v77, %v73
  %v82 = vpack.c.b16 %v78, %v74
  %v83 = vpack.c.b16 %v79, %v75
  %v84 = vpack.c.b16 %v80, %v76
  %v138 = vunpack.c.l.b16 %v19
  %v139 = vunpack.c.h.b16 %v19
  %v140 = vunpack.c.l.b16 %v20
  %v141 = vunpack.c.h.b16 %v20
  %v142 = vunpack.c.l.b16 %v21
  %v143 = vunpack.c.h.b16 %v21
  %v144 = vunpack.c.l.b16 %v22
  %v145 = vunpack.c.h.b16 %v22
  %v146 = vunpack.c.l.b16 %v23
  %v147 = vunpack.c.h.b16 %v23
  %v148 = vunpack.c.l.b16 %v24
  %v149 = vunpack.c.h.b16 %v24
  %v150 = vunpack.c.l.b16 %v25
  %v151 = vunpack.c.h.b16 %v25
  %v152 = vunpack.c.l.b16 %v26
  %v153 = vunpack.c.h.b16 %v26
  %v154 = vunpack.c.l.b16 %v27
  %v155 = vunpack.c.h.b16 %v27
  %v156 = vunpack.c.l.b16 %v28
  %v157 = vunpack.c.h.b16 %v28
  %v158 = vunpack.c.l.b16 %v29
  %v159 = vunpack.c.h.b16 %v29
  %v160 = vunpack.c.l.b16 %v30
  %v161 = vunpack.c.h.b16 %v30
  %v162 = vunpack.c.l.b16 %v31
  %v163 = vunpack.c.h.b16 %v31
  %v164 = vunpack.c.l.b16 %v32
  %v165 = vunpack.c.h.b16 %v32
  %v166 = vunpack.c.l.b16 %v33
  %v167 = vunpack.c.h.b16 %v33
  %v168 = vunpack.c.l.b16 %v34
  %v169 = vunpack.c.h.b16 %v34
  %v170 = vunpack.c.l.b16 %v35
  %v171 = vunpack.c.h.b16 %v35
  %v172 = vunpack.c.l.b16 %v36
  %v173 = vunpack.c.h.b16 %v36
  %v174 = vunpack.c.l.b16 %v37
  %v175 = vunpack.c.h.b16 %v37
  %v176 = vunpack.c.l.b16 %v38
  %v177 = vunpack.c.h.b16 %v38
  %v178 = vunpack.c.l.b16 %v39
  %v179 = vunpack.c.h.b16 %v39
  %v180 = vunpack.c.l.b16 %v40
  %v181 = vunpack.c.h.b16 %v40
  %v182 = vunpack.c.l.b16 %v41
  %v183 = vunpack.c.h.b16 %v41
  %v184 = vunpack.c.l.b16 %v42
  %v185 = vunpack.c.h.b16 %v42
  %v186 = vunpack.c.l.b16 %v43
  %v187 = vunpack.c.h.b16 %v43
  %v188 = vunpack.c.l.b16 %v44
  %v189 = vunpack.c.h.b16 %v44
  %v190 = vunpack.c.l.b16 %v45
  %v191 = vunpack.c.h.b16 %v45
  %v192 = vunpack.c.l.b16 %v46
  %v193 = vunpack.c.h.b16 %v46
  %v194 = vunpack.c.l.b16 %v47
  %v195 = vunpack.c.h.b16 %v47
  %v196 = vunpack.c.l.b16 %v48
  %v197 = vunpack.c.h.b16 %v48
  %v198 = vunpack.c.l.b16 %v49
  %v199 = vunpack.c.h.b16 %v49
  %v200 = vunpack.c.l.b16 %v50
  %v201 = vunpack.c.h.b16 %v50
  %v202 = vunpack.c.l.b16 %v51
  %v203 = vunpack.c.h.b16 %v51
  %v204 = vunpack.c.l.b16 %v52
  %v205 = vunpack.c.h.b16 %v52
  %v206 = vunpack.c.l.b16 %v53
  %v207 = vunpack.c.h.b16 %v53
  %v208 = vunpack.c.l.b16 %v54
  %v209 = vunpack.c.h.b16 %v54
  %v210 = vunpack.c.l.b16 %v55
  %v211 = vunpack.c.h.b16 %v55
  %v212 = vunpack.c.l.b16 %v56
  %v213 = vunpack.c.h.b16 %v56
  %v214 = vunpack.c.l.b16 %v57
  %v215 = vunpack.c.h.b16 %v57
  %v216 = vunpack.c.l.b16 %v58
  %v217 = vunpack.c.h.b16 %v58
  %v218 = vunpack.c.l.b16 %v59
  %v219 = vunpack.c.h.b16 %v59
  %v220 = vunpack.c.l.b16 %v60
  %v221 = vunpack.c.h.b16 %v60
  %v222 = vunpack.c.l.b16 %v61
  %v223 = vunpack.c.h.b16 %v61
  %v224 = vunpack.c.l.b16 %v62
  %v225 = vunpack.c.h.b16 %v62
  %v226 = vunpack.c.l.b16 %v63
  %v227 = vunpack.c.h.b16 %v63
  %v228 = vunpack.c.l.b16 %v64
  %v229 = vunpack.c.h.b16 %v64
  %v230 = vunpack.c.l.b16 %v65
  %v231 = vunpack.c.h.b16 %v65
  %v232 = vunpack.c.l.b16 %v66
  %v233 = vunpack.c.h.b16 %v66
  %v234 = vunpack.c.l.b16 %v67
  %v235 = vunpack.c.h.b16 %v67
  %v236 = vunpack.c.l.b16 %v68
  %v237 = vunpack.c.h.b16 %v68
  %v238 = vpack.c.b16 %v140, %v138
  %v239 = vpack.c.b16 %v141, %v139
  %v240 = vpack.c.b16 %v144, %v142
  %v241 = vpack.c.b16 %v145, %v143
  %v242 = vpack.c.b16 %v148, %v146
  %v243 = vpack.c.b16 %v149, %v147
  %v244 = vpack.c.b16 %v152, %v150
  %v245 = vpack.c.b16 %v153, %v151
  %v246 = vpack.c.b16 %v156, %v154
  %v247 = vpack.c.b16 %v157, %v155
  %v248 = vpack.c.b16 %v160, %v158
  %v249 = vpack.c.b16 %v161, %v159
  %v250 = vpack.c.b16 %v164, %v162
  %v251 = vpack.c.b16 %v165, %v163
  %v252 = vpack.c.b16 %v168, %v166
  %v253 = vpack.c.b16 %v169, %v167
  %v254 = vpack.c.b16 %v172, %v170
  %v255 = vpack.c.b16 %v173, %v171
  %v256 = vpack.c.b16 %v176, %v174
  %v257 = vpack.c.b16 %v177, %v175
  %v258 = vpack.c.b16 %v180, %v178
  %v259 = vpack.c.b16 %v181, %v179
  %v260 = vpack.c.b16 %v184, %v182
  %v261 = vpack.c.b16 %v185, %v183
  %v262 = vpack.c.b16 %v188, %v186
  %v263 = vpack.c.b16 %v189, %v187
  %v264 = vpack.c.b16 %v192, %v190
  %v265 = vpack.c.b16 %v193, %v191
  %v266 = vpack.c.b16 %v196, %v194
  %v267 = vpack.c.b16 %v197, %v195
  %v268 = vpack.c.b16 %v200, %v198
  %v269 = vpack.c.b16 %v201, %v199
  %v270 = vpack.c.b16 %v204, %v202
  %v271 = vpack.c.b16 %v205, %v203
  %v272 = vpack.c.b16 %v208, %v206
  %v273 = vpack.c.b16 %v209, %v207
  %v274 = vpack.c.b16 %v212, %v210
  %v275 = vpack.c.b16 %v213, %v211
  %v276 = vpack.c.b16 %v216, %v214
  %v277 = vpack.c.b16 %v217, %v215
  %v278 = vpack.c.b16 %v220, %v218
  %v279 = vpack.c.b16 %v221, %v219
  %v280 = vpack.c.b16 %v224, %v222
  %v281 = vpack.c.b16 %v225, %v223
  %v282 = vpack.c.b16 %v228, %v226
  %v283 = vpack.c.b16 %v229, %v227
  %v284 = vpack.c.b16 %v232, %v230
  %v285 = vpack.c.b16 %v233, %v231
  %v286 = vpack.c.b16 %v236, %v234
  %v287 = vpack.c.b16 %v237, %v235
  %vm338 = vcmask 130048
  %v340 = vsel %vm338, %v84, 0
  %342 = vmatprep.subr.bf16.mxu0 %v239
  %343 = vmatpush1.bf16.msra.mxu0 %v238
  %344 = vmatprep.subr.bf16.mxu0 %v241
  %345 = vmatpush1.bf16.msra.mxu0 %v240
  %346 = vmatprep.subr.bf16.mxu0 %v243
  %347 = vmatpush1.bf16.msra.mxu0 %v242
  %348 = vmatprep.subr.bf16.mxu0 %v245
  %349 = vmatpush1.bf16.msra.mxu0 %v244
  %350 = vmatprep.subr.bf16.mxu0 %v247
  %351 = vmatpush1.bf16.msra.mxu0 %v246
  %352 = vmatprep.subr.bf16.mxu0 %v249
  %353 = vmatpush1.bf16.msra.mxu0 %v248
  %354 = vmatprep.subr.bf16.mxu0 %v251
  %355 = vmatpush1.bf16.msra.mxu0 %v250
  %356 = vmatprep.subr.bf16.mxu0 %v253
  %357 = vmatpush1.bf16.msra.mxu0 %v252
  %358 = vmatprep.subr.bf16.mxu0 %v255
  %359 = vmatpush1.bf16.msra.mxu0 %v254
  %360 = vmatprep.subr.bf16.mxu0 %v257
  %361 = vmatpush1.bf16.msra.mxu0 %v256
  %362 = vmatprep.subr.bf16.mxu0 %v259
  %363 = vmatpush1.bf16.msra.mxu0 %v258
  %364 = vmatprep.subr.bf16.mxu0 %v261
  %365 = vmatpush1.bf16.msra.mxu0 %v260
  %366 = vmatprep.subr.bf16.mxu0 %v263
  %367 = vmatpush1.bf16.msra.mxu0 %v262
  %368 = vmatprep.subr.bf16.mxu0 %v265
  %369 = vmatpush1.bf16.msra.mxu0 %v264
  %370 = vmatprep.subr.bf16.mxu0 %v267
  %371 = vmatpush1.bf16.msra.mxu0 %v266
  %372 = vmatprep.subr.bf16.mxu0 %v269
  %373 = vmatpush1.bf16.msra.mxu0 %v268
  %374 = vmatprep.mubr.bf16.mxu0 %v82
  %375 = vmatmul.mubr.bf16.gmra.mrb[0].mxu0 %v81
  %v376 = vpop.f32.mrb[0].mxu0
  %v377 = vadd.f32 0.0, %v376
  %v378 = vpop.f32.mrb[0].mxu0
  %v379 = vadd.f32 0.0, %v378
  %v380 = vpop.f32.mrb[0].mxu0
  %v381 = vadd.f32 0.0, %v380
  %v382 = vpop.f32.mrb[0].mxu0
  %v383 = vadd.f32 0.0, %v382
  %384 = vdwg.mxu0
  %385 = vmatprep.subr.bf16.mxu0 %v271
  %386 = vmatpush1.bf16.msra.mxu0 %v270
  %387 = vmatprep.subr.bf16.mxu0 %v273
  %388 = vmatpush1.bf16.msra.mxu0 %v272
  %389 = vmatprep.subr.bf16.mxu0 %v275
  %390 = vmatpush1.bf16.msra.mxu0 %v274
  %391 = vmatprep.subr.bf16.mxu0 %v277
  %392 = vmatpush1.bf16.msra.mxu0 %v276
  %393 = vmatprep.subr.bf16.mxu0 %v279
  %394 = vmatpush1.bf16.msra.mxu0 %v278
  %395 = vmatprep.subr.bf16.mxu0 %v281
  %396 = vmatpush1.bf16.msra.mxu0 %v280
  %397 = vmatprep.subr.bf16.mxu0 %v283
  %398 = vmatpush1.bf16.msra.mxu0 %v282
  %399 = vmatprep.subr.bf16.mxu0 %v285
  %400 = vmatpush1.bf16.msra.mxu0 %v284
  %401 = vmatprep.subr.bf16.mxu0 %v287
  %402 = vmatpush1.bf16.msra.mxu0 %v286
  %403 = vmatprep.subr.bf16.mxu0 0
  %404 = vmatpush1.bf16.msra.mxu0 0
  %405 = vmatprep.subr.bf16.mxu0 0
  %406 = vmatpush1.bf16.msra.mxu0 0
  %407 = vmatprep.subr.bf16.mxu0 0
  %408 = vmatpush1.bf16.msra.mxu0 0
  %409 = vmatprep.subr.bf16.mxu0 0
  %410 = vmatpush1.bf16.msra.mxu0 0
  %411 = vmatprep.subr.bf16.mxu0 0
  %412 = vmatpush1.bf16.msra.mxu0 0
  %413 = vmatprep.subr.bf16.mxu0 0
  %414 = vmatpush1.bf16.msra.mxu0 0
  %415 = vmatprep.subr.bf16.mxu0 0
  %416 = vmatpush1.bf16.msra.mxu0 0
  %417 = vmatprep.mubr.bf16.mxu0 %v340
  %418 = vmatmul.mubr.bf16.gmra.mrb[0].mxu0 %v83
  %v419 = vpop.f32.mrb[0].mxu0
  %v420 = vadd.f32 %v377, %v419
  %v421 = vpop.f32.mrb[0].mxu0
  %v422 = vadd.f32 %v379, %v421
  %v423 = vpop.f32.mrb[0].mxu0
  %v424 = vadd.f32 %v381, %v423
  %v425 = vpop.f32.mrb[0].mxu0
  %v426 = vadd.f32 %v383, %v425
  %427 = vdwg.mxu0
  %v428 = vld [vmem:[%s2] sm:$0xff]
  %v429 = vld [vmem:[%s2 + $0x8] sm:$0xff]
  %v430 = vld [vmem:[%s2 + $0x10] sm:$0x3]
  %v431 = vld [vmem:[%s2 + $0x18] sm:$0x3]
  %v432 = vmax.f32 %v428, %v420
  %v433 = vmax.f32 %v429, %v422
  %v434 = vmax.f32 %v430, %v424
  %v435 = vmax.f32 %v431, %v426
  %436 = vst [vmem:[%s3] sm:$0xff] %v432
  %437 = vst [vmem:[%s3 + $0x8] sm:$0xff] %v433
  %438 = vst [vmem:[%s3 + $0x10] sm:$0x3] %v434
  %439 = vst [vmem:[%s3 + $0x18] sm:$0x3] %v435
  // Predicated region
  $region14: #{a_call__.25} parent=0 // pred_check
    _
  $region15: #{a_call__.25} parent=0 // pred_check_branch
    %441 = sbr.rel (0) target = $region17
  $region16: #{a_call__.25} parent=0 // pred_region
    _
  $region17: #{a_call__.25} parent=0 // pred_fallthru
    _
  // Predicated region
  $region18: #{a_call__.25} parent=0 // pred_check
    _
  $region19: #{a_call__.25} parent=0 // pred_check_branch
    %443 = sbr.rel (0) target = $region21
  $region20: #{a_call__.25} parent=0 // pred_region
    _
  $region21: #{a_call__.25} parent=0 // pred_fallthru
    _

// kernel: a_call__.27
$region0: #{a_call__.27}
  #allocation0 [shape = 'u32[]', space=smem, size = 0x4, offset = 0x4, fixed_abs, tag = 'smem constant byte address 0x4 - core index']
  #allocation1 [shape = 'u32[144,128]{1,0:T(1,128)}', space=vmem, size = 0x12000, scoped, tag = 'internal scratch']
  %s0 = inlined_call_operand.vmem [shape: bf16[2,4,576], index: 0, kind: input, shape index: {}]
  %s1 = inlined_call_operand.vmem [shape: bf16[5,4], index: 1, kind: input, shape index: {}]
  %s2 = inlined_call_operand.vmem [shape: f32[5,1], index: 2, kind: input, shape index: {}]
  %s3 = inlined_call_operand.vmem [shape: bf16[2,5,576], index: 3, kind: output, shape index: {}]
  %s4 = sld [smem:[#allocation0]]
  $region45: #{a_call__.27} parent=0
    _
  %s6 = ssub.s32 1, %s4
  %s7 = scalar_select 0, %s6, %s4
  loop: start=0, step=1, limit=4
  $region2: #{a_call__.27} parent=0 // loop_pre_header
    _
  $region3: #{a_call__.27} parent=0 // loop_header
    %s9 = sphi 0, %s13
    %p10 = scmp.ge.s32.totalorder %s9, 4
    %s16 = sphi 0, %s28
    %s17 = sphi 0, %s24
    %s18 = sphi 0, %s16
    %s19 = sphi 0, %s17
    %s20 = sphi 0, %s18
    %s21 = sphi 0, %s19
    %s33 = sphi 0, %s35
    %s36 = sphi 0, %s33
    %s37 = sphi 0, %s36
    %s53 = sphi 0, %s37
    %s57 = sphi 0, %s57
    %s59 = sphi 0, %s57
    %s60 = sphi 0, %s59
    %s74 = sphi 0, %s60
    %s78 = sphi 0, %s78
    %s80 = sphi 0, %s78
    %s81 = sphi 0, %s80
    %s95 = sphi 0, %s81
    %s103 = sphi 0, %s105
    %s106 = sphi 0, %s103
    %s107 = sphi 0, %s106
    %s123 = sphi 0, %s107
  $region4: #{a_call__.27} parent=0 // loop_header_branch
    %12 = sbr.rel (%p10) target = $region8
  $region5: #{a_call__.27} parent=0 // loop_body
    %s14 = ssub.s32 %s9, 1
    %s15 = ssub.s32 %s9, 2
    %s22 = sadd.s32 1, %s17
    %p23 = scmp.ge.s32.totalorder %s22, 1
    %s24 = scalar_select %p23, 0, %s22
    %s25 = sadd.s32 1, %s16
    %s26 = scalar_select %p23, %s25, %s16
    %p27 = scmp.ge.s32.totalorder %s26, 2
    %s28 = scalar_select %p27, 0, %s26
    %s29 = ssub.s32 %s16, %s28
    %s30 = ssub.s32 %s17, %s24
    %s31 = sor.u32 %s29, %s30
    %p32 = scmp.eq.s32.totalorder %s31, 0
    %s34 = sadd.s32 %s33, 1
    %s35 = scalar_select %p32, %s33, %s34
    %p38 = pneg %p32
    %p39 = scmp.eq.s32.totalorder %s9, 1
    %p40 = por %p38, %p39
    %p41 = scmp.ne.s32.totalorder %s33, %s36
    %p42 = scmp.eq.s32.totalorder %s9, 0
    %p43 = por %p41, %p42
    %p44 = scmp.ne.s32.totalorder %s33, %s36
    %p45 = scmp.eq.s32.totalorder %s14, 1
    %p46 = por %p44, %p45
    %p47 = scmp.ne.s32.totalorder %s36, %s37
    %p48 = scmp.eq.s32.totalorder %s14, 0
    %p49 = por %p47, %p48
    %p50 = scmp.ne.s32.totalorder %s36, %s37
    %p51 = scmp.eq.s32.totalorder %s15, 1
    %p52 = por %p50, %p51
    %p54 = scmp.ne.s32.totalorder %s37, %s53
    %p55 = scmp.eq.s32.totalorder %s15, 0
    %p56 = por %p54, %p55
    %s58 = sadd.s32 %s57, 1
    %p61 = scmp.eq.s32.totalorder %s9, 1
    %p62 = scmp.ne.s32.totalorder %s57, %s59
    %p63 = scmp.eq.s32.totalorder %s9, 0
    %p64 = por %p62, %p63
    %p65 = scmp.ne.s32.totalorder %s57, %s59
    %p66 = scmp.eq.s32.totalorder %s14, 1
    %p67 = por %p65, %p66
    %p68 = scmp.ne.s32.totalorder %s59, %s60
    %p69 = scmp.eq.s32.totalorder %s14, 0
    %p70 = por %p68, %p69
    %p71 = scmp.ne.s32.totalorder %s59, %s60
    %p72 = scmp.eq.s32.totalorder %s15, 1
    %p73 = por %p71, %p72
    %p75 = scmp.ne.s32.totalorder %s60, %s74
    %p76 = scmp.eq.s32.totalorder %s15, 0
    %p77 = por %p75, %p76
    %s79 = sadd.s32 %s78, 1
    %p82 = scmp.eq.s32.totalorder %s9, 1
    %p83 = scmp.ne.s32.totalorder %s78, %s80
    %p84 = scmp.eq.s32.totalorder %s9, 0
    %p85 = por %p83, %p84
    %p86 = scmp.ne.s32.totalorder %s78, %s80
    %p87 = scmp.eq.s32.totalorder %s14, 1
    %p88 = por %p86, %p87
    %p89 = scmp.ne.s32.totalorder %s80, %s81
    %p90 = scmp.eq.s32.totalorder %s14, 0
    %p91 = por %p89, %p90
    %p92 = scmp.ne.s32.totalorder %s80, %s81
    %p93 = scmp.eq.s32.totalorder %s15, 1
    %p94 = por %p92, %p93
    %p96 = scmp.ne.s32.totalorder %s81, %s95
    %p97 = scmp.eq.s32.totalorder %s15, 0
    %p98 = por %p96, %p97
    %s99 = ssub.s32 %s16, %s28
    %s100 = ssub.s32 %s17, %s24
    %s101 = sor.u32 %s99, %s100
    %p102 = scmp.eq.s32.totalorder %s101, 0
    %s104 = sadd.s32 %s103, 1
    %s105 = scalar_select %p102, %s103, %s104
    %p108 = pneg %p102
    %p109 = scmp.eq.s32.totalorder %s9, 1
    %p110 = por %p108, %p109
    %p111 = scmp.ne.s32.totalorder %s103, %s106
    %p112 = scmp.eq.s32.totalorder %s9, 0
    %p113 = por %p111, %p112
    %p114 = scmp.ne.s32.totalorder %s103, %s106
    %p115 = scmp.eq.s32.totalorder %s14, 1
    %p116 = por %p114, %p115
    %p117 = scmp.ne.s32.totalorder %s106, %s107
    %p118 = scmp.eq.s32.totalorder %s14, 0
    %p119 = por %p117, %p118
    %p120 = scmp.ne.s32.totalorder %s106, %s107
    %p121 = scmp.eq.s32.totalorder %s15, 1
    %p122 = por %p120, %p121
    %p124 = scmp.ne.s32.totalorder %s107, %s123
    %p125 = scmp.eq.s32.totalorder %s15, 0
    %p126 = por %p124, %p125
    %p127 = scmp.le.s32.totalorder 1, %s9
    %p128 = scmp.lt.s32.totalorder %s9, 3
    %p129 = pnand %p127, %p128
    %p130 = pneg %p129
    // Predicated region
    $region9: #{a_call__.27} parent=5 // pred_check
      _
    $region10: #{a_call__.27} parent=5 // pred_check_branch
      %132 = sbr.rel (%p129) target = $region12
    $region11: #{a_call__.27} parent=5 // pred_region
      %s133 = ssub.s32 %s9, 1
      // Predicated region
      $region13: #{a_call__.27} parent=11 // pred_check
        %p134 = pneg %p70
      $region14: #{a_call__.27} parent=11 // pred_check_branch
        %136 = sbr.rel (%p134) target = $region16
      $region15: #{a_call__.27} parent=11 // pred_region
        _
      $region16: #{a_call__.27} parent=11 // pred_fallthru
        _
      // Predicated region
      $region17: #{a_call__.27} parent=11 // pred_check
        %p137 = pneg %p91
      $region18: #{a_call__.27} parent=11 // pred_check_branch
        %139 = sbr.rel (%p137) target = $region20
      $region19: #{a_call__.27} parent=11 // pred_region
        _
      $region20: #{a_call__.27} parent=11 // pred_fallthru
        _
    $region12: #{a_call__.27} parent=5 // pred_fallthru
      _
    %p140 = scmp.lt.s32.totalorder %s9, 2
    // Predicated region
    $region21: #{a_call__.27} parent=5 // pred_check
      %p141 = pneg %p140
    $region22: #{a_call__.27} parent=5 // pred_check_branch
      %143 = sbr.rel (%p141) target = $region24
    $region23: #{a_call__.27} parent=5 // pred_region
      // Predicated region
      $region25: #{a_call__.27} parent=23 // pred_check
        %p144 = pneg %p43
      $region26: #{a_call__.27} parent=23 // pred_check_branch
        %146 = sbr.rel (%p144) target = $region28
      $region27: #{a_call__.27} parent=23 // pred_region
        %s147 = smul.u32 5, %s17
        %p148 = scmp.lt.s32.totalorder %s16, 1
        %s149 = scalar_select %p148, %s16, 1
        %p150 = scmp.lt.s32.totalorder %s147, 4
        %s151 = scalar_select %p150, %s147, 4
        %s152 = smul.addr %s149, 5
        %s153 = sadd.s32 %s151, %s152
        %s154 = smul.addr %s153, 2
        %s155 = scalar_lea.vmem %s0, %s154
        %s156 = smul.u32 5, %s17
      $region28: #{a_call__.27} parent=23 // pred_fallthru
        _
    $region24: #{a_call__.27} parent=5 // pred_fallthru
      _
    %p157 = scmp.le.s32.totalorder 1, %s9
    %p158 = scmp.lt.s32.totalorder %s9, 3
    %p159 = pnand %p157, %p158
    %p160 = pneg %p159
    // Predicated region
    $region29: #{a_call__.27} parent=5 // pred_check
      _
    $region30: #{a_call__.27} parent=5 // pred_check_branch
      %162 = sbr.rel (%p159) target = $region32
    $region31: #{a_call__.27} parent=5 // pred_region
      %s163 = ssub.s32 %s9, 1
      %s164 = smul.u32 5, %s19
      %p165 = scmp.lt.s32.totalorder %s18, 1
      %s166 = scalar_select %p165, %s18, 1
      %p167 = scmp.lt.s32.totalorder %s164, 4
      %s168 = scalar_select %p167, %s164, 4
      %s169 = smul.addr %s166, 5
      %s170 = sadd.s32 %s168, %s169
      %s171 = smul.addr %s170, 2
      %s172 = scalar_lea.vmem %s0, %s171
      %p173 = pneg %p49
      %p174 = pneg %p46
      %p175 = pneg %p70
      %p176 = pneg %p67
      %p177 = pneg %p91
      %p178 = pneg %p88
      %p179 = pneg %p119
      %p180 = pneg %p116
      %s181 = smul.u32 5, %s19
      %p182 = scmp.lt.s32.totalorder %s18, 1
      %s183 = scalar_select %p182, %s18, 1
      %p184 = scmp.lt.s32.totalorder %s181, 4
      %s185 = scalar_select %p184, %s181, 4
      %s186 = smul.addr %s183, 5
      %s187 = sadd.s32 %s185, %s186
      %s188 = smul.addr %s187, 4
      %s189 = scalar_lea.vmem %s3, %s188
      %s190 = smul.u32 5, %s19
      %p191 = scmp.lt.s32.totalorder %s18, 1
      %s192 = scalar_select %p191, %s18, 1
      %p193 = scmp.lt.s32.totalorder %s190, 4
      %s194 = scalar_select %p193, %s190, 4
      %s195 = smul.addr %s192, 5
      %s196 = sadd.s32 %s194, %s195
      %s197 = smul.addr %s196, 2
      %s198 = scalar_lea.vmem %s0, %s197
      %s199 = smul.u32 5, %s19
      %s200 = smul.u32 5, %s19
      %p201 = scmp.lt.s32.totalorder %s18, 1
      %s202 = scalar_select %p201, %s18, 1
      %p203 = scmp.lt.s32.totalorder %s200, 4
      %s204 = scalar_select %p203, %s200, 4
      %s205 = smul.addr %s202, 5
      %s206 = sadd.s32 %s204, %s205
      %s207 = smul.addr %s206, 4
      %s208 = scalar_lea.vmem %s3, %s207
      %s209 = smul.u32 5, %s19
      %v211 = vld [vmem:[%s1] sm:$0x7]
      %v212 = vld [vmem:[%s198] sm:$0xff]
      %v213 = vld [vmem:[%s198 + $0x8] sm:$0x3]
      %v214 = vld [vmem:[%s2] sm:$0x1f]
      %216 = vset.pattern.permute.xlu0 0
      %217 = vperm.xlu0 %216, %v214
      %v218 = vpop.permute.xlu0 %217
      %v222 = vcombine.high %v212, %v212
      %v224 = vunpack.c.l.s4 1983009808
      %v225 = vunpack.c.0.s8 %v224
      %v226 = vlaneseq
      %v227 = vshrl.u32 %v226, 7
      %v228 = vsub.s32 %v225, %v227
      %v229 = vrot.slane %v212, %v228
      %v231 = vunpack.c.l.s4 1983009808
      %v232 = vunpack.c.0.s8 %v231
      %v233 = vlaneseq
      %v234 = vshrl.u32 %v233, 7
      %v235 = vsub.s32 %v232, %v234
      %v236 = vrot.slane %v222, %v235
      %v237 = vcombine.high %v229, %v229
      %v238 = vcombine.high %v236, %v236
      %v240 = vunpack.c.l.s4 1983009808
      %v241 = vunpack.c.0.s8 %v240
      %v242 = vlaneseq
      %v243 = vshrl.u32 %v242, 7
      %v244 = vsub.s32 %v241, %v243
      %v245 = vrot.slane %v213, %v244
      %vm246 = vcmask 31744
      %v248 = vsel %vm246, %v211, 0
      %vm250 = vcmask 1041408
      %v252 = vsel %vm250, %v229, 0
      %v255 = vsel %vm250, %v237, 0
      %v258 = vsel %vm250, %v236, 0
      %v261 = vsel %vm250, %v238, 0
      %v264 = vsel %vm250, %v245, 0
      %266 = vmatprep.subr.bf16.mxu0 %v255
      %267 = vmatpush1.bf16.msra.mxu0 %v252
      %268 = vmatprep.subr.bf16.mxu0 0
      %269 = vmatpush1.bf16.msra.mxu0 0
      %270 = vmatprep.subr.bf16.mxu0 0
      %271 = vmatpush1.bf16.msra.mxu0 0
      %272 = vmatprep.subr.bf16.mxu0 0
      %273 = vmatpush1.bf16.msra.mxu0 0
      %274 = vmatprep.subr.bf16.mxu0 0
      %275 = vmatpush1.bf16.msra.mxu0 0
      %276 = vmatprep.subr.bf16.mxu0 0
      %277 = vmatpush1.bf16.msra.mxu0 0
      %278 = vmatprep.subr.bf16.mxu0 0
      %279 = vmatpush1.bf16.msra.mxu0 0
      %280 = vmatprep.subr.bf16.mxu0 0
      %281 = vmatpush1.bf16.msra.mxu0 0
      %282 = vmatprep.subr.bf16.mxu0 0
      %283 = vmatpush1.bf16.msra.mxu0 0
      %284 = vmatprep.subr.bf16.mxu0 0
      %285 = vmatpush1.bf16.msra.mxu0 0
      %286 = vmatprep.subr.bf16.mxu0 0
      %287 = vmatpush1.bf16.msra.mxu0 0
      %288 = vmatprep.subr.bf16.mxu0 0
      %289 = vmatpush1.bf16.msra.mxu0 0
      %290 = vmatprep.subr.bf16.mxu0 0
      %291 = vmatpush1.bf16.msra.mxu0 0
      %292 = vmatprep.subr.bf16.mxu0 0
      %293 = vmatpush1.bf16.msra.mxu0 0
      %294 = vmatprep.subr.bf16.mxu0 0
      %295 = vmatpush1.bf16.msra.mxu0 0
      %296 = vmatprep.subr.bf16.mxu0 0
      %297 = vmatpush1.bf16.msra.mxu0 0
      %298 = vmatprep.mubr.bf16.mxu0 0
      %299 = vmatmul.mubr.bf16.gmra.mrb[0].mxu0 %v248
      %v300 = vpop.f32.mrb[0].mxu0
      %v301 = vadd.f32 %v218, %v300
      %v302 = vpop.f32.mrb[0].mxu0
      %v303 = vadd.f32 %v218, %v302
      %v304 = vpop.f32.mrb[0].mxu0
      %v305 = vpop.f32.mrb[0].mxu0
      %306 = vdwg.mxu0
      %307 = vmatprep.subr.bf16.mxu0 %v261
      %308 = vmatpush1.bf16.msra.mxu0 %v258
      %309 = vmatprep.subr.bf16.mxu0 0
      %310 = vmatpush1.bf16.msra.mxu0 0
      %311 = vmatprep.subr.bf16.mxu0 0
      %312 = vmatpush1.bf16.msra.mxu0 0
      %313 = vmatprep.subr.bf16.mxu0 0
      %314 = vmatpush1.bf16.msra.mxu0 0
      %315 = vmatprep.subr.bf16.mxu0 0
      %316 = vmatpush1.bf16.msra.mxu0 0
      %317 = vmatprep.subr.bf16.mxu0 0
      %318 = vmatpush1.bf16.msra.mxu0 0
      %319 = vmatprep.subr.bf16.mxu0 0
      %320 = vmatpush1.bf16.msra.mxu0 0
      %321 = vmatprep.subr.bf16.mxu0 0
      %322 = vmatpush1.bf16.msra.mxu0 0
      %323 = vmatprep.subr.bf16.mxu0 0
      %324 = vmatpush1.bf16.msra.mxu0 0
      %325 = vmatprep.subr.bf16.mxu0 0
      %326 = vmatpush1.bf16.msra.mxu0 0
      %327 = vmatprep.subr.bf16.mxu0 0
      %328 = vmatpush1.bf16.msra.mxu0 0
      %329 = vmatprep.subr.bf16.mxu0 0
      %330 = vmatpush1.bf16.msra.mxu0 0
      %331 = vmatprep.subr.bf16.mxu0 0
      %332 = vmatpush1.bf16.msra.mxu0 0
      %333 = vmatprep.subr.bf16.mxu0 0
      %334 = vmatpush1.bf16.msra.mxu0 0
      %335 = vmatprep.subr.bf16.mxu0 0
      %336 = vmatpush1.bf16.msra.mxu0 0
      %337 = vmatprep.subr.bf16.mxu0 0
      %338 = vmatpush1.bf16.msra.mxu0 0
      %339 = vmatprep.mubr.bf16.mxu0 0
      %340 = vmatmul.mubr.bf16.gmra.mrb[0].mxu0 %v248
      %v341 = vpop.f32.mrb[0].mxu0
      %v342 = vadd.f32 %v218, %v341
      %v343 = vpop.f32.mrb[0].mxu0
      %v344 = vadd.f32 %v218, %v343
      %v345 = vpop.f32.mrb[0].mxu0
      %v346 = vpop.f32.mrb[0].mxu0
      %347 = vdwg.mxu0
      %348 = vmatprep.subr.bf16.mxu0 0
      %349 = vmatpush1.bf16.msra.mxu0 %v264
      %350 = vmatprep.subr.bf16.mxu0 0
      %351 = vmatpush1.bf16.msra.mxu0 0
      %352 = vmatprep.subr.bf16.mxu0 0
      %353 = vmatpush1.bf16.msra.mxu0 0
      %354 = vmatprep.subr.bf16.mxu0 0
      %355 = vmatpush1.bf16.msra.mxu0 0
      %356 = vmatprep.subr.bf16.mxu0 0
      %357 = vmatpush1.bf16.msra.mxu0 0
      %358 = vmatprep.subr.bf16.mxu0 0
      %359 = vmatpush1.bf16.msra.mxu0 0
      %360 = vmatprep.subr.bf16.mxu0 0
      %361 = vmatpush1.bf16.msra.mxu0 0
      %362 = vmatprep.subr.bf16.mxu0 0
      %363 = vmatpush1.bf16.msra.mxu0 0
      %364 = vmatprep.subr.bf16.mxu0 0
      %365 = vmatpush1.bf16.msra.mxu0 0
      %366 = vmatprep.subr.bf16.mxu0 0
      %367 = vmatpush1.bf16.msra.mxu0 0
      %368 = vmatprep.subr.bf16.mxu0 0
      %369 = vmatpush1.bf16.msra.mxu0 0
      %370 = vmatprep.subr.bf16.mxu0 0
      %371 = vmatpush1.bf16.msra.mxu0 0
      %372 = vmatprep.subr.bf16.mxu0 0
      %373 = vmatpush1.bf16.msra.mxu0 0
      %374 = vmatprep.subr.bf16.mxu0 0
      %375 = vmatpush1.bf16.msra.mxu0 0
      %376 = vmatprep.subr.bf16.mxu0 0
      %377 = vmatpush1.bf16.msra.mxu0 0
      %378 = vmatprep.subr.bf16.mxu0 0
      %379 = vmatpush1.bf16.msra.mxu0 0
      %380 = vmatprep.mubr.bf16.mxu0 0
      %381 = vmatmul.mubr.bf16.gmra.mrb[0].mxu0 %v248
      %v382 = vpop.f32.mrb[0].mxu0
      %v383 = vadd.f32 %v218, %v382
      %v384 = vpop.f32.mrb[0].mxu0
      %v385 = vpop.f32.mrb[0].mxu0
      %v386 = vpop.f32.mrb[0].mxu0
      %387 = vdwg.mxu0
      %v388 = vpack.c.bf16 %v301, %v301
      %v389 = vpack.c.bf16 %v303, %v303
      %v390 = vpack.c.bf16 %v342, %v342
      %v391 = vpack.c.bf16 %v344, %v344
      %v392 = vpack.c.bf16 %v383, %v383
      %v398 = vunpack.c.l.b16 %v388
      %v399 = vunpack.c.l.b16 %v389
      %v400 = vunpack.c.l.b16 %v390
      %v401 = vunpack.c.l.b16 %v391
      %v402 = vunpack.c.l.b16 %v392
      %v403 = vpack.c.b16 %v399, %v398
      %v404 = vpack.c.b16 %v401, %v400
      %v405 = vpack.c.b16 %v402, %v402
      %vm409 = vcmask 1042432
      %vm410 = vsmask.f32 2304
      %vm411 = vmand %vm409, %vm410
      %vm412 = vcmask 1046532
      %vm413 = vsmask.f32 6400
      %vm414 = vmand %vm412, %vm413
      %vm415 = vmor %vm414, %vm411
      %v416 = vld [vmem:[%s208] sm:$0x77]
      %v417 = vsel %vm415, %v403, %v416
      %418 = vst [vmem:[%s208] sm:$0x77] %v417
      %v419 = vld [vmem:[%s208 + $0x8] sm:$0x77]
      %v420 = vsel %vm415, %v404, %v419
      %421 = vst [vmem:[%s208 + $0x8] sm:$0x77] %v420
      %vm422 = vcmask 518144
      %vm423 = vmand %vm422, %vm410
      %v424 = vld [vmem:[%s208 + $0x10] sm:$0x7]
      %v425 = vsel %vm423, %v405, %v424
      %426 = vst [vmem:[%s208 + $0x10] sm:$0x7] %v425
      %s427 = smul.u32 5, %s19
      %p428 = scmp.lt.s32.totalorder %s18, 1
      %s429 = scalar_select %p428, %s18, 1
      %p430 = scmp.lt.s32.totalorder %s427, 4
      %s431 = scalar_select %p430, %s427, 4
      %s432 = smul.addr %s429, 5
      %s433 = sadd.s32 %s431, %s432
      %s434 = smul.addr %s433, 4
      %s435 = scalar_lea.vmem %s3, %s434
      // Predicated region
      $region33: #{a_call__.27} parent=31 // pred_check
        %p436 = pneg %p116
      $region34: #{a_call__.27} parent=31 // pred_check_branch
        %438 = sbr.rel (%p436) target = $region36
      $region35: #{a_call__.27} parent=31 // pred_region
        %s439 = smul.u32 5, %s19
      $region36: #{a_call__.27} parent=31 // pred_fallthru
        _
    $region32: #{a_call__.27} parent=5 // pred_fallthru
      _
    %p440 = scmp.le.s32.totalorder 2, %s9
    // Predicated region
    $region37: #{a_call__.27} parent=5 // pred_check
      %p441 = pneg %p440
    $region38: #{a_call__.27} parent=5 // pred_check_branch
      %443 = sbr.rel (%p441) target = $region40
    $region39: #{a_call__.27} parent=5 // pred_region
      %s444 = ssub.s32 %s9, 2
      // Predicated region
      $region41: #{a_call__.27} parent=39 // pred_check
        %p445 = pneg %p122
      $region42: #{a_call__.27} parent=39 // pred_check_branch
        %447 = sbr.rel (%p445) target = $region44
      $region43: #{a_call__.27} parent=39 // pred_region
        %s448 = smul.u32 5, %s21
        %p449 = scmp.lt.s32.totalorder %s20, 1
        %s450 = scalar_select %p449, %s20, 1
        %p451 = scmp.lt.s32.totalorder %s448, 4
        %s452 = scalar_select %p451, %s448, 4
        %s453 = smul.addr %s450, 5
        %s454 = sadd.s32 %s452, %s453
        %s455 = smul.addr %s454, 4
        %s456 = scalar_lea.vmem %s3, %s455
      $region44: #{a_call__.27} parent=39 // pred_fallthru
        _
    $region40: #{a_call__.27} parent=5 // pred_fallthru
      _
  $region6: #{a_call__.27} parent=0 // loop_footer
    %s13 = sadd.s32 1, %s9
  $region7: #{a_call__.27} parent=0 // loop_footer_branch
    %8 = sbr.rel target = $region3
  $region8: #{a_call__.27} parent=0 // loop_exit
    _

// kernel: a_call__.26
$region0: #{a_call__.26}
  #allocation0 [shape = 'u32[]', space=smem, size = 0x4, offset = 0x4, fixed_abs, tag = 'smem constant byte address 0x4 - core index']
  #allocation1 [shape = 'u32[144,128]{1,0:T(1,128)}', space=vmem, size = 0x12000, scoped, tag = 'internal scratch']
  %s0 = inlined_call_operand.vmem [shape: bf16[8,256], index: 0, kind: input, shape index: {}]
  %s1 = inlined_call_operand.vmem [shape: bf16[256,576], index: 1, kind: input, shape index: {}]
  %s2 = inlined_call_operand.vmem [shape: bf16[8,576], index: 2, kind: output, shape index: {}]
  %s3 = sld [smem:[#allocation0]]
  $region18: #{a_call__.26} parent=0
    _
  %s5 = ssub.s32 1, %s3
  %s6 = scalar_select 0, %s5, %s3
  // Predicated region
  $region2: #{a_call__.26} parent=0 // pred_check
    _
  $region3: #{a_call__.26} parent=0 // pred_check_branch
    %8 = sbr.rel (0) target = $region5
  $region4: #{a_call__.26} parent=0 // pred_region
    _
  $region5: #{a_call__.26} parent=0 // pred_fallthru
    _
  // Predicated region
  $region6: #{a_call__.26} parent=0 // pred_check
    _
  $region7: #{a_call__.26} parent=0 // pred_check_branch
    %10 = sbr.rel (0) target = $region9
  $region8: #{a_call__.26} parent=0 // pred_region
    _
  $region9: #{a_call__.26} parent=0 // pred_fallthru
    _
  %v12 = vld [vmem:[%s0] sm:$0xff]
  %v13 = vld [vmem:[%s1] sm:$0xff]
  %v14 = vld [vmem:[%s1 + $0x8] sm:$0xff]
  %v15 = vld [vmem:[%s1 + $0x10] sm:$0xf]
  %v16 = vld [vmem:[%s1 + $0x14] sm:$0xff]
  %v17 = vld [vmem:[%s1 + $0x1c] sm:$0xff]
  %v18 = vld [vmem:[%s1 + $0x24] sm:$0xf]
  %v19 = vld [vmem:[%s1 + $0x28] sm:$0xff]
  %v20 = vld [vmem:[%s1 + $0x30] sm:$0xff]
  %v21 = vld [vmem:[%s1 + $0x38] sm:$0xf]
  %v22 = vld [vmem:[%s1 + $0x3c] sm:$0xff]
  %v23 = vld [vmem:[%s1 + $0x44] sm:$0xff]
  %v24 = vld [vmem:[%s1 + $0x4c] sm:$0xf]
  %v25 = vld [vmem:[%s1 + $0x50] sm:$0xff]
  %v26 = vld [vmem:[%s1 + $0x58] sm:$0xff]
  %v27 = vld [vmem:[%s1 + $0x60] sm:$0xf]
  %v28 = vld [vmem:[%s1 + $0x64] sm:$0xff]
  %v29 = vld [vmem:[%s1 + $0x6c] sm:$0xff]
  %v30 = vld [vmem:[%s1 + $0x74] sm:$0xf]
  %v31 = vld [vmem:[%s1 + $0x78] sm:$0xff]
  %v32 = vld [vmem:[%s1 + $0x80] sm:$0xff]
  %v33 = vld [vmem:[%s1 + $0x88] sm:$0xf]
  %v34 = vld [vmem:[%s1 + $0x8c] sm:$0xff]
  %v35 = vld [vmem:[%s1 + $0x94] sm:$0xff]
  %v36 = vld [vmem:[%s1 + $0x9c] sm:$0xf]
  %v37 = vld [vmem:[%s1 + $0xa0] sm:$0xff]
  %v38 = vld [vmem:[%s1 + $0xa8] sm:$0xff]
  %v39 = vld [vmem:[%s1 + $0xb0] sm:$0xf]
  %v40 = vld [vmem:[%s1 + $0xb4] sm:$0xff]
  %v41 = vld [vmem:[%s1 + $0xbc] sm:$0xff]
  %v42 = vld [vmem:[%s1 + $0xc4] sm:$0xf]
  %v43 = vld [vmem:[%s1 + $0xc8] sm:$0xff]
  %v44 = vld [vmem:[%s1 + $0xd0] sm:$0xff]
  %v45 = vld [vmem:[%s1 + $0xd8] sm:$0xf]
  %v46 = vld [vmem:[%s1 + $0xdc] sm:$0xff]
  %v47 = vld [vmem:[%s1 + $0xe4] sm:$0xff]
  %v48 = vld [vmem:[%s1 + $0xec] sm:$0xf]
  %v49 = vld [vmem:[%s1 + $0xf0] sm:$0xff]
  %v50 = vld [vmem:[%s1 + $0xf8] sm:$0xff]
  %v51 = vld [vmem:[%s1 + $0x100] sm:$0xf]
  %v52 = vld [vmem:[%s1 + $0x104] sm:$0xff]
  %v53 = vld [vmem:[%s1 + $0x10c] sm:$0xff]
  %v54 = vld [vmem:[%s1 + $0x114] sm:$0xf]
  %v55 = vld [vmem:[%s1 + $0x118] sm:$0xff]
  %v56 = vld [vmem:[%s1 + $0x120] sm:$0xff]
  %v57 = vld [vmem:[%s1 + $0x128] sm:$0xf]
  %v58 = vld [vmem:[%s1 + $0x12c] sm:$0xff]
  %v59 = vld [vmem:[%s1 + $0x134] sm:$0xff]
  %v60 = vld [vmem:[%s1 + $0x13c] sm:$0xf]
  %v61 = vld [vmem:[%s1 + $0x140] sm:$0xff]
  %v62 = vld [vmem:[%s1 + $0x148] sm:$0xff]
  %v63 = vld [vmem:[%s1 + $0x150] sm:$0xf]
  %v64 = vld [vmem:[%s1 + $0x154] sm:$0xff]
  %v65 = vld [vmem:[%s1 + $0x15c] sm:$0xff]
  %v66 = vld [vmem:[%s1 + $0x164] sm:$0xf]
  %v67 = vld [vmem:[%s1 + $0x168] sm:$0xff]
  %v68 = vld [vmem:[%s1 + $0x170] sm:$0xff]
  %v69 = vld [vmem:[%s1 + $0x178] sm:$0xf]
  %v70 = vld [vmem:[%s1 + $0x17c] sm:$0xff]
  %v71 = vld [vmem:[%s1 + $0x184] sm:$0xff]
  %v72 = vld [vmem:[%s1 + $0x18c] sm:$0xf]
  %v73 = vld [vmem:[%s1 + $0x190] sm:$0xff]
  %v74 = vld [vmem:[%s1 + $0x198] sm:$0xff]
  %v75 = vld [vmem:[%s1 + $0x1a0] sm:$0xf]
  %v76 = vld [vmem:[%s1 + $0x1a4] sm:$0xff]
  %v77 = vld [vmem:[%s1 + $0x1ac] sm:$0xff]
  %v78 = vld [vmem:[%s1 + $0x1b4] sm:$0xf]
  %v79 = vld [vmem:[%s1 + $0x1b8] sm:$0xff]
  %v80 = vld [vmem:[%s1 + $0x1c0] sm:$0xff]
  %v81 = vld [vmem:[%s1 + $0x1c8] sm:$0xf]
  %v82 = vld [vmem:[%s1 + $0x1cc] sm:$0xff]
  %v83 = vld [vmem:[%s1 + $0x1d4] sm:$0xff]
  %v84 = vld [vmem:[%s1 + $0x1dc] sm:$0xf]
  %v85 = vld [vmem:[%s1 + $0x1e0] sm:$0xff]
  %v86 = vld [vmem:[%s1 + $0x1e8] sm:$0xff]
  %v87 = vld [vmem:[%s1 + $0x1f0] sm:$0xf]
  %v88 = vld [vmem:[%s1 + $0x1f4] sm:$0xff]
  %v89 = vld [vmem:[%s1 + $0x1fc] sm:$0xff]
  %v90 = vld [vmem:[%s1 + $0x204] sm:$0xf]
  %v91 = vld [vmem:[%s1 + $0x208] sm:$0xff]
  %v92 = vld [vmem:[%s1 + $0x210] sm:$0xff]
  %v93 = vld [vmem:[%s1 + $0x218] sm:$0xf]
  %v94 = vld [vmem:[%s1 + $0x21c] sm:$0xff]
  %v95 = vld [vmem:[%s1 + $0x224] sm:$0xff]
  %v96 = vld [vmem:[%s1 + $0x22c] sm:$0xf]
  %v97 = vld [vmem:[%s1 + $0x230] sm:$0xff]
  %v98 = vld [vmem:[%s1 + $0x238] sm:$0xff]
  %v99 = vld [vmem:[%s1 + $0x240] sm:$0xf]
  %v100 = vld [vmem:[%s1 + $0x244] sm:$0xff]
  %v101 = vld [vmem:[%s1 + $0x24c] sm:$0xff]
  %v102 = vld [vmem:[%s1 + $0x254] sm:$0xf]
  %v103 = vld [vmem:[%s1 + $0x258] sm:$0xff]
  %v104 = vld [vmem:[%s1 + $0x260] sm:$0xff]
  %v105 = vld [vmem:[%s1 + $0x268] sm:$0xf]
  %v106 = vld [vmem:[%s1 + $0x26c] sm:$0xff]
  %v107 = vld [vmem:[%s1 + $0x274] sm:$0xff]
  %v108 = vld [vmem:[%s1 + $0x27c] sm:$0xf]
  %v110 = vunpack.c.l.b16 %v12
  %v111 = vunpack.c.h.b16 %v12
  %v112 = vpack.c.b16 %v110, %v110
  %v113 = vpack.c.b16 %v111, %v111
  %v212 = vunpack.c.l.b16 %v13
  %v213 = vunpack.c.h.b16 %v13
  %v214 = vunpack.c.l.b16 %v14
  %v215 = vunpack.c.h.b16 %v14
  %v216 = vunpack.c.l.b16 %v15
  %v217 = vunpack.c.l.b16 %v16
  %v218 = vunpack.c.h.b16 %v16
  %v219 = vunpack.c.l.b16 %v17
  %v220 = vunpack.c.h.b16 %v17
  %v221 = vunpack.c.l.b16 %v18
  %v222 = vunpack.c.l.b16 %v19
  %v223 = vunpack.c.h.b16 %v19
  %v224 = vunpack.c.l.b16 %v20
  %v225 = vunpack.c.h.b16 %v20
  %v226 = vunpack.c.l.b16 %v21
  %v227 = vunpack.c.l.b16 %v22
  %v228 = vunpack.c.h.b16 %v22
  %v229 = vunpack.c.l.b16 %v23
  %v230 = vunpack.c.h.b16 %v23
  %v231 = vunpack.c.l.b16 %v24
  %v232 = vunpack.c.l.b16 %v25
  %v233 = vunpack.c.h.b16 %v25
  %v234 = vunpack.c.l.b16 %v26
  %v235 = vunpack.c.h.b16 %v26
  %v236 = vunpack.c.l.b16 %v27
  %v237 = vunpack.c.l.b16 %v28
  %v238 = vunpack.c.h.b16 %v28
  %v239 = vunpack.c.l.b16 %v29
  %v240 = vunpack.c.h.b16 %v29
  %v241 = vunpack.c.l.b16 %v30
  %v242 = vunpack.c.l.b16 %v31
  %v243 = vunpack.c.h.b16 %v31
  %v244 = vunpack.c.l.b16 %v32
  %v245 = vunpack.c.h.b16 %v32
  %v246 = vunpack.c.l.b16 %v33
  %v247 = vunpack.c.l.b16 %v34
  %v248 = vunpack.c.h.b16 %v34
  %v249 = vunpack.c.l.b16 %v35
  %v250 = vunpack.c.h.b16 %v35
  %v251 = vunpack.c.l.b16 %v36
  %v252 = vunpack.c.l.b16 %v37
  %v253 = vunpack.c.h.b16 %v37
  %v254 = vunpack.c.l.b16 %v38
  %v255 = vunpack.c.h.b16 %v38
  %v256 = vunpack.c.l.b16 %v39
  %v257 = vunpack.c.l.b16 %v40
  %v258 = vunpack.c.h.b16 %v40
  %v259 = vunpack.c.l.b16 %v41
  %v260 = vunpack.c.h.b16 %v41
  %v261 = vunpack.c.l.b16 %v42
  %v262 = vunpack.c.l.b16 %v43
  %v263 = vunpack.c.h.b16 %v43
  %v264 = vunpack.c.l.b16 %v44
  %v265 = vunpack.c.h.b16 %v44
  %v266 = vunpack.c.l.b16 %v45
  %v267 = vunpack.c.l.b16 %v46
  %v268 = vunpack.c.h.b16 %v46
  %v269 = vunpack.c.l.b16 %v47
  %v270 = vunpack.c.h.b16 %v47
  %v271 = vunpack.c.l.b16 %v48
  %v272 = vunpack.c.l.b16 %v49
  %v273 = vunpack.c.h.b16 %v49
  %v274 = vunpack.c.l.b16 %v50
  %v275 = vunpack.c.h.b16 %v50
  %v276 = vunpack.c.l.b16 %v51
  %v277 = vunpack.c.l.b16 %v52
  %v278 = vunpack.c.h.b16 %v52
  %v279 = vunpack.c.l.b16 %v53
  %v280 = vunpack.c.h.b16 %v53
  %v281 = vunpack.c.l.b16 %v54
  %v282 = vunpack.c.l.b16 %v55
  %v283 = vunpack.c.h.b16 %v55
  %v284 = vunpack.c.l.b16 %v56
  %v285 = vunpack.c.h.b16 %v56
  %v286 = vunpack.c.l.b16 %v57
  %v287 = vunpack.c.l.b16 %v58
  %v288 = vunpack.c.h.b16 %v58
  %v289 = vunpack.c.l.b16 %v59
  %v290 = vunpack.c.h.b16 %v59
  %v291 = vunpack.c.l.b16 %v60
  %v292 = vunpack.c.l.b16 %v61
  %v293 = vunpack.c.h.b16 %v61
  %v294 = vunpack.c.l.b16 %v62
  %v295 = vunpack.c.h.b16 %v62
  %v296 = vunpack.c.l.b16 %v63
  %v297 = vunpack.c.l.b16 %v64
  %v298 = vunpack.c.h.b16 %v64
  %v299 = vunpack.c.l.b16 %v65
  %v300 = vunpack.c.h.b16 %v65
  %v301 = vunpack.c.l.b16 %v66
  %v302 = vunpack.c.l.b16 %v67
  %v303 = vunpack.c.h.b16 %v67
  %v304 = vunpack.c.l.b16 %v68
  %v305 = vunpack.c.h.b16 %v68
  %v306 = vunpack.c.l.b16 %v69
  %v307 = vunpack.c.l.b16 %v70
  %v308 = vunpack.c.h.b16 %v70
  %v309 = vunpack.c.l.b16 %v71
  %v310 = vunpack.c.h.b16 %v71
  %v311 = vunpack.c.l.b16 %v72
  %v312 = vunpack.c.l.b16 %v73
  %v313 = vunpack.c.h.b16 %v73
  %v314 = vunpack.c.l.b16 %v74
  %v315 = vunpack.c.h.b16 %v74
  %v316 = vunpack.c.l.b16 %v75
  %v317 = vunpack.c.l.b16 %v76
  %v318 = vunpack.c.h.b16 %v76
  %v319 = vunpack.c.l.b16 %v77
  %v320 = vunpack.c.h.b16 %v77
  %v321 = vunpack.c.l.b16 %v78
  %v322 = vunpack.c.l.b16 %v79
  %v323 = vunpack.c.h.b16 %v79
  %v324 = vunpack.c.l.b16 %v80
  %v325 = vunpack.c.h.b16 %v80
  %v326 = vunpack.c.l.b16 %v81
  %v327 = vunpack.c.l.b16 %v82
  %v328 = vunpack.c.h.b16 %v82
  %v329 = vunpack.c.l.b16 %v83
  %v330 = vunpack.c.h.b16 %v83
  %v331 = vunpack.c.l.b16 %v84
  %v332 = vunpack.c.l.b16 %v85
  %v333 = vunpack.c.h.b16 %v85
  %v334 = vunpack.c.l.b16 %v86
  %v335 = vunpack.c.h.b16 %v86
  %v336 = vunpack.c.l.b16 %v87
  %v337 = vunpack.c.l.b16 %v88
  %v338 = vunpack.c.h.b16 %v88
  %v339 = vunpack.c.l.b16 %v89
  %v340 = vunpack.c.h.b16 %v89
  %v341 = vunpack.c.l.b16 %v90
  %v342 = vunpack.c.l.b16 %v91
  %v343 = vunpack.c.h.b16 %v91
  %v344 = vunpack.c.l.b16 %v92
  %v345 = vunpack.c.h.b16 %v92
  %v346 = vunpack.c.l.b16 %v93
  %v347 = vunpack.c.l.b16 %v94
  %v348 = vunpack.c.h.b16 %v94
  %v349 = vunpack.c.l.b16 %v95
  %v350 = vunpack.c.h.b16 %v95
  %v351 = vunpack.c.l.b16 %v96
  %v352 = vunpack.c.l.b16 %v97
  %v353 = vunpack.c.h.b16 %v97
  %v354 = vunpack.c.l.b16 %v98
  %v355 = vunpack.c.h.b16 %v98
  %v356 = vunpack.c.l.b16 %v99
  %v357 = vunpack.c.l.b16 %v100
  %v358 = vunpack.c.h.b16 %v100
  %v359 = vunpack.c.l.b16 %v101
  %v360 = vunpack.c.h.b16 %v101
  %v361 = vunpack.c.l.b16 %v102
  %v362 = vunpack.c.l.b16 %v103
  %v363 = vunpack.c.h.b16 %v103
  %v364 = vunpack.c.l.b16 %v104
  %v365 = vunpack.c.h.b16 %v104
  %v366 = vunpack.c.l.b16 %v105
  %v367 = vunpack.c.l.b16 %v106
  %v368 = vunpack.c.h.b16 %v106
  %v369 = vunpack.c.l.b16 %v107
  %v370 = vunpack.c.h.b16 %v107
  %v371 = vunpack.c.l.b16 %v108
  %v372 = vpack.c.b16 %v217, %v212
  %v373 = vpack.c.b16 %v218, %v213
  %v374 = vpack.c.b16 %v219, %v214
  %v375 = vpack.c.b16 %v220, %v215
  %v376 = vpack.c.b16 %v221, %v216
  %v377 = vpack.c.b16 %v227, %v222
  %v378 = vpack.c.b16 %v228, %v223
  %v379 = vpack.c.b16 %v229, %v224
  %v380 = vpack.c.b16 %v230, %v225
  %v381 = vpack.c.b16 %v231, %v226
  %v382 = vpack.c.b16 %v237, %v232
  %v383 = vpack.c.b16 %v238, %v233
  %v384 = vpack.c.b16 %v239, %v234
  %v385 = vpack.c.b16 %v240, %v235
  %v386 = vpack.c.b16 %v241, %v236
  %v387 = vpack.c.b16 %v247, %v242
  %v388 = vpack.c.b16 %v248, %v243
  %v389 = vpack.c.b16 %v249, %v244
  %v390 = vpack.c.b16 %v250, %v245
  %v391 = vpack.c.b16 %v251, %v246
  %v392 = vpack.c.b16 %v257, %v252
  %v393 = vpack.c.b16 %v258, %v253
  %v394 = vpack.c.b16 %v259, %v254
  %v395 = vpack.c.b16 %v260, %v255
  %v396 = vpack.c.b16 %v261, %v256
  %v397 = vpack.c.b16 %v267, %v262
  %v398 = vpack.c.b16 %v268, %v263
  %v399 = vpack.c.b16 %v269, %v264
  %v400 = vpack.c.b16 %v270, %v265
  %v401 = vpack.c.b16 %v271, %v266
  %v402 = vpack.c.b16 %v277, %v272
  %v403 = vpack.c.b16 %v278, %v273
  %v404 = vpack.c.b16 %v279, %v274
  %v405 = vpack.c.b16 %v280, %v275
  %v406 = vpack.c.b16 %v281, %v276
  %v407 = vpack.c.b16 %v287, %v282
  %v408 = vpack.c.b16 %v288, %v283
  %v409 = vpack.c.b16 %v289, %v284
  %v410 = vpack.c.b16 %v290, %v285
  %v411 = vpack.c.b16 %v291, %v286
  %v412 = vpack.c.b16 %v297, %v292
  %v413 = vpack.c.b16 %v298, %v293
  %v414 = vpack.c.b16 %v299, %v294
  %v415 = vpack.c.b16 %v300, %v295
  %v416 = vpack.c.b16 %v301, %v296
  %v417 = vpack.c.b16 %v307, %v302
  %v418 = vpack.c.b16 %v308, %v303
  %v419 = vpack.c.b16 %v309, %v304
  %v420 = vpack.c.b16 %v310, %v305
  %v421 = vpack.c.b16 %v311, %v306
  %v422 = vpack.c.b16 %v317, %v312
  %v423 = vpack.c.b16 %v318, %v313
  %v424 = vpack.c.b16 %v319, %v314
  %v425 = vpack.c.b16 %v320, %v315
  %v426 = vpack.c.b16 %v321, %v316
  %v427 = vpack.c.b16 %v327, %v322
  %v428 = vpack.c.b16 %v328, %v323
  %v429 = vpack.c.b16 %v329, %v324
  %v430 = vpack.c.b16 %v330, %v325
  %v431 = vpack.c.b16 %v331, %v326
  %v432 = vpack.c.b16 %v337, %v332
  %v433 = vpack.c.b16 %v338, %v333
  %v434 = vpack.c.b16 %v339, %v334
  %v435 = vpack.c.b16 %v340, %v335
  %v436 = vpack.c.b16 %v341, %v336
  %v437 = vpack.c.b16 %v347, %v342
  %v438 = vpack.c.b16 %v348, %v343
  %v439 = vpack.c.b16 %v349, %v344
  %v440 = vpack.c.b16 %v350, %v345
  %v441 = vpack.c.b16 %v351, %v346
  %v442 = vpack.c.b16 %v357, %v352
  %v443 = vpack.c.b16 %v358, %v353
  %v444 = vpack.c.b16 %v359, %v354
  %v445 = vpack.c.b16 %v360, %v355
  %v446 = vpack.c.b16 %v361, %v356
  %v447 = vpack.c.b16 %v367, %v362
  %v448 = vpack.c.b16 %v368, %v363
  %v449 = vpack.c.b16 %v369, %v364
  %v450 = vpack.c.b16 %v370, %v365
  %v451 = vpack.c.b16 %v371, %v366
  %532 = vmatprep.subr.bf16.mxu0 %v373
  %533 = vmatpush1.bf16.msra.mxu0 %v372
  %534 = vmatprep.subr.bf16.mxu0 %v378
  %535 = vmatpush1.bf16.msra.mxu0 %v377
  %536 = vmatprep.subr.bf16.mxu0 %v383
  %537 = vmatpush1.bf16.msra.mxu0 %v382
  %538 = vmatprep.subr.bf16.mxu0 %v388
  %539 = vmatpush1.bf16.msra.mxu0 %v387
  %540 = vmatprep.subr.bf16.mxu0 %v393
  %541 = vmatpush1.bf16.msra.mxu0 %v392
  %542 = vmatprep.subr.bf16.mxu0 %v398
  %543 = vmatpush1.bf16.msra.mxu0 %v397
  %544 = vmatprep.subr.bf16.mxu0 %v403
  %545 = vmatpush1.bf16.msra.mxu0 %v402
  %546 = vmatprep.subr.bf16.mxu0 %v408
  %547 = vmatpush1.bf16.msra.mxu0 %v407
  %548 = vmatprep.subr.bf16.mxu0 %v413
  %549 = vmatpush1.bf16.msra.mxu0 %v412
  %550 = vmatprep.subr.bf16.mxu0 %v418
  %551 = vmatpush1.bf16.msra.mxu0 %v417
  %552 = vmatprep.subr.bf16.mxu0 %v423
  %553 = vmatpush1.bf16.msra.mxu0 %v422
  %554 = vmatprep.subr.bf16.mxu0 %v428
  %555 = vmatpush1.bf16.msra.mxu0 %v427
  %556 = vmatprep.subr.bf16.mxu0 %v433
  %557 = vmatpush1.bf16.msra.mxu0 %v432
  %558 = vmatprep.subr.bf16.mxu0 %v438
  %559 = vmatpush1.bf16.msra.mxu0 %v437
  %560 = vmatprep.subr.bf16.mxu0 %v443
  %561 = vmatpush1.bf16.msra.mxu0 %v442
  %562 = vmatprep.subr.bf16.mxu0 %v448
  %563 = vmatpush1.bf16.msra.mxu0 %v447
  %564 = vmatprep.mubr.bf16.mxu0 %v113
  %565 = vmatmul.mubr.bf16.gmra.mrb[0].mxu0 %v112
  %v566 = vpop.f32.mrb[0].mxu0
  %v567 = vadd.f32 0.0, %v566
  %v568 = vpop.f32.mrb[0].mxu0
  %v569 = vadd.f32 0.0, %v568
  %v570 = vpop.f32.mrb[0].mxu0
  %v571 = vpop.f32.mrb[0].mxu0
  %572 = vdwg.mxu0
  %573 = vmatprep.subr.bf16.mxu0 %v375
  %574 = vmatpush1.bf16.msra.mxu0 %v374
  %575 = vmatprep.subr.bf16.mxu0 %v380
  %576 = vmatpush1.bf16.msra.mxu0 %v379
  %577 = vmatprep.subr.bf16.mxu0 %v385
  %578 = vmatpush1.bf16.msra.mxu0 %v384
  %579 = vmatprep.subr.bf16.mxu0 %v390
  %580 = vmatpush1.bf16.msra.mxu0 %v389
  %581 = vmatprep.subr.bf16.mxu0 %v395
  %582 = vmatpush1.bf16.msra.mxu0 %v394
  %583 = vmatprep.subr.bf16.mxu0 %v400
  %584 = vmatpush1.bf16.msra.mxu0 %v399
  %585 = vmatprep.subr.bf16.mxu0 %v405
  %586 = vmatpush1.bf16.msra.mxu0 %v404
  %587 = vmatprep.subr.bf16.mxu0 %v410
  %588 = vmatpush1.bf16.msra.mxu0 %v409
  %589 = vmatprep.subr.bf16.mxu0 %v415
  %590 = vmatpush1.bf16.msra.mxu0 %v414
  %591 = vmatprep.subr.bf16.mxu0 %v420
  %592 = vmatpush1.bf16.msra.mxu0 %v419
  %593 = vmatprep.subr.bf16.mxu0 %v425
  %594 = vmatpush1.bf16.msra.mxu0 %v424
  %595 = vmatprep.subr.bf16.mxu0 %v430
  %596 = vmatpush1.bf16.msra.mxu0 %v429
  %597 = vmatprep.subr.bf16.mxu0 %v435
  %598 = vmatpush1.bf16.msra.mxu0 %v434
  %599 = vmatprep.subr.bf16.mxu0 %v440
  %600 = vmatpush1.bf16.msra.mxu0 %v439
  %601 = vmatprep.subr.bf16.mxu0 %v445
  %602 = vmatpush1.bf16.msra.mxu0 %v444
  %603 = vmatprep.subr.bf16.mxu0 %v450
  %604 = vmatpush1.bf16.msra.mxu0 %v449
  %605 = vmatprep.mubr.bf16.mxu0 %v113
  %606 = vmatmul.mubr.bf16.gmra.mrb[0].mxu0 %v112
  %v607 = vpop.f32.mrb[0].mxu0
  %v608 = vadd.f32 0.0, %v607
  %v609 = vpop.f32.mrb[0].mxu0
  %v610 = vadd.f32 0.0, %v609
  %v611 = vpop.f32.mrb[0].mxu0
  %v612 = vpop.f32.mrb[0].mxu0
  %613 = vdwg.mxu0
  %614 = vmatprep.subr.bf16.mxu0 0
  %615 = vmatpush1.bf16.msra.mxu0 %v376
  %616 = vmatprep.subr.bf16.mxu0 0
  %617 = vmatpush1.bf16.msra.mxu0 %v381
  %618 = vmatprep.subr.bf16.mxu0 0
  %619 = vmatpush1.bf16.msra.mxu0 %v386
  %620 = vmatprep.subr.bf16.mxu0 0
  %621 = vmatpush1.bf16.msra.mxu0 %v391
  %622 = vmatprep.subr.bf16.mxu0 0
  %623 = vmatpush1.bf16.msra.mxu0 %v396
  %624 = vmatprep.subr.bf16.mxu0 0
  %625 = vmatpush1.bf16.msra.mxu0 %v401
  %626 = vmatprep.subr.bf16.mxu0 0
  %627 = vmatpush1.bf16.msra.mxu0 %v406
  %628 = vmatprep.subr.bf16.mxu0 0
  %629 = vmatpush1.bf16.msra.mxu0 %v411
  %630 = vmatprep.subr.bf16.mxu0 0
  %631 = vmatpush1.bf16.msra.mxu0 %v416
  %632 = vmatprep.subr.bf16.mxu0 0
  %633 = vmatpush1.bf16.msra.mxu0 %v421
  %634 = vmatprep.subr.bf16.mxu0 0
  %635 = vmatpush1.bf16.msra.mxu0 %v426
  %636 = vmatprep.subr.bf16.mxu0 0
  %637 = vmatpush1.bf16.msra.mxu0 %v431
  %638 = vmatprep.subr.bf16.mxu0 0
  %639 = vmatpush1.bf16.msra.mxu0 %v436
  %640 = vmatprep.subr.bf16.mxu0 0
  %641 = vmatpush1.bf16.msra.mxu0 %v441
  %642 = vmatprep.subr.bf16.mxu0 0
  %643 = vmatpush1.bf16.msra.mxu0 %v446
  %644 = vmatprep.subr.bf16.mxu0 0
  %645 = vmatpush1.bf16.msra.mxu0 %v451
  %646 = vmatprep.mubr.bf16.mxu0 %v113
  %647 = vmatmul.mubr.bf16.gmra.mrb[0].mxu0 %v112
  %v648 = vpop.f32.mrb[0].mxu0
  %v649 = vadd.f32 0.0, %v648
  %v650 = vpop.f32.mrb[0].mxu0
  %v651 = vpop.f32.mrb[0].mxu0
  %v652 = vpop.f32.mrb[0].mxu0
  %653 = vdwg.mxu0
  %v654 = vpack.c.bf16 %v567, %v567
  %v655 = vpack.c.bf16 %v569, %v569
  %v656 = vpack.c.bf16 %v608, %v608
  %v657 = vpack.c.bf16 %v610, %v610
  %v658 = vpack.c.bf16 %v649, %v649
  %v664 = vunpack.c.l.b16 %v654
  %v665 = vunpack.c.l.b16 %v655
  %v666 = vunpack.c.l.b16 %v656
  %v667 = vunpack.c.l.b16 %v657
  %v668 = vunpack.c.l.b16 %v658
  %v669 = vpack.c.b16 %v665, %v664
  %v670 = vpack.c.b16 %v667, %v666
  %v671 = vpack.c.b16 %v668, %v668
  %675 = vst [vmem:[%s2] sm:$0xff] %v669
  %676 = vst [vmem:[%s2 + $0x8] sm:$0xff] %v670
  %vm677 = vcmask 519168
  %678 = vst.msk [vmem:[%s2 + $0x10] sm:$0xf] %vm677, %v671
  // Predicated region
  $region10: #{a_call__.26} parent=0 // pred_check
    _
  $region11: #{a_call__.26} parent=0 // pred_check_branch
    %680 = sbr.rel (0) target = $region13
  $region12: #{a_call__.26} parent=0 // pred_region
    _
  $region13: #{a_call__.26} parent=0 // pred_fallthru
    _
  // Predicated region
  $region14: #{a_call__.26} parent=0 // pred_check
    _
  $region15: #{a_call__.26} parent=0 // pred_check_branch
    %682 = sbr.rel (0) target = $region17
  $region16: #{a_call__.26} parent=0 // pred_region
    _
  $region17: #{a_call__.26} parent=0 // pred_fallthru
    _

// kernel: a_call__.28
$region0: #{a_call__.28}
  #allocation0 [shape = 'u32[]', space=smem, size = 0x4, offset = 0x4, fixed_abs, tag = 'smem constant byte address 0x4 - core index']
  #allocation1 [shape = 'u32[144,128]{1,0:T(1,128)}', space=vmem, size = 0x12000, scoped, tag = 'internal scratch']
  %s0 = inlined_call_operand.vmem [shape: bf16[10,576], index: 0, kind: input, shape index: {}]
  %s1 = inlined_call_operand.vmem [shape: bf16[576,256], index: 1, kind: input, shape index: {}]
  %s2 = inlined_call_operand.vmem [shape: f32[10,256], index: 2, kind: input, shape index: {}, may-alias: {2,3}]
  %s3 = inlined_call_operand.vmem [shape: f32[10,256], index: 3, kind: output, shape index: {}, may-alias: {2,3}]
  %s4 = sld [smem:[#allocation0]]
  $region22: #{a_call__.28} parent=0
    _
  %s6 = ssub.s32 1, %s4
  %s7 = scalar_select 0, %s6, %s4
  // Predicated region
  $region2: #{a_call__.28} parent=0 // pred_check
    _
  $region3: #{a_call__.28} parent=0 // pred_check_branch
    %9 = sbr.rel (0) target = $region5
  $region4: #{a_call__.28} parent=0 // pred_region
    _
  $region5: #{a_call__.28} parent=0 // pred_fallthru
    _
  // Predicated region
  $region6: #{a_call__.28} parent=0 // pred_check
    _
  $region7: #{a_call__.28} parent=0 // pred_check_branch
    %11 = sbr.rel (0) target = $region9
  $region8: #{a_call__.28} parent=0 // pred_region
    _
  $region9: #{a_call__.28} parent=0 // pred_fallthru
    _
  // Predicated region
  $region10: #{a_call__.28} parent=0 // pred_check
    _
  $region11: #{a_call__.28} parent=0 // pred_check_branch
    %13 = sbr.rel (0) target = $region13
  $region12: #{a_call__.28} parent=0 // pred_region
    _
  $region13: #{a_call__.28} parent=0 // pred_fallthru
    _
  %v15 = vld [vmem:[%s0] sm:$0xff]
  %v16 = vld [vmem:[%s0 + $0x8] sm:$0xff]
  %v17 = vld [vmem:[%s0 + $0x10] sm:$0xf]
  %v18 = vld [vmem:[%s0 + $0x14] sm:$0x11]
  %v19 = vld [vmem:[%s0 + $0x1c] sm:$0x11]
  %v20 = vld [vmem:[%s0 + $0x24] sm:$0x1]
  %v21 = vld [vmem:[%s1] sm:$0xff]
  %v22 = vld [vmem:[%s1 + $0x8] sm:$0xff]
  %v23 = vld [vmem:[%s1 + $0x10] sm:$0xff]
  %v24 = vld [vmem:[%s1 + $0x18] sm:$0xff]
  %v25 = vld [vmem:[%s1 + $0x20] sm:$0xff]
  %v26 = vld [vmem:[%s1 + $0x28] sm:$0xff]
  %v27 = vld [vmem:[%s1 + $0x30] sm:$0xff]
  %v28 = vld [vmem:[%s1 + $0x38] sm:$0xff]
  %v29 = vld [vmem:[%s1 + $0x40] sm:$0xff]
  %v30 = vld [vmem:[%s1 + $0x48] sm:$0xff]
  %v31 = vld [vmem:[%s1 + $0x50] sm:$0xff]
  %v32 = vld [vmem:[%s1 + $0x58] sm:$0xff]
  %v33 = vld [vmem:[%s1 + $0x60] sm:$0xff]
  %v34 = vld [vmem:[%s1 + $0x68] sm:$0xff]
  %v35 = vld [vmem:[%s1 + $0x70] sm:$0xff]
  %v36 = vld [vmem:[%s1 + $0x78] sm:$0xff]
  %v37 = vld [vmem:[%s1 + $0x80] sm:$0xff]
  %v38 = vld [vmem:[%s1 + $0x88] sm:$0xff]
  %v39 = vld [vmem:[%s1 + $0x90] sm:$0xff]
  %v40 = vld [vmem:[%s1 + $0x98] sm:$0xff]
  %v41 = vld [vmem:[%s1 + $0xa0] sm:$0xff]
  %v42 = vld [vmem:[%s1 + $0xa8] sm:$0xff]
  %v43 = vld [vmem:[%s1 + $0xb0] sm:$0xff]
  %v44 = vld [vmem:[%s1 + $0xb8] sm:$0xff]
  %v45 = vld [vmem:[%s1 + $0xc0] sm:$0xff]
  %v46 = vld [vmem:[%s1 + $0xc8] sm:$0xff]
  %v47 = vld [vmem:[%s1 + $0xd0] sm:$0xff]
  %v48 = vld [vmem:[%s1 + $0xd8] sm:$0xff]
  %v49 = vld [vmem:[%s1 + $0xe0] sm:$0xff]
  %v50 = vld [vmem:[%s1 + $0xe8] sm:$0xff]
  %v51 = vld [vmem:[%s1 + $0xf0] sm:$0xff]
  %v52 = vld [vmem:[%s1 + $0xf8] sm:$0xff]
  %v53 = vld [vmem:[%s1 + $0x100] sm:$0xff]
  %v54 = vld [vmem:[%s1 + $0x108] sm:$0xff]
  %v55 = vld [vmem:[%s1 + $0x110] sm:$0xff]
  %v56 = vld [vmem:[%s1 + $0x118] sm:$0xff]
  %v57 = vld [vmem:[%s1 + $0x120] sm:$0xff]
  %v58 = vld [vmem:[%s1 + $0x128] sm:$0xff]
  %v59 = vld [vmem:[%s1 + $0x130] sm:$0xff]
  %v60 = vld [vmem:[%s1 + $0x138] sm:$0xff]
  %v61 = vld [vmem:[%s1 + $0x140] sm:$0xff]
  %v62 = vld [vmem:[%s1 + $0x148] sm:$0xff]
  %v63 = vld [vmem:[%s1 + $0x150] sm:$0xff]
  %v64 = vld [vmem:[%s1 + $0x158] sm:$0xff]
  %v65 = vld [vmem:[%s1 + $0x160] sm:$0xff]
  %v66 = vld [vmem:[%s1 + $0x168] sm:$0xff]
  %v67 = vld [vmem:[%s1 + $0x170] sm:$0xff]
  %v68 = vld [vmem:[%s1 + $0x178] sm:$0xff]
  %v69 = vld [vmem:[%s1 + $0x180] sm:$0xff]
  %v70 = vld [vmem:[%s1 + $0x188] sm:$0xff]
  %v71 = vld [vmem:[%s1 + $0x190] sm:$0xff]
  %v72 = vld [vmem:[%s1 + $0x198] sm:$0xff]
  %v73 = vld [vmem:[%s1 + $0x1a0] sm:$0xff]
  %v74 = vld [vmem:[%s1 + $0x1a8] sm:$0xff]
  %v75 = vld [vmem:[%s1 + $0x1b0] sm:$0xff]
  %v76 = vld [vmem:[%s1 + $0x1b8] sm:$0xff]
  %v77 = vld [vmem:[%s1 + $0x1c0] sm:$0xff]
  %v78 = vld [vmem:[%s1 + $0x1c8] sm:$0xff]
  %v79 = vld [vmem:[%s1 + $0x1d0] sm:$0xff]
  %v80 = vld [vmem:[%s1 + $0x1d8] sm:$0xff]
  %v81 = vld [vmem:[%s1 + $0x1e0] sm:$0xff]
  %v82 = vld [vmem:[%s1 + $0x1e8] sm:$0xff]
  %v83 = vld [vmem:[%s1 + $0x1f0] sm:$0xff]
  %v84 = vld [vmem:[%s1 + $0x1f8] sm:$0xff]
  %v85 = vld [vmem:[%s1 + $0x200] sm:$0xff]
  %v86 = vld [vmem:[%s1 + $0x208] sm:$0xff]
  %v87 = vld [vmem:[%s1 + $0x210] sm:$0xff]
  %v88 = vld [vmem:[%s1 + $0x218] sm:$0xff]
  %v89 = vld [vmem:[%s1 + $0x220] sm:$0xff]
  %v90 = vld [vmem:[%s1 + $0x228] sm:$0xff]
  %v91 = vld [vmem:[%s1 + $0x230] sm:$0xff]
  %v92 = vld [vmem:[%s1 + $0x238] sm:$0xff]
  %v99 = vunpack.c.l.b16 %v15
  %v100 = vunpack.c.h.b16 %v15
  %v101 = vunpack.c.l.b16 %v16
  %v102 = vunpack.c.h.b16 %v16
  %v103 = vunpack.c.l.b16 %v17
  %v104 = vunpack.c.l.b16 %v18
  %v105 = vunpack.c.h.b16 %v18
  %v106 = vunpack.c.l.b16 %v19
  %v107 = vunpack.c.h.b16 %v19
  %v108 = vunpack.c.l.b16 %v20
  %v109 = vpack.c.b16 %v104, %v99
  %v110 = vpack.c.b16 %v105, %v100
  %v111 = vpack.c.b16 %v106, %v101
  %v112 = vpack.c.b16 %v107, %v102
  %v113 = vpack.c.b16 %v108, %v103
  %v190 = vunpack.c.l.b16 %v21
  %v191 = vunpack.c.h.b16 %v21
  %v192 = vunpack.c.l.b16 %v22
  %v193 = vunpack.c.h.b16 %v22
  %v194 = vunpack.c.l.b16 %v23
  %v195 = vunpack.c.h.b16 %v23
  %v196 = vunpack.c.l.b16 %v24
  %v197 = vunpack.c.h.b16 %v24
  %v198 = vunpack.c.l.b16 %v25
  %v199 = vunpack.c.h.b16 %v25
  %v200 = vunpack.c.l.b16 %v26
  %v201 = vunpack.c.h.b16 %v26
  %v202 = vunpack.c.l.b16 %v27
  %v203 = vunpack.c.h.b16 %v27
  %v204 = vunpack.c.l.b16 %v28
  %v205 = vunpack.c.h.b16 %v28
  %v206 = vunpack.c.l.b16 %v29
  %v207 = vunpack.c.h.b16 %v29
  %v208 = vunpack.c.l.b16 %v30
  %v209 = vunpack.c.h.b16 %v30
  %v210 = vunpack.c.l.b16 %v31
  %v211 = vunpack.c.h.b16 %v31
  %v212 = vunpack.c.l.b16 %v32
  %v213 = vunpack.c.h.b16 %v32
  %v214 = vunpack.c.l.b16 %v33
  %v215 = vunpack.c.h.b16 %v33
  %v216 = vunpack.c.l.b16 %v34
  %v217 = vunpack.c.h.b16 %v34
  %v218 = vunpack.c.l.b16 %v35
  %v219 = vunpack.c.h.b16 %v35
  %v220 = vunpack.c.l.b16 %v36
  %v221 = vunpack.c.h.b16 %v36
  %v222 = vunpack.c.l.b16 %v37
  %v223 = vunpack.c.h.b16 %v37
  %v224 = vunpack.c.l.b16 %v38
  %v225 = vunpack.c.h.b16 %v38
  %v226 = vunpack.c.l.b16 %v39
  %v227 = vunpack.c.h.b16 %v39
  %v228 = vunpack.c.l.b16 %v40
  %v229 = vunpack.c.h.b16 %v40
  %v230 = vunpack.c.l.b16 %v41
  %v231 = vunpack.c.h.b16 %v41
  %v232 = vunpack.c.l.b16 %v42
  %v233 = vunpack.c.h.b16 %v42
  %v234 = vunpack.c.l.b16 %v43
  %v235 = vunpack.c.h.b16 %v43
  %v236 = vunpack.c.l.b16 %v44
  %v237 = vunpack.c.h.b16 %v44
  %v238 = vunpack.c.l.b16 %v45
  %v239 = vunpack.c.h.b16 %v45
  %v240 = vunpack.c.l.b16 %v46
  %v241 = vunpack.c.h.b16 %v46
  %v242 = vunpack.c.l.b16 %v47
  %v243 = vunpack.c.h.b16 %v47
  %v244 = vunpack.c.l.b16 %v48
  %v245 = vunpack.c.h.b16 %v48
  %v246 = vunpack.c.l.b16 %v49
  %v247 = vunpack.c.h.b16 %v49
  %v248 = vunpack.c.l.b16 %v50
  %v249 = vunpack.c.h.b16 %v50
  %v250 = vunpack.c.l.b16 %v51
  %v251 = vunpack.c.h.b16 %v51
  %v252 = vunpack.c.l.b16 %v52
  %v253 = vunpack.c.h.b16 %v52
  %v254 = vunpack.c.l.b16 %v53
  %v255 = vunpack.c.h.b16 %v53
  %v256 = vunpack.c.l.b16 %v54
  %v257 = vunpack.c.h.b16 %v54
  %v258 = vunpack.c.l.b16 %v55
  %v259 = vunpack.c.h.b16 %v55
  %v260 = vunpack.c.l.b16 %v56
  %v261 = vunpack.c.h.b16 %v56
  %v262 = vunpack.c.l.b16 %v57
  %v263 = vunpack.c.h.b16 %v57
  %v264 = vunpack.c.l.b16 %v58
  %v265 = vunpack.c.h.b16 %v58
  %v266 = vunpack.c.l.b16 %v59
  %v267 = vunpack.c.h.b16 %v59
  %v268 = vunpack.c.l.b16 %v60
  %v269 = vunpack.c.h.b16 %v60
  %v270 = vunpack.c.l.b16 %v61
  %v271 = vunpack.c.h.b16 %v61
  %v272 = vunpack.c.l.b16 %v62
  %v273 = vunpack.c.h.b16 %v62
  %v274 = vunpack.c.l.b16 %v63
  %v275 = vunpack.c.h.b16 %v63
  %v276 = vunpack.c.l.b16 %v64
  %v277 = vunpack.c.h.b16 %v64
  %v278 = vunpack.c.l.b16 %v65
  %v279 = vunpack.c.h.b16 %v65
  %v280 = vunpack.c.l.b16 %v66
  %v281 = vunpack.c.h.b16 %v66
  %v282 = vunpack.c.l.b16 %v67
  %v283 = vunpack.c.h.b16 %v67
  %v284 = vunpack.c.l.b16 %v68
  %v285 = vunpack.c.h.b16 %v68
  %v286 = vunpack.c.l.b16 %v69
  %v287 = vunpack.c.h.b16 %v69
  %v288 = vunpack.c.l.b16 %v70
  %v289 = vunpack.c.h.b16 %v70
  %v290 = vunpack.c.l.b16 %v71
  %v291 = vunpack.c.h.b16 %v71
  %v292 = vunpack.c.l.b16 %v72
  %v293 = vunpack.c.h.b16 %v72
  %v294 = vunpack.c.l.b16 %v73
  %v295 = vunpack.c.h.b16 %v73
  %v296 = vunpack.c.l.b16 %v74
  %v297 = vunpack.c.h.b16 %v74
  %v298 = vunpack.c.l.b16 %v75
  %v299 = vunpack.c.h.b16 %v75
  %v300 = vunpack.c.l.b16 %v76
  %v301 = vunpack.c.h.b16 %v76
  %v302 = vunpack.c.l.b16 %v77
  %v303 = vunpack.c.h.b16 %v77
  %v304 = vunpack.c.l.b16 %v78
  %v305 = vunpack.c.h.b16 %v78
  %v306 = vunpack.c.l.b16 %v79
  %v307 = vunpack.c.h.b16 %v79
  %v308 = vunpack.c.l.b16 %v80
  %v309 = vunpack.c.h.b16 %v80
  %v310 = vunpack.c.l.b16 %v81
  %v311 = vunpack.c.h.b16 %v81
  %v312 = vunpack.c.l.b16 %v82
  %v313 = vunpack.c.h.b16 %v82
  %v314 = vunpack.c.l.b16 %v83
  %v315 = vunpack.c.h.b16 %v83
  %v316 = vunpack.c.l.b16 %v84
  %v317 = vunpack.c.h.b16 %v84
  %v318 = vunpack.c.l.b16 %v85
  %v319 = vunpack.c.h.b16 %v85
  %v320 = vunpack.c.l.b16 %v86
  %v321 = vunpack.c.h.b16 %v86
  %v322 = vunpack.c.l.b16 %v87
  %v323 = vunpack.c.h.b16 %v87
  %v324 = vunpack.c.l.b16 %v88
  %v325 = vunpack.c.h.b16 %v88
  %v326 = vunpack.c.l.b16 %v89
  %v327 = vunpack.c.h.b16 %v89
  %v328 = vunpack.c.l.b16 %v90
  %v329 = vunpack.c.h.b16 %v90
  %v330 = vunpack.c.l.b16 %v91
  %v331 = vunpack.c.h.b16 %v91
  %v332 = vunpack.c.l.b16 %v92
  %v333 = vunpack.c.h.b16 %v92
  %v334 = vpack.c.b16 %v192, %v190
  %v335 = vpack.c.b16 %v193, %v191
  %v336 = vpack.c.b16 %v196, %v194
  %v337 = vpack.c.b16 %v197, %v195
  %v338 = vpack.c.b16 %v200, %v198
  %v339 = vpack.c.b16 %v201, %v199
  %v340 = vpack.c.b16 %v204, %v202
  %v341 = vpack.c.b16 %v205, %v203
  %v342 = vpack.c.b16 %v208, %v206
  %v343 = vpack.c.b16 %v209, %v207
  %v344 = vpack.c.b16 %v212, %v210
  %v345 = vpack.c.b16 %v213, %v211
  %v346 = vpack.c.b16 %v216, %v214
  %v347 = vpack.c.b16 %v217, %v215
  %v348 = vpack.c.b16 %v220, %v218
  %v349 = vpack.c.b16 %v221, %v219
  %v350 = vpack.c.b16 %v224, %v222
  %v351 = vpack.c.b16 %v225, %v223
  %v352 = vpack.c.b16 %v228, %v226
  %v353 = vpack.c.b16 %v229, %v227
  %v354 = vpack.c.b16 %v232, %v230
  %v355 = vpack.c.b16 %v233, %v231
  %v356 = vpack.c.b16 %v236, %v234
  %v357 = vpack.c.b16 %v237, %v235
  %v358 = vpack.c.b16 %v240, %v238
  %v359 = vpack.c.b16 %v241, %v239
  %v360 = vpack.c.b16 %v244, %v242
  %v361 = vpack.c.b16 %v245, %v243
  %v362 = vpack.c.b16 %v248, %v246
  %v363 = vpack.c.b16 %v249, %v247
  %v364 = vpack.c.b16 %v252, %v250
  %v365 = vpack.c.b16 %v253, %v251
  %v366 = vpack.c.b16 %v256, %v254
  %v367 = vpack.c.b16 %v257, %v255
  %v368 = vpack.c.b16 %v260, %v258
  %v369 = vpack.c.b16 %v261, %v259
  %v370 = vpack.c.b16 %v264, %v262
  %v371 = vpack.c.b16 %v265, %v263
  %v372 = vpack.c.b16 %v268, %v266
  %v373 = vpack.c.b16 %v269, %v267
  %v374 = vpack.c.b16 %v272, %v270
  %v375 = vpack.c.b16 %v273, %v271
  %v376 = vpack.c.b16 %v276, %v274
  %v377 = vpack.c.b16 %v277, %v275
  %v378 = vpack.c.b16 %v280, %v278
  %v379 = vpack.c.b16 %v281, %v279
  %v380 = vpack.c.b16 %v284, %v282
  %v381 = vpack.c.b16 %v285, %v283
  %v382 = vpack.c.b16 %v288, %v286
  %v383 = vpack.c.b16 %v289, %v287
  %v384 = vpack.c.b16 %v292, %v290
  %v385 = vpack.c.b16 %v293, %v291
  %v386 = vpack.c.b16 %v296, %v294
  %v387 = vpack.c.b16 %v297, %v295
  %v388 = vpack.c.b16 %v300, %v298
  %v389 = vpack.c.b16 %v301, %v299
  %v390 = vpack.c.b16 %v304, %v302
  %v391 = vpack.c.b16 %v305, %v303
  %v392 = vpack.c.b16 %v308, %v306
  %v393 = vpack.c.b16 %v309, %v307
  %v394 = vpack.c.b16 %v312, %v310
  %v395 = vpack.c.b16 %v313, %v311
  %v396 = vpack.c.b16 %v316, %v314
  %v397 = vpack.c.b16 %v317, %v315
  %v398 = vpack.c.b16 %v320, %v318
  %v399 = vpack.c.b16 %v321, %v319
  %v400 = vpack.c.b16 %v324, %v322
  %v401 = vpack.c.b16 %v325, %v323
  %v402 = vpack.c.b16 %v328, %v326
  %v403 = vpack.c.b16 %v329, %v327
  %v404 = vpack.c.b16 %v332, %v330
  %v405 = vpack.c.b16 %v333, %v331
  %vm478 = vcmask 523264
  %v480 = vsel %vm478, %v113, 0
  %482 = vmatprep.subr.bf16.mxu0 %v335
  %483 = vmatpush1.bf16.msra.mxu0 %v334
  %484 = vmatprep.subr.bf16.mxu0 %v337
  %485 = vmatpush1.bf16.msra.mxu0 %v336
  %486 = vmatprep.subr.bf16.mxu0 %v339
  %487 = vmatpush1.bf16.msra.mxu0 %v338
  %488 = vmatprep.subr.bf16.mxu0 %v341
  %489 = vmatpush1.bf16.msra.mxu0 %v340
  %490 = vmatprep.subr.bf16.mxu0 %v343
  %491 = vmatpush1.bf16.msra.mxu0 %v342
  %492 = vmatprep.subr.bf16.mxu0 %v345
  %493 = vmatpush1.bf16.msra.mxu0 %v344
  %494 = vmatprep.subr.bf16.mxu0 %v347
  %495 = vmatpush1.bf16.msra.mxu0 %v346
  %496 = vmatprep.subr.bf16.mxu0 %v349
  %497 = vmatpush1.bf16.msra.mxu0 %v348
  %498 = vmatprep.subr.bf16.mxu0 %v351
  %499 = vmatpush1.bf16.msra.mxu0 %v350
  %500 = vmatprep.subr.bf16.mxu0 %v353
  %501 = vmatpush1.bf16.msra.mxu0 %v352
  %502 = vmatprep.subr.bf16.mxu0 %v355
  %503 = vmatpush1.bf16.msra.mxu0 %v354
  %504 = vmatprep.subr.bf16.mxu0 %v357
  %505 = vmatpush1.bf16.msra.mxu0 %v356
  %506 = vmatprep.subr.bf16.mxu0 %v359
  %507 = vmatpush1.bf16.msra.mxu0 %v358
  %508 = vmatprep.subr.bf16.mxu0 %v361
  %509 = vmatpush1.bf16.msra.mxu0 %v360
  %510 = vmatprep.subr.bf16.mxu0 %v363
  %511 = vmatpush1.bf16.msra.mxu0 %v362
  %512 = vmatprep.subr.bf16.mxu0 %v365
  %513 = vmatpush1.bf16.msra.mxu0 %v364
  %514 = vmatprep.mubr.bf16.mxu0 %v110
  %515 = vmatmul.mubr.bf16.gmra.mrb[0].mxu0 %v109
  %v516 = vpop.f32.mrb[0].mxu0
  %v517 = vadd.f32 0.0, %v516
  %v518 = vpop.f32.mrb[0].mxu0
  %v519 = vadd.f32 0.0, %v518
  %v520 = vpop.f32.mrb[0].mxu0
  %v521 = vadd.f32 0.0, %v520
  %v522 = vpop.f32.mrb[0].mxu0
  %v523 = vadd.f32 0.0, %v522
  %524 = vdwg.mxu0
  %525 = vmatprep.subr.bf16.mxu0 %v367
  %526 = vmatpush1.bf16.msra.mxu0 %v366
  %527 = vmatprep.subr.bf16.mxu0 %v369
  %528 = vmatpush1.bf16.msra.mxu0 %v368
  %529 = vmatprep.subr.bf16.mxu0 %v371
  %530 = vmatpush1.bf16.msra.mxu0 %v370
  %531 = vmatprep.subr.bf16.mxu0 %v373
  %532 = vmatpush1.bf16.msra.mxu0 %v372
  %533 = vmatprep.subr.bf16.mxu0 %v375
  %534 = vmatpush1.bf16.msra.mxu0 %v374
  %535 = vmatprep.subr.bf16.mxu0 %v377
  %536 = vmatpush1.bf16.msra.mxu0 %v376
  %537 = vmatprep.subr.bf16.mxu0 %v379
  %538 = vmatpush1.bf16.msra.mxu0 %v378
  %539 = vmatprep.subr.bf16.mxu0 %v381
  %540 = vmatpush1.bf16.msra.mxu0 %v380
  %541 = vmatprep.subr.bf16.mxu0 %v383
  %542 = vmatpush1.bf16.msra.mxu0 %v382
  %543 = vmatprep.subr.bf16.mxu0 %v385
  %544 = vmatpush1.bf16.msra.mxu0 %v384
  %545 = vmatprep.subr.bf16.mxu0 %v387
  %546 = vmatpush1.bf16.msra.mxu0 %v386
  %547 = vmatprep.subr.bf16.mxu0 %v389
  %548 = vmatpush1.bf16.msra.mxu0 %v388
  %549 = vmatprep.subr.bf16.mxu0 %v391
  %550 = vmatpush1.bf16.msra.mxu0 %v390
  %551 = vmatprep.subr.bf16.mxu0 %v393
  %552 = vmatpush1.bf16.msra.mxu0 %v392
  %553 = vmatprep.subr.bf16.mxu0 %v395
  %554 = vmatpush1.bf16.msra.mxu0 %v394
  %555 = vmatprep.subr.bf16.mxu0 %v397
  %556 = vmatpush1.bf16.msra.mxu0 %v396
  %557 = vmatprep.mubr.bf16.mxu0 %v112
  %558 = vmatmul.mubr.bf16.gmra.mrb[0].mxu0 %v111
  %v559 = vpop.f32.mrb[0].mxu0
  %v560 = vadd.f32 %v517, %v559
  %v561 = vpop.f32.mrb[0].mxu0
  %v562 = vadd.f32 %v519, %v561
  %v563 = vpop.f32.mrb[0].mxu0
  %v564 = vadd.f32 %v521, %v563
  %v565 = vpop.f32.mrb[0].mxu0
  %v566 = vadd.f32 %v523, %v565
  %567 = vdwg.mxu0
  %568 = vmatprep.subr.bf16.mxu0 %v399
  %569 = vmatpush1.bf16.msra.mxu0 %v398
  %570 = vmatprep.subr.bf16.mxu0 %v401
  %571 = vmatpush1.bf16.msra.mxu0 %v400
  %572 = vmatprep.subr.bf16.mxu0 %v403
  %573 = vmatpush1.bf16.msra.mxu0 %v402
  %574 = vmatprep.subr.bf16.mxu0 %v405
  %575 = vmatpush1.bf16.msra.mxu0 %v404
  %576 = vmatprep.subr.bf16.mxu0 0
  %577 = vmatpush1.bf16.msra.mxu0 0
  %578 = vmatprep.subr.bf16.mxu0 0
  %579 = vmatpush1.bf16.msra.mxu0 0
  %580 = vmatprep.subr.bf16.mxu0 0
  %581 = vmatpush1.bf16.msra.mxu0 0
  %582 = vmatprep.subr.bf16.mxu0 0
  %583 = vmatpush1.bf16.msra.mxu0 0
  %584 = vmatprep.subr.bf16.mxu0 0
  %585 = vmatpush1.bf16.msra.mxu0 0
  %586 = vmatprep.subr.bf16.mxu0 0
  %587 = vmatpush1.bf16.msra.mxu0 0
  %588 = vmatprep.subr.bf16.mxu0 0
  %589 = vmatpush1.bf16.msra.mxu0 0
  %590 = vmatprep.subr.bf16.mxu0 0
  %591 = vmatpush1.bf16.msra.mxu0 0
  %592 = vmatprep.subr.bf16.mxu0 0
  %593 = vmatpush1.bf16.msra.mxu0 0
  %594 = vmatprep.subr.bf16.mxu0 0
  %595 = vmatpush1.bf16.msra.mxu0 0
  %596 = vmatprep.subr.bf16.mxu0 0
  %597 = vmatpush1.bf16.msra.mxu0 0
  %598 = vmatprep.subr.bf16.mxu0 0
  %599 = vmatpush1.bf16.msra.mxu0 0
  %600 = vmatprep.mubr.bf16.mxu0 0
  %601 = vmatmul.mubr.bf16.gmra.mrb[0].mxu0 %v480
  %v602 = vpop.f32.mrb[0].mxu0
  %v603 = vadd.f32 %v560, %v602
  %v604 = vpop.f32.mrb[0].mxu0
  %v605 = vadd.f32 %v562, %v604
  %v606 = vpop.f32.mrb[0].mxu0
  %v607 = vadd.f32 %v564, %v606
  %v608 = vpop.f32.mrb[0].mxu0
  %v609 = vadd.f32 %v566, %v608
  %610 = vdwg.mxu0
  %v611 = vld [vmem:[%s2] sm:$0xff]
  %v612 = vld [vmem:[%s2 + $0x8] sm:$0xff]
  %v613 = vld [vmem:[%s2 + $0x10] sm:$0x3]
  %v614 = vld [vmem:[%s2 + $0x18] sm:$0x3]
  %v615 = vmax.f32 %v611, %v603
  %v616 = vmax.f32 %v612, %v605
  %v617 = vmax.f32 %v613, %v607
  %v618 = vmax.f32 %v614, %v609
  %619 = vst [vmem:[%s3] sm:$0xff] %v615
  %620 = vst [vmem:[%s3 + $0x8] sm:$0xff] %v616
  %621 = vst [vmem:[%s3 + $0x10] sm:$0x3] %v617
  %622 = vst [vmem:[%s3 + $0x18] sm:$0x3] %v618
  // Predicated region
  $region14: #{a_call__.28} parent=0 // pred_check
    _
  $region15: #{a_call__.28} parent=0 // pred_check_branch
    %624 = sbr.rel (0) target = $region17
  $region16: #{a_call__.28} parent=0 // pred_region
    _
  $region17: #{a_call__.28} parent=0 // pred_fallthru
    _
  // Predicated region
  $region18: #{a_call__.28} parent=0 // pred_check
    _
  $region19: #{a_call__.28} parent=0 // pred_check_branch
    %626 = sbr.rel (0) target = $region21
  $region20: #{a_call__.28} parent=0 // pred_region
    _
  $region21: #{a_call__.28} parent=0 // pred_fallthru
    _

// kernel: a_call__.30
$region0: #{a_call__.30}
  #allocation0 [shape = 'u32[]', space=smem, size = 0x4, offset = 0x4, fixed_abs, tag = 'smem constant byte address 0x4 - core index']
  #allocation1 [shape = 'u32[144,128]{1,0:T(1,128)}', space=vmem, size = 0x12000, scoped, tag = 'internal scratch']
  %s0 = inlined_call_operand.vmem [shape: bf16[2,4,784], index: 0, kind: input, shape index: {}]
  %s1 = inlined_call_operand.vmem [shape: bf16[5,4], index: 1, kind: input, shape index: {}]
  %s2 = inlined_call_operand.vmem [shape: f32[5,1], index: 2, kind: input, shape index: {}]
  %s3 = inlined_call_operand.vmem [shape: bf16[2,5,784], index: 3, kind: output, shape index: {}]
  %s4 = sld [smem:[#allocation0]]
  $region45: #{a_call__.30} parent=0
    _
  %s6 = ssub.s32 1, %s4
  %s7 = scalar_select 0, %s6, %s4
  loop: start=0, step=1, limit=4
  $region2: #{a_call__.30} parent=0 // loop_pre_header
    _
  $region3: #{a_call__.30} parent=0 // loop_header
    %s9 = sphi 0, %s13
    %p10 = scmp.ge.s32.totalorder %s9, 4
    %s16 = sphi 0, %s28
    %s17 = sphi 0, %s24
    %s18 = sphi 0, %s16
    %s19 = sphi 0, %s17
    %s20 = sphi 0, %s18
    %s21 = sphi 0, %s19
    %s33 = sphi 0, %s35
    %s36 = sphi 0, %s33
    %s37 = sphi 0, %s36
    %s53 = sphi 0, %s37
    %s57 = sphi 0, %s57
    %s59 = sphi 0, %s57
    %s60 = sphi 0, %s59
    %s74 = sphi 0, %s60
    %s78 = sphi 0, %s78
    %s80 = sphi 0, %s78
    %s81 = sphi 0, %s80
    %s95 = sphi 0, %s81
    %s103 = sphi 0, %s105
    %s106 = sphi 0, %s103
    %s107 = sphi 0, %s106
    %s123 = sphi 0, %s107
  $region4: #{a_call__.30} parent=0 // loop_header_branch
    %12 = sbr.rel (%p10) target = $region8
  $region5: #{a_call__.30} parent=0 // loop_body
    %s14 = ssub.s32 %s9, 1
    %s15 = ssub.s32 %s9, 2
    %s22 = sadd.s32 1, %s17
    %p23 = scmp.ge.s32.totalorder %s22, 1
    %s24 = scalar_select %p23, 0, %s22
    %s25 = sadd.s32 1, %s16
    %s26 = scalar_select %p23, %s25, %s16
    %p27 = scmp.ge.s32.totalorder %s26, 2
    %s28 = scalar_select %p27, 0, %s26
    %s29 = ssub.s32 %s16, %s28
    %s30 = ssub.s32 %s17, %s24
    %s31 = sor.u32 %s29, %s30
    %p32 = scmp.eq.s32.totalorder %s31, 0
    %s34 = sadd.s32 %s33, 1
    %s35 = scalar_select %p32, %s33, %s34
    %p38 = pneg %p32
    %p39 = scmp.eq.s32.totalorder %s9, 1
    %p40 = por %p38, %p39
    %p41 = scmp.ne.s32.totalorder %s33, %s36
    %p42 = scmp.eq.s32.totalorder %s9, 0
    %p43 = por %p41, %p42
    %p44 = scmp.ne.s32.totalorder %s33, %s36
    %p45 = scmp.eq.s32.totalorder %s14, 1
    %p46 = por %p44, %p45
    %p47 = scmp.ne.s32.totalorder %s36, %s37
    %p48 = scmp.eq.s32.totalorder %s14, 0
    %p49 = por %p47, %p48
    %p50 = scmp.ne.s32.totalorder %s36, %s37
    %p51 = scmp.eq.s32.totalorder %s15, 1
    %p52 = por %p50, %p51
    %p54 = scmp.ne.s32.totalorder %s37, %s53
    %p55 = scmp.eq.s32.totalorder %s15, 0
    %p56 = por %p54, %p55
    %s58 = sadd.s32 %s57, 1
    %p61 = scmp.eq.s32.totalorder %s9, 1
    %p62 = scmp.ne.s32.totalorder %s57, %s59
    %p63 = scmp.eq.s32.totalorder %s9, 0
    %p64 = por %p62, %p63
    %p65 = scmp.ne.s32.totalorder %s57, %s59
    %p66 = scmp.eq.s32.totalorder %s14, 1
    %p67 = por %p65, %p66
    %p68 = scmp.ne.s32.totalorder %s59, %s60
    %p69 = scmp.eq.s32.totalorder %s14, 0
    %p70 = por %p68, %p69
    %p71 = scmp.ne.s32.totalorder %s59, %s60
    %p72 = scmp.eq.s32.totalorder %s15, 1
    %p73 = por %p71, %p72
    %p75 = scmp.ne.s32.totalorder %s60, %s74
    %p76 = scmp.eq.s32.totalorder %s15, 0
    %p77 = por %p75, %p76
    %s79 = sadd.s32 %s78, 1
    %p82 = scmp.eq.s32.totalorder %s9, 1
    %p83 = scmp.ne.s32.totalorder %s78, %s80
    %p84 = scmp.eq.s32.totalorder %s9, 0
    %p85 = por %p83, %p84
    %p86 = scmp.ne.s32.totalorder %s78, %s80
    %p87 = scmp.eq.s32.totalorder %s14, 1
    %p88 = por %p86, %p87
    %p89 = scmp.ne.s32.totalorder %s80, %s81
    %p90 = scmp.eq.s32.totalorder %s14, 0
    %p91 = por %p89, %p90
    %p92 = scmp.ne.s32.totalorder %s80, %s81
    %p93 = scmp.eq.s32.totalorder %s15, 1
    %p94 = por %p92, %p93
    %p96 = scmp.ne.s32.totalorder %s81, %s95
    %p97 = scmp.eq.s32.totalorder %s15, 0
    %p98 = por %p96, %p97
    %s99 = ssub.s32 %s16, %s28
    %s100 = ssub.s32 %s17, %s24
    %s101 = sor.u32 %s99, %s100
    %p102 = scmp.eq.s32.totalorder %s101, 0
    %s104 = sadd.s32 %s103, 1
    %s105 = scalar_select %p102, %s103, %s104
    %p108 = pneg %p102
    %p109 = scmp.eq.s32.totalorder %s9, 1
    %p110 = por %p108, %p109
    %p111 = scmp.ne.s32.totalorder %s103, %s106
    %p112 = scmp.eq.s32.totalorder %s9, 0
    %p113 = por %p111, %p112
    %p114 = scmp.ne.s32.totalorder %s103, %s106
    %p115 = scmp.eq.s32.totalorder %s14, 1
    %p116 = por %p114, %p115
    %p117 = scmp.ne.s32.totalorder %s106, %s107
    %p118 = scmp.eq.s32.totalorder %s14, 0
    %p119 = por %p117, %p118
    %p120 = scmp.ne.s32.totalorder %s106, %s107
    %p121 = scmp.eq.s32.totalorder %s15, 1
    %p122 = por %p120, %p121
    %p124 = scmp.ne.s32.totalorder %s107, %s123
    %p125 = scmp.eq.s32.totalorder %s15, 0
    %p126 = por %p124, %p125
    %p127 = scmp.le.s32.totalorder 1, %s9
    %p128 = scmp.lt.s32.totalorder %s9, 3
    %p129 = pnand %p127, %p128
    %p130 = pneg %p129
    // Predicated region
    $region9: #{a_call__.30} parent=5 // pred_check
      _
    $region10: #{a_call__.30} parent=5 // pred_check_branch
      %132 = sbr.rel (%p129) target = $region12
    $region11: #{a_call__.30} parent=5 // pred_region
      %s133 = ssub.s32 %s9, 1
      // Predicated region
      $region13: #{a_call__.30} parent=11 // pred_check
        %p134 = pneg %p70
      $region14: #{a_call__.30} parent=11 // pred_check_branch
        %136 = sbr.rel (%p134) target = $region16
      $region15: #{a_call__.30} parent=11 // pred_region
        _
      $region16: #{a_call__.30} parent=11 // pred_fallthru
        _
      // Predicated region
      $region17: #{a_call__.30} parent=11 // pred_check
        %p137 = pneg %p91
      $region18: #{a_call__.30} parent=11 // pred_check_branch
        %139 = sbr.rel (%p137) target = $region20
      $region19: #{a_call__.30} parent=11 // pred_region
        _
      $region20: #{a_call__.30} parent=11 // pred_fallthru
        _
    $region12: #{a_call__.30} parent=5 // pred_fallthru
      _
    %p140 = scmp.lt.s32.totalorder %s9, 2
    // Predicated region
    $region21: #{a_call__.30} parent=5 // pred_check
      %p141 = pneg %p140
    $region22: #{a_call__.30} parent=5 // pred_check_branch
      %143 = sbr.rel (%p141) target = $region24
    $region23: #{a_call__.30} parent=5 // pred_region
      // Predicated region
      $region25: #{a_call__.30} parent=23 // pred_check
        %p144 = pneg %p43
      $region26: #{a_call__.30} parent=23 // pred_check_branch
        %146 = sbr.rel (%p144) target = $region28
      $region27: #{a_call__.30} parent=23 // pred_region
        %s147 = smul.u32 7, %s17
        %p148 = scmp.lt.s32.totalorder %s16, 1
        %s149 = scalar_select %p148, %s16, 1
        %p150 = scmp.lt.s32.totalorder %s147, 6
        %s151 = scalar_select %p150, %s147, 6
        %s152 = smul.addr %s149, 7
        %s153 = sadd.s32 %s151, %s152
        %s154 = smul.addr %s153, 2
        %s155 = scalar_lea.vmem %s0, %s154
        %s156 = smul.u32 7, %s17
      $region28: #{a_call__.30} parent=23 // pred_fallthru
        _
    $region24: #{a_call__.30} parent=5 // pred_fallthru
      _
    %p157 = scmp.le.s32.totalorder 1, %s9
    %p158 = scmp.lt.s32.totalorder %s9, 3
    %p159 = pnand %p157, %p158
    %p160 = pneg %p159
    // Predicated region
    $region29: #{a_call__.30} parent=5 // pred_check
      _
    $region30: #{a_call__.30} parent=5 // pred_check_branch
      %162 = sbr.rel (%p159) target = $region32
    $region31: #{a_call__.30} parent=5 // pred_region
      %s163 = ssub.s32 %s9, 1
      %s164 = smul.u32 7, %s19
      %p165 = scmp.lt.s32.totalorder %s18, 1
      %s166 = scalar_select %p165, %s18, 1
      %p167 = scmp.lt.s32.totalorder %s164, 6
      %s168 = scalar_select %p167, %s164, 6
      %s169 = smul.addr %s166, 7
      %s170 = sadd.s32 %s168, %s169
      %s171 = smul.addr %s170, 2
      %s172 = scalar_lea.vmem %s0, %s171
      %p173 = pneg %p49
      %p174 = pneg %p46
      %p175 = pneg %p70
      %p176 = pneg %p67
      %p177 = pneg %p91
      %p178 = pneg %p88
      %p179 = pneg %p119
      %p180 = pneg %p116
      %s181 = smul.u32 7, %s19
      %p182 = scmp.lt.s32.totalorder %s18, 1
      %s183 = scalar_select %p182, %s18, 1
      %p184 = scmp.lt.s32.totalorder %s181, 6
      %s185 = scalar_select %p184, %s181, 6
      %s186 = smul.addr %s183, 7
      %s187 = sadd.s32 %s185, %s186
      %s188 = smul.addr %s187, 4
      %s189 = scalar_lea.vmem %s3, %s188
      %s190 = smul.u32 7, %s19
      %p191 = scmp.lt.s32.totalorder %s18, 1
      %s192 = scalar_select %p191, %s18, 1
      %p193 = scmp.lt.s32.totalorder %s190, 6
      %s194 = scalar_select %p193, %s190, 6
      %s195 = smul.addr %s192, 7
      %s196 = sadd.s32 %s194, %s195
      %s197 = smul.addr %s196, 2
      %s198 = scalar_lea.vmem %s0, %s197
      %s199 = smul.u32 7, %s19
      %s200 = smul.u32 7, %s19
      %p201 = scmp.lt.s32.totalorder %s18, 1
      %s202 = scalar_select %p201, %s18, 1
      %p203 = scmp.lt.s32.totalorder %s200, 6
      %s204 = scalar_select %p203, %s200, 6
      %s205 = smul.addr %s202, 7
      %s206 = sadd.s32 %s204, %s205
      %s207 = smul.addr %s206, 4
      %s208 = scalar_lea.vmem %s3, %s207
      %s209 = smul.u32 7, %s19
      %v211 = vld [vmem:[%s1] sm:$0x7]
      %v212 = vld [vmem:[%s198] sm:$0xff]
      %v213 = vld [vmem:[%s198 + $0x8] sm:$0x3f]
      %v214 = vld [vmem:[%s2] sm:$0x1f]
      %216 = vset.pattern.permute.xlu0 0
      %217 = vperm.xlu0 %216, %v214
      %v218 = vpop.permute.xlu0 %217
      %v222 = vcombine.high %v212, %v212
      %v224 = vunpack.c.l.s4 1983009808
      %v225 = vunpack.c.0.s8 %v224
      %v226 = vlaneseq
      %v227 = vshrl.u32 %v226, 7
      %v228 = vsub.s32 %v225, %v227
      %v229 = vrot.slane %v212, %v228
      %v231 = vunpack.c.l.s4 1983009808
      %v232 = vunpack.c.0.s8 %v231
      %v233 = vlaneseq
      %v234 = vshrl.u32 %v233, 7
      %v235 = vsub.s32 %v232, %v234
      %v236 = vrot.slane %v222, %v235
      %v237 = vcombine.high %v229, %v229
      %v238 = vcombine.high %v236, %v236
      %v239 = vcombine.high %v213, %v213
      %v241 = vunpack.c.l.s4 1983009808
      %v242 = vunpack.c.0.s8 %v241
      %v243 = vlaneseq
      %v244 = vshrl.u32 %v243, 7
      %v245 = vsub.s32 %v242, %v244
      %v246 = vrot.slane %v213, %v245
      %v248 = vunpack.c.l.s4 1983009808
      %v249 = vunpack.c.0.s8 %v248
      %v250 = vlaneseq
      %v251 = vshrl.u32 %v250, 7
      %v252 = vsub.s32 %v249, %v251
      %v253 = vrot.slane %v239, %v252
      %v254 = vcombine.high %v246, %v246
      %vm255 = vcmask 31744
      %v257 = vsel %vm255, %v211, 0
      %vm259 = vcmask 1041408
      %v261 = vsel %vm259, %v229, 0
      %v264 = vsel %vm259, %v237, 0
      %v267 = vsel %vm259, %v236, 0
      %v270 = vsel %vm259, %v238, 0
      %v273 = vsel %vm259, %v246, 0
      %v276 = vsel %vm259, %v254, 0
      %v279 = vsel %vm259, %v253, 0
      %281 = vmatprep.subr.bf16.mxu0 %v264
      %282 = vmatpush1.bf16.msra.mxu0 %v261
      %283 = vmatprep.subr.bf16.mxu0 0
      %284 = vmatpush1.bf16.msra.mxu0 0
      %285 = vmatprep.subr.bf16.mxu0 0
      %286 = vmatpush1.bf16.msra.mxu0 0
      %287 = vmatprep.subr.bf16.mxu0 0
      %288 = vmatpush1.bf16.msra.mxu0 0
      %289 = vmatprep.subr.bf16.mxu0 0
      %290 = vmatpush1.bf16.msra.mxu0 0
      %291 = vmatprep.subr.bf16.mxu0 0
      %292 = vmatpush1.bf16.msra.mxu0 0
      %293 = vmatprep.subr.bf16.mxu0 0
      %294 = vmatpush1.bf16.msra.mxu0 0
      %295 = vmatprep.subr.bf16.mxu0 0
      %296 = vmatpush1.bf16.msra.mxu0 0
      %297 = vmatprep.subr.bf16.mxu0 0
      %298 = vmatpush1.bf16.msra.mxu0 0
      %299 = vmatprep.subr.bf16.mxu0 0
      %300 = vmatpush1.bf16.msra.mxu0 0
      %301 = vmatprep.subr.bf16.mxu0 0
      %302 = vmatpush1.bf16.msra.mxu0 0
      %303 = vmatprep.subr.bf16.mxu0 0
      %304 = vmatpush1.bf16.msra.mxu0 0
      %305 = vmatprep.subr.bf16.mxu0 0
      %306 = vmatpush1.bf16.msra.mxu0 0
      %307 = vmatprep.subr.bf16.mxu0 0
      %308 = vmatpush1.bf16.msra.mxu0 0
      %309 = vmatprep.subr.bf16.mxu0 0
      %310 = vmatpush1.bf16.msra.mxu0 0
      %311 = vmatprep.subr.bf16.mxu0 0
      %312 = vmatpush1.bf16.msra.mxu0 0
      %313 = vmatprep.mubr.bf16.mxu0 0
      %314 = vmatmul.mubr.bf16.gmra.mrb[0].mxu0 %v257
      %v315 = vpop.f32.mrb[0].mxu0
      %v316 = vadd.f32 %v218, %v315
      %v317 = vpop.f32.mrb[0].mxu0
      %v318 = vadd.f32 %v218, %v317
      %v319 = vpop.f32.mrb[0].mxu0
      %v320 = vpop.f32.mrb[0].mxu0
      %321 = vdwg.mxu0
      %322 = vmatprep.subr.bf16.mxu0 %v270
      %323 = vmatpush1.bf16.msra.mxu0 %v267
      %324 = vmatprep.subr.bf16.mxu0 0
      %325 = vmatpush1.bf16.msra.mxu0 0
      %326 = vmatprep.subr.bf16.mxu0 0
      %327 = vmatpush1.bf16.msra.mxu0 0
      %328 = vmatprep.subr.bf16.mxu0 0
      %329 = vmatpush1.bf16.msra.mxu0 0
      %330 = vmatprep.subr.bf16.mxu0 0
      %331 = vmatpush1.bf16.msra.mxu0 0
      %332 = vmatprep.subr.bf16.mxu0 0
      %333 = vmatpush1.bf16.msra.mxu0 0
      %334 = vmatprep.subr.bf16.mxu0 0
      %335 = vmatpush1.bf16.msra.mxu0 0
      %336 = vmatprep.subr.bf16.mxu0 0
      %337 = vmatpush1.bf16.msra.mxu0 0
      %338 = vmatprep.subr.bf16.mxu0 0
      %339 = vmatpush1.bf16.msra.mxu0 0
      %340 = vmatprep.subr.bf16.mxu0 0
      %341 = vmatpush1.bf16.msra.mxu0 0
      %342 = vmatprep.subr.bf16.mxu0 0
      %343 = vmatpush1.bf16.msra.mxu0 0
      %344 = vmatprep.subr.bf16.mxu0 0
      %345 = vmatpush1.bf16.msra.mxu0 0
      %346 = vmatprep.subr.bf16.mxu0 0
      %347 = vmatpush1.bf16.msra.mxu0 0
      %348 = vmatprep.subr.bf16.mxu0 0
      %349 = vmatpush1.bf16.msra.mxu0 0
      %350 = vmatprep.subr.bf16.mxu0 0
      %351 = vmatpush1.bf16.msra.mxu0 0
      %352 = vmatprep.subr.bf16.mxu0 0
      %353 = vmatpush1.bf16.msra.mxu0 0
      %354 = vmatprep.mubr.bf16.mxu0 0
      %355 = vmatmul.mubr.bf16.gmra.mrb[0].mxu0 %v257
      %v356 = vpop.f32.mrb[0].mxu0
      %v357 = vadd.f32 %v218, %v356
      %v358 = vpop.f32.mrb[0].mxu0
      %v359 = vadd.f32 %v218, %v358
      %v360 = vpop.f32.mrb[0].mxu0
      %v361 = vpop.f32.mrb[0].mxu0
      %362 = vdwg.mxu0
      %363 = vmatprep.subr.bf16.mxu0 %v276
      %364 = vmatpush1.bf16.msra.mxu0 %v273
      %365 = vmatprep.subr.bf16.mxu0 0
      %366 = vmatpush1.bf16.msra.mxu0 0
      %367 = vmatprep.subr.bf16.mxu0 0
      %368 = vmatpush1.bf16.msra.mxu0 0
      %369 = vmatprep.subr.bf16.mxu0 0
      %370 = vmatpush1.bf16.msra.mxu0 0
      %371 = vmatprep.subr.bf16.mxu0 0
      %372 = vmatpush1.bf16.msra.mxu0 0
      %373 = vmatprep.subr.bf16.mxu0 0
      %374 = vmatpush1.bf16.msra.mxu0 0
      %375 = vmatprep.subr.bf16.mxu0 0
      %376 = vmatpush1.bf16.msra.mxu0 0
      %377 = vmatprep.subr.bf16.mxu0 0
      %378 = vmatpush1.bf16.msra.mxu0 0
      %379 = vmatprep.subr.bf16.mxu0 0
      %380 = vmatpush1.bf16.msra.mxu0 0
      %381 = vmatprep.subr.bf16.mxu0 0
      %382 = vmatpush1.bf16.msra.mxu0 0
      %383 = vmatprep.subr.bf16.mxu0 0
      %384 = vmatpush1.bf16.msra.mxu0 0
      %385 = vmatprep.subr.bf16.mxu0 0
      %386 = vmatpush1.bf16.msra.mxu0 0
      %387 = vmatprep.subr.bf16.mxu0 0
      %388 = vmatpush1.bf16.msra.mxu0 0
      %389 = vmatprep.subr.bf16.mxu0 0
      %390 = vmatpush1.bf16.msra.mxu0 0
      %391 = vmatprep.subr.bf16.mxu0 0
      %392 = vmatpush1.bf16.msra.mxu0 0
      %393 = vmatprep.subr.bf16.mxu0 0
      %394 = vmatpush1.bf16.msra.mxu0 0
      %395 = vmatprep.mubr.bf16.mxu0 0
      %396 = vmatmul.mubr.bf16.gmra.mrb[0].mxu0 %v257
      %v397 = vpop.f32.mrb[0].mxu0
      %v398 = vadd.f32 %v218, %v397
      %v399 = vpop.f32.mrb[0].mxu0
      %v400 = vadd.f32 %v218, %v399
      %v401 = vpop.f32.mrb[0].mxu0
      %v402 = vpop.f32.mrb[0].mxu0
      %403 = vdwg.mxu0
      %404 = vmatprep.subr.bf16.mxu0 0
      %405 = vmatpush1.bf16.msra.mxu0 %v279
      %406 = vmatprep.subr.bf16.mxu0 0
      %407 = vmatpush1.bf16.msra.mxu0 0
      %408 = vmatprep.subr.bf16.mxu0 0
      %409 = vmatpush1.bf16.msra.mxu0 0
      %410 = vmatprep.subr.bf16.mxu0 0
      %411 = vmatpush1.bf16.msra.mxu0 0
      %412 = vmatprep.subr.bf16.mxu0 0
      %413 = vmatpush1.bf16.msra.mxu0 0
      %414 = vmatprep.subr.bf16.mxu0 0
      %415 = vmatpush1.bf16.msra.mxu0 0
      %416 = vmatprep.subr.bf16.mxu0 0
      %417 = vmatpush1.bf16.msra.mxu0 0
      %418 = vmatprep.subr.bf16.mxu0 0
      %419 = vmatpush1.bf16.msra.mxu0 0
      %420 = vmatprep.subr.bf16.mxu0 0
      %421 = vmatpush1.bf16.msra.mxu0 0
      %422 = vmatprep.subr.bf16.mxu0 0
      %423 = vmatpush1.bf16.msra.mxu0 0
      %424 = vmatprep.subr.bf16.mxu0 0
      %425 = vmatpush1.bf16.msra.mxu0 0
      %426 = vmatprep.subr.bf16.mxu0 0
      %427 = vmatpush1.bf16.msra.mxu0 0
      %428 = vmatprep.subr.bf16.mxu0 0
      %429 = vmatpush1.bf16.msra.mxu0 0
      %430 = vmatprep.subr.bf16.mxu0 0
      %431 = vmatpush1.bf16.msra.mxu0 0
      %432 = vmatprep.subr.bf16.mxu0 0
      %433 = vmatpush1.bf16.msra.mxu0 0
      %434 = vmatprep.subr.bf16.mxu0 0
      %435 = vmatpush1.bf16.msra.mxu0 0
      %436 = vmatprep.mubr.bf16.mxu0 0
      %437 = vmatmul.mubr.bf16.gmra.mrb[0].mxu0 %v257
      %v438 = vpop.f32.mrb[0].mxu0
      %v439 = vadd.f32 %v218, %v438
      %v440 = vpop.f32.mrb[0].mxu0
      %v441 = vpop.f32.mrb[0].mxu0
      %v442 = vpop.f32.mrb[0].mxu0
      %443 = vdwg.mxu0
      %v444 = vpack.c.bf16 %v316, %v316
      %v445 = vpack.c.bf16 %v318, %v318
      %v446 = vpack.c.bf16 %v357, %v357
      %v447 = vpack.c.bf16 %v359, %v359
      %v448 = vpack.c.bf16 %v398, %v398
      %v449 = vpack.c.bf16 %v400, %v400
      %v450 = vpack.c.bf16 %v439, %v439
      %v458 = vunpack.c.l.b16 %v444
      %v459 = vunpack.c.l.b16 %v445
      %v460 = vunpack.c.l.b16 %v446
      %v461 = vunpack.c.l.b16 %v447
      %v462 = vunpack.c.l.b16 %v448
      %v463 = vunpack.c.l.b16 %v449
      %v464 = vunpack.c.l.b16 %v450
      %v465 = vpack.c.b16 %v459, %v458
      %v466 = vpack.c.b16 %v461, %v460
      %v467 = vpack.c.b16 %v463, %v462
      %v468 = vpack.c.b16 %v464, %v464
      %vm473 = vcmask 1042432
      %vm474 = vsmask.f32 2304
      %vm475 = vmand %vm473, %vm474
      %vm476 = vcmask 1046532
      %vm477 = vsmask.f32 6400
      %vm478 = vmand %vm476, %vm477
      %vm479 = vmor %vm478, %vm475
      %v480 = vld [vmem:[%s208] sm:$0x77]
      %v481 = vsel %vm479, %v465, %v480
      %482 = vst [vmem:[%s208] sm:$0x77] %v481
      %v483 = vld [vmem:[%s208 + $0x8] sm:$0x77]
      %v484 = vsel %vm479, %v466, %v483
      %485 = vst [vmem:[%s208 + $0x8] sm:$0x77] %v484
      %v486 = vld [vmem:[%s208 + $0x10] sm:$0x77]
      %v487 = vsel %vm479, %v467, %v486
      %488 = vst [vmem:[%s208 + $0x10] sm:$0x77] %v487
      %vm489 = vcmask 124928
      %vm490 = vmand %vm489, %vm474
      %v491 = vld [vmem:[%s208 + $0x18] sm:$0x7]
      %v492 = vsel %vm490, %v468, %v491
      %493 = vst [vmem:[%s208 + $0x18] sm:$0x7] %v492
      %s494 = smul.u32 7, %s19
      %p495 = scmp.lt.s32.totalorder %s18, 1
      %s496 = scalar_select %p495, %s18, 1
      %p497 = scmp.lt.s32.totalorder %s494, 6
      %s498 = scalar_select %p497, %s494, 6
      %s499 = smul.addr %s496, 7
      %s500 = sadd.s32 %s498, %s499
      %s501 = smul.addr %s500, 4
      %s502 = scalar_lea.vmem %s3, %s501
      // Predicated region
      $region33: #{a_call__.30} parent=31 // pred_check
        %p503 = pneg %p116
      $region34: #{a_call__.30} parent=31 // pred_check_branch
        %505 = sbr.rel (%p503) target = $region36
      $region35: #{a_call__.30} parent=31 // pred_region
        %s506 = smul.u32 7, %s19
      $region36: #{a_call__.30} parent=31 // pred_fallthru
        _
    $region32: #{a_call__.30} parent=5 // pred_fallthru
      _
    %p507 = scmp.le.s32.totalorder 2, %s9
    // Predicated region
    $region37: #{a_call__.30} parent=5 // pred_check
      %p508 = pneg %p507
    $region38: #{a_call__.30} parent=5 // pred_check_branch
      %510 = sbr.rel (%p508) target = $region40
    $region39: #{a_call__.30} parent=5 // pred_region
      %s511 = ssub.s32 %s9, 2
      // Predicated region
      $region41: #{a_call__.30} parent=39 // pred_check
        %p512 = pneg %p122
      $region42: #{a_call__.30} parent=39 // pred_check_branch
        %514 = sbr.rel (%p512) target = $region44
      $region43: #{a_call__.30} parent=39 // pred_region
        %s515 = smul.u32 7, %s21
        %p516 = scmp.lt.s32.totalorder %s20, 1
        %s517 = scalar_select %p516, %s20, 1
        %p518 = scmp.lt.s32.totalorder %s515, 6
        %s519 = scalar_select %p518, %s515, 6
        %s520 = smul.addr %s517, 7
        %s521 = sadd.s32 %s519, %s520
        %s522 = smul.addr %s521, 4
        %s523 = scalar_lea.vmem %s3, %s522
      $region44: #{a_call__.30} parent=39 // pred_fallthru
        _
    $region40: #{a_call__.30} parent=5 // pred_fallthru
      _
  $region6: #{a_call__.30} parent=0 // loop_footer
    %s13 = sadd.s32 1, %s9
  $region7: #{a_call__.30} parent=0 // loop_footer_branch
    %8 = sbr.rel target = $region3
  $region8: #{a_call__.30} parent=0 // loop_exit
    _

// kernel: a_call__.29
$region0: #{a_call__.29}
  #allocation0 [shape = 'u32[]', space=smem, size = 0x4, offset = 0x4, fixed_abs, tag = 'smem constant byte address 0x4 - core index']
  #allocation1 [shape = 'u32[144,128]{1,0:T(1,128)}', space=vmem, size = 0x12000, scoped, tag = 'internal scratch']
  %s0 = inlined_call_operand.vmem [shape: bf16[8,256], index: 0, kind: input, shape index: {}]
  %s1 = inlined_call_operand.vmem [shape: bf16[256,784], index: 1, kind: input, shape index: {}]
  %s2 = inlined_call_operand.vmem [shape: bf16[8,784], index: 2, kind: output, shape index: {}]
  %s3 = sld [smem:[#allocation0]]
  $region18: #{a_call__.29} parent=0
    _
  %s5 = ssub.s32 1, %s3
  %s6 = scalar_select 0, %s5, %s3
  // Predicated region
  $region2: #{a_call__.29} parent=0 // pred_check
    _
  $region3: #{a_call__.29} parent=0 // pred_check_branch
    %8 = sbr.rel (0) target = $region5
  $region4: #{a_call__.29} parent=0 // pred_region
    _
  $region5: #{a_call__.29} parent=0 // pred_fallthru
    _
  // Predicated region
  $region6: #{a_call__.29} parent=0 // pred_check
    _
  $region7: #{a_call__.29} parent=0 // pred_check_branch
    %10 = sbr.rel (0) target = $region9
  $region8: #{a_call__.29} parent=0 // pred_region
    _
  $region9: #{a_call__.29} parent=0 // pred_fallthru
    _
  %v12 = vld [vmem:[%s0] sm:$0xff]
  %v13 = vld [vmem:[%s1] sm:$0xff]
  %v14 = vld [vmem:[%s1 + $0x8] sm:$0xff]
  %v15 = vld [vmem:[%s1 + $0x10] sm:$0xff]
  %v16 = vld [vmem:[%s1 + $0x18] sm:$0xf]
  %v17 = vld [vmem:[%s1 + $0x1c] sm:$0xff]
  %v18 = vld [vmem:[%s1 + $0x24] sm:$0xff]
  %v19 = vld [vmem:[%s1 + $0x2c] sm:$0xff]
  %v20 = vld [vmem:[%s1 + $0x34] sm:$0xf]
  %v21 = vld [vmem:[%s1 + $0x38] sm:$0xff]
  %v22 = vld [vmem:[%s1 + $0x40] sm:$0xff]
  %v23 = vld [vmem:[%s1 + $0x48] sm:$0xff]
  %v24 = vld [vmem:[%s1 + $0x50] sm:$0xf]
  %v25 = vld [vmem:[%s1 + $0x54] sm:$0xff]
  %v26 = vld [vmem:[%s1 + $0x5c] sm:$0xff]
  %v27 = vld [vmem:[%s1 + $0x64] sm:$0xff]
  %v28 = vld [vmem:[%s1 + $0x6c] sm:$0xf]
  %v29 = vld [vmem:[%s1 + $0x70] sm:$0xff]
  %v30 = vld [vmem:[%s1 + $0x78] sm:$0xff]
  %v31 = vld [vmem:[%s1 + $0x80] sm:$0xff]
  %v32 = vld [vmem:[%s1 + $0x88] sm:$0xf]
  %v33 = vld [vmem:[%s1 + $0x8c] sm:$0xff]
  %v34 = vld [vmem:[%s1 + $0x94] sm:$0xff]
  %v35 = vld [vmem:[%s1 + $0x9c] sm:$0xff]
  %v36 = vld [vmem:[%s1 + $0xa4] sm:$0xf]
  %v37 = vld [vmem:[%s1 + $0xa8] sm:$0xff]
  %v38 = vld [vmem:[%s1 + $0xb0] sm:$0xff]
  %v39 = vld [vmem:[%s1 + $0xb8] sm:$0xff]
  %v40 = vld [vmem:[%s1 + $0xc0] sm:$0xf]
  %v41 = vld [vmem:[%s1 + $0xc4] sm:$0xff]
  %v42 = vld [vmem:[%s1 + $0xcc] sm:$0xff]
  %v43 = vld [vmem:[%s1 + $0xd4] sm:$0xff]
  %v44 = vld [vmem:[%s1 + $0xdc] sm:$0xf]
  %v45 = vld [vmem:[%s1 + $0xe0] sm:$0xff]
  %v46 = vld [vmem:[%s1 + $0xe8] sm:$0xff]
  %v47 = vld [vmem:[%s1 + $0xf0] sm:$0xff]
  %v48 = vld [vmem:[%s1 + $0xf8] sm:$0xf]
  %v49 = vld [vmem:[%s1 + $0xfc] sm:$0xff]
  %v50 = vld [vmem:[%s1 + $0x104] sm:$0xff]
  %v51 = vld [vmem:[%s1 + $0x10c] sm:$0xff]
  %v52 = vld [vmem:[%s1 + $0x114] sm:$0xf]
  %v53 = vld [vmem:[%s1 + $0x118] sm:$0xff]
  %v54 = vld [vmem:[%s1 + $0x120] sm:$0xff]
  %v55 = vld [vmem:[%s1 + $0x128] sm:$0xff]
  %v56 = vld [vmem:[%s1 + $0x130] sm:$0xf]
  %v57 = vld [vmem:[%s1 + $0x134] sm:$0xff]
  %v58 = vld [vmem:[%s1 + $0x13c] sm:$0xff]
  %v59 = vld [vmem:[%s1 + $0x144] sm:$0xff]
  %v60 = vld [vmem:[%s1 + $0x14c] sm:$0xf]
  %v61 = vld [vmem:[%s1 + $0x150] sm:$0xff]
  %v62 = vld [vmem:[%s1 + $0x158] sm:$0xff]
  %v63 = vld [vmem:[%s1 + $0x160] sm:$0xff]
  %v64 = vld [vmem:[%s1 + $0x168] sm:$0xf]
  %v65 = vld [vmem:[%s1 + $0x16c] sm:$0xff]
  %v66 = vld [vmem:[%s1 + $0x174] sm:$0xff]
  %v67 = vld [vmem:[%s1 + $0x17c] sm:$0xff]
  %v68 = vld [vmem:[%s1 + $0x184] sm:$0xf]
  %v69 = vld [vmem:[%s1 + $0x188] sm:$0xff]
  %v70 = vld [vmem:[%s1 + $0x190] sm:$0xff]
  %v71 = vld [vmem:[%s1 + $0x198] sm:$0xff]
  %v72 = vld [vmem:[%s1 + $0x1a0] sm:$0xf]
  %v73 = vld [vmem:[%s1 + $0x1a4] sm:$0xff]
  %v74 = vld [vmem:[%s1 + $0x1ac] sm:$0xff]
  %v75 = vld [vmem:[%s1 + $0x1b4] sm:$0xff]
  %v76 = vld [vmem:[%s1 + $0x1bc] sm:$0xf]
  %v77 = vld [vmem:[%s1 + $0x1c0] sm:$0xff]
  %v78 = vld [vmem:[%s1 + $0x1c8] sm:$0xff]
  %v79 = vld [vmem:[%s1 + $0x1d0] sm:$0xff]
  %v80 = vld [vmem:[%s1 + $0x1d8] sm:$0xf]
  %v81 = vld [vmem:[%s1 + $0x1dc] sm:$0xff]
  %v82 = vld [vmem:[%s1 + $0x1e4] sm:$0xff]
  %v83 = vld [vmem:[%s1 + $0x1ec] sm:$0xff]
  %v84 = vld [vmem:[%s1 + $0x1f4] sm:$0xf]
  %v85 = vld [vmem:[%s1 + $0x1f8] sm:$0xff]
  %v86 = vld [vmem:[%s1 + $0x200] sm:$0xff]
  %v87 = vld [vmem:[%s1 + $0x208] sm:$0xff]
  %v88 = vld [vmem:[%s1 + $0x210] sm:$0xf]
  %v89 = vld [vmem:[%s1 + $0x214] sm:$0xff]
  %v90 = vld [vmem:[%s1 + $0x21c] sm:$0xff]
  %v91 = vld [vmem:[%s1 + $0x224] sm:$0xff]
  %v92 = vld [vmem:[%s1 + $0x22c] sm:$0xf]
  %v93 = vld [vmem:[%s1 + $0x230] sm:$0xff]
  %v94 = vld [vmem:[%s1 + $0x238] sm:$0xff]
  %v95 = vld [vmem:[%s1 + $0x240] sm:$0xff]
  %v96 = vld [vmem:[%s1 + $0x248] sm:$0xf]
  %v97 = vld [vmem:[%s1 + $0x24c] sm:$0xff]
  %v98 = vld [vmem:[%s1 + $0x254] sm:$0xff]
  %v99 = vld [vmem:[%s1 + $0x25c] sm:$0xff]
  %v100 = vld [vmem:[%s1 + $0x264] sm:$0xf]
  %v101 = vld [vmem:[%s1 + $0x268] sm:$0xff]
  %v102 = vld [vmem:[%s1 + $0x270] sm:$0xff]
  %v103 = vld [vmem:[%s1 + $0x278] sm:$0xff]
  %v104 = vld [vmem:[%s1 + $0x280] sm:$0xf]
  %v105 = vld [vmem:[%s1 + $0x284] sm:$0xff]
  %v106 = vld [vmem:[%s1 + $0x28c] sm:$0xff]
  %v107 = vld [vmem:[%s1 + $0x294] sm:$0xff]
  %v108 = vld [vmem:[%s1 + $0x29c] sm:$0xf]
  %v109 = vld [vmem:[%s1 + $0x2a0] sm:$0xff]
  %v110 = vld [vmem:[%s1 + $0x2a8] sm:$0xff]
  %v111 = vld [vmem:[%s1 + $0x2b0] sm:$0xff]
  %v112 = vld [vmem:[%s1 + $0x2b8] sm:$0xf]
  %v113 = vld [vmem:[%s1 + $0x2bc] sm:$0xff]
  %v114 = vld [vmem:[%s1 + $0x2c4] sm:$0xff]
  %v115 = vld [vmem:[%s1 + $0x2cc] sm:$0xff]
  %v116 = vld [vmem:[%s1 + $0x2d4] sm:$0xf]
  %v117 = vld [vmem:[%s1 + $0x2d8] sm:$0xff]
  %v118 = vld [vmem:[%s1 + $0x2e0] sm:$0xff]
  %v119 = vld [vmem:[%s1 + $0x2e8] sm:$0xff]
  %v120 = vld [vmem:[%s1 + $0x2f0] sm:$0xf]
  %v121 = vld [vmem:[%s1 + $0x2f4] sm:$0xff]
  %v122 = vld [vmem:[%s1 + $0x2fc] sm:$0xff]
  %v123 = vld [vmem:[%s1 + $0x304] sm:$0xff]
  %v124 = vld [vmem:[%s1 + $0x30c] sm:$0xf]
  %v125 = vld [vmem:[%s1 + $0x310] sm:$0xff]
  %v126 = vld [vmem:[%s1 + $0x318] sm:$0xff]
  %v127 = vld [vmem:[%s1 + $0x320] sm:$0xff]
  %v128 = vld [vmem:[%s1 + $0x328] sm:$0xf]
  %v129 = vld [vmem:[%s1 + $0x32c] sm:$0xff]
  %v130 = vld [vmem:[%s1 + $0x334] sm:$0xff]
  %v131 = vld [vmem:[%s1 + $0x33c] sm:$0xff]
  %v132 = vld [vmem:[%s1 + $0x344] sm:$0xf]
  %v133 = vld [vmem:[%s1 + $0x348] sm:$0xff]
  %v134 = vld [vmem:[%s1 + $0x350] sm:$0xff]
  %v135 = vld [vmem:[%s1 + $0x358] sm:$0xff]
  %v136 = vld [vmem:[%s1 + $0x360] sm:$0xf]
  %v137 = vld [vmem:[%s1 + $0x364] sm:$0xff]
  %v138 = vld [vmem:[%s1 + $0x36c] sm:$0xff]
  %v139 = vld [vmem:[%s1 + $0x374] sm:$0xff]
  %v140 = vld [vmem:[%s1 + $0x37c] sm:$0xf]
  %v142 = vunpack.c.l.b16 %v12
  %v143 = vunpack.c.h.b16 %v12
  %v144 = vpack.c.b16 %v142, %v142
  %v145 = vpack.c.b16 %v143, %v143
  %v276 = vunpack.c.l.b16 %v13
  %v277 = vunpack.c.h.b16 %v13
  %v278 = vunpack.c.l.b16 %v14
  %v279 = vunpack.c.h.b16 %v14
  %v280 = vunpack.c.l.b16 %v15
  %v281 = vunpack.c.h.b16 %v15
  %v282 = vunpack.c.l.b16 %v16
  %v283 = vunpack.c.l.b16 %v17
  %v284 = vunpack.c.h.b16 %v17
  %v285 = vunpack.c.l.b16 %v18
  %v286 = vunpack.c.h.b16 %v18
  %v287 = vunpack.c.l.b16 %v19
  %v288 = vunpack.c.h.b16 %v19
  %v289 = vunpack.c.l.b16 %v20
  %v290 = vunpack.c.l.b16 %v21
  %v291 = vunpack.c.h.b16 %v21
  %v292 = vunpack.c.l.b16 %v22
  %v293 = vunpack.c.h.b16 %v22
  %v294 = vunpack.c.l.b16 %v23
  %v295 = vunpack.c.h.b16 %v23
  %v296 = vunpack.c.l.b16 %v24
  %v297 = vunpack.c.l.b16 %v25
  %v298 = vunpack.c.h.b16 %v25
  %v299 = vunpack.c.l.b16 %v26
  %v300 = vunpack.c.h.b16 %v26
  %v301 = vunpack.c.l.b16 %v27
  %v302 = vunpack.c.h.b16 %v27
  %v303 = vunpack.c.l.b16 %v28
  %v304 = vunpack.c.l.b16 %v29
  %v305 = vunpack.c.h.b16 %v29
  %v306 = vunpack.c.l.b16 %v30
  %v307 = vunpack.c.h.b16 %v30
  %v308 = vunpack.c.l.b16 %v31
  %v309 = vunpack.c.h.b16 %v31
  %v310 = vunpack.c.l.b16 %v32
  %v311 = vunpack.c.l.b16 %v33
  %v312 = vunpack.c.h.b16 %v33
  %v313 = vunpack.c.l.b16 %v34
  %v314 = vunpack.c.h.b16 %v34
  %v315 = vunpack.c.l.b16 %v35
  %v316 = vunpack.c.h.b16 %v35
  %v317 = vunpack.c.l.b16 %v36
  %v318 = vunpack.c.l.b16 %v37
  %v319 = vunpack.c.h.b16 %v37
  %v320 = vunpack.c.l.b16 %v38
  %v321 = vunpack.c.h.b16 %v38
  %v322 = vunpack.c.l.b16 %v39
  %v323 = vunpack.c.h.b16 %v39
  %v324 = vunpack.c.l.b16 %v40
  %v325 = vunpack.c.l.b16 %v41
  %v326 = vunpack.c.h.b16 %v41
  %v327 = vunpack.c.l.b16 %v42
  %v328 = vunpack.c.h.b16 %v42
  %v329 = vunpack.c.l.b16 %v43
  %v330 = vunpack.c.h.b16 %v43
  %v331 = vunpack.c.l.b16 %v44
  %v332 = vunpack.c.l.b16 %v45
  %v333 = vunpack.c.h.b16 %v45
  %v334 = vunpack.c.l.b16 %v46
  %v335 = vunpack.c.h.b16 %v46
  %v336 = vunpack.c.l.b16 %v47
  %v337 = vunpack.c.h.b16 %v47
  %v338 = vunpack.c.l.b16 %v48
  %v339 = vunpack.c.l.b16 %v49
  %v340 = vunpack.c.h.b16 %v49
  %v341 = vunpack.c.l.b16 %v50
  %v342 = vunpack.c.h.b16 %v50
  %v343 = vunpack.c.l.b16 %v51
  %v344 = vunpack.c.h.b16 %v51
  %v345 = vunpack.c.l.b16 %v52
  %v346 = vunpack.c.l.b16 %v53
  %v347 = vunpack.c.h.b16 %v53
  %v348 = vunpack.c.l.b16 %v54
  %v349 = vunpack.c.h.b16 %v54
  %v350 = vunpack.c.l.b16 %v55
  %v351 = vunpack.c.h.b16 %v55
  %v352 = vunpack.c.l.b16 %v56
  %v353 = vunpack.c.l.b16 %v57
  %v354 = vunpack.c.h.b16 %v57
  %v355 = vunpack.c.l.b16 %v58
  %v356 = vunpack.c.h.b16 %v58
  %v357 = vunpack.c.l.b16 %v59
  %v358 = vunpack.c.h.b16 %v59
  %v359 = vunpack.c.l.b16 %v60
  %v360 = vunpack.c.l.b16 %v61
  %v361 = vunpack.c.h.b16 %v61
  %v362 = vunpack.c.l.b16 %v62
  %v363 = vunpack.c.h.b16 %v62
  %v364 = vunpack.c.l.b16 %v63
  %v365 = vunpack.c.h.b16 %v63
  %v366 = vunpack.c.l.b16 %v64
  %v367 = vunpack.c.l.b16 %v65
  %v368 = vunpack.c.h.b16 %v65
  %v369 = vunpack.c.l.b16 %v66
  %v370 = vunpack.c.h.b16 %v66
  %v371 = vunpack.c.l.b16 %v67
  %v372 = vunpack.c.h.b16 %v67
  %v373 = vunpack.c.l.b16 %v68
  %v374 = vunpack.c.l.b16 %v69
  %v375 = vunpack.c.h.b16 %v69
  %v376 = vunpack.c.l.b16 %v70
  %v377 = vunpack.c.h.b16 %v70
  %v378 = vunpack.c.l.b16 %v71
  %v379 = vunpack.c.h.b16 %v71
  %v380 = vunpack.c.l.b16 %v72
  %v381 = vunpack.c.l.b16 %v73
  %v382 = vunpack.c.h.b16 %v73
  %v383 = vunpack.c.l.b16 %v74
  %v384 = vunpack.c.h.b16 %v74
  %v385 = vunpack.c.l.b16 %v75
  %v386 = vunpack.c.h.b16 %v75
  %v387 = vunpack.c.l.b16 %v76
  %v388 = vunpack.c.l.b16 %v77
  %v389 = vunpack.c.h.b16 %v77
  %v390 = vunpack.c.l.b16 %v78
  %v391 = vunpack.c.h.b16 %v78
  %v392 = vunpack.c.l.b16 %v79
  %v393 = vunpack.c.h.b16 %v79
  %v394 = vunpack.c.l.b16 %v80
  %v395 = vunpack.c.l.b16 %v81
  %v396 = vunpack.c.h.b16 %v81
  %v397 = vunpack.c.l.b16 %v82
  %v398 = vunpack.c.h.b16 %v82
  %v399 = vunpack.c.l.b16 %v83
  %v400 = vunpack.c.h.b16 %v83
  %v401 = vunpack.c.l.b16 %v84
  %v402 = vunpack.c.l.b16 %v85
  %v403 = vunpack.c.h.b16 %v85
  %v404 = vunpack.c.l.b16 %v86
  %v405 = vunpack.c.h.b16 %v86
  %v406 = vunpack.c.l.b16 %v87
  %v407 = vunpack.c.h.b16 %v87
  %v408 = vunpack.c.l.b16 %v88
  %v409 = vunpack.c.l.b16 %v89
  %v410 = vunpack.c.h.b16 %v89
  %v411 = vunpack.c.l.b16 %v90
  %v412 = vunpack.c.h.b16 %v90
  %v413 = vunpack.c.l.b16 %v91
  %v414 = vunpack.c.h.b16 %v91
  %v415 = vunpack.c.l.b16 %v92
  %v416 = vunpack.c.l.b16 %v93
  %v417 = vunpack.c.h.b16 %v93
  %v418 = vunpack.c.l.b16 %v94
  %v419 = vunpack.c.h.b16 %v94
  %v420 = vunpack.c.l.b16 %v95
  %v421 = vunpack.c.h.b16 %v95
  %v422 = vunpack.c.l.b16 %v96
  %v423 = vunpack.c.l.b16 %v97
  %v424 = vunpack.c.h.b16 %v97
  %v425 = vunpack.c.l.b16 %v98
  %v426 = vunpack.c.h.b16 %v98
  %v427 = vunpack.c.l.b16 %v99
  %v428 = vunpack.c.h.b16 %v99
  %v429 = vunpack.c.l.b16 %v100
  %v430 = vunpack.c.l.b16 %v101
  %v431 = vunpack.c.h.b16 %v101
  %v432 = vunpack.c.l.b16 %v102
  %v433 = vunpack.c.h.b16 %v102
  %v434 = vunpack.c.l.b16 %v103
  %v435 = vunpack.c.h.b16 %v103
  %v436 = vunpack.c.l.b16 %v104
  %v437 = vunpack.c.l.b16 %v105
  %v438 = vunpack.c.h.b16 %v105
  %v439 = vunpack.c.l.b16 %v106
  %v440 = vunpack.c.h.b16 %v106
  %v441 = vunpack.c.l.b16 %v107
  %v442 = vunpack.c.h.b16 %v107
  %v443 = vunpack.c.l.b16 %v108
  %v444 = vunpack.c.l.b16 %v109
  %v445 = vunpack.c.h.b16 %v109
  %v446 = vunpack.c.l.b16 %v110
  %v447 = vunpack.c.h.b16 %v110
  %v448 = vunpack.c.l.b16 %v111
  %v449 = vunpack.c.h.b16 %v111
  %v450 = vunpack.c.l.b16 %v112
  %v451 = vunpack.c.l.b16 %v113
  %v452 = vunpack.c.h.b16 %v113
  %v453 = vunpack.c.l.b16 %v114
  %v454 = vunpack.c.h.b16 %v114
  %v455 = vunpack.c.l.b16 %v115
  %v456 = vunpack.c.h.b16 %v115
  %v457 = vunpack.c.l.b16 %v116
  %v458 = vunpack.c.l.b16 %v117
  %v459 = vunpack.c.h.b16 %v117
  %v460 = vunpack.c.l.b16 %v118
  %v461 = vunpack.c.h.b16 %v118
  %v462 = vunpack.c.l.b16 %v119
  %v463 = vunpack.c.h.b16 %v119
  %v464 = vunpack.c.l.b16 %v120
  %v465 = vunpack.c.l.b16 %v121
  %v466 = vunpack.c.h.b16 %v121
  %v467 = vunpack.c.l.b16 %v122
  %v468 = vunpack.c.h.b16 %v122
  %v469 = vunpack.c.l.b16 %v123
  %v470 = vunpack.c.h.b16 %v123
  %v471 = vunpack.c.l.b16 %v124
  %v472 = vunpack.c.l.b16 %v125
  %v473 = vunpack.c.h.b16 %v125
  %v474 = vunpack.c.l.b16 %v126
  %v475 = vunpack.c.h.b16 %v126
  %v476 = vunpack.c.l.b16 %v127
  %v477 = vunpack.c.h.b16 %v127
  %v478 = vunpack.c.l.b16 %v128
  %v479 = vunpack.c.l.b16 %v129
  %v480 = vunpack.c.h.b16 %v129
  %v481 = vunpack.c.l.b16 %v130
  %v482 = vunpack.c.h.b16 %v130
  %v483 = vunpack.c.l.b16 %v131
  %v484 = vunpack.c.h.b16 %v131
  %v485 = vunpack.c.l.b16 %v132
  %v486 = vunpack.c.l.b16 %v133
  %v487 = vunpack.c.h.b16 %v133
  %v488 = vunpack.c.l.b16 %v134
  %v489 = vunpack.c.h.b16 %v134
  %v490 = vunpack.c.l.b16 %v135
  %v491 = vunpack.c.h.b16 %v135
  %v492 = vunpack.c.l.b16 %v136
  %v493 = vunpack.c.l.b16 %v137
  %v494 = vunpack.c.h.b16 %v137
  %v495 = vunpack.c.l.b16 %v138
  %v496 = vunpack.c.h.b16 %v138
  %v497 = vunpack.c.l.b16 %v139
  %v498 = vunpack.c.h.b16 %v139
  %v499 = vunpack.c.l.b16 %v140
  %v500 = vpack.c.b16 %v283, %v276
  %v501 = vpack.c.b16 %v284, %v277
  %v502 = vpack.c.b16 %v285, %v278
  %v503 = vpack.c.b16 %v286, %v279
  %v504 = vpack.c.b16 %v287, %v280
  %v505 = vpack.c.b16 %v288, %v281
  %v506 = vpack.c.b16 %v289, %v282
  %v507 = vpack.c.b16 %v297, %v290
  %v508 = vpack.c.b16 %v298, %v291
  %v509 = vpack.c.b16 %v299, %v292
  %v510 = vpack.c.b16 %v300, %v293
  %v511 = vpack.c.b16 %v301, %v294
  %v512 = vpack.c.b16 %v302, %v295
  %v513 = vpack.c.b16 %v303, %v296
  %v514 = vpack.c.b16 %v311, %v304
  %v515 = vpack.c.b16 %v312, %v305
  %v516 = vpack.c.b16 %v313, %v306
  %v517 = vpack.c.b16 %v314, %v307
  %v518 = vpack.c.b16 %v315, %v308
  %v519 = vpack.c.b16 %v316, %v309
  %v520 = vpack.c.b16 %v317, %v310
  %v521 = vpack.c.b16 %v325, %v318
  %v522 = vpack.c.b16 %v326, %v319
  %v523 = vpack.c.b16 %v327, %v320
  %v524 = vpack.c.b16 %v328, %v321
  %v525 = vpack.c.b16 %v329, %v322
  %v526 = vpack.c.b16 %v330, %v323
  %v527 = vpack.c.b16 %v331, %v324
  %v528 = vpack.c.b16 %v339, %v332
  %v529 = vpack.c.b16 %v340, %v333
  %v530 = vpack.c.b16 %v341, %v334
  %v531 = vpack.c.b16 %v342, %v335
  %v532 = vpack.c.b16 %v343, %v336
  %v533 = vpack.c.b16 %v344, %v337
  %v534 = vpack.c.b16 %v345, %v338
  %v535 = vpack.c.b16 %v353, %v346
  %v536 = vpack.c.b16 %v354, %v347
  %v537 = vpack.c.b16 %v355, %v348
  %v538 = vpack.c.b16 %v356, %v349
  %v539 = vpack.c.b16 %v357, %v350
  %v540 = vpack.c.b16 %v358, %v351
  %v541 = vpack.c.b16 %v359, %v352
  %v542 = vpack.c.b16 %v367, %v360
  %v543 = vpack.c.b16 %v368, %v361
  %v544 = vpack.c.b16 %v369, %v362
  %v545 = vpack.c.b16 %v370, %v363
  %v546 = vpack.c.b16 %v371, %v364
  %v547 = vpack.c.b16 %v372, %v365
  %v548 = vpack.c.b16 %v373, %v366
  %v549 = vpack.c.b16 %v381, %v374
  %v550 = vpack.c.b16 %v382, %v375
  %v551 = vpack.c.b16 %v383, %v376
  %v552 = vpack.c.b16 %v384, %v377
  %v553 = vpack.c.b16 %v385, %v378
  %v554 = vpack.c.b16 %v386, %v379
  %v555 = vpack.c.b16 %v387, %v380
  %v556 = vpack.c.b16 %v395, %v388
  %v557 = vpack.c.b16 %v396, %v389
  %v558 = vpack.c.b16 %v397, %v390
  %v559 = vpack.c.b16 %v398, %v391
  %v560 = vpack.c.b16 %v399, %v392
  %v561 = vpack.c.b16 %v400, %v393
  %v562 = vpack.c.b16 %v401, %v394
  %v563 = vpack.c.b16 %v409, %v402
  %v564 = vpack.c.b16 %v410, %v403
  %v565 = vpack.c.b16 %v411, %v404
  %v566 = vpack.c.b16 %v412, %v405
  %v567 = vpack.c.b16 %v413, %v406
  %v568 = vpack.c.b16 %v414, %v407
  %v569 = vpack.c.b16 %v415, %v408
  %v570 = vpack.c.b16 %v423, %v416
  %v571 = vpack.c.b16 %v424, %v417
  %v572 = vpack.c.b16 %v425, %v418
  %v573 = vpack.c.b16 %v426, %v419
  %v574 = vpack.c.b16 %v427, %v420
  %v575 = vpack.c.b16 %v428, %v421
  %v576 = vpack.c.b16 %v429, %v422
  %v577 = vpack.c.b16 %v437, %v430
  %v578 = vpack.c.b16 %v438, %v431
  %v579 = vpack.c.b16 %v439, %v432
  %v580 = vpack.c.b16 %v440, %v433
  %v581 = vpack.c.b16 %v441, %v434
  %v582 = vpack.c.b16 %v442, %v435
  %v583 = vpack.c.b16 %v443, %v436
  %v584 = vpack.c.b16 %v451, %v444
  %v585 = vpack.c.b16 %v452, %v445
  %v586 = vpack.c.b16 %v453, %v446
  %v587 = vpack.c.b16 %v454, %v447
  %v588 = vpack.c.b16 %v455, %v448
  %v589 = vpack.c.b16 %v456, %v449
  %v590 = vpack.c.b16 %v457, %v450
  %v591 = vpack.c.b16 %v465, %v458
  %v592 = vpack.c.b16 %v466, %v459
  %v593 = vpack.c.b16 %v467, %v460
  %v594 = vpack.c.b16 %v468, %v461
  %v595 = vpack.c.b16 %v469, %v462
  %v596 = vpack.c.b16 %v470, %v463
  %v597 = vpack.c.b16 %v471, %v464
  %v598 = vpack.c.b16 %v479, %v472
  %v599 = vpack.c.b16 %v480, %v473
  %v600 = vpack.c.b16 %v481, %v474
  %v601 = vpack.c.b16 %v482, %v475
  %v602 = vpack.c.b16 %v483, %v476
  %v603 = vpack.c.b16 %v484, %v477
  %v604 = vpack.c.b16 %v485, %v478
  %v605 = vpack.c.b16 %v493, %v486
  %v606 = vpack.c.b16 %v494, %v487
  %v607 = vpack.c.b16 %v495, %v488
  %v608 = vpack.c.b16 %v496, %v489
  %v609 = vpack.c.b16 %v497, %v490
  %v610 = vpack.c.b16 %v498, %v491
  %v611 = vpack.c.b16 %v499, %v492
  %724 = vmatprep.subr.bf16.mxu0 %v501
  %725 = vmatpush1.bf16.msra.mxu0 %v500
  %726 = vmatprep.subr.bf16.mxu0 %v508
  %727 = vmatpush1.bf16.msra.mxu0 %v507
  %728 = vmatprep.subr.bf16.mxu0 %v515
  %729 = vmatpush1.bf16.msra.mxu0 %v514
  %730 = vmatprep.subr.bf16.mxu0 %v522
  %731 = vmatpush1.bf16.msra.mxu0 %v521
  %732 = vmatprep.subr.bf16.mxu0 %v529
  %733 = vmatpush1.bf16.msra.mxu0 %v528
  %734 = vmatprep.subr.bf16.mxu0 %v536
  %735 = vmatpush1.bf16.msra.mxu0 %v535
  %736 = vmatprep.subr.bf16.mxu0 %v543
  %737 = vmatpush1.bf16.msra.mxu0 %v542
  %738 = vmatprep.subr.bf16.mxu0 %v550
  %739 = vmatpush1.bf16.msra.mxu0 %v549
  %740 = vmatprep.subr.bf16.mxu0 %v557
  %741 = vmatpush1.bf16.msra.mxu0 %v556
  %742 = vmatprep.subr.bf16.mxu0 %v564
  %743 = vmatpush1.bf16.msra.mxu0 %v563
  %744 = vmatprep.subr.bf16.mxu0 %v571
  %745 = vmatpush1.bf16.msra.mxu0 %v570
  %746 = vmatprep.subr.bf16.mxu0 %v578
  %747 = vmatpush1.bf16.msra.mxu0 %v577
  %748 = vmatprep.subr.bf16.mxu0 %v585
  %749 = vmatpush1.bf16.msra.mxu0 %v584
  %750 = vmatprep.subr.bf16.mxu0 %v592
  %751 = vmatpush1.bf16.msra.mxu0 %v591
  %752 = vmatprep.subr.bf16.mxu0 %v599
  %753 = vmatpush1.bf16.msra.mxu0 %v598
  %754 = vmatprep.subr.bf16.mxu0 %v606
  %755 = vmatpush1.bf16.msra.mxu0 %v605
  %756 = vmatprep.mubr.bf16.mxu0 %v145
  %757 = vmatmul.mubr.bf16.gmra.mrb[0].mxu0 %v144
  %v758 = vpop.f32.mrb[0].mxu0
  %v759 = vadd.f32 0.0, %v758
  %v760 = vpop.f32.mrb[0].mxu0
  %v761 = vadd.f32 0.0, %v760
  %v762 = vpop.f32.mrb[0].mxu0
  %v763 = vpop.f32.mrb[0].mxu0
  %764 = vdwg.mxu0
  %765 = vmatprep.subr.bf16.mxu0 %v503
  %766 = vmatpush1.bf16.msra.mxu0 %v502
  %767 = vmatprep.subr.bf16.mxu0 %v510
  %768 = vmatpush1.bf16.msra.mxu0 %v509
  %769 = vmatprep.subr.bf16.mxu0 %v517
  %770 = vmatpush1.bf16.msra.mxu0 %v516
  %771 = vmatprep.subr.bf16.mxu0 %v524
  %772 = vmatpush1.bf16.msra.mxu0 %v523
  %773 = vmatprep.subr.bf16.mxu0 %v531
  %774 = vmatpush1.bf16.msra.mxu0 %v530
  %775 = vmatprep.subr.bf16.mxu0 %v538
  %776 = vmatpush1.bf16.msra.mxu0 %v537
  %777 = vmatprep.subr.bf16.mxu0 %v545
  %778 = vmatpush1.bf16.msra.mxu0 %v544
  %779 = vmatprep.subr.bf16.mxu0 %v552
  %780 = vmatpush1.bf16.msra.mxu0 %v551
  %781 = vmatprep.subr.bf16.mxu0 %v559
  %782 = vmatpush1.bf16.msra.mxu0 %v558
  %783 = vmatprep.subr.bf16.mxu0 %v566
  %784 = vmatpush1.bf16.msra.mxu0 %v565
  %785 = vmatprep.subr.bf16.mxu0 %v573
  %786 = vmatpush1.bf16.msra.mxu0 %v572
  %787 = vmatprep.subr.bf16.mxu0 %v580
  %788 = vmatpush1.bf16.msra.mxu0 %v579
  %789 = vmatprep.subr.bf16.mxu0 %v587
  %790 = vmatpush1.bf16.msra.mxu0 %v586
  %791 = vmatprep.subr.bf16.mxu0 %v594
  %792 = vmatpush1.bf16.msra.mxu0 %v593
  %793 = vmatprep.subr.bf16.mxu0 %v601
  %794 = vmatpush1.bf16.msra.mxu0 %v600
  %795 = vmatprep.subr.bf16.mxu0 %v608
  %796 = vmatpush1.bf16.msra.mxu0 %v607
  %797 = vmatprep.mubr.bf16.mxu0 %v145
  %798 = vmatmul.mubr.bf16.gmra.mrb[0].mxu0 %v144
  %v799 = vpop.f32.mrb[0].mxu0
  %v800 = vadd.f32 0.0, %v799
  %v801 = vpop.f32.mrb[0].mxu0
  %v802 = vadd.f32 0.0, %v801
  %v803 = vpop.f32.mrb[0].mxu0
  %v804 = vpop.f32.mrb[0].mxu0
  %805 = vdwg.mxu0
  %806 = vmatprep.subr.bf16.mxu0 %v505
  %807 = vmatpush1.bf16.msra.mxu0 %v504
  %808 = vmatprep.subr.bf16.mxu0 %v512
  %809 = vmatpush1.bf16.msra.mxu0 %v511
  %810 = vmatprep.subr.bf16.mxu0 %v519
  %811 = vmatpush1.bf16.msra.mxu0 %v518
  %812 = vmatprep.subr.bf16.mxu0 %v526
  %813 = vmatpush1.bf16.msra.mxu0 %v525
  %814 = vmatprep.subr.bf16.mxu0 %v533
  %815 = vmatpush1.bf16.msra.mxu0 %v532
  %816 = vmatprep.subr.bf16.mxu0 %v540
  %817 = vmatpush1.bf16.msra.mxu0 %v539
  %818 = vmatprep.subr.bf16.mxu0 %v547
  %819 = vmatpush1.bf16.msra.mxu0 %v546
  %820 = vmatprep.subr.bf16.mxu0 %v554
  %821 = vmatpush1.bf16.msra.mxu0 %v553
  %822 = vmatprep.subr.bf16.mxu0 %v561
  %823 = vmatpush1.bf16.msra.mxu0 %v560
  %824 = vmatprep.subr.bf16.mxu0 %v568
  %825 = vmatpush1.bf16.msra.mxu0 %v567
  %826 = vmatprep.subr.bf16.mxu0 %v575
  %827 = vmatpush1.bf16.msra.mxu0 %v574
  %828 = vmatprep.subr.bf16.mxu0 %v582
  %829 = vmatpush1.bf16.msra.mxu0 %v581
  %830 = vmatprep.subr.bf16.mxu0 %v589
  %831 = vmatpush1.bf16.msra.mxu0 %v588
  %832 = vmatprep.subr.bf16.mxu0 %v596
  %833 = vmatpush1.bf16.msra.mxu0 %v595
  %834 = vmatprep.subr.bf16.mxu0 %v603
  %835 = vmatpush1.bf16.msra.mxu0 %v602
  %836 = vmatprep.subr.bf16.mxu0 %v610
  %837 = vmatpush1.bf16.msra.mxu0 %v609
  %838 = vmatprep.mubr.bf16.mxu0 %v145
  %839 = vmatmul.mubr.bf16.gmra.mrb[0].mxu0 %v144
  %v840 = vpop.f32.mrb[0].mxu0
  %v841 = vadd.f32 0.0, %v840
  %v842 = vpop.f32.mrb[0].mxu0
  %v843 = vadd.f32 0.0, %v842
  %v844 = vpop.f32.mrb[0].mxu0
  %v845 = vpop.f32.mrb[0].mxu0
  %846 = vdwg.mxu0
  %847 = vmatprep.subr.bf16.mxu0 0
  %848 = vmatpush1.bf16.msra.mxu0 %v506
  %849 = vmatprep.subr.bf16.mxu0 0
  %850 = vmatpush1.bf16.msra.mxu0 %v513
  %851 = vmatprep.subr.bf16.mxu0 0
  %852 = vmatpush1.bf16.msra.mxu0 %v520
  %853 = vmatprep.subr.bf16.mxu0 0
  %854 = vmatpush1.bf16.msra.mxu0 %v527
  %855 = vmatprep.subr.bf16.mxu0 0
  %856 = vmatpush1.bf16.msra.mxu0 %v534
  %857 = vmatprep.subr.bf16.mxu0 0
  %858 = vmatpush1.bf16.msra.mxu0 %v541
  %859 = vmatprep.subr.bf16.mxu0 0
  %860 = vmatpush1.bf16.msra.mxu0 %v548
  %861 = vmatprep.subr.bf16.mxu0 0
  %862 = vmatpush1.bf16.msra.mxu0 %v555
  %863 = vmatprep.subr.bf16.mxu0 0
  %864 = vmatpush1.bf16.msra.mxu0 %v562
  %865 = vmatprep.subr.bf16.mxu0 0
  %866 = vmatpush1.bf16.msra.mxu0 %v569
  %867 = vmatprep.subr.bf16.mxu0 0
  %868 = vmatpush1.bf16.msra.mxu0 %v576
  %869 = vmatprep.subr.bf16.mxu0 0
  %870 = vmatpush1.bf16.msra.mxu0 %v583
  %871 = vmatprep.subr.bf16.mxu0 0
  %872 = vmatpush1.bf16.msra.mxu0 %v590
  %873 = vmatprep.subr.bf16.mxu0 0
  %874 = vmatpush1.bf16.msra.mxu0 %v597
  %875 = vmatprep.subr.bf16.mxu0 0
  %876 = vmatpush1.bf16.msra.mxu0 %v604
  %877 = vmatprep.subr.bf16.mxu0 0
  %878 = vmatpush1.bf16.msra.mxu0 %v611
  %879 = vmatprep.mubr.bf16.mxu0 %v145
  %880 = vmatmul.mubr.bf16.gmra.mrb[0].mxu0 %v144
  %v881 = vpop.f32.mrb[0].mxu0
  %v882 = vadd.f32 0.0, %v881
  %v883 = vpop.f32.mrb[0].mxu0
  %v884 = vpop.f32.mrb[0].mxu0
  %v885 = vpop.f32.mrb[0].mxu0
  %886 = vdwg.mxu0
  %v887 = vpack.c.bf16 %v759, %v759
  %v888 = vpack.c.bf16 %v761, %v761
  %v889 = vpack.c.bf16 %v800, %v800
  %v890 = vpack.c.bf16 %v802, %v802
  %v891 = vpack.c.bf16 %v841, %v841
  %v892 = vpack.c.bf16 %v843, %v843
  %v893 = vpack.c.bf16 %v882, %v882
  %v901 = vunpack.c.l.b16 %v887
  %v902 = vunpack.c.l.b16 %v888
  %v903 = vunpack.c.l.b16 %v889
  %v904 = vunpack.c.l.b16 %v890
  %v905 = vunpack.c.l.b16 %v891
  %v906 = vunpack.c.l.b16 %v892
  %v907 = vunpack.c.l.b16 %v893
  %v908 = vpack.c.b16 %v902, %v901
  %v909 = vpack.c.b16 %v904, %v903
  %v910 = vpack.c.b16 %v906, %v905
  %v911 = vpack.c.b16 %v907, %v907
  %916 = vst [vmem:[%s2] sm:$0xff] %v908
  %917 = vst [vmem:[%s2 + $0x8] sm:$0xff] %v909
  %918 = vst [vmem:[%s2 + $0x10] sm:$0xff] %v910
  %vm919 = vcmask 125952
  %920 = vst.msk [vmem:[%s2 + $0x18] sm:$0xf] %vm919, %v911
  // Predicated region
  $region10: #{a_call__.29} parent=0 // pred_check
    _
  $region11: #{a_call__.29} parent=0 // pred_check_branch
    %922 = sbr.rel (0) target = $region13
  $region12: #{a_call__.29} parent=0 // pred_region
    _
  $region13: #{a_call__.29} parent=0 // pred_fallthru
    _
  // Predicated region
  $region14: #{a_call__.29} parent=0 // pred_check
    _
  $region15: #{a_call__.29} parent=0 // pred_check_branch
    %924 = sbr.rel (0) target = $region17
  $region16: #{a_call__.29} parent=0 // pred_region
    _
  $region17: #{a_call__.29} parent=0 // pred_fallthru
    _

// kernel: a_call__.31
$region0: #{a_call__.31}
  #allocation0 [shape = 'u32[]', space=smem, size = 0x4, offset = 0x4, fixed_abs, tag = 'smem constant byte address 0x4 - core index']
  #allocation1 [shape = 'u32[144,128]{1,0:T(1,128)}', space=vmem, size = 0x12000, scoped, tag = 'internal scratch']
  %s0 = inlined_call_operand.vmem [shape: bf16[10,784], index: 0, kind: input, shape index: {}]
  %s1 = inlined_call_operand.vmem [shape: bf16[784,256], index: 1, kind: input, shape index: {}]
  %s2 = inlined_call_operand.vmem [shape: f32[10,256], index: 2, kind: input, shape index: {}, may-alias: {2,3}]
  %s3 = inlined_call_operand.vmem [shape: f32[10,256], index: 3, kind: output, shape index: {}, may-alias: {2,3}]
  %s4 = sld [smem:[#allocation0]]
  $region22: #{a_call__.31} parent=0
    _
  %s6 = ssub.s32 1, %s4
  %s7 = scalar_select 0, %s6, %s4
  // Predicated region
  $region2: #{a_call__.31} parent=0 // pred_check
    _
  $region3: #{a_call__.31} parent=0 // pred_check_branch
    %9 = sbr.rel (0) target = $region5
  $region4: #{a_call__.31} parent=0 // pred_region
    _
  $region5: #{a_call__.31} parent=0 // pred_fallthru
    _
  // Predicated region
  $region6: #{a_call__.31} parent=0 // pred_check
    _
  $region7: #{a_call__.31} parent=0 // pred_check_branch
    %11 = sbr.rel (0) target = $region9
  $region8: #{a_call__.31} parent=0 // pred_region
    _
  $region9: #{a_call__.31} parent=0 // pred_fallthru
    _
  // Predicated region
  $region10: #{a_call__.31} parent=0 // pred_check
    _
  $region11: #{a_call__.31} parent=0 // pred_check_branch
    %13 = sbr.rel (0) target = $region13
  $region12: #{a_call__.31} parent=0 // pred_region
    _
  $region13: #{a_call__.31} parent=0 // pred_fallthru
    _
  %v15 = vld [vmem:[%s0] sm:$0xff]
  %v16 = vld [vmem:[%s0 + $0x8] sm:$0xff]
  %v17 = vld [vmem:[%s0 + $0x10] sm:$0xff]
  %v18 = vld [vmem:[%s0 + $0x18] sm:$0xf]
  %v19 = vld [vmem:[%s0 + $0x1c] sm:$0x11]
  %v20 = vld [vmem:[%s0 + $0x24] sm:$0x11]
  %v21 = vld [vmem:[%s0 + $0x2c] sm:$0x11]
  %v22 = vld [vmem:[%s0 + $0x34] sm:$0x1]
  %v23 = vld [vmem:[%s1] sm:$0xff]
  %v24 = vld [vmem:[%s1 + $0x8] sm:$0xff]
  %v25 = vld [vmem:[%s1 + $0x10] sm:$0xff]
  %v26 = vld [vmem:[%s1 + $0x18] sm:$0xff]
  %v27 = vld [vmem:[%s1 + $0x20] sm:$0xff]
  %v28 = vld [vmem:[%s1 + $0x28] sm:$0xff]
  %v29 = vld [vmem:[%s1 + $0x30] sm:$0xff]
  %v30 = vld [vmem:[%s1 + $0x38] sm:$0xff]
  %v31 = vld [vmem:[%s1 + $0x40] sm:$0xff]
  %v32 = vld [vmem:[%s1 + $0x48] sm:$0xff]
  %v33 = vld [vmem:[%s1 + $0x50] sm:$0xff]
  %v34 = vld [vmem:[%s1 + $0x58] sm:$0xff]
  %v35 = vld [vmem:[%s1 + $0x60] sm:$0xff]
  %v36 = vld [vmem:[%s1 + $0x68] sm:$0xff]
  %v37 = vld [vmem:[%s1 + $0x70] sm:$0xff]
  %v38 = vld [vmem:[%s1 + $0x78] sm:$0xff]
  %v39 = vld [vmem:[%s1 + $0x80] sm:$0xff]
  %v40 = vld [vmem:[%s1 + $0x88] sm:$0xff]
  %v41 = vld [vmem:[%s1 + $0x90] sm:$0xff]
  %v42 = vld [vmem:[%s1 + $0x98] sm:$0xff]
  %v43 = vld [vmem:[%s1 + $0xa0] sm:$0xff]
  %v44 = vld [vmem:[%s1 + $0xa8] sm:$0xff]
  %v45 = vld [vmem:[%s1 + $0xb0] sm:$0xff]
  %v46 = vld [vmem:[%s1 + $0xb8] sm:$0xff]
  %v47 = vld [vmem:[%s1 + $0xc0] sm:$0xff]
  %v48 = vld [vmem:[%s1 + $0xc8] sm:$0xff]
  %v49 = vld [vmem:[%s1 + $0xd0] sm:$0xff]
  %v50 = vld [vmem:[%s1 + $0xd8] sm:$0xff]
  %v51 = vld [vmem:[%s1 + $0xe0] sm:$0xff]
  %v52 = vld [vmem:[%s1 + $0xe8] sm:$0xff]
  %v53 = vld [vmem:[%s1 + $0xf0] sm:$0xff]
  %v54 = vld [vmem:[%s1 + $0xf8] sm:$0xff]
  %v55 = vld [vmem:[%s1 + $0x100] sm:$0xff]
  %v56 = vld [vmem:[%s1 + $0x108] sm:$0xff]
  %v57 = vld [vmem:[%s1 + $0x110] sm:$0xff]
  %v58 = vld [vmem:[%s1 + $0x118] sm:$0xff]
  %v59 = vld [vmem:[%s1 + $0x120] sm:$0xff]
  %v60 = vld [vmem:[%s1 + $0x128] sm:$0xff]
  %v61 = vld [vmem:[%s1 + $0x130] sm:$0xff]
  %v62 = vld [vmem:[%s1 + $0x138] sm:$0xff]
  %v63 = vld [vmem:[%s1 + $0x140] sm:$0xff]
  %v64 = vld [vmem:[%s1 + $0x148] sm:$0xff]
  %v65 = vld [vmem:[%s1 + $0x150] sm:$0xff]
  %v66 = vld [vmem:[%s1 + $0x158] sm:$0xff]
  %v67 = vld [vmem:[%s1 + $0x160] sm:$0xff]
  %v68 = vld [vmem:[%s1 + $0x168] sm:$0xff]
  %v69 = vld [vmem:[%s1 + $0x170] sm:$0xff]
  %v70 = vld [vmem:[%s1 + $0x178] sm:$0xff]
  %v71 = vld [vmem:[%s1 + $0x180] sm:$0xff]
  %v72 = vld [vmem:[%s1 + $0x188] sm:$0xff]
  %v73 = vld [vmem:[%s1 + $0x190] sm:$0xff]
  %v74 = vld [vmem:[%s1 + $0x198] sm:$0xff]
  %v75 = vld [vmem:[%s1 + $0x1a0] sm:$0xff]
  %v76 = vld [vmem:[%s1 + $0x1a8] sm:$0xff]
  %v77 = vld [vmem:[%s1 + $0x1b0] sm:$0xff]
  %v78 = vld [vmem:[%s1 + $0x1b8] sm:$0xff]
  %v79 = vld [vmem:[%s1 + $0x1c0] sm:$0xff]
  %v80 = vld [vmem:[%s1 + $0x1c8] sm:$0xff]
  %v81 = vld [vmem:[%s1 + $0x1d0] sm:$0xff]
  %v82 = vld [vmem:[%s1 + $0x1d8] sm:$0xff]
  %v83 = vld [vmem:[%s1 + $0x1e0] sm:$0xff]
  %v84 = vld [vmem:[%s1 + $0x1e8] sm:$0xff]
  %v85 = vld [vmem:[%s1 + $0x1f0] sm:$0xff]
  %v86 = vld [vmem:[%s1 + $0x1f8] sm:$0xff]
  %v87 = vld [vmem:[%s1 + $0x200] sm:$0xff]
  %v88 = vld [vmem:[%s1 + $0x208] sm:$0xff]
  %v89 = vld [vmem:[%s1 + $0x210] sm:$0xff]
  %v90 = vld [vmem:[%s1 + $0x218] sm:$0xff]
  %v91 = vld [vmem:[%s1 + $0x220] sm:$0xff]
  %v92 = vld [vmem:[%s1 + $0x228] sm:$0xff]
  %v93 = vld [vmem:[%s1 + $0x230] sm:$0xff]
  %v94 = vld [vmem:[%s1 + $0x238] sm:$0xff]
  %v95 = vld [vmem:[%s1 + $0x240] sm:$0xff]
  %v96 = vld [vmem:[%s1 + $0x248] sm:$0xff]
  %v97 = vld [vmem:[%s1 + $0x250] sm:$0xff]
  %v98 = vld [vmem:[%s1 + $0x258] sm:$0xff]
  %v99 = vld [vmem:[%s1 + $0x260] sm:$0xff]
  %v100 = vld [vmem:[%s1 + $0x268] sm:$0xff]
  %v101 = vld [vmem:[%s1 + $0x270] sm:$0xff]
  %v102 = vld [vmem:[%s1 + $0x278] sm:$0xff]
  %v103 = vld [vmem:[%s1 + $0x280] sm:$0xff]
  %v104 = vld [vmem:[%s1 + $0x288] sm:$0xff]
  %v105 = vld [vmem:[%s1 + $0x290] sm:$0xff]
  %v106 = vld [vmem:[%s1 + $0x298] sm:$0xff]
  %v107 = vld [vmem:[%s1 + $0x2a0] sm:$0xff]
  %v108 = vld [vmem:[%s1 + $0x2a8] sm:$0xff]
  %v109 = vld [vmem:[%s1 + $0x2b0] sm:$0xff]
  %v110 = vld [vmem:[%s1 + $0x2b8] sm:$0xff]
  %v111 = vld [vmem:[%s1 + $0x2c0] sm:$0xff]
  %v112 = vld [vmem:[%s1 + $0x2c8] sm:$0xff]
  %v113 = vld [vmem:[%s1 + $0x2d0] sm:$0xff]
  %v114 = vld [vmem:[%s1 + $0x2d8] sm:$0xff]
  %v115 = vld [vmem:[%s1 + $0x2e0] sm:$0xff]
  %v116 = vld [vmem:[%s1 + $0x2e8] sm:$0xff]
  %v117 = vld [vmem:[%s1 + $0x2f0] sm:$0xff]
  %v118 = vld [vmem:[%s1 + $0x2f8] sm:$0xff]
  %v119 = vld [vmem:[%s1 + $0x300] sm:$0xff]
  %v120 = vld [vmem:[%s1 + $0x308] sm:$0xff]
  %v129 = vunpack.c.l.b16 %v15
  %v130 = vunpack.c.h.b16 %v15
  %v131 = vunpack.c.l.b16 %v16
  %v132 = vunpack.c.h.b16 %v16
  %v133 = vunpack.c.l.b16 %v17
  %v134 = vunpack.c.h.b16 %v17
  %v135 = vunpack.c.l.b16 %v18
  %v136 = vunpack.c.l.b16 %v19
  %v137 = vunpack.c.h.b16 %v19
  %v138 = vunpack.c.l.b16 %v20
  %v139 = vunpack.c.h.b16 %v20
  %v140 = vunpack.c.l.b16 %v21
  %v141 = vunpack.c.h.b16 %v21
  %v142 = vunpack.c.l.b16 %v22
  %v143 = vpack.c.b16 %v136, %v129
  %v144 = vpack.c.b16 %v137, %v130
  %v145 = vpack.c.b16 %v138, %v131
  %v146 = vpack.c.b16 %v139, %v132
  %v147 = vpack.c.b16 %v140, %v133
  %v148 = vpack.c.b16 %v141, %v134
  %v149 = vpack.c.b16 %v142, %v135
  %v254 = vunpack.c.l.b16 %v23
  %v255 = vunpack.c.h.b16 %v23
  %v256 = vunpack.c.l.b16 %v24
  %v257 = vunpack.c.h.b16 %v24
  %v258 = vunpack.c.l.b16 %v25
  %v259 = vunpack.c.h.b16 %v25
  %v260 = vunpack.c.l.b16 %v26
  %v261 = vunpack.c.h.b16 %v26
  %v262 = vunpack.c.l.b16 %v27
  %v263 = vunpack.c.h.b16 %v27
  %v264 = vunpack.c.l.b16 %v28
  %v265 = vunpack.c.h.b16 %v28
  %v266 = vunpack.c.l.b16 %v29
  %v267 = vunpack.c.h.b16 %v29
  %v268 = vunpack.c.l.b16 %v30
  %v269 = vunpack.c.h.b16 %v30
  %v270 = vunpack.c.l.b16 %v31
  %v271 = vunpack.c.h.b16 %v31
  %v272 = vunpack.c.l.b16 %v32
  %v273 = vunpack.c.h.b16 %v32
  %v274 = vunpack.c.l.b16 %v33
  %v275 = vunpack.c.h.b16 %v33
  %v276 = vunpack.c.l.b16 %v34
  %v277 = vunpack.c.h.b16 %v34
  %v278 = vunpack.c.l.b16 %v35
  %v279 = vunpack.c.h.b16 %v35
  %v280 = vunpack.c.l.b16 %v36
  %v281 = vunpack.c.h.b16 %v36
  %v282 = vunpack.c.l.b16 %v37
  %v283 = vunpack.c.h.b16 %v37
  %v284 = vunpack.c.l.b16 %v38
  %v285 = vunpack.c.h.b16 %v38
  %v286 = vunpack.c.l.b16 %v39
  %v287 = vunpack.c.h.b16 %v39
  %v288 = vunpack.c.l.b16 %v40
  %v289 = vunpack.c.h.b16 %v40
  %v290 = vunpack.c.l.b16 %v41
  %v291 = vunpack.c.h.b16 %v41
  %v292 = vunpack.c.l.b16 %v42
  %v293 = vunpack.c.h.b16 %v42
  %v294 = vunpack.c.l.b16 %v43
  %v295 = vunpack.c.h.b16 %v43
  %v296 = vunpack.c.l.b16 %v44
  %v297 = vunpack.c.h.b16 %v44
  %v298 = vunpack.c.l.b16 %v45
  %v299 = vunpack.c.h.b16 %v45
  %v300 = vunpack.c.l.b16 %v46
  %v301 = vunpack.c.h.b16 %v46
  %v302 = vunpack.c.l.b16 %v47
  %v303 = vunpack.c.h.b16 %v47
  %v304 = vunpack.c.l.b16 %v48
  %v305 = vunpack.c.h.b16 %v48
  %v306 = vunpack.c.l.b16 %v49
  %v307 = vunpack.c.h.b16 %v49
  %v308 = vunpack.c.l.b16 %v50
  %v309 = vunpack.c.h.b16 %v50
  %v310 = vunpack.c.l.b16 %v51
  %v311 = vunpack.c.h.b16 %v51
  %v312 = vunpack.c.l.b16 %v52
  %v313 = vunpack.c.h.b16 %v52
  %v314 = vunpack.c.l.b16 %v53
  %v315 = vunpack.c.h.b16 %v53
  %v316 = vunpack.c.l.b16 %v54
  %v317 = vunpack.c.h.b16 %v54
  %v318 = vunpack.c.l.b16 %v55
  %v319 = vunpack.c.h.b16 %v55
  %v320 = vunpack.c.l.b16 %v56
  %v321 = vunpack.c.h.b16 %v56
  %v322 = vunpack.c.l.b16 %v57
  %v323 = vunpack.c.h.b16 %v57
  %v324 = vunpack.c.l.b16 %v58
  %v325 = vunpack.c.h.b16 %v58
  %v326 = vunpack.c.l.b16 %v59
  %v327 = vunpack.c.h.b16 %v59
  %v328 = vunpack.c.l.b16 %v60
  %v329 = vunpack.c.h.b16 %v60
  %v330 = vunpack.c.l.b16 %v61
  %v331 = vunpack.c.h.b16 %v61
  %v332 = vunpack.c.l.b16 %v62
  %v333 = vunpack.c.h.b16 %v62
  %v334 = vunpack.c.l.b16 %v63
  %v335 = vunpack.c.h.b16 %v63
  %v336 = vunpack.c.l.b16 %v64
  %v337 = vunpack.c.h.b16 %v64
  %v338 = vunpack.c.l.b16 %v65
  %v339 = vunpack.c.h.b16 %v65
  %v340 = vunpack.c.l.b16 %v66
  %v341 = vunpack.c.h.b16 %v66
  %v342 = vunpack.c.l.b16 %v67
  %v343 = vunpack.c.h.b16 %v67
  %v344 = vunpack.c.l.b16 %v68
  %v345 = vunpack.c.h.b16 %v68
  %v346 = vunpack.c.l.b16 %v69
  %v347 = vunpack.c.h.b16 %v69
  %v348 = vunpack.c.l.b16 %v70
  %v349 = vunpack.c.h.b16 %v70
  %v350 = vunpack.c.l.b16 %v71
  %v351 = vunpack.c.h.b16 %v71
  %v352 = vunpack.c.l.b16 %v72
  %v353 = vunpack.c.h.b16 %v72
  %v354 = vunpack.c.l.b16 %v73
  %v355 = vunpack.c.h.b16 %v73
  %v356 = vunpack.c.l.b16 %v74
  %v357 = vunpack.c.h.b16 %v74
  %v358 = vunpack.c.l.b16 %v75
  %v359 = vunpack.c.h.b16 %v75
  %v360 = vunpack.c.l.b16 %v76
  %v361 = vunpack.c.h.b16 %v76
  %v362 = vunpack.c.l.b16 %v77
  %v363 = vunpack.c.h.b16 %v77
  %v364 = vunpack.c.l.b16 %v78
  %v365 = vunpack.c.h.b16 %v78
  %v366 = vunpack.c.l.b16 %v79
  %v367 = vunpack.c.h.b16 %v79
  %v368 = vunpack.c.l.b16 %v80
  %v369 = vunpack.c.h.b16 %v80
  %v370 = vunpack.c.l.b16 %v81
  %v371 = vunpack.c.h.b16 %v81
  %v372 = vunpack.c.l.b16 %v82
  %v373 = vunpack.c.h.b16 %v82
  %v374 = vunpack.c.l.b16 %v83
  %v375 = vunpack.c.h.b16 %v83
  %v376 = vunpack.c.l.b16 %v84
  %v377 = vunpack.c.h.b16 %v84
  %v378 = vunpack.c.l.b16 %v85
  %v379 = vunpack.c.h.b16 %v85
  %v380 = vunpack.c.l.b16 %v86
  %v381 = vunpack.c.h.b16 %v86
  %v382 = vunpack.c.l.b16 %v87
  %v383 = vunpack.c.h.b16 %v87
  %v384 = vunpack.c.l.b16 %v88
  %v385 = vunpack.c.h.b16 %v88
  %v386 = vunpack.c.l.b16 %v89
  %v387 = vunpack.c.h.b16 %v89
  %v388 = vunpack.c.l.b16 %v90
  %v389 = vunpack.c.h.b16 %v90
  %v390 = vunpack.c.l.b16 %v91
  %v391 = vunpack.c.h.b16 %v91
  %v392 = vunpack.c.l.b16 %v92
  %v393 = vunpack.c.h.b16 %v92
  %v394 = vunpack.c.l.b16 %v93
  %v395 = vunpack.c.h.b16 %v93
  %v396 = vunpack.c.l.b16 %v94
  %v397 = vunpack.c.h.b16 %v94
  %v398 = vunpack.c.l.b16 %v95
  %v399 = vunpack.c.h.b16 %v95
  %v400 = vunpack.c.l.b16 %v96
  %v401 = vunpack.c.h.b16 %v96
  %v402 = vunpack.c.l.b16 %v97
  %v403 = vunpack.c.h.b16 %v97
  %v404 = vunpack.c.l.b16 %v98
  %v405 = vunpack.c.h.b16 %v98
  %v406 = vunpack.c.l.b16 %v99
  %v407 = vunpack.c.h.b16 %v99
  %v408 = vunpack.c.l.b16 %v100
  %v409 = vunpack.c.h.b16 %v100
  %v410 = vunpack.c.l.b16 %v101
  %v411 = vunpack.c.h.b16 %v101
  %v412 = vunpack.c.l.b16 %v102
  %v413 = vunpack.c.h.b16 %v102
  %v414 = vunpack.c.l.b16 %v103
  %v415 = vunpack.c.h.b16 %v103
  %v416 = vunpack.c.l.b16 %v104
  %v417 = vunpack.c.h.b16 %v104
  %v418 = vunpack.c.l.b16 %v105
  %v419 = vunpack.c.h.b16 %v105
  %v420 = vunpack.c.l.b16 %v106
  %v421 = vunpack.c.h.b16 %v106
  %v422 = vunpack.c.l.b16 %v107
  %v423 = vunpack.c.h.b16 %v107
  %v424 = vunpack.c.l.b16 %v108
  %v425 = vunpack.c.h.b16 %v108
  %v426 = vunpack.c.l.b16 %v109
  %v427 = vunpack.c.h.b16 %v109
  %v428 = vunpack.c.l.b16 %v110
  %v429 = vunpack.c.h.b16 %v110
  %v430 = vunpack.c.l.b16 %v111
  %v431 = vunpack.c.h.b16 %v111
  %v432 = vunpack.c.l.b16 %v112
  %v433 = vunpack.c.h.b16 %v112
  %v434 = vunpack.c.l.b16 %v113
  %v435 = vunpack.c.h.b16 %v113
  %v436 = vunpack.c.l.b16 %v114
  %v437 = vunpack.c.h.b16 %v114
  %v438 = vunpack.c.l.b16 %v115
  %v439 = vunpack.c.h.b16 %v115
  %v440 = vunpack.c.l.b16 %v116
  %v441 = vunpack.c.h.b16 %v116
  %v442 = vunpack.c.l.b16 %v117
  %v443 = vunpack.c.h.b16 %v117
  %v444 = vunpack.c.l.b16 %v118
  %v445 = vunpack.c.h.b16 %v118
  %v446 = vunpack.c.l.b16 %v119
  %v447 = vunpack.c.h.b16 %v119
  %v448 = vunpack.c.l.b16 %v120
  %v449 = vunpack.c.h.b16 %v120
  %v450 = vpack.c.b16 %v256, %v254
  %v451 = vpack.c.b16 %v257, %v255
  %v452 = vpack.c.b16 %v260, %v258
  %v453 = vpack.c.b16 %v261, %v259
  %v454 = vpack.c.b16 %v264, %v262
  %v455 = vpack.c.b16 %v265, %v263
  %v456 = vpack.c.b16 %v268, %v266
  %v457 = vpack.c.b16 %v269, %v267
  %v458 = vpack.c.b16 %v272, %v270
  %v459 = vpack.c.b16 %v273, %v271
  %v460 = vpack.c.b16 %v276, %v274
  %v461 = vpack.c.b16 %v277, %v275
  %v462 = vpack.c.b16 %v280, %v278
  %v463 = vpack.c.b16 %v281, %v279
  %v464 = vpack.c.b16 %v284, %v282
  %v465 = vpack.c.b16 %v285, %v283
  %v466 = vpack.c.b16 %v288, %v286
  %v467 = vpack.c.b16 %v289, %v287
  %v468 = vpack.c.b16 %v292, %v290
  %v469 = vpack.c.b16 %v293, %v291
  %v470 = vpack.c.b16 %v296, %v294
  %v471 = vpack.c.b16 %v297, %v295
  %v472 = vpack.c.b16 %v300, %v298
  %v473 = vpack.c.b16 %v301, %v299
  %v474 = vpack.c.b16 %v304, %v302
  %v475 = vpack.c.b16 %v305, %v303
  %v476 = vpack.c.b16 %v308, %v306
  %v477 = vpack.c.b16 %v309, %v307
  %v478 = vpack.c.b16 %v312, %v310
  %v479 = vpack.c.b16 %v313, %v311
  %v480 = vpack.c.b16 %v316, %v314
  %v481 = vpack.c.b16 %v317, %v315
  %v482 = vpack.c.b16 %v320, %v318
  %v483 = vpack.c.b16 %v321, %v319
  %v484 = vpack.c.b16 %v324, %v322
  %v485 = vpack.c.b16 %v325, %v323
  %v486 = vpack.c.b16 %v328, %v326
  %v487 = vpack.c.b16 %v329, %v327
  %v488 = vpack.c.b16 %v332, %v330
  %v489 = vpack.c.b16 %v333, %v331
  %v490 = vpack.c.b16 %v336, %v334
  %v491 = vpack.c.b16 %v337, %v335
  %v492 = vpack.c.b16 %v340, %v338
  %v493 = vpack.c.b16 %v341, %v339
  %v494 = vpack.c.b16 %v344, %v342
  %v495 = vpack.c.b16 %v345, %v343
  %v496 = vpack.c.b16 %v348, %v346
  %v497 = vpack.c.b16 %v349, %v347
  %v498 = vpack.c.b16 %v352, %v350
  %v499 = vpack.c.b16 %v353, %v351
  %v500 = vpack.c.b16 %v356, %v354
  %v501 = vpack.c.b16 %v357, %v355
  %v502 = vpack.c.b16 %v360, %v358
  %v503 = vpack.c.b16 %v361, %v359
  %v504 = vpack.c.b16 %v364, %v362
  %v505 = vpack.c.b16 %v365, %v363
  %v506 = vpack.c.b16 %v368, %v366
  %v507 = vpack.c.b16 %v369, %v367
  %v508 = vpack.c.b16 %v372, %v370
  %v509 = vpack.c.b16 %v373, %v371
  %v510 = vpack.c.b16 %v376, %v374
  %v511 = vpack.c.b16 %v377, %v375
  %v512 = vpack.c.b16 %v380, %v378
  %v513 = vpack.c.b16 %v381, %v379
  %v514 = vpack.c.b16 %v384, %v382
  %v515 = vpack.c.b16 %v385, %v383
  %v516 = vpack.c.b16 %v388, %v386
  %v517 = vpack.c.b16 %v389, %v387
  %v518 = vpack.c.b16 %v392, %v390
  %v519 = vpack.c.b16 %v393, %v391
  %v520 = vpack.c.b16 %v396, %v394
  %v521 = vpack.c.b16 %v397, %v395
  %v522 = vpack.c.b16 %v400, %v398
  %v523 = vpack.c.b16 %v401, %v399
  %v524 = vpack.c.b16 %v404, %v402
  %v525 = vpack.c.b16 %v405, %v403
  %v526 = vpack.c.b16 %v408, %v406
  %v527 = vpack.c.b16 %v409, %v407
  %v528 = vpack.c.b16 %v412, %v410
  %v529 = vpack.c.b16 %v413, %v411
  %v530 = vpack.c.b16 %v416, %v414
  %v531 = vpack.c.b16 %v417, %v415
  %v532 = vpack.c.b16 %v420, %v418
  %v533 = vpack.c.b16 %v421, %v419
  %v534 = vpack.c.b16 %v424, %v422
  %v535 = vpack.c.b16 %v425, %v423
  %v536 = vpack.c.b16 %v428, %v426
  %v537 = vpack.c.b16 %v429, %v427
  %v538 = vpack.c.b16 %v432, %v430
  %v539 = vpack.c.b16 %v433, %v431
  %v540 = vpack.c.b16 %v436, %v434
  %v541 = vpack.c.b16 %v437, %v435
  %v542 = vpack.c.b16 %v440, %v438
  %v543 = vpack.c.b16 %v441, %v439
  %v544 = vpack.c.b16 %v444, %v442
  %v545 = vpack.c.b16 %v445, %v443
  %v546 = vpack.c.b16 %v448, %v446
  %v547 = vpack.c.b16 %v449, %v447
  %vm646 = vcmask 130048
  %v648 = vsel %vm646, %v149, 0
  %650 = vmatprep.subr.bf16.mxu0 %v451
  %651 = vmatpush1.bf16.msra.mxu0 %v450
  %652 = vmatprep.subr.bf16.mxu0 %v453
  %653 = vmatpush1.bf16.msra.mxu0 %v452
  %654 = vmatprep.subr.bf16.mxu0 %v455
  %655 = vmatpush1.bf16.msra.mxu0 %v454
  %656 = vmatprep.subr.bf16.mxu0 %v457
  %657 = vmatpush1.bf16.msra.mxu0 %v456
  %658 = vmatprep.subr.bf16.mxu0 %v459
  %659 = vmatpush1.bf16.msra.mxu0 %v458
  %660 = vmatprep.subr.bf16.mxu0 %v461
  %661 = vmatpush1.bf16.msra.mxu0 %v460
  %662 = vmatprep.subr.bf16.mxu0 %v463
  %663 = vmatpush1.bf16.msra.mxu0 %v462
  %664 = vmatprep.subr.bf16.mxu0 %v465
  %665 = vmatpush1.bf16.msra.mxu0 %v464
  %666 = vmatprep.subr.bf16.mxu0 %v467
  %667 = vmatpush1.bf16.msra.mxu0 %v466
  %668 = vmatprep.subr.bf16.mxu0 %v469
  %669 = vmatpush1.bf16.msra.mxu0 %v468
  %670 = vmatprep.subr.bf16.mxu0 %v471
  %671 = vmatpush1.bf16.msra.mxu0 %v470
  %672 = vmatprep.subr.bf16.mxu0 %v473
  %673 = vmatpush1.bf16.msra.mxu0 %v472
  %674 = vmatprep.subr.bf16.mxu0 %v475
  %675 = vmatpush1.bf16.msra.mxu0 %v474
  %676 = vmatprep.subr.bf16.mxu0 %v477
  %677 = vmatpush1.bf16.msra.mxu0 %v476
  %678 = vmatprep.subr.bf16.mxu0 %v479
  %679 = vmatpush1.bf16.msra.mxu0 %v478
  %680 = vmatprep.subr.bf16.mxu0 %v481
  %681 = vmatpush1.bf16.msra.mxu0 %v480
  %682 = vmatprep.mubr.bf16.mxu0 %v144
  %683 = vmatmul.mubr.bf16.gmra.mrb[0].mxu0 %v143
  %v684 = vpop.f32.mrb[0].mxu0
  %v685 = vadd.f32 0.0, %v684
  %v686 = vpop.f32.mrb[0].mxu0
  %v687 = vadd.f32 0.0, %v686
  %v688 = vpop.f32.mrb[0].mxu0
  %v689 = vadd.f32 0.0, %v688
  %v690 = vpop.f32.mrb[0].mxu0
  %v691 = vadd.f32 0.0, %v690
  %692 = vdwg.mxu0
  %693 = vmatprep.subr.bf16.mxu0 %v483
  %694 = vmatpush1.bf16.msra.mxu0 %v482
  %695 = vmatprep.subr.bf16.mxu0 %v485
  %696 = vmatpush1.bf16.msra.mxu0 %v484
  %697 = vmatprep.subr.bf16.mxu0 %v487
  %698 = vmatpush1.bf16.msra.mxu0 %v486
  %699 = vmatprep.subr.bf16.mxu0 %v489
  %700 = vmatpush1.bf16.msra.mxu0 %v488
  %701 = vmatprep.subr.bf16.mxu0 %v491
  %702 = vmatpush1.bf16.msra.mxu0 %v490
  %703 = vmatprep.subr.bf16.mxu0 %v493
  %704 = vmatpush1.bf16.msra.mxu0 %v492
  %705 = vmatprep.subr.bf16.mxu0 %v495
  %706 = vmatpush1.bf16.msra.mxu0 %v494
  %707 = vmatprep.subr.bf16.mxu0 %v497
  %708 = vmatpush1.bf16.msra.mxu0 %v496
  %709 = vmatprep.subr.bf16.mxu0 %v499
  %710 = vmatpush1.bf16.msra.mxu0 %v498
  %711 = vmatprep.subr.bf16.mxu0 %v501
  %712 = vmatpush1.bf16.msra.mxu0 %v500
  %713 = vmatprep.subr.bf16.mxu0 %v503
  %714 = vmatpush1.bf16.msra.mxu0 %v502
  %715 = vmatprep.subr.bf16.mxu0 %v505
  %716 = vmatpush1.bf16.msra.mxu0 %v504
  %717 = vmatprep.subr.bf16.mxu0 %v507
  %718 = vmatpush1.bf16.msra.mxu0 %v506
  %719 = vmatprep.subr.bf16.mxu0 %v509
  %720 = vmatpush1.bf16.msra.mxu0 %v508
  %721 = vmatprep.subr.bf16.mxu0 %v511
  %722 = vmatpush1.bf16.msra.mxu0 %v510
  %723 = vmatprep.subr.bf16.mxu0 %v513
  %724 = vmatpush1.bf16.msra.mxu0 %v512
  %725 = vmatprep.mubr.bf16.mxu0 %v146
  %726 = vmatmul.mubr.bf16.gmra.mrb[0].mxu0 %v145
  %v727 = vpop.f32.mrb[0].mxu0
  %v728 = vadd.f32 %v685, %v727
  %v729 = vpop.f32.mrb[0].mxu0
  %v730 = vadd.f32 %v687, %v729
  %v731 = vpop.f32.mrb[0].mxu0
  %v732 = vadd.f32 %v689, %v731
  %v733 = vpop.f32.mrb[0].mxu0
  %v734 = vadd.f32 %v691, %v733
  %735 = vdwg.mxu0
  %736 = vmatprep.subr.bf16.mxu0 %v515
  %737 = vmatpush1.bf16.msra.mxu0 %v514
  %738 = vmatprep.subr.bf16.mxu0 %v517
  %739 = vmatpush1.bf16.msra.mxu0 %v516
  %740 = vmatprep.subr.bf16.mxu0 %v519
  %741 = vmatpush1.bf16.msra.mxu0 %v518
  %742 = vmatprep.subr.bf16.mxu0 %v521
  %743 = vmatpush1.bf16.msra.mxu0 %v520
  %744 = vmatprep.subr.bf16.mxu0 %v523
  %745 = vmatpush1.bf16.msra.mxu0 %v522
  %746 = vmatprep.subr.bf16.mxu0 %v525
  %747 = vmatpush1.bf16.msra.mxu0 %v524
  %748 = vmatprep.subr.bf16.mxu0 %v527
  %749 = vmatpush1.bf16.msra.mxu0 %v526
  %750 = vmatprep.subr.bf16.mxu0 %v529
  %751 = vmatpush1.bf16.msra.mxu0 %v528
  %752 = vmatprep.subr.bf16.mxu0 %v531
  %753 = vmatpush1.bf16.msra.mxu0 %v530
  %754 = vmatprep.subr.bf16.mxu0 %v533
  %755 = vmatpush1.bf16.msra.mxu0 %v532
  %756 = vmatprep.subr.bf16.mxu0 %v535
  %757 = vmatpush1.bf16.msra.mxu0 %v534
  %758 = vmatprep.subr.bf16.mxu0 %v537
  %759 = vmatpush1.bf16.msra.mxu0 %v536
  %760 = vmatprep.subr.bf16.mxu0 %v539
  %761 = vmatpush1.bf16.msra.mxu0 %v538
  %762 = vmatprep.subr.bf16.mxu0 %v541
  %763 = vmatpush1.bf16.msra.mxu0 %v540
  %764 = vmatprep.subr.bf16.mxu0 %v543
  %765 = vmatpush1.bf16.msra.mxu0 %v542
  %766 = vmatprep.subr.bf16.mxu0 %v545
  %767 = vmatpush1.bf16.msra.mxu0 %v544
  %768 = vmatprep.mubr.bf16.mxu0 %v148
  %769 = vmatmul.mubr.bf16.gmra.mrb[0].mxu0 %v147
  %v770 = vpop.f32.mrb[0].mxu0
  %v771 = vadd.f32 %v728, %v770
  %v772 = vpop.f32.mrb[0].mxu0
  %v773 = vadd.f32 %v730, %v772
  %v774 = vpop.f32.mrb[0].mxu0
  %v775 = vadd.f32 %v732, %v774
  %v776 = vpop.f32.mrb[0].mxu0
  %v777 = vadd.f32 %v734, %v776
  %778 = vdwg.mxu0
  %779 = vmatprep.subr.bf16.mxu0 %v547
  %780 = vmatpush1.bf16.msra.mxu0 %v546
  %781 = vmatprep.subr.bf16.mxu0 0
  %782 = vmatpush1.bf16.msra.mxu0 0
  %783 = vmatprep.subr.bf16.mxu0 0
  %784 = vmatpush1.bf16.msra.mxu0 0
  %785 = vmatprep.subr.bf16.mxu0 0
  %786 = vmatpush1.bf16.msra.mxu0 0
  %787 = vmatprep.subr.bf16.mxu0 0
  %788 = vmatpush1.bf16.msra.mxu0 0
  %789 = vmatprep.subr.bf16.mxu0 0
  %790 = vmatpush1.bf16.msra.mxu0 0
  %791 = vmatprep.subr.bf16.mxu0 0
  %792 = vmatpush1.bf16.msra.mxu0 0
  %793 = vmatprep.subr.bf16.mxu0 0
  %794 = vmatpush1.bf16.msra.mxu0 0
  %795 = vmatprep.subr.bf16.mxu0 0
  %796 = vmatpush1.bf16.msra.mxu0 0
  %797 = vmatprep.subr.bf16.mxu0 0
  %798 = vmatpush1.bf16.msra.mxu0 0
  %799 = vmatprep.subr.bf16.mxu0 0
  %800 = vmatpush1.bf16.msra.mxu0 0
  %801 = vmatprep.subr.bf16.mxu0 0
  %802 = vmatpush1.bf16.msra.mxu0 0
  %803 = vmatprep.subr.bf16.mxu0 0
  %804 = vmatpush1.bf16.msra.mxu0 0
  %805 = vmatprep.subr.bf16.mxu0 0
  %806 = vmatpush1.bf16.msra.mxu0 0
  %807 = vmatprep.subr.bf16.mxu0 0
  %808 = vmatpush1.bf16.msra.mxu0 0
  %809 = vmatprep.subr.bf16.mxu0 0
  %810 = vmatpush1.bf16.msra.mxu0 0
  %811 = vmatprep.mubr.bf16.mxu0 0
  %812 = vmatmul.mubr.bf16.gmra.mrb[0].mxu0 %v648
  %v813 = vpop.f32.mrb[0].mxu0
  %v814 = vadd.f32 %v771, %v813
  %v815 = vpop.f32.mrb[0].mxu0
  %v816 = vadd.f32 %v773, %v815
  %v817 = vpop.f32.mrb[0].mxu0
  %v818 = vadd.f32 %v775, %v817
  %v819 = vpop.f32.mrb[0].mxu0
  %v820 = vadd.f32 %v777, %v819
  %821 = vdwg.mxu0
  %v822 = vld [vmem:[%s2] sm:$0xff]
  %v823 = vld [vmem:[%s2 + $0x8] sm:$0xff]
  %v824 = vld [vmem:[%s2 + $0x10] sm:$0x3]
  %v825 = vld [vmem:[%s2 + $0x18] sm:$0x3]
  %v826 = vmax.f32 %v822, %v814
  %v827 = vmax.f32 %v823, %v816
  %v828 = vmax.f32 %v824, %v818
  %v829 = vmax.f32 %v825, %v820
  %830 = vst [vmem:[%s3] sm:$0xff] %v826
  %831 = vst [vmem:[%s3 + $0x8] sm:$0xff] %v827
  %832 = vst [vmem:[%s3 + $0x10] sm:$0x3] %v828
  %833 = vst [vmem:[%s3 + $0x18] sm:$0x3] %v829
  // Predicated region
  $region14: #{a_call__.31} parent=0 // pred_check
    _
  $region15: #{a_call__.31} parent=0 // pred_check_branch
    %835 = sbr.rel (0) target = $region17
  $region16: #{a_call__.31} parent=0 // pred_region
    _
  $region17: #{a_call__.31} parent=0 // pred_fallthru
    _
  // Predicated region
  $region18: #{a_call__.31} parent=0 // pred_check
    _
  $region19: #{a_call__.31} parent=0 // pred_check_branch
    %837 = sbr.rel (0) target = $region21
  $region20: #{a_call__.31} parent=0 // pred_region
    _
  $region21: #{a_call__.31} parent=0 // pred_fallthru
    _

</llo_original>
